<compile_context>
chip_gen: v7x
topology: tpu7x:2x2x1
jax: 0.10.0
libtpu: 0.0.40
codegen_flags: <defaults>
</compile_context>

<pallas_src>
import jax
import jax.numpy as jnp
from jax.experimental import pallas as pl
from jax.experimental.pallas import tpu as pltpu


def _vmem_limit_bytes():
    """Generation-aware VMEM limit: <=48 MiB on v7x (64 MiB), <=96 MiB elsewhere."""
    cap = 64 * 1024 * 1024
    try:
        info = pltpu.get_tpu_info()
        cap = int(getattr(info, "vmem_capacity_bytes", cap))
    except Exception:
        pass
    return max(32 * 1024 * 1024, min(cap - 16 * 1024 * 1024, 96 * 1024 * 1024))


def _pick_rows(B, H, W, W2, Cx, Cr, Cout, vmem_budget, max_unroll=32):
    """Low-res rows per tile: sublane-legal, lane-dense, VMEM-budgeted."""

    def bytes_per(m):
        tp = 2 * m * W2
        return (2 * (Cx * m * W + Cr * tp + Cout * tp) * 4   # double-buffered blocks
                + 2 * Cout * tp * 4                           # scratch + temporaries
                + (W * W2 + Cout * (Cx + Cr + 1)) * 4)        # resident weights / U

    cands = []
    for m in range(8, min(H, max_unroll) + 1, 8):
        if (2 * m * W2) % 128 == 0 and bytes_per(m) <= vmem_budget:
            cands.append(m)
    if H <= max_unroll and bytes_per(H) <= vmem_budget:
        cands.append(H)
    if not cands:
        cands = [min(H, 8)]
    m = max(cands)
    if B == 1:
        # Keep >=2 grid steps so the row axis can shard across megacore TCs.
        two_step = [c for c in cands if -(-H // c) >= 2]
        if two_step:
            m = max(two_step)
    return m


def _make_kernel(m, W2, H, with_stats):
    """Fused ReLU(up(x)) + split channel matmul (1x1 conv), channel-major.

    with_stats=True : emit per-tile (Cout,1) sum / sum-of-squares (bias-free).
    with_stats=False: emit the conv output tile (BN already folded in weights).
    """
    TP = 2 * m * W2              # flat output pixels per tile (2m output rows)
    ragged = (H % m) != 0

    def x_row(j, x_ref, wx, u):
        # One low-res row: ReLU -> channel matmul at low res -> W-duplication
        # via the tiny 0/1 (W, W2) matmul.  All dots are plain 2-D MXU dots.
        xj = jnp.maximum(x_ref[0, :, j, :], 0.0)                       # (Cx, W)
        yxj = jnp.dot(wx, xj, preferred_element_type=jnp.float32)      # (Cout, W)
        return jnp.dot(yxj, u, preferred_element_type=jnp.float32)     # (Cout, W2)

    if with_stats:
        def kernel(x_ref, r_ref, wx_ref, wr_ref, u_ref, b_ref,
                   sum_ref, sq_ref, acc_ref):
            acc_ref[...] = (jnp.dot(wr_ref[...], r_ref[0],
                                    preferred_element_type=jnp.float32)
                            + b_ref[...])                              # (Cout, TP)
            wx = wx_ref[...]
            u = u_ref[...]
            for j in range(m):                       # static unroll, H-dup = 2 adds
                wide = x_row(j, x_ref, wx, u)
                c0 = 2 * j * W2
                acc_ref[:, c0:c0 + W2] += wide
                acc_ref[:, c0 + W2:c0 + 2 * W2] += wide
            y = acc_ref[...]
            if ragged:                               # drop padded tail pixels
                i = pl.program_id(1)
                valid = jnp.minimum(m, H - i * m) * (2 * W2)
                col = jax.lax.broadcasted_iota(jnp.int32, (1, TP), 1)
                y = jnp.where(col < valid, y, 0.0)
            sum_ref[0, 0, :, :] = jnp.sum(y, axis=1, keepdims=True)
            sq_ref[0, 0, :, :] = jnp.sum(y * y, axis=1, keepdims=True)
    else:
        def kernel(x_ref, r_ref, wx_ref, wr_ref, u_ref, b_ref, o_ref):
            o_ref[0, :, :] = (jnp.dot(wr_ref[...], r_ref[0],
                                      preferred_element_type=jnp.float32)
                              + b_ref[...]).astype(o_ref.dtype)
            wx = wx_ref[...]
            u = u_ref[...]
            for j in range(m):
                wide = x_row(j, x_ref, wx, u)
                c0 = 2 * j * W2
                o_ref[0, :, c0:c0 + W2] += wide.astype(o_ref.dtype)
                o_ref[0, :, c0 + W2:c0 + 2 * W2] += wide.astype(o_ref.dtype)
    return kernel


def _run_pass(with_stats, x4, r_flat, wx, wr, u, bias,
              B, H, W, W2, Cout, m, nt, vmem_limit):
    Cx = x4.shape[1]
    Cr = r_flat.shape[1]
    P2 = r_flat.shape[2]
    TP = 2 * m * W2
    kernel = _make_kernel(m, W2, H, with_stats)

    in_specs = [
        pl.BlockSpec((1, Cx, m, W), lambda b, i: (b, 0, i, 0)),   # low-res x rows
        pl.BlockSpec((1, Cr, TP), lambda b, i: (b, 0, i)),        # flat r pixels
        pl.BlockSpec((Cout, Cx), lambda b, i: (0, 0)),
        pl.BlockSpec((Cout, Cr), lambda b, i: (0, 0)),
        pl.BlockSpec((W, W2), lambda b, i: (0, 0)),               # 0/1 W-upsample
        pl.BlockSpec((Cout, 1), lambda b, i: (0, 0)),
    ]
    cparams = pltpu.CompilerParams(
        dimension_semantics=("parallel", "parallel"),
        vmem_limit_bytes=vmem_limit)

    if with_stats:
        out_shape = (jax.ShapeDtypeStruct((B, nt, Cout, 1), jnp.float32),
                     jax.ShapeDtypeStruct((B, nt, Cout, 1), jnp.float32))
        out_specs = [pl.BlockSpec((1, 1, Cout, 1), lambda b, i: (b, i, 0, 0)),
                     pl.BlockSpec((1, 1, Cout, 1), lambda b, i: (b, i, 0, 0))]
        scratch = [pltpu.VMEM((Cout, TP), jnp.float32)]
    else:
        out_shape = jax.ShapeDtypeStruct((B, Cout, P2), jnp.float32)
        out_specs = pl.BlockSpec((1, Cout, TP), lambda b, i: (b, 0, i))
        scratch = []

    return pl.pallas_call(
        kernel,
        out_shape=out_shape,
        grid_spec=pltpu.PrefetchScalarGridSpec(
            num_scalar_prefetch=0,
            grid=(B, nt),
            in_specs=in_specs,
            out_specs=out_specs,
            scratch_shapes=scratch),
        compiler_params=cparams,
    )(x4, r_flat, wx, wr, u, bias)


def combine_forward(r_nchw, x_nchw, conv_w, conv_b, gamma, beta, eps=1e-5):
    B, Cx, H, W = x_nchw.shape
    Br, Cr, H2, W2 = r_nchw.shape
    assert Br == B and H2 == 2 * H and W2 == 2 * W
    Cout, Cin = conv_w.shape[0], conv_w.shape[1]
    assert Cin == Cx + Cr
    f32 = jnp.float32

    # Free (contiguous) reshapes only -- no transposes, no repeat.
    x4 = x_nchw.astype(f32)                                  # (B, Cx, H, W)
    r_flat = r_nchw.astype(f32).reshape(B, Cr, H2 * W2)      # (B, Cr, H2*W2)

    # Split the 1x1-conv weight so concat([x_up, r]) conv == Wx@x_up + Wr@r.
    wx = conv_w[:, :Cx, 0, 0].astype(f32)                    # (Cout, Cx)
    wr = conv_w[:, Cx:, 0, 0].astype(f32)                    # (Cout, Cr)
    bias = conv_b.astype(f32).reshape(Cout, 1)

    # 0/1 nearest-neighbour W-upsample matrix: U[w, c] = (c // 2 == w).
    u = (jnp.arange(W)[:, None] == (jnp.arange(W2)[None, :] // 2)).astype(f32)

    vmem_limit = _vmem_limit_bytes()
    m = _pick_rows(B, H, W, W2, Cx, Cr, Cout, vmem_budget=vmem_limit * 6 // 10)
    nt = pl.cdiv(H, m)

    # ---- Pass 1: bias-free conv, per-tile partial sum / sum-of-squares ----
    zero_bias = jnp.zeros((Cout, 1), f32)
    psum, psq = _run_pass(True, x4, r_flat, wx, wr, u, zero_bias,
                          B, H, W, W2, Cout, m, nt, vmem_limit)

    # BatchNorm2d training-mode stats (biased variance over N*H*W), reduced
    # across tiles in JAX and folded into the conv weights / bias.
    count = float(B * H2 * W2)
    mean_nb = psum.sum(axis=(0, 1))[:, 0] / count            # mean of conv-minus-bias
    ex2 = psq.sum(axis=(0, 1))[:, 0] / count
    var = jnp.maximum(ex2 - mean_nb * mean_nb, 0.0)          # bias-shifted moments
    mean = mean_nb + conv_b.astype(f32)
    scale = gamma.astype(f32) * jax.lax.rsqrt(var + eps)
    shift = beta.astype(f32) - mean * scale

    wx_s = wx * scale[:, None]
    wr_s = wr * scale[:, None]
    bias_s = (conv_b.astype(f32) * scale + shift).reshape(Cout, 1)

    # ---- Pass 2: conv with BN folded in, writes the final output directly ----
    out_flat = _run_pass(False, x4, r_flat, wx_s, wr_s, u, bias_s,
                         B, H, W, W2, Cout, m, nt, vmem_limit)
    return out_flat.reshape(B, Cout, H2, W2)                 # free reshape, stays NCHW


def _reference(r, x, conv_w, conv_b, gamma, beta, eps=1e-5):
    """Pure-JAX reference mirroring the PyTorch forward (training-mode BN)."""
    xu = jnp.repeat(jnp.repeat(x, 2, axis=2), 2, axis=3)
    xu = jnp.maximum(xu, 0.0)
    z = jnp.concatenate([xu, r], axis=1)                     # NCHW concat
    w = conv_w[:, :, 0, 0]                                   # (Cout, Cin)
    y = jnp.einsum('nchw,oc->nohw', z, w) + conv_b.reshape(1, -1, 1, 1)
    mean = y.mean(axis=(0, 2, 3), keepdims=True)
    var = ((y - mean) ** 2).mean(axis=(0, 2, 3), keepdims=True)   # biased
    return ((y - mean) / jnp.sqrt(var + eps) * gamma.reshape(1, -1, 1, 1)
            + beta.reshape(1, -1, 1, 1))


if __name__ == "__main__":
    def run_case(key, B, Cx, Cr, H, W, Cout):
        Cin = Cx + Cr
        k1, k2, k3, k4, k5, k6 = jax.random.split(key, 6)
        x = jax.random.normal(k1, (B, Cx, H, W), jnp.float32)          # low-res feature
        r = jax.random.normal(k2, (B, Cr, 2 * H, 2 * W), jnp.float32)  # skip connection
        conv_w = 0.1 * jax.random.normal(k3, (Cout, Cin, 1, 1), jnp.float32)
        conv_b = 0.1 * jax.random.normal(k4, (Cout,), jnp.float32)
        gamma = 1.0 + 0.1 * jax.random.normal(k5, (Cout,), jnp.float32)
        beta = 0.1 * jax.random.normal(k6, (Cout,), jnp.float32)

        out = jax.block_until_ready(
            combine_forward(r, x, conv_w, conv_b, gamma, beta))
        ref = _reference(r, x, conv_w, conv_b, gamma, beta)
        assert out.shape == (B, Cout, 2 * H, 2 * W), out.shape
        max_err = float(jnp.max(jnp.abs(out - ref)))
        assert jnp.allclose(out, ref, rtol=2e-3, atol=2e-3), max_err

    key = jax.random.PRNGKey(0)
    k_main, k_ragged = jax.random.split(key)
    # Main case: tile rows divide H exactly; batch axis shards across cores.
    run_case(k_main, B=2, Cx=4, Cr=4, H=32, W=32, Cout=8)
    # Ragged case: H % tile_rows != 0 exercises the in-kernel tail masking.
    run_case(k_ragged, B=1, Cx=4, Cr=4, H=40, W=40, Cout=8)

    print("KERNEL_OK")
</pallas_src>

<mosaic_0001>
module attributes {stable_mosaic.version = 11 : i64} {
  func.func @kernel(%arg0: i32, %arg1: i32, %arg2: memref<1x4x32x32xf32, #tpu.memory_space<vmem>>, %arg3: memref<1x4x4096xf32, #tpu.memory_space<vmem>>, %arg4: memref<8x4xf32, #tpu.memory_space<vmem>>, %arg5: memref<8x4xf32, #tpu.memory_space<vmem>>, %arg6: memref<32x64xf32, #tpu.memory_space<vmem>>, %arg7: memref<8x1xf32, #tpu.memory_space<vmem>>, %arg8: memref<1x1x8x1xf32, #tpu.memory_space<vmem>>, %arg9: memref<1x1x8x1xf32, #tpu.memory_space<vmem>>, %arg10: memref<8x4096xf32, #tpu.memory_space<vmem>>) attributes {dimension_semantics = [#tpu.dimension_semantics<parallel>, #tpu.dimension_semantics<parallel>], iteration_bounds = array<i64: 2, 1>, scalar_prefetch = 0 : i64, scratch_operands = 1 : i64, tpu.core_type = #tpu.core_type<tc>, window_params = [{transform_indices = @transform_0, window_bounds = array<i64: 1, 4, 32, 32>}, {transform_indices = @transform_1, window_bounds = array<i64: 1, 4, 4096>}, {pipeline_mode = #tpu.pipeline_mode<synchronous>, transform_indices = @transform_2, window_bounds = array<i64: 8, 4>}, {pipeline_mode = #tpu.pipeline_mode<synchronous>, transform_indices = @transform_3, window_bounds = array<i64: 8, 4>}, {pipeline_mode = #tpu.pipeline_mode<synchronous>, transform_indices = @transform_4, window_bounds = array<i64: 32, 64>}, {pipeline_mode = #tpu.pipeline_mode<synchronous>, transform_indices = @transform_5, window_bounds = array<i64: 8, 1>}, {transform_indices = @transform_6, window_bounds = array<i64: 1, 1, 8, 1>}, {transform_indices = @transform_7, window_bounds = array<i64: 1, 1, 8, 1>}]} {
    %c0 = arith.constant 0 : index
    %c0_0 = arith.constant 0 : index
    %0 = vector.load %arg5[%c0, %c0_0] : memref<8x4xf32, #tpu.memory_space<vmem>>, vector<8x4xf32>
    %c0_1 = arith.constant 0 : index
    %c0_2 = arith.constant 0 : index
    %c0_3 = arith.constant 0 : index
    %1 = vector.load %arg3[%c0_1, %c0_2, %c0_3] : memref<1x4x4096xf32, #tpu.memory_space<vmem>>, vector<1x4x4096xf32>
    %2 = vector.shape_cast %1 : vector<1x4x4096xf32> to vector<4x4096xf32>
    %cst = arith.constant dense<0.000000e+00> : vector<8x4096xf32>
    %3 = tpu.matmul %0, %2, %cst {dimension_numbers = #tpu.dot_dimension_numbers<[1], [0], [0], [1], [0, 0, 1, 1], [], []>} : vector<8x4xf32>, vector<4x4096xf32>, vector<8x4096xf32> -> vector<8x4096xf32>
    %c0_4 = arith.constant 0 : index
    %c0_5 = arith.constant 0 : index
    %4 = vector.load %arg7[%c0_4, %c0_5] : memref<8x1xf32, #tpu.memory_space<vmem>>, vector<8x1xf32>
    %5 = vector.broadcast %4 : vector<8x1xf32> to vector<8x4096xf32>
    %6 = arith.addf %3, %5 : vector<8x4096xf32>
    %c0_6 = arith.constant 0 : index
    %c0_7 = arith.constant 0 : index
    %7 = vector.load %arg10[%c0_6, %c0_7] : memref<8x4096xf32, #tpu.memory_space<vmem>>, vector<8x4096xf32>
    tpu.vector_store %arg10[%c0_6, %c0_7], %6 {strides = array<i32>} : memref<8x4096xf32, #tpu.memory_space<vmem>>, vector<8x4096xf32>,
    %c0_8 = arith.constant 0 : index
    %c0_9 = arith.constant 0 : index
    %8 = vector.load %arg4[%c0_8, %c0_9] : memref<8x4xf32, #tpu.memory_space<vmem>>, vector<8x4xf32>
    %c0_10 = arith.constant 0 : index
    %c0_11 = arith.constant 0 : index
    %9 = vector.load %arg6[%c0_10, %c0_11] : memref<32x64xf32, #tpu.memory_space<vmem>>, vector<32x64xf32>
    %c0_12 = arith.constant 0 : index
    %c0_13 = arith.constant 0 : index
    %c0_14 = arith.constant 0 : index
    %c0_15 = arith.constant 0 : index
    %10 = vector.load %arg2[%c0_12, %c0_13, %c0_14, %c0_15] : memref<1x4x32x32xf32, #tpu.memory_space<vmem>>, vector<1x4x1x32xf32>
    %11 = vector.shape_cast %10 : vector<1x4x1x32xf32> to vector<4x32xf32>
    %cst_16 = arith.constant 0.000000e+00 : f32
    %12 = vector.broadcast %cst_16 : f32 to vector<4x32xf32>
    %13 = arith.maximumf %11, %12 : vector<4x32xf32>
    %cst_17 = arith.constant dense<0.000000e+00> : vector<8x32xf32>
    %14 = tpu.matmul %8, %13, %cst_17 {dimension_numbers = #tpu.dot_dimension_numbers<[1], [0], [0], [1], [0, 0, 1, 1], [], []>} : vector<8x4xf32>, vector<4x32xf32>, vector<8x32xf32> -> vector<8x32xf32>
    %cst_18 = arith.constant dense<0.000000e+00> : vector<8x64xf32>
    %15 = tpu.matmul %14, %9, %cst_18 {dimension_numbers = #tpu.dot_dimension_numbers<[1], [0], [0], [1], [0, 0, 1, 1], [], []>} : vector<8x32xf32>, vector<32x64xf32>, vector<8x64xf32> -> vector<8x64xf32>
    %c0_19 = arith.constant 0 : index
    %c0_20 = arith.constant 0 : index
    %16 = vector.load %arg10[%c0_19, %c0_20] : memref<8x4096xf32, #tpu.memory_space<vmem>>, vector<8x64xf32>
    %17 = arith.addf %16, %15 : vector<8x64xf32>
    %c0_21 = arith.constant 0 : index
    %c0_22 = arith.constant 0 : index
    %18 = vector.load %arg10[%c0_21, %c0_22] : memref<8x4096xf32, #tpu.memory_space<vmem>>, vector<8x64xf32>
    tpu.vector_store %arg10[%c0_21, %c0_22], %17 {strides = array<i32>} : memref<8x4096xf32, #tpu.memory_space<vmem>>, vector<8x64xf32>,
    %c0_23 = arith.constant 0 : index
    %c64 = arith.constant 64 : index
    %19 = vector.load %arg10[%c0_23, %c64] : memref<8x4096xf32, #tpu.memory_space<vmem>>, vector<8x64xf32>
    %20 = arith.addf %19, %15 : vector<8x64xf32>
    %c0_24 = arith.constant 0 : index
    %c64_25 = arith.constant 64 : index
    %21 = vector.load %arg10[%c0_24, %c64_25] : memref<8x4096xf32, #tpu.memory_space<vmem>>, vector<8x64xf32>
    tpu.vector_store %arg10[%c0_24, %c64_25], %20 {strides = array<i32>} : memref<8x4096xf32, #tpu.memory_space<vmem>>, vector<8x64xf32>,
    %c0_26 = arith.constant 0 : index
    %c0_27 = arith.constant 0 : index
    %c1 = arith.constant 1 : index
    %c0_28 = arith.constant 0 : index
    %22 = vector.load %arg2[%c0_26, %c0_27, %c1, %c0_28] : memref<1x4x32x32xf32, #tpu.memory_space<vmem>>, vector<1x4x1x32xf32>
    %23 = vector.shape_cast %22 : vector<1x4x1x32xf32> to vector<4x32xf32>
    %cst_29 = arith.constant 0.000000e+00 : f32
    %24 = vector.broadcast %cst_29 : f32 to vector<4x32xf32>
    %25 = arith.maximumf %23, %24 : vector<4x32xf32>
    %cst_30 = arith.constant dense<0.000000e+00> : vector<8x32xf32>
    %26 = tpu.matmul %8, %25, %cst_30 {dimension_numbers = #tpu.dot_dimension_numbers<[1], [0], [0], [1], [0, 0, 1, 1], [], []>} : vector<8x4xf32>, vector<4x32xf32>, vector<8x32xf32> -> vector<8x32xf32>
    %cst_31 = arith.constant dense<0.000000e+00> : vector<8x64xf32>
    %27 = tpu.matmul %26, %9, %cst_31 {dimension_numbers = #tpu.dot_dimension_numbers<[1], [0], [0], [1], [0, 0, 1, 1], [], []>} : vector<8x32xf32>, vector<32x64xf32>, vector<8x64xf32> -> vector<8x64xf32>
    %c0_32 = arith.constant 0 : index
    %c128 = arith.constant 128 : index
    %28 = vector.load %arg10[%c0_32, %c128] : memref<8x4096xf32, #tpu.memory_space<vmem>>, vector<8x64xf32>
    %29 = arith.addf %28, %27 : vector<8x64xf32>
    %c0_33 = arith.constant 0 : index
    %c128_34 = arith.constant 128 : index
    %30 = vector.load %arg10[%c0_33, %c128_34] : memref<8x4096xf32, #tpu.memory_space<vmem>>, vector<8x64xf32>
    tpu.vector_store %arg10[%c0_33, %c128_34], %29 {strides = array<i32>} : memref<8x4096xf32, #tpu.memory_space<vmem>>, vector<8x64xf32>,
    %c0_35 = arith.constant 0 : index
    %c192 = arith.constant 192 : index
    %31 = vector.load %arg10[%c0_35, %c192] : memref<8x4096xf32, #tpu.memory_space<vmem>>, vector<8x64xf32>
    %32 = arith.addf %31, %27 : vector<8x64xf32>
    %c0_36 = arith.constant 0 : index
    %c192_37 = arith.constant 192 : index
    %33 = vector.load %arg10[%c0_36, %c192_37] : memref<8x4096xf32, #tpu.memory_space<vmem>>, vector<8x64xf32>
    tpu.vector_store %arg10[%c0_36, %c192_37], %32 {strides = array<i32>} : memref<8x4096xf32, #tpu.memory_space<vmem>>, vector<8x64xf32>,
    %c0_38 = arith.constant 0 : index
    %c0_39 = arith.constant 0 : index
    %c2 = arith.constant 2 : index
    %c0_40 = arith.constant 0 : index
    %34 = vector.load %arg2[%c0_38, %c0_39, %c2, %c0_40] : memref<1x4x32x32xf32, #tpu.memory_space<vmem>>, vector<1x4x1x32xf32>
    %35 = vector.shape_cast %34 : vector<1x4x1x32xf32> to vector<4x32xf32>
    %cst_41 = arith.constant 0.000000e+00 : f32
    %36 = vector.broadcast %cst_41 : f32 to vector<4x32xf32>
    %37 = arith.maximumf %35, %36 : vector<4x32xf32>
    %cst_42 = arith.constant dense<0.000000e+00> : vector<8x32xf32>
    %38 = tpu.matmul %8, %37, %cst_42 {dimension_numbers = #tpu.dot_dimension_numbers<[1], [0], [0], [1], [0, 0, 1, 1], [], []>} : vector<8x4xf32>, vector<4x32xf32>, vector<8x32xf32> -> vector<8x32xf32>
    %cst_43 = arith.constant dense<0.000000e+00> : vector<8x64xf32>
    %39 = tpu.matmul %38, %9, %cst_43 {dimension_numbers = #tpu.dot_dimension_numbers<[1], [0], [0], [1], [0, 0, 1, 1], [], []>} : vector<8x32xf32>, vector<32x64xf32>, vector<8x64xf32> -> vector<8x64xf32>
    %c0_44 = arith.constant 0 : index
    %c256 = arith.constant 256 : index
    %40 = vector.load %arg10[%c0_44, %c256] : memref<8x4096xf32, #tpu.memory_space<vmem>>, vector<8x64xf32>
    %41 = arith.addf %40, %39 : vector<8x64xf32>
    %c0_45 = arith.constant 0 : index
    %c256_46 = arith.constant 256 : index
    %42 = vector.load %arg10[%c0_45, %c256_46] : memref<8x4096xf32, #tpu.memory_space<vmem>>, vector<8x64xf32>
    tpu.vector_store %arg10[%c0_45, %c256_46], %41 {strides = array<i32>} : memref<8x4096xf32, #tpu.memory_space<vmem>>, vector<8x64xf32>,
    %c0_47 = arith.constant 0 : index
    %c320 = arith.constant 320 : index
    %43 = vector.load %arg10[%c0_47, %c320] : memref<8x4096xf32, #tpu.memory_space<vmem>>, vector<8x64xf32>
    %44 = arith.addf %43, %39 : vector<8x64xf32>
    %c0_48 = arith.constant 0 : index
    %c320_49 = arith.constant 320 : index
    %45 = vector.load %arg10[%c0_48, %c320_49] : memref<8x4096xf32, #tpu.memory_space<vmem>>, vector<8x64xf32>
    tpu.vector_store %arg10[%c0_48, %c320_49], %44 {strides = array<i32>} : memref<8x4096xf32, #tpu.memory_space<vmem>>, vector<8x64xf32>,
    %c0_50 = arith.constant 0 : index
    %c0_51 = arith.constant 0 : index
    %c3 = arith.constant 3 : index
    %c0_52 = arith.constant 0 : index
    %46 = vector.load %arg2[%c0_50, %c0_51, %c3, %c0_52] : memref<1x4x32x32xf32, #tpu.memory_space<vmem>>, vector<1x4x1x32xf32>
    %47 = vector.shape_cast %46 : vector<1x4x1x32xf32> to vector<4x32xf32>
    %cst_53 = arith.constant 0.000000e+00 : f32
    %48 = vector.broadcast %cst_53 : f32 to vector<4x32xf32>
    %49 = arith.maximumf %47, %48 : vector<4x32xf32>
    %cst_54 = arith.constant dense<0.000000e+00> : vector<8x32xf32>
    %50 = tpu.matmul %8, %49, %cst_54 {dimension_numbers = #tpu.dot_dimension_numbers<[1], [0], [0], [1], [0, 0, 1, 1], [], []>} : vector<8x4xf32>, vector<4x32xf32>, vector<8x32xf32> -> vector<8x32xf32>
    %cst_55 = arith.constant dense<0.000000e+00> : vector<8x64xf32>
    %51 = tpu.matmul %50, %9, %cst_55 {dimension_numbers = #tpu.dot_dimension_numbers<[1], [0], [0], [1], [0, 0, 1, 1], [], []>} : vector<8x32xf32>, vector<32x64xf32>, vector<8x64xf32> -> vector<8x64xf32>
    %c0_56 = arith.constant 0 : index
    %c384 = arith.constant 384 : index
    %52 = vector.load %arg10[%c0_56, %c384] : memref<8x4096xf32, #tpu.memory_space<vmem>>, vector<8x64xf32>
    %53 = arith.addf %52, %51 : vector<8x64xf32>
    %c0_57 = arith.constant 0 : index
    %c384_58 = arith.constant 384 : index
    %54 = vector.load %arg10[%c0_57, %c384_58] : memref<8x4096xf32, #tpu.memory_space<vmem>>, vector<8x64xf32>
    tpu.vector_store %arg10[%c0_57, %c384_58], %53 {strides = array<i32>} : memref<8x4096xf32, #tpu.memory_space<vmem>>, vector<8x64xf32>,
    %c0_59 = arith.constant 0 : index
    %c448 = arith.constant 448 : index
    %55 = vector.load %arg10[%c0_59, %c448] : memref<8x4096xf32, #tpu.memory_space<vmem>>, vector<8x64xf32>
    %56 = arith.addf %55, %51 : vector<8x64xf32>
    %c0_60 = arith.constant 0 : index
    %c448_61 = arith.constant 448 : index
    %57 = vector.load %arg10[%c0_60, %c448_61] : memref<8x4096xf32, #tpu.memory_space<vmem>>, vector<8x64xf32>
    tpu.vector_store %arg10[%c0_60, %c448_61], %56 {strides = array<i32>} : memref<8x4096xf32, #tpu.memory_space<vmem>>, vector<8x64xf32>,
    %c0_62 = arith.constant 0 : index
    %c0_63 = arith.constant 0 : index
    %c4 = arith.constant 4 : index
    %c0_64 = arith.constant 0 : index
    %58 = vector.load %arg2[%c0_62, %c0_63, %c4, %c0_64] : memref<1x4x32x32xf32, #tpu.memory_space<vmem>>, vector<1x4x1x32xf32>
    %59 = vector.shape_cast %58 : vector<1x4x1x32xf32> to vector<4x32xf32>
    %cst_65 = arith.constant 0.000000e+00 : f32
    %60 = vector.broadcast %cst_65 : f32 to vector<4x32xf32>
    %61 = arith.maximumf %59, %60 : vector<4x32xf32>
    %cst_66 = arith.constant dense<0.000000e+00> : vector<8x32xf32>
    %62 = tpu.matmul %8, %61, %cst_66 {dimension_numbers = #tpu.dot_dimension_numbers<[1], [0], [0], [1], [0, 0, 1, 1], [], []>} : vector<8x4xf32>, vector<4x32xf32>, vector<8x32xf32> -> vector<8x32xf32>
    %cst_67 = arith.constant dense<0.000000e+00> : vector<8x64xf32>
    %63 = tpu.matmul %62, %9, %cst_67 {dimension_numbers = #tpu.dot_dimension_numbers<[1], [0], [0], [1], [0, 0, 1, 1], [], []>} : vector<8x32xf32>, vector<32x64xf32>, vector<8x64xf32> -> vector<8x64xf32>
    %c0_68 = arith.constant 0 : index
    %c512 = arith.constant 512 : index
    %64 = vector.load %arg10[%c0_68, %c512] : memref<8x4096xf32, #tpu.memory_space<vmem>>, vector<8x64xf32>
    %65 = arith.addf %64, %63 : vector<8x64xf32>
    %c0_69 = arith.constant 0 : index
    %c512_70 = arith.constant 512 : index
    %66 = vector.load %arg10[%c0_69, %c512_70] : memref<8x4096xf32, #tpu.memory_space<vmem>>, vector<8x64xf32>
    tpu.vector_store %arg10[%c0_69, %c512_70], %65 {strides = array<i32>} : memref<8x4096xf32, #tpu.memory_space<vmem>>, vector<8x64xf32>,
    %c0_71 = arith.constant 0 : index
    %c576 = arith.constant 576 : index
    %67 = vector.load %arg10[%c0_71, %c576] : memref<8x4096xf32, #tpu.memory_space<vmem>>, vector<8x64xf32>
    %68 = arith.addf %67, %63 : vector<8x64xf32>
    %c0_72 = arith.constant 0 : index
    %c576_73 = arith.constant 576 : index
    %69 = vector.load %arg10[%c0_72, %c576_73] : memref<8x4096xf32, #tpu.memory_space<vmem>>, vector<8x64xf32>
    tpu.vector_store %arg10[%c0_72, %c576_73], %68 {strides = array<i32>} : memref<8x4096xf32, #tpu.memory_space<vmem>>, vector<8x64xf32>,
    %c0_74 = arith.constant 0 : index
    %c0_75 = arith.constant 0 : index
    %c5 = arith.constant 5 : index
    %c0_76 = arith.constant 0 : index
    %70 = vector.load %arg2[%c0_74, %c0_75, %c5, %c0_76] : memref<1x4x32x32xf32, #tpu.memory_space<vmem>>, vector<1x4x1x32xf32>
    %71 = vector.shape_cast %70 : vector<1x4x1x32xf32> to vector<4x32xf32>
    %cst_77 = arith.constant 0.000000e+00 : f32
    %72 = vector.broadcast %cst_77 : f32 to vector<4x32xf32>
    %73 = arith.maximumf %71, %72 : vector<4x32xf32>
    %cst_78 = arith.constant dense<0.000000e+00> : vector<8x32xf32>
    %74 = tpu.matmul %8, %73, %cst_78 {dimension_numbers = #tpu.dot_dimension_numbers<[1], [0], [0], [1], [0, 0, 1, 1], [], []>} : vector<8x4xf32>, vector<4x32xf32>, vector<8x32xf32> -> vector<8x32xf32>
    %cst_79 = arith.constant dense<0.000000e+00> : vector<8x64xf32>
    %75 = tpu.matmul %74, %9, %cst_79 {dimension_numbers = #tpu.dot_dimension_numbers<[1], [0], [0], [1], [0, 0, 1, 1], [], []>} : vector<8x32xf32>, vector<32x64xf32>, vector<8x64xf32> -> vector<8x64xf32>
    %c0_80 = arith.constant 0 : index
    %c640 = arith.constant 640 : index
    %76 = vector.load %arg10[%c0_80, %c640] : memref<8x4096xf32, #tpu.memory_space<vmem>>, vector<8x64xf32>
    %77 = arith.addf %76, %75 : vector<8x64xf32>
    %c0_81 = arith.constant 0 : index
    %c640_82 = arith.constant 640 : index
    %78 = vector.load %arg10[%c0_81, %c640_82] : memref<8x4096xf32, #tpu.memory_space<vmem>>, vector<8x64xf32>
    tpu.vector_store %arg10[%c0_81, %c640_82], %77 {strides = array<i32>} : memref<8x4096xf32, #tpu.memory_space<vmem>>, vector<8x64xf32>,
    %c0_83 = arith.constant 0 : index
    %c704 = arith.constant 704 : index
    %79 = vector.load %arg10[%c0_83, %c704] : memref<8x4096xf32, #tpu.memory_space<vmem>>, vector<8x64xf32>
    %80 = arith.addf %79, %75 : vector<8x64xf32>
    %c0_84 = arith.constant 0 : index
    %c704_85 = arith.constant 704 : index
    %81 = vector.load %arg10[%c0_84, %c704_85] : memref<8x4096xf32, #tpu.memory_space<vmem>>, vector<8x64xf32>
    tpu.vector_store %arg10[%c0_84, %c704_85], %80 {strides = array<i32>} : memref<8x4096xf32, #tpu.memory_space<vmem>>, vector<8x64xf32>,
    %c0_86 = arith.constant 0 : index
    %c0_87 = arith.constant 0 : index
    %c6 = arith.constant 6 : index
    %c0_88 = arith.constant 0 : index
    %82 = vector.load %arg2[%c0_86, %c0_87, %c6, %c0_88] : memref<1x4x32x32xf32, #tpu.memory_space<vmem>>, vector<1x4x1x32xf32>
    %83 = vector.shape_cast %82 : vector<1x4x1x32xf32> to vector<4x32xf32>
    %cst_89 = arith.constant 0.000000e+00 : f32
    %84 = vector.broadcast %cst_89 : f32 to vector<4x32xf32>
    %85 = arith.maximumf %83, %84 : vector<4x32xf32>
    %cst_90 = arith.constant dense<0.000000e+00> : vector<8x32xf32>
    %86 = tpu.matmul %8, %85, %cst_90 {dimension_numbers = #tpu.dot_dimension_numbers<[1], [0], [0], [1], [0, 0, 1, 1], [], []>} : vector<8x4xf32>, vector<4x32xf32>, vector<8x32xf32> -> vector<8x32xf32>
    %cst_91 = arith.constant dense<0.000000e+00> : vector<8x64xf32>
    %87 = tpu.matmul %86, %9, %cst_91 {dimension_numbers = #tpu.dot_dimension_numbers<[1], [0], [0], [1], [0, 0, 1, 1], [], []>} : vector<8x32xf32>, vector<32x64xf32>, vector<8x64xf32> -> vector<8x64xf32>
    %c0_92 = arith.constant 0 : index
    %c768 = arith.constant 768 : index
    %88 = vector.load %arg10[%c0_92, %c768] : memref<8x4096xf32, #tpu.memory_space<vmem>>, vector<8x64xf32>
    %89 = arith.addf %88, %87 : vector<8x64xf32>
    %c0_93 = arith.constant 0 : index
    %c768_94 = arith.constant 768 : index
    %90 = vector.load %arg10[%c0_93, %c768_94] : memref<8x4096xf32, #tpu.memory_space<vmem>>, vector<8x64xf32>
    tpu.vector_store %arg10[%c0_93, %c768_94], %89 {strides = array<i32>} : memref<8x4096xf32, #tpu.memory_space<vmem>>, vector<8x64xf32>,
    %c0_95 = arith.constant 0 : index
    %c832 = arith.constant 832 : index
    %91 = vector.load %arg10[%c0_95, %c832] : memref<8x4096xf32, #tpu.memory_space<vmem>>, vector<8x64xf32>
    %92 = arith.addf %91, %87 : vector<8x64xf32>
    %c0_96 = arith.constant 0 : index
    %c832_97 = arith.constant 832 : index
    %93 = vector.load %arg10[%c0_96, %c832_97] : memref<8x4096xf32, #tpu.memory_space<vmem>>, vector<8x64xf32>
    tpu.vector_store %arg10[%c0_96, %c832_97], %92 {strides = array<i32>} : memref<8x4096xf32, #tpu.memory_space<vmem>>, vector<8x64xf32>,
    %c0_98 = arith.constant 0 : index
    %c0_99 = arith.constant 0 : index
    %c7 = arith.constant 7 : index
    %c0_100 = arith.constant 0 : index
    %94 = vector.load %arg2[%c0_98, %c0_99, %c7, %c0_100] : memref<1x4x32x32xf32, #tpu.memory_space<vmem>>, vector<1x4x1x32xf32>
    %95 = vector.shape_cast %94 : vector<1x4x1x32xf32> to vector<4x32xf32>
    %cst_101 = arith.constant 0.000000e+00 : f32
    %96 = vector.broadcast %cst_101 : f32 to vector<4x32xf32>
    %97 = arith.maximumf %95, %96 : vector<4x32xf32>
    %cst_102 = arith.constant dense<0.000000e+00> : vector<8x32xf32>
    %98 = tpu.matmul %8, %97, %cst_102 {dimension_numbers = #tpu.dot_dimension_numbers<[1], [0], [0], [1], [0, 0, 1, 1], [], []>} : vector<8x4xf32>, vector<4x32xf32>, vector<8x32xf32> -> vector<8x32xf32>
    %cst_103 = arith.constant dense<0.000000e+00> : vector<8x64xf32>
    %99 = tpu.matmul %98, %9, %cst_103 {dimension_numbers = #tpu.dot_dimension_numbers<[1], [0], [0], [1], [0, 0, 1, 1], [], []>} : vector<8x32xf32>, vector<32x64xf32>, vector<8x64xf32> -> vector<8x64xf32>
    %c0_104 = arith.constant 0 : index
    %c896 = arith.constant 896 : index
    %100 = vector.load %arg10[%c0_104, %c896] : memref<8x4096xf32, #tpu.memory_space<vmem>>, vector<8x64xf32>
    %101 = arith.addf %100, %99 : vector<8x64xf32>
    %c0_105 = arith.constant 0 : index
    %c896_106 = arith.constant 896 : index
    %102 = vector.load %arg10[%c0_105, %c896_106] : memref<8x4096xf32, #tpu.memory_space<vmem>>, vector<8x64xf32>
    tpu.vector_store %arg10[%c0_105, %c896_106], %101 {strides = array<i32>} : memref<8x4096xf32, #tpu.memory_space<vmem>>, vector<8x64xf32>,
    %c0_107 = arith.constant 0 : index
    %c960 = arith.constant 960 : index
    %103 = vector.load %arg10[%c0_107, %c960] : memref<8x4096xf32, #tpu.memory_space<vmem>>, vector<8x64xf32>
    %104 = arith.addf %103, %99 : vector<8x64xf32>
    %c0_108 = arith.constant 0 : index
    %c960_109 = arith.constant 960 : index
    %105 = vector.load %arg10[%c0_108, %c960_109] : memref<8x4096xf32, #tpu.memory_space<vmem>>, vector<8x64xf32>
    tpu.vector_store %arg10[%c0_108, %c960_109], %104 {strides = array<i32>} : memref<8x4096xf32, #tpu.memory_space<vmem>>, vector<8x64xf32>,
    %c0_110 = arith.constant 0 : index
    %c0_111 = arith.constant 0 : index
    %c8 = arith.constant 8 : index
    %c0_112 = arith.constant 0 : index
    %106 = vector.load %arg2[%c0_110, %c0_111, %c8, %c0_112] : memref<1x4x32x32xf32, #tpu.memory_space<vmem>>, vector<1x4x1x32xf32>
    %107 = vector.shape_cast %106 : vector<1x4x1x32xf32> to vector<4x32xf32>
    %cst_113 = arith.constant 0.000000e+00 : f32
    %108 = vector.broadcast %cst_113 : f32 to vector<4x32xf32>
    %109 = arith.maximumf %107, %108 : vector<4x32xf32>
    %cst_114 = arith.constant dense<0.000000e+00> : vector<8x32xf32>
    %110 = tpu.matmul %8, %109, %cst_114 {dimension_numbers = #tpu.dot_dimension_numbers<[1], [0], [0], [1], [0, 0, 1, 1], [], []>} : vector<8x4xf32>, vector<4x32xf32>, vector<8x32xf32> -> vector<8x32xf32>
    %cst_115 = arith.constant dense<0.000000e+00> : vector<8x64xf32>
    %111 = tpu.matmul %110, %9, %cst_115 {dimension_numbers = #tpu.dot_dimension_numbers<[1], [0], [0], [1], [0, 0, 1, 1], [], []>} : vector<8x32xf32>, vector<32x64xf32>, vector<8x64xf32> -> vector<8x64xf32>
    %c0_116 = arith.constant 0 : index
    %c1024 = arith.constant 1024 : index
    %112 = vector.load %arg10[%c0_116, %c1024] : memref<8x4096xf32, #tpu.memory_space<vmem>>, vector<8x64xf32>
    %113 = arith.addf %112, %111 : vector<8x64xf32>
    %c0_117 = arith.constant 0 : index
    %c1024_118 = arith.constant 1024 : index
    %114 = vector.load %arg10[%c0_117, %c1024_118] : memref<8x4096xf32, #tpu.memory_space<vmem>>, vector<8x64xf32>
    tpu.vector_store %arg10[%c0_117, %c1024_118], %113 {strides = array<i32>} : memref<8x4096xf32, #tpu.memory_space<vmem>>, vector<8x64xf32>,
    %c0_119 = arith.constant 0 : index
    %c1088 = arith.constant 1088 : index
    %115 = vector.load %arg10[%c0_119, %c1088] : memref<8x4096xf32, #tpu.memory_space<vmem>>, vector<8x64xf32>
    %116 = arith.addf %115, %111 : vector<8x64xf32>
    %c0_120 = arith.constant 0 : index
    %c1088_121 = arith.constant 1088 : index
    %117 = vector.load %arg10[%c0_120, %c1088_121] : memref<8x4096xf32, #tpu.memory_space<vmem>>, vector<8x64xf32>
    tpu.vector_store %arg10[%c0_120, %c1088_121], %116 {strides = array<i32>} : memref<8x4096xf32, #tpu.memory_space<vmem>>, vector<8x64xf32>,
    %c0_122 = arith.constant 0 : index
    %c0_123 = arith.constant 0 : index
    %c9 = arith.constant 9 : index
    %c0_124 = arith.constant 0 : index
    %118 = vector.load %arg2[%c0_122, %c0_123, %c9, %c0_124] : memref<1x4x32x32xf32, #tpu.memory_space<vmem>>, vector<1x4x1x32xf32>
    %119 = vector.shape_cast %118 : vector<1x4x1x32xf32> to vector<4x32xf32>
    %cst_125 = arith.constant 0.000000e+00 : f32
    %120 = vector.broadcast %cst_125 : f32 to vector<4x32xf32>
    %121 = arith.maximumf %119, %120 : vector<4x32xf32>
    %cst_126 = arith.constant dense<0.000000e+00> : vector<8x32xf32>
    %122 = tpu.matmul %8, %121, %cst_126 {dimension_numbers = #tpu.dot_dimension_numbers<[1], [0], [0], [1], [0, 0, 1, 1], [], []>} : vector<8x4xf32>, vector<4x32xf32>, vector<8x32xf32> -> vector<8x32xf32>
    %cst_127 = arith.constant dense<0.000000e+00> : vector<8x64xf32>
    %123 = tpu.matmul %122, %9, %cst_127 {dimension_numbers = #tpu.dot_dimension_numbers<[1], [0], [0], [1], [0, 0, 1, 1], [], []>} : vector<8x32xf32>, vector<32x64xf32>, vector<8x64xf32> -> vector<8x64xf32>
    %c0_128 = arith.constant 0 : index
    %c1152 = arith.constant 1152 : index
    %124 = vector.load %arg10[%c0_128, %c1152] : memref<8x4096xf32, #tpu.memory_space<vmem>>, vector<8x64xf32>
    %125 = arith.addf %124, %123 : vector<8x64xf32>
    %c0_129 = arith.constant 0 : index
    %c1152_130 = arith.constant 1152 : index
    %126 = vector.load %arg10[%c0_129, %c1152_130] : memref<8x4096xf32, #tpu.memory_space<vmem>>, vector<8x64xf32>
    tpu.vector_store %arg10[%c0_129, %c1152_130], %125 {strides = array<i32>} : memref<8x4096xf32, #tpu.memory_space<vmem>>, vector<8x64xf32>,
    %c0_131 = arith.constant 0 : index
    %c1216 = arith.constant 1216 : index
    %127 = vector.load %arg10[%c0_131, %c1216] : memref<8x4096xf32, #tpu.memory_space<vmem>>, vector<8x64xf32>
    %128 = arith.addf %127, %123 : vector<8x64xf32>
    %c0_132 = arith.constant 0 : index
    %c1216_133 = arith.constant 1216 : index
    %129 = vector.load %arg10[%c0_132, %c1216_133] : memref<8x4096xf32, #tpu.memory_space<vmem>>, vector<8x64xf32>
    tpu.vector_store %arg10[%c0_132, %c1216_133], %128 {strides = array<i32>} : memref<8x4096xf32, #tpu.memory_space<vmem>>, vector<8x64xf32>,
    %c0_134 = arith.constant 0 : index
    %c0_135 = arith.constant 0 : index
    %c10 = arith.constant 10 : index
    %c0_136 = arith.constant 0 : index
    %130 = vector.load %arg2[%c0_134, %c0_135, %c10, %c0_136] : memref<1x4x32x32xf32, #tpu.memory_space<vmem>>, vector<1x4x1x32xf32>
    %131 = vector.shape_cast %130 : vector<1x4x1x32xf32> to vector<4x32xf32>
    %cst_137 = arith.constant 0.000000e+00 : f32
    %132 = vector.broadcast %cst_137 : f32 to vector<4x32xf32>
    %133 = arith.maximumf %131, %132 : vector<4x32xf32>
    %cst_138 = arith.constant dense<0.000000e+00> : vector<8x32xf32>
    %134 = tpu.matmul %8, %133, %cst_138 {dimension_numbers = #tpu.dot_dimension_numbers<[1], [0], [0], [1], [0, 0, 1, 1], [], []>} : vector<8x4xf32>, vector<4x32xf32>, vector<8x32xf32> -> vector<8x32xf32>
    %cst_139 = arith.constant dense<0.000000e+00> : vector<8x64xf32>
    %135 = tpu.matmul %134, %9, %cst_139 {dimension_numbers = #tpu.dot_dimension_numbers<[1], [0], [0], [1], [0, 0, 1, 1], [], []>} : vector<8x32xf32>, vector<32x64xf32>, vector<8x64xf32> -> vector<8x64xf32>
    %c0_140 = arith.constant 0 : index
    %c1280 = arith.constant 1280 : index
    %136 = vector.load %arg10[%c0_140, %c1280] : memref<8x4096xf32, #tpu.memory_space<vmem>>, vector<8x64xf32>
    %137 = arith.addf %136, %135 : vector<8x64xf32>
    %c0_141 = arith.constant 0 : index
    %c1280_142 = arith.constant 1280 : index
    %138 = vector.load %arg10[%c0_141, %c1280_142] : memref<8x4096xf32, #tpu.memory_space<vmem>>, vector<8x64xf32>
    tpu.vector_store %arg10[%c0_141, %c1280_142], %137 {strides = array<i32>} : memref<8x4096xf32, #tpu.memory_space<vmem>>, vector<8x64xf32>,
    %c0_143 = arith.constant 0 : index
    %c1344 = arith.constant 1344 : index
    %139 = vector.load %arg10[%c0_143, %c1344] : memref<8x4096xf32, #tpu.memory_space<vmem>>, vector<8x64xf32>
    %140 = arith.addf %139, %135 : vector<8x64xf32>
    %c0_144 = arith.constant 0 : index
    %c1344_145 = arith.constant 1344 : index
    %141 = vector.load %arg10[%c0_144, %c1344_145] : memref<8x4096xf32, #tpu.memory_space<vmem>>, vector<8x64xf32>
    tpu.vector_store %arg10[%c0_144, %c1344_145], %140 {strides = array<i32>} : memref<8x4096xf32, #tpu.memory_space<vmem>>, vector<8x64xf32>,
    %c0_146 = arith.constant 0 : index
    %c0_147 = arith.constant 0 : index
    %c11 = arith.constant 11 : index
    %c0_148 = arith.constant 0 : index
    %142 = vector.load %arg2[%c0_146, %c0_147, %c11, %c0_148] : memref<1x4x32x32xf32, #tpu.memory_space<vmem>>, vector<1x4x1x32xf32>
    %143 = vector.shape_cast %142 : vector<1x4x1x32xf32> to vector<4x32xf32>
    %cst_149 = arith.constant 0.000000e+00 : f32
    %144 = vector.broadcast %cst_149 : f32 to vector<4x32xf32>
    %145 = arith.maximumf %143, %144 : vector<4x32xf32>
    %cst_150 = arith.constant dense<0.000000e+00> : vector<8x32xf32>
    %146 = tpu.matmul %8, %145, %cst_150 {dimension_numbers = #tpu.dot_dimension_numbers<[1], [0], [0], [1], [0, 0, 1, 1], [], []>} : vector<8x4xf32>, vector<4x32xf32>, vector<8x32xf32> -> vector<8x32xf32>
    %cst_151 = arith.constant dense<0.000000e+00> : vector<8x64xf32>
    %147 = tpu.matmul %146, %9, %cst_151 {dimension_numbers = #tpu.dot_dimension_numbers<[1], [0], [0], [1], [0, 0, 1, 1], [], []>} : vector<8x32xf32>, vector<32x64xf32>, vector<8x64xf32> -> vector<8x64xf32>
    %c0_152 = arith.constant 0 : index
    %c1408 = arith.constant 1408 : index
    %148 = vector.load %arg10[%c0_152, %c1408] : memref<8x4096xf32, #tpu.memory_space<vmem>>, vector<8x64xf32>
    %149 = arith.addf %148, %147 : vector<8x64xf32>
    %c0_153 = arith.constant 0 : index
    %c1408_154 = arith.constant 1408 : index
    %150 = vector.load %arg10[%c0_153, %c1408_154] : memref<8x4096xf32, #tpu.memory_space<vmem>>, vector<8x64xf32>
    tpu.vector_store %arg10[%c0_153, %c1408_154], %149 {strides = array<i32>} : memref<8x4096xf32, #tpu.memory_space<vmem>>, vector<8x64xf32>,
    %c0_155 = arith.constant 0 : index
    %c1472 = arith.constant 1472 : index
    %151 = vector.load %arg10[%c0_155, %c1472] : memref<8x4096xf32, #tpu.memory_space<vmem>>, vector<8x64xf32>
    %152 = arith.addf %151, %147 : vector<8x64xf32>
    %c0_156 = arith.constant 0 : index
    %c1472_157 = arith.constant 1472 : index
    %153 = vector.load %arg10[%c0_156, %c1472_157] : memref<8x4096xf32, #tpu.memory_space<vmem>>, vector<8x64xf32>
    tpu.vector_store %arg10[%c0_156, %c1472_157], %152 {strides = array<i32>} : memref<8x4096xf32, #tpu.memory_space<vmem>>, vector<8x64xf32>,
    %c0_158 = arith.constant 0 : index
    %c0_159 = arith.constant 0 : index
    %c12 = arith.constant 12 : index
    %c0_160 = arith.constant 0 : index
    %154 = vector.load %arg2[%c0_158, %c0_159, %c12, %c0_160] : memref<1x4x32x32xf32, #tpu.memory_space<vmem>>, vector<1x4x1x32xf32>
    %155 = vector.shape_cast %154 : vector<1x4x1x32xf32> to vector<4x32xf32>
    %cst_161 = arith.constant 0.000000e+00 : f32
    %156 = vector.broadcast %cst_161 : f32 to vector<4x32xf32>
    %157 = arith.maximumf %155, %156 : vector<4x32xf32>
    %cst_162 = arith.constant dense<0.000000e+00> : vector<8x32xf32>
    %158 = tpu.matmul %8, %157, %cst_162 {dimension_numbers = #tpu.dot_dimension_numbers<[1], [0], [0], [1], [0, 0, 1, 1], [], []>} : vector<8x4xf32>, vector<4x32xf32>, vector<8x32xf32> -> vector<8x32xf32>
    %cst_163 = arith.constant dense<0.000000e+00> : vector<8x64xf32>
    %159 = tpu.matmul %158, %9, %cst_163 {dimension_numbers = #tpu.dot_dimension_numbers<[1], [0], [0], [1], [0, 0, 1, 1], [], []>} : vector<8x32xf32>, vector<32x64xf32>, vector<8x64xf32> -> vector<8x64xf32>
    %c0_164 = arith.constant 0 : index
    %c1536 = arith.constant 1536 : index
    %160 = vector.load %arg10[%c0_164, %c1536] : memref<8x4096xf32, #tpu.memory_space<vmem>>, vector<8x64xf32>
    %161 = arith.addf %160, %159 : vector<8x64xf32>
    %c0_165 = arith.constant 0 : index
    %c1536_166 = arith.constant 1536 : index
    %162 = vector.load %arg10[%c0_165, %c1536_166] : memref<8x4096xf32, #tpu.memory_space<vmem>>, vector<8x64xf32>
    tpu.vector_store %arg10[%c0_165, %c1536_166], %161 {strides = array<i32>} : memref<8x4096xf32, #tpu.memory_space<vmem>>, vector<8x64xf32>,
    %c0_167 = arith.constant 0 : index
    %c1600 = arith.constant 1600 : index
    %163 = vector.load %arg10[%c0_167, %c1600] : memref<8x4096xf32, #tpu.memory_space<vmem>>, vector<8x64xf32>
    %164 = arith.addf %163, %159 : vector<8x64xf32>
    %c0_168 = arith.constant 0 : index
    %c1600_169 = arith.constant 1600 : index
    %165 = vector.load %arg10[%c0_168, %c1600_169] : memref<8x4096xf32, #tpu.memory_space<vmem>>, vector<8x64xf32>
    tpu.vector_store %arg10[%c0_168, %c1600_169], %164 {strides = array<i32>} : memref<8x4096xf32, #tpu.memory_space<vmem>>, vector<8x64xf32>,
    %c0_170 = arith.constant 0 : index
    %c0_171 = arith.constant 0 : index
    %c13 = arith.constant 13 : index
    %c0_172 = arith.constant 0 : index
    %166 = vector.load %arg2[%c0_170, %c0_171, %c13, %c0_172] : memref<1x4x32x32xf32, #tpu.memory_space<vmem>>, vector<1x4x1x32xf32>
    %167 = vector.shape_cast %166 : vector<1x4x1x32xf32> to vector<4x32xf32>
    %cst_173 = arith.constant 0.000000e+00 : f32
    %168 = vector.broadcast %cst_173 : f32 to vector<4x32xf32>
    %169 = arith.maximumf %167, %168 : vector<4x32xf32>
    %cst_174 = arith.constant dense<0.000000e+00> : vector<8x32xf32>
    %170 = tpu.matmul %8, %169, %cst_174 {dimension_numbers = #tpu.dot_dimension_numbers<[1], [0], [0], [1], [0, 0, 1, 1], [], []>} : vector<8x4xf32>, vector<4x32xf32>, vector<8x32xf32> -> vector<8x32xf32>
    %cst_175 = arith.constant dense<0.000000e+00> : vector<8x64xf32>
    %171 = tpu.matmul %170, %9, %cst_175 {dimension_numbers = #tpu.dot_dimension_numbers<[1], [0], [0], [1], [0, 0, 1, 1], [], []>} : vector<8x32xf32>, vector<32x64xf32>, vector<8x64xf32> -> vector<8x64xf32>
    %c0_176 = arith.constant 0 : index
    %c1664 = arith.constant 1664 : index
    %172 = vector.load %arg10[%c0_176, %c1664] : memref<8x4096xf32, #tpu.memory_space<vmem>>, vector<8x64xf32>
    %173 = arith.addf %172, %171 : vector<8x64xf32>
    %c0_177 = arith.constant 0 : index
    %c1664_178 = arith.constant 1664 : index
    %174 = vector.load %arg10[%c0_177, %c1664_178] : memref<8x4096xf32, #tpu.memory_space<vmem>>, vector<8x64xf32>
    tpu.vector_store %arg10[%c0_177, %c1664_178], %173 {strides = array<i32>} : memref<8x4096xf32, #tpu.memory_space<vmem>>, vector<8x64xf32>,
    %c0_179 = arith.constant 0 : index
    %c1728 = arith.constant 1728 : index
    %175 = vector.load %arg10[%c0_179, %c1728] : memref<8x4096xf32, #tpu.memory_space<vmem>>, vector<8x64xf32>
    %176 = arith.addf %175, %171 : vector<8x64xf32>
    %c0_180 = arith.constant 0 : index
    %c1728_181 = arith.constant 1728 : index
    %177 = vector.load %arg10[%c0_180, %c1728_181] : memref<8x4096xf32, #tpu.memory_space<vmem>>, vector<8x64xf32>
    tpu.vector_store %arg10[%c0_180, %c1728_181], %176 {strides = array<i32>} : memref<8x4096xf32, #tpu.memory_space<vmem>>, vector<8x64xf32>,
    %c0_182 = arith.constant 0 : index
    %c0_183 = arith.constant 0 : index
    %c14 = arith.constant 14 : index
    %c0_184 = arith.constant 0 : index
    %178 = vector.load %arg2[%c0_182, %c0_183, %c14, %c0_184] : memref<1x4x32x32xf32, #tpu.memory_space<vmem>>, vector<1x4x1x32xf32>
    %179 = vector.shape_cast %178 : vector<1x4x1x32xf32> to vector<4x32xf32>
    %cst_185 = arith.constant 0.000000e+00 : f32
    %180 = vector.broadcast %cst_185 : f32 to vector<4x32xf32>
    %181 = arith.maximumf %179, %180 : vector<4x32xf32>
    %cst_186 = arith.constant dense<0.000000e+00> : vector<8x32xf32>
    %182 = tpu.matmul %8, %181, %cst_186 {dimension_numbers = #tpu.dot_dimension_numbers<[1], [0], [0], [1], [0, 0, 1, 1], [], []>} : vector<8x4xf32>, vector<4x32xf32>, vector<8x32xf32> -> vector<8x32xf32>
    %cst_187 = arith.constant dense<0.000000e+00> : vector<8x64xf32>
    %183 = tpu.matmul %182, %9, %cst_187 {dimension_numbers = #tpu.dot_dimension_numbers<[1], [0], [0], [1], [0, 0, 1, 1], [], []>} : vector<8x32xf32>, vector<32x64xf32>, vector<8x64xf32> -> vector<8x64xf32>
    %c0_188 = arith.constant 0 : index
    %c1792 = arith.constant 1792 : index
    %184 = vector.load %arg10[%c0_188, %c1792] : memref<8x4096xf32, #tpu.memory_space<vmem>>, vector<8x64xf32>
    %185 = arith.addf %184, %183 : vector<8x64xf32>
    %c0_189 = arith.constant 0 : index
    %c1792_190 = arith.constant 1792 : index
    %186 = vector.load %arg10[%c0_189, %c1792_190] : memref<8x4096xf32, #tpu.memory_space<vmem>>, vector<8x64xf32>
    tpu.vector_store %arg10[%c0_189, %c1792_190], %185 {strides = array<i32>} : memref<8x4096xf32, #tpu.memory_space<vmem>>, vector<8x64xf32>,
    %c0_191 = arith.constant 0 : index
    %c1856 = arith.constant 1856 : index
    %187 = vector.load %arg10[%c0_191, %c1856] : memref<8x4096xf32, #tpu.memory_space<vmem>>, vector<8x64xf32>
    %188 = arith.addf %187, %183 : vector<8x64xf32>
    %c0_192 = arith.constant 0 : index
    %c1856_193 = arith.constant 1856 : index
    %189 = vector.load %arg10[%c0_192, %c1856_193] : memref<8x4096xf32, #tpu.memory_space<vmem>>, vector<8x64xf32>
    tpu.vector_store %arg10[%c0_192, %c1856_193], %188 {strides = array<i32>} : memref<8x4096xf32, #tpu.memory_space<vmem>>, vector<8x64xf32>,
    %c0_194 = arith.constant 0 : index
    %c0_195 = arith.constant 0 : index
    %c15 = arith.constant 15 : index
    %c0_196 = arith.constant 0 : index
    %190 = vector.load %arg2[%c0_194, %c0_195, %c15, %c0_196] : memref<1x4x32x32xf32, #tpu.memory_space<vmem>>, vector<1x4x1x32xf32>
    %191 = vector.shape_cast %190 : vector<1x4x1x32xf32> to vector<4x32xf32>
    %cst_197 = arith.constant 0.000000e+00 : f32
    %192 = vector.broadcast %cst_197 : f32 to vector<4x32xf32>
    %193 = arith.maximumf %191, %192 : vector<4x32xf32>
    %cst_198 = arith.constant dense<0.000000e+00> : vector<8x32xf32>
    %194 = tpu.matmul %8, %193, %cst_198 {dimension_numbers = #tpu.dot_dimension_numbers<[1], [0], [0], [1], [0, 0, 1, 1], [], []>} : vector<8x4xf32>, vector<4x32xf32>, vector<8x32xf32> -> vector<8x32xf32>
    %cst_199 = arith.constant dense<0.000000e+00> : vector<8x64xf32>
    %195 = tpu.matmul %194, %9, %cst_199 {dimension_numbers = #tpu.dot_dimension_numbers<[1], [0], [0], [1], [0, 0, 1, 1], [], []>} : vector<8x32xf32>, vector<32x64xf32>, vector<8x64xf32> -> vector<8x64xf32>
    %c0_200 = arith.constant 0 : index
    %c1920 = arith.constant 1920 : index
    %196 = vector.load %arg10[%c0_200, %c1920] : memref<8x4096xf32, #tpu.memory_space<vmem>>, vector<8x64xf32>
    %197 = arith.addf %196, %195 : vector<8x64xf32>
    %c0_201 = arith.constant 0 : index
    %c1920_202 = arith.constant 1920 : index
    %198 = vector.load %arg10[%c0_201, %c1920_202] : memref<8x4096xf32, #tpu.memory_space<vmem>>, vector<8x64xf32>
    tpu.vector_store %arg10[%c0_201, %c1920_202], %197 {strides = array<i32>} : memref<8x4096xf32, #tpu.memory_space<vmem>>, vector<8x64xf32>,
    %c0_203 = arith.constant 0 : index
    %c1984 = arith.constant 1984 : index
    %199 = vector.load %arg10[%c0_203, %c1984] : memref<8x4096xf32, #tpu.memory_space<vmem>>, vector<8x64xf32>
    %200 = arith.addf %199, %195 : vector<8x64xf32>
    %c0_204 = arith.constant 0 : index
    %c1984_205 = arith.constant 1984 : index
    %201 = vector.load %arg10[%c0_204, %c1984_205] : memref<8x4096xf32, #tpu.memory_space<vmem>>, vector<8x64xf32>
    tpu.vector_store %arg10[%c0_204, %c1984_205], %200 {strides = array<i32>} : memref<8x4096xf32, #tpu.memory_space<vmem>>, vector<8x64xf32>,
    %c0_206 = arith.constant 0 : index
    %c0_207 = arith.constant 0 : index
    %c16 = arith.constant 16 : index
    %c0_208 = arith.constant 0 : index
    %202 = vector.load %arg2[%c0_206, %c0_207, %c16, %c0_208] : memref<1x4x32x32xf32, #tpu.memory_space<vmem>>, vector<1x4x1x32xf32>
    %203 = vector.shape_cast %202 : vector<1x4x1x32xf32> to vector<4x32xf32>
    %cst_209 = arith.constant 0.000000e+00 : f32
    %204 = vector.broadcast %cst_209 : f32 to vector<4x32xf32>
    %205 = arith.maximumf %203, %204 : vector<4x32xf32>
    %cst_210 = arith.constant dense<0.000000e+00> : vector<8x32xf32>
    %206 = tpu.matmul %8, %205, %cst_210 {dimension_numbers = #tpu.dot_dimension_numbers<[1], [0], [0], [1], [0, 0, 1, 1], [], []>} : vector<8x4xf32>, vector<4x32xf32>, vector<8x32xf32> -> vector<8x32xf32>
    %cst_211 = arith.constant dense<0.000000e+00> : vector<8x64xf32>
    %207 = tpu.matmul %206, %9, %cst_211 {dimension_numbers = #tpu.dot_dimension_numbers<[1], [0], [0], [1], [0, 0, 1, 1], [], []>} : vector<8x32xf32>, vector<32x64xf32>, vector<8x64xf32> -> vector<8x64xf32>
    %c0_212 = arith.constant 0 : index
    %c2048 = arith.constant 2048 : index
    %208 = vector.load %arg10[%c0_212, %c2048] : memref<8x4096xf32, #tpu.memory_space<vmem>>, vector<8x64xf32>
    %209 = arith.addf %208, %207 : vector<8x64xf32>
    %c0_213 = arith.constant 0 : index
    %c2048_214 = arith.constant 2048 : index
    %210 = vector.load %arg10[%c0_213, %c2048_214] : memref<8x4096xf32, #tpu.memory_space<vmem>>, vector<8x64xf32>
    tpu.vector_store %arg10[%c0_213, %c2048_214], %209 {strides = array<i32>} : memref<8x4096xf32, #tpu.memory_space<vmem>>, vector<8x64xf32>,
    %c0_215 = arith.constant 0 : index
    %c2112 = arith.constant 2112 : index
    %211 = vector.load %arg10[%c0_215, %c2112] : memref<8x4096xf32, #tpu.memory_space<vmem>>, vector<8x64xf32>
    %212 = arith.addf %211, %207 : vector<8x64xf32>
    %c0_216 = arith.constant 0 : index
    %c2112_217 = arith.constant 2112 : index
    %213 = vector.load %arg10[%c0_216, %c2112_217] : memref<8x4096xf32, #tpu.memory_space<vmem>>, vector<8x64xf32>
    tpu.vector_store %arg10[%c0_216, %c2112_217], %212 {strides = array<i32>} : memref<8x4096xf32, #tpu.memory_space<vmem>>, vector<8x64xf32>,
    %c0_218 = arith.constant 0 : index
    %c0_219 = arith.constant 0 : index
    %c17 = arith.constant 17 : index
    %c0_220 = arith.constant 0 : index
    %214 = vector.load %arg2[%c0_218, %c0_219, %c17, %c0_220] : memref<1x4x32x32xf32, #tpu.memory_space<vmem>>, vector<1x4x1x32xf32>
    %215 = vector.shape_cast %214 : vector<1x4x1x32xf32> to vector<4x32xf32>
    %cst_221 = arith.constant 0.000000e+00 : f32
    %216 = vector.broadcast %cst_221 : f32 to vector<4x32xf32>
    %217 = arith.maximumf %215, %216 : vector<4x32xf32>
    %cst_222 = arith.constant dense<0.000000e+00> : vector<8x32xf32>
    %218 = tpu.matmul %8, %217, %cst_222 {dimension_numbers = #tpu.dot_dimension_numbers<[1], [0], [0], [1], [0, 0, 1, 1], [], []>} : vector<8x4xf32>, vector<4x32xf32>, vector<8x32xf32> -> vector<8x32xf32>
    %cst_223 = arith.constant dense<0.000000e+00> : vector<8x64xf32>
    %219 = tpu.matmul %218, %9, %cst_223 {dimension_numbers = #tpu.dot_dimension_numbers<[1], [0], [0], [1], [0, 0, 1, 1], [], []>} : vector<8x32xf32>, vector<32x64xf32>, vector<8x64xf32> -> vector<8x64xf32>
    %c0_224 = arith.constant 0 : index
    %c2176 = arith.constant 2176 : index
    %220 = vector.load %arg10[%c0_224, %c2176] : memref<8x4096xf32, #tpu.memory_space<vmem>>, vector<8x64xf32>
    %221 = arith.addf %220, %219 : vector<8x64xf32>
    %c0_225 = arith.constant 0 : index
    %c2176_226 = arith.constant 2176 : index
    %222 = vector.load %arg10[%c0_225, %c2176_226] : memref<8x4096xf32, #tpu.memory_space<vmem>>, vector<8x64xf32>
    tpu.vector_store %arg10[%c0_225, %c2176_226], %221 {strides = array<i32>} : memref<8x4096xf32, #tpu.memory_space<vmem>>, vector<8x64xf32>,
    %c0_227 = arith.constant 0 : index
    %c2240 = arith.constant 2240 : index
    %223 = vector.load %arg10[%c0_227, %c2240] : memref<8x4096xf32, #tpu.memory_space<vmem>>, vector<8x64xf32>
    %224 = arith.addf %223, %219 : vector<8x64xf32>
    %c0_228 = arith.constant 0 : index
    %c2240_229 = arith.constant 2240 : index
    %225 = vector.load %arg10[%c0_228, %c2240_229] : memref<8x4096xf32, #tpu.memory_space<vmem>>, vector<8x64xf32>
    tpu.vector_store %arg10[%c0_228, %c2240_229], %224 {strides = array<i32>} : memref<8x4096xf32, #tpu.memory_space<vmem>>, vector<8x64xf32>,
    %c0_230 = arith.constant 0 : index
    %c0_231 = arith.constant 0 : index
    %c18 = arith.constant 18 : index
    %c0_232 = arith.constant 0 : index
    %226 = vector.load %arg2[%c0_230, %c0_231, %c18, %c0_232] : memref<1x4x32x32xf32, #tpu.memory_space<vmem>>, vector<1x4x1x32xf32>
    %227 = vector.shape_cast %226 : vector<1x4x1x32xf32> to vector<4x32xf32>
    %cst_233 = arith.constant 0.000000e+00 : f32
    %228 = vector.broadcast %cst_233 : f32 to vector<4x32xf32>
    %229 = arith.maximumf %227, %228 : vector<4x32xf32>
    %cst_234 = arith.constant dense<0.000000e+00> : vector<8x32xf32>
    %230 = tpu.matmul %8, %229, %cst_234 {dimension_numbers = #tpu.dot_dimension_numbers<[1], [0], [0], [1], [0, 0, 1, 1], [], []>} : vector<8x4xf32>, vector<4x32xf32>, vector<8x32xf32> -> vector<8x32xf32>
    %cst_235 = arith.constant dense<0.000000e+00> : vector<8x64xf32>
    %231 = tpu.matmul %230, %9, %cst_235 {dimension_numbers = #tpu.dot_dimension_numbers<[1], [0], [0], [1], [0, 0, 1, 1], [], []>} : vector<8x32xf32>, vector<32x64xf32>, vector<8x64xf32> -> vector<8x64xf32>
    %c0_236 = arith.constant 0 : index
    %c2304 = arith.constant 2304 : index
    %232 = vector.load %arg10[%c0_236, %c2304] : memref<8x4096xf32, #tpu.memory_space<vmem>>, vector<8x64xf32>
    %233 = arith.addf %232, %231 : vector<8x64xf32>
    %c0_237 = arith.constant 0 : index
    %c2304_238 = arith.constant 2304 : index
    %234 = vector.load %arg10[%c0_237, %c2304_238] : memref<8x4096xf32, #tpu.memory_space<vmem>>, vector<8x64xf32>
    tpu.vector_store %arg10[%c0_237, %c2304_238], %233 {strides = array<i32>} : memref<8x4096xf32, #tpu.memory_space<vmem>>, vector<8x64xf32>,
    %c0_239 = arith.constant 0 : index
    %c2368 = arith.constant 2368 : index
    %235 = vector.load %arg10[%c0_239, %c2368] : memref<8x4096xf32, #tpu.memory_space<vmem>>, vector<8x64xf32>
    %236 = arith.addf %235, %231 : vector<8x64xf32>
    %c0_240 = arith.constant 0 : index
    %c2368_241 = arith.constant 2368 : index
    %237 = vector.load %arg10[%c0_240, %c2368_241] : memref<8x4096xf32, #tpu.memory_space<vmem>>, vector<8x64xf32>
    tpu.vector_store %arg10[%c0_240, %c2368_241], %236 {strides = array<i32>} : memref<8x4096xf32, #tpu.memory_space<vmem>>, vector<8x64xf32>,
    %c0_242 = arith.constant 0 : index
    %c0_243 = arith.constant 0 : index
    %c19 = arith.constant 19 : index
    %c0_244 = arith.constant 0 : index
    %238 = vector.load %arg2[%c0_242, %c0_243, %c19, %c0_244] : memref<1x4x32x32xf32, #tpu.memory_space<vmem>>, vector<1x4x1x32xf32>
    %239 = vector.shape_cast %238 : vector<1x4x1x32xf32> to vector<4x32xf32>
    %cst_245 = arith.constant 0.000000e+00 : f32
    %240 = vector.broadcast %cst_245 : f32 to vector<4x32xf32>
    %241 = arith.maximumf %239, %240 : vector<4x32xf32>
    %cst_246 = arith.constant dense<0.000000e+00> : vector<8x32xf32>
    %242 = tpu.matmul %8, %241, %cst_246 {dimension_numbers = #tpu.dot_dimension_numbers<[1], [0], [0], [1], [0, 0, 1, 1], [], []>} : vector<8x4xf32>, vector<4x32xf32>, vector<8x32xf32> -> vector<8x32xf32>
    %cst_247 = arith.constant dense<0.000000e+00> : vector<8x64xf32>
    %243 = tpu.matmul %242, %9, %cst_247 {dimension_numbers = #tpu.dot_dimension_numbers<[1], [0], [0], [1], [0, 0, 1, 1], [], []>} : vector<8x32xf32>, vector<32x64xf32>, vector<8x64xf32> -> vector<8x64xf32>
    %c0_248 = arith.constant 0 : index
    %c2432 = arith.constant 2432 : index
    %244 = vector.load %arg10[%c0_248, %c2432] : memref<8x4096xf32, #tpu.memory_space<vmem>>, vector<8x64xf32>
    %245 = arith.addf %244, %243 : vector<8x64xf32>
    %c0_249 = arith.constant 0 : index
    %c2432_250 = arith.constant 2432 : index
    %246 = vector.load %arg10[%c0_249, %c2432_250] : memref<8x4096xf32, #tpu.memory_space<vmem>>, vector<8x64xf32>
    tpu.vector_store %arg10[%c0_249, %c2432_250], %245 {strides = array<i32>} : memref<8x4096xf32, #tpu.memory_space<vmem>>, vector<8x64xf32>,
    %c0_251 = arith.constant 0 : index
    %c2496 = arith.constant 2496 : index
    %247 = vector.load %arg10[%c0_251, %c2496] : memref<8x4096xf32, #tpu.memory_space<vmem>>, vector<8x64xf32>
    %248 = arith.addf %247, %243 : vector<8x64xf32>
    %c0_252 = arith.constant 0 : index
    %c2496_253 = arith.constant 2496 : index
    %249 = vector.load %arg10[%c0_252, %c2496_253] : memref<8x4096xf32, #tpu.memory_space<vmem>>, vector<8x64xf32>
    tpu.vector_store %arg10[%c0_252, %c2496_253], %248 {strides = array<i32>} : memref<8x4096xf32, #tpu.memory_space<vmem>>, vector<8x64xf32>,
    %c0_254 = arith.constant 0 : index
    %c0_255 = arith.constant 0 : index
    %c20 = arith.constant 20 : index
    %c0_256 = arith.constant 0 : index
    %250 = vector.load %arg2[%c0_254, %c0_255, %c20, %c0_256] : memref<1x4x32x32xf32, #tpu.memory_space<vmem>>, vector<1x4x1x32xf32>
    %251 = vector.shape_cast %250 : vector<1x4x1x32xf32> to vector<4x32xf32>
    %cst_257 = arith.constant 0.000000e+00 : f32
    %252 = vector.broadcast %cst_257 : f32 to vector<4x32xf32>
    %253 = arith.maximumf %251, %252 : vector<4x32xf32>
    %cst_258 = arith.constant dense<0.000000e+00> : vector<8x32xf32>
    %254 = tpu.matmul %8, %253, %cst_258 {dimension_numbers = #tpu.dot_dimension_numbers<[1], [0], [0], [1], [0, 0, 1, 1], [], []>} : vector<8x4xf32>, vector<4x32xf32>, vector<8x32xf32> -> vector<8x32xf32>
    %cst_259 = arith.constant dense<0.000000e+00> : vector<8x64xf32>
    %255 = tpu.matmul %254, %9, %cst_259 {dimension_numbers = #tpu.dot_dimension_numbers<[1], [0], [0], [1], [0, 0, 1, 1], [], []>} : vector<8x32xf32>, vector<32x64xf32>, vector<8x64xf32> -> vector<8x64xf32>
    %c0_260 = arith.constant 0 : index
    %c2560 = arith.constant 2560 : index
    %256 = vector.load %arg10[%c0_260, %c2560] : memref<8x4096xf32, #tpu.memory_space<vmem>>, vector<8x64xf32>
    %257 = arith.addf %256, %255 : vector<8x64xf32>
    %c0_261 = arith.constant 0 : index
    %c2560_262 = arith.constant 2560 : index
    %258 = vector.load %arg10[%c0_261, %c2560_262] : memref<8x4096xf32, #tpu.memory_space<vmem>>, vector<8x64xf32>
    tpu.vector_store %arg10[%c0_261, %c2560_262], %257 {strides = array<i32>} : memref<8x4096xf32, #tpu.memory_space<vmem>>, vector<8x64xf32>,
    %c0_263 = arith.constant 0 : index
    %c2624 = arith.constant 2624 : index
    %259 = vector.load %arg10[%c0_263, %c2624] : memref<8x4096xf32, #tpu.memory_space<vmem>>, vector<8x64xf32>
    %260 = arith.addf %259, %255 : vector<8x64xf32>
    %c0_264 = arith.constant 0 : index
    %c2624_265 = arith.constant 2624 : index
    %261 = vector.load %arg10[%c0_264, %c2624_265] : memref<8x4096xf32, #tpu.memory_space<vmem>>, vector<8x64xf32>
    tpu.vector_store %arg10[%c0_264, %c2624_265], %260 {strides = array<i32>} : memref<8x4096xf32, #tpu.memory_space<vmem>>, vector<8x64xf32>,
    %c0_266 = arith.constant 0 : index
    %c0_267 = arith.constant 0 : index
    %c21 = arith.constant 21 : index
    %c0_268 = arith.constant 0 : index
    %262 = vector.load %arg2[%c0_266, %c0_267, %c21, %c0_268] : memref<1x4x32x32xf32, #tpu.memory_space<vmem>>, vector<1x4x1x32xf32>
    %263 = vector.shape_cast %262 : vector<1x4x1x32xf32> to vector<4x32xf32>
    %cst_269 = arith.constant 0.000000e+00 : f32
    %264 = vector.broadcast %cst_269 : f32 to vector<4x32xf32>
    %265 = arith.maximumf %263, %264 : vector<4x32xf32>
    %cst_270 = arith.constant dense<0.000000e+00> : vector<8x32xf32>
    %266 = tpu.matmul %8, %265, %cst_270 {dimension_numbers = #tpu.dot_dimension_numbers<[1], [0], [0], [1], [0, 0, 1, 1], [], []>} : vector<8x4xf32>, vector<4x32xf32>, vector<8x32xf32> -> vector<8x32xf32>
    %cst_271 = arith.constant dense<0.000000e+00> : vector<8x64xf32>
    %267 = tpu.matmul %266, %9, %cst_271 {dimension_numbers = #tpu.dot_dimension_numbers<[1], [0], [0], [1], [0, 0, 1, 1], [], []>} : vector<8x32xf32>, vector<32x64xf32>, vector<8x64xf32> -> vector<8x64xf32>
    %c0_272 = arith.constant 0 : index
    %c2688 = arith.constant 2688 : index
    %268 = vector.load %arg10[%c0_272, %c2688] : memref<8x4096xf32, #tpu.memory_space<vmem>>, vector<8x64xf32>
    %269 = arith.addf %268, %267 : vector<8x64xf32>
    %c0_273 = arith.constant 0 : index
    %c2688_274 = arith.constant 2688 : index
    %270 = vector.load %arg10[%c0_273, %c2688_274] : memref<8x4096xf32, #tpu.memory_space<vmem>>, vector<8x64xf32>
    tpu.vector_store %arg10[%c0_273, %c2688_274], %269 {strides = array<i32>} : memref<8x4096xf32, #tpu.memory_space<vmem>>, vector<8x64xf32>,
    %c0_275 = arith.constant 0 : index
    %c2752 = arith.constant 2752 : index
    %271 = vector.load %arg10[%c0_275, %c2752] : memref<8x4096xf32, #tpu.memory_space<vmem>>, vector<8x64xf32>
    %272 = arith.addf %271, %267 : vector<8x64xf32>
    %c0_276 = arith.constant 0 : index
    %c2752_277 = arith.constant 2752 : index
    %273 = vector.load %arg10[%c0_276, %c2752_277] : memref<8x4096xf32, #tpu.memory_space<vmem>>, vector<8x64xf32>
    tpu.vector_store %arg10[%c0_276, %c2752_277], %272 {strides = array<i32>} : memref<8x4096xf32, #tpu.memory_space<vmem>>, vector<8x64xf32>,
    %c0_278 = arith.constant 0 : index
    %c0_279 = arith.constant 0 : index
    %c22 = arith.constant 22 : index
    %c0_280 = arith.constant 0 : index
    %274 = vector.load %arg2[%c0_278, %c0_279, %c22, %c0_280] : memref<1x4x32x32xf32, #tpu.memory_space<vmem>>, vector<1x4x1x32xf32>
    %275 = vector.shape_cast %274 : vector<1x4x1x32xf32> to vector<4x32xf32>
    %cst_281 = arith.constant 0.000000e+00 : f32
    %276 = vector.broadcast %cst_281 : f32 to vector<4x32xf32>
    %277 = arith.maximumf %275, %276 : vector<4x32xf32>
    %cst_282 = arith.constant dense<0.000000e+00> : vector<8x32xf32>
    %278 = tpu.matmul %8, %277, %cst_282 {dimension_numbers = #tpu.dot_dimension_numbers<[1], [0], [0], [1], [0, 0, 1, 1], [], []>} : vector<8x4xf32>, vector<4x32xf32>, vector<8x32xf32> -> vector<8x32xf32>
    %cst_283 = arith.constant dense<0.000000e+00> : vector<8x64xf32>
    %279 = tpu.matmul %278, %9, %cst_283 {dimension_numbers = #tpu.dot_dimension_numbers<[1], [0], [0], [1], [0, 0, 1, 1], [], []>} : vector<8x32xf32>, vector<32x64xf32>, vector<8x64xf32> -> vector<8x64xf32>
    %c0_284 = arith.constant 0 : index
    %c2816 = arith.constant 2816 : index
    %280 = vector.load %arg10[%c0_284, %c2816] : memref<8x4096xf32, #tpu.memory_space<vmem>>, vector<8x64xf32>
    %281 = arith.addf %280, %279 : vector<8x64xf32>
    %c0_285 = arith.constant 0 : index
    %c2816_286 = arith.constant 2816 : index
    %282 = vector.load %arg10[%c0_285, %c2816_286] : memref<8x4096xf32, #tpu.memory_space<vmem>>, vector<8x64xf32>
    tpu.vector_store %arg10[%c0_285, %c2816_286], %281 {strides = array<i32>} : memref<8x4096xf32, #tpu.memory_space<vmem>>, vector<8x64xf32>,
    %c0_287 = arith.constant 0 : index
    %c2880 = arith.constant 2880 : index
    %283 = vector.load %arg10[%c0_287, %c2880] : memref<8x4096xf32, #tpu.memory_space<vmem>>, vector<8x64xf32>
    %284 = arith.addf %283, %279 : vector<8x64xf32>
    %c0_288 = arith.constant 0 : index
    %c2880_289 = arith.constant 2880 : index
    %285 = vector.load %arg10[%c0_288, %c2880_289] : memref<8x4096xf32, #tpu.memory_space<vmem>>, vector<8x64xf32>
    tpu.vector_store %arg10[%c0_288, %c2880_289], %284 {strides = array<i32>} : memref<8x4096xf32, #tpu.memory_space<vmem>>, vector<8x64xf32>,
    %c0_290 = arith.constant 0 : index
    %c0_291 = arith.constant 0 : index
    %c23 = arith.constant 23 : index
    %c0_292 = arith.constant 0 : index
    %286 = vector.load %arg2[%c0_290, %c0_291, %c23, %c0_292] : memref<1x4x32x32xf32, #tpu.memory_space<vmem>>, vector<1x4x1x32xf32>
    %287 = vector.shape_cast %286 : vector<1x4x1x32xf32> to vector<4x32xf32>
    %cst_293 = arith.constant 0.000000e+00 : f32
    %288 = vector.broadcast %cst_293 : f32 to vector<4x32xf32>
    %289 = arith.maximumf %287, %288 : vector<4x32xf32>
    %cst_294 = arith.constant dense<0.000000e+00> : vector<8x32xf32>
    %290 = tpu.matmul %8, %289, %cst_294 {dimension_numbers = #tpu.dot_dimension_numbers<[1], [0], [0], [1], [0, 0, 1, 1], [], []>} : vector<8x4xf32>, vector<4x32xf32>, vector<8x32xf32> -> vector<8x32xf32>
    %cst_295 = arith.constant dense<0.000000e+00> : vector<8x64xf32>
    %291 = tpu.matmul %290, %9, %cst_295 {dimension_numbers = #tpu.dot_dimension_numbers<[1], [0], [0], [1], [0, 0, 1, 1], [], []>} : vector<8x32xf32>, vector<32x64xf32>, vector<8x64xf32> -> vector<8x64xf32>
    %c0_296 = arith.constant 0 : index
    %c2944 = arith.constant 2944 : index
    %292 = vector.load %arg10[%c0_296, %c2944] : memref<8x4096xf32, #tpu.memory_space<vmem>>, vector<8x64xf32>
    %293 = arith.addf %292, %291 : vector<8x64xf32>
    %c0_297 = arith.constant 0 : index
    %c2944_298 = arith.constant 2944 : index
    %294 = vector.load %arg10[%c0_297, %c2944_298] : memref<8x4096xf32, #tpu.memory_space<vmem>>, vector<8x64xf32>
    tpu.vector_store %arg10[%c0_297, %c2944_298], %293 {strides = array<i32>} : memref<8x4096xf32, #tpu.memory_space<vmem>>, vector<8x64xf32>,
    %c0_299 = arith.constant 0 : index
    %c3008 = arith.constant 3008 : index
    %295 = vector.load %arg10[%c0_299, %c3008] : memref<8x4096xf32, #tpu.memory_space<vmem>>, vector<8x64xf32>
    %296 = arith.addf %295, %291 : vector<8x64xf32>
    %c0_300 = arith.constant 0 : index
    %c3008_301 = arith.constant 3008 : index
    %297 = vector.load %arg10[%c0_300, %c3008_301] : memref<8x4096xf32, #tpu.memory_space<vmem>>, vector<8x64xf32>
    tpu.vector_store %arg10[%c0_300, %c3008_301], %296 {strides = array<i32>} : memref<8x4096xf32, #tpu.memory_space<vmem>>, vector<8x64xf32>,
    %c0_302 = arith.constant 0 : index
    %c0_303 = arith.constant 0 : index
    %c24 = arith.constant 24 : index
    %c0_304 = arith.constant 0 : index
    %298 = vector.load %arg2[%c0_302, %c0_303, %c24, %c0_304] : memref<1x4x32x32xf32, #tpu.memory_space<vmem>>, vector<1x4x1x32xf32>
    %299 = vector.shape_cast %298 : vector<1x4x1x32xf32> to vector<4x32xf32>
    %cst_305 = arith.constant 0.000000e+00 : f32
    %300 = vector.broadcast %cst_305 : f32 to vector<4x32xf32>
    %301 = arith.maximumf %299, %300 : vector<4x32xf32>
    %cst_306 = arith.constant dense<0.000000e+00> : vector<8x32xf32>
    %302 = tpu.matmul %8, %301, %cst_306 {dimension_numbers = #tpu.dot_dimension_numbers<[1], [0], [0], [1], [0, 0, 1, 1], [], []>} : vector<8x4xf32>, vector<4x32xf32>, vector<8x32xf32> -> vector<8x32xf32>
    %cst_307 = arith.constant dense<0.000000e+00> : vector<8x64xf32>
    %303 = tpu.matmul %302, %9, %cst_307 {dimension_numbers = #tpu.dot_dimension_numbers<[1], [0], [0], [1], [0, 0, 1, 1], [], []>} : vector<8x32xf32>, vector<32x64xf32>, vector<8x64xf32> -> vector<8x64xf32>
    %c0_308 = arith.constant 0 : index
    %c3072 = arith.constant 3072 : index
    %304 = vector.load %arg10[%c0_308, %c3072] : memref<8x4096xf32, #tpu.memory_space<vmem>>, vector<8x64xf32>
    %305 = arith.addf %304, %303 : vector<8x64xf32>
    %c0_309 = arith.constant 0 : index
    %c3072_310 = arith.constant 3072 : index
    %306 = vector.load %arg10[%c0_309, %c3072_310] : memref<8x4096xf32, #tpu.memory_space<vmem>>, vector<8x64xf32>
    tpu.vector_store %arg10[%c0_309, %c3072_310], %305 {strides = array<i32>} : memref<8x4096xf32, #tpu.memory_space<vmem>>, vector<8x64xf32>,
    %c0_311 = arith.constant 0 : index
    %c3136 = arith.constant 3136 : index
    %307 = vector.load %arg10[%c0_311, %c3136] : memref<8x4096xf32, #tpu.memory_space<vmem>>, vector<8x64xf32>
    %308 = arith.addf %307, %303 : vector<8x64xf32>
    %c0_312 = arith.constant 0 : index
    %c3136_313 = arith.constant 3136 : index
    %309 = vector.load %arg10[%c0_312, %c3136_313] : memref<8x4096xf32, #tpu.memory_space<vmem>>, vector<8x64xf32>
    tpu.vector_store %arg10[%c0_312, %c3136_313], %308 {strides = array<i32>} : memref<8x4096xf32, #tpu.memory_space<vmem>>, vector<8x64xf32>,
    %c0_314 = arith.constant 0 : index
    %c0_315 = arith.constant 0 : index
    %c25 = arith.constant 25 : index
    %c0_316 = arith.constant 0 : index
    %310 = vector.load %arg2[%c0_314, %c0_315, %c25, %c0_316] : memref<1x4x32x32xf32, #tpu.memory_space<vmem>>, vector<1x4x1x32xf32>
    %311 = vector.shape_cast %310 : vector<1x4x1x32xf32> to vector<4x32xf32>
    %cst_317 = arith.constant 0.000000e+00 : f32
    %312 = vector.broadcast %cst_317 : f32 to vector<4x32xf32>
    %313 = arith.maximumf %311, %312 : vector<4x32xf32>
    %cst_318 = arith.constant dense<0.000000e+00> : vector<8x32xf32>
    %314 = tpu.matmul %8, %313, %cst_318 {dimension_numbers = #tpu.dot_dimension_numbers<[1], [0], [0], [1], [0, 0, 1, 1], [], []>} : vector<8x4xf32>, vector<4x32xf32>, vector<8x32xf32> -> vector<8x32xf32>
    %cst_319 = arith.constant dense<0.000000e+00> : vector<8x64xf32>
    %315 = tpu.matmul %314, %9, %cst_319 {dimension_numbers = #tpu.dot_dimension_numbers<[1], [0], [0], [1], [0, 0, 1, 1], [], []>} : vector<8x32xf32>, vector<32x64xf32>, vector<8x64xf32> -> vector<8x64xf32>
    %c0_320 = arith.constant 0 : index
    %c3200 = arith.constant 3200 : index
    %316 = vector.load %arg10[%c0_320, %c3200] : memref<8x4096xf32, #tpu.memory_space<vmem>>, vector<8x64xf32>
    %317 = arith.addf %316, %315 : vector<8x64xf32>
    %c0_321 = arith.constant 0 : index
    %c3200_322 = arith.constant 3200 : index
    %318 = vector.load %arg10[%c0_321, %c3200_322] : memref<8x4096xf32, #tpu.memory_space<vmem>>, vector<8x64xf32>
    tpu.vector_store %arg10[%c0_321, %c3200_322], %317 {strides = array<i32>} : memref<8x4096xf32, #tpu.memory_space<vmem>>, vector<8x64xf32>,
    %c0_323 = arith.constant 0 : index
    %c3264 = arith.constant 3264 : index
    %319 = vector.load %arg10[%c0_323, %c3264] : memref<8x4096xf32, #tpu.memory_space<vmem>>, vector<8x64xf32>
    %320 = arith.addf %319, %315 : vector<8x64xf32>
    %c0_324 = arith.constant 0 : index
    %c3264_325 = arith.constant 3264 : index
    %321 = vector.load %arg10[%c0_324, %c3264_325] : memref<8x4096xf32, #tpu.memory_space<vmem>>, vector<8x64xf32>
    tpu.vector_store %arg10[%c0_324, %c3264_325], %320 {strides = array<i32>} : memref<8x4096xf32, #tpu.memory_space<vmem>>, vector<8x64xf32>,
    %c0_326 = arith.constant 0 : index
    %c0_327 = arith.constant 0 : index
    %c26 = arith.constant 26 : index
    %c0_328 = arith.constant 0 : index
    %322 = vector.load %arg2[%c0_326, %c0_327, %c26, %c0_328] : memref<1x4x32x32xf32, #tpu.memory_space<vmem>>, vector<1x4x1x32xf32>
    %323 = vector.shape_cast %322 : vector<1x4x1x32xf32> to vector<4x32xf32>
    %cst_329 = arith.constant 0.000000e+00 : f32
    %324 = vector.broadcast %cst_329 : f32 to vector<4x32xf32>
    %325 = arith.maximumf %323, %324 : vector<4x32xf32>
    %cst_330 = arith.constant dense<0.000000e+00> : vector<8x32xf32>
    %326 = tpu.matmul %8, %325, %cst_330 {dimension_numbers = #tpu.dot_dimension_numbers<[1], [0], [0], [1], [0, 0, 1, 1], [], []>} : vector<8x4xf32>, vector<4x32xf32>, vector<8x32xf32> -> vector<8x32xf32>
    %cst_331 = arith.constant dense<0.000000e+00> : vector<8x64xf32>
    %327 = tpu.matmul %326, %9, %cst_331 {dimension_numbers = #tpu.dot_dimension_numbers<[1], [0], [0], [1], [0, 0, 1, 1], [], []>} : vector<8x32xf32>, vector<32x64xf32>, vector<8x64xf32> -> vector<8x64xf32>
    %c0_332 = arith.constant 0 : index
    %c3328 = arith.constant 3328 : index
    %328 = vector.load %arg10[%c0_332, %c3328] : memref<8x4096xf32, #tpu.memory_space<vmem>>, vector<8x64xf32>
    %329 = arith.addf %328, %327 : vector<8x64xf32>
    %c0_333 = arith.constant 0 : index
    %c3328_334 = arith.constant 3328 : index
    %330 = vector.load %arg10[%c0_333, %c3328_334] : memref<8x4096xf32, #tpu.memory_space<vmem>>, vector<8x64xf32>
    tpu.vector_store %arg10[%c0_333, %c3328_334], %329 {strides = array<i32>} : memref<8x4096xf32, #tpu.memory_space<vmem>>, vector<8x64xf32>,
    %c0_335 = arith.constant 0 : index
    %c3392 = arith.constant 3392 : index
    %331 = vector.load %arg10[%c0_335, %c3392] : memref<8x4096xf32, #tpu.memory_space<vmem>>, vector<8x64xf32>
    %332 = arith.addf %331, %327 : vector<8x64xf32>
    %c0_336 = arith.constant 0 : index
    %c3392_337 = arith.constant 3392 : index
    %333 = vector.load %arg10[%c0_336, %c3392_337] : memref<8x4096xf32, #tpu.memory_space<vmem>>, vector<8x64xf32>
    tpu.vector_store %arg10[%c0_336, %c3392_337], %332 {strides = array<i32>} : memref<8x4096xf32, #tpu.memory_space<vmem>>, vector<8x64xf32>,
    %c0_338 = arith.constant 0 : index
    %c0_339 = arith.constant 0 : index
    %c27 = arith.constant 27 : index
    %c0_340 = arith.constant 0 : index
    %334 = vector.load %arg2[%c0_338, %c0_339, %c27, %c0_340] : memref<1x4x32x32xf32, #tpu.memory_space<vmem>>, vector<1x4x1x32xf32>
    %335 = vector.shape_cast %334 : vector<1x4x1x32xf32> to vector<4x32xf32>
    %cst_341 = arith.constant 0.000000e+00 : f32
    %336 = vector.broadcast %cst_341 : f32 to vector<4x32xf32>
    %337 = arith.maximumf %335, %336 : vector<4x32xf32>
    %cst_342 = arith.constant dense<0.000000e+00> : vector<8x32xf32>
    %338 = tpu.matmul %8, %337, %cst_342 {dimension_numbers = #tpu.dot_dimension_numbers<[1], [0], [0], [1], [0, 0, 1, 1], [], []>} : vector<8x4xf32>, vector<4x32xf32>, vector<8x32xf32> -> vector<8x32xf32>
    %cst_343 = arith.constant dense<0.000000e+00> : vector<8x64xf32>
    %339 = tpu.matmul %338, %9, %cst_343 {dimension_numbers = #tpu.dot_dimension_numbers<[1], [0], [0], [1], [0, 0, 1, 1], [], []>} : vector<8x32xf32>, vector<32x64xf32>, vector<8x64xf32> -> vector<8x64xf32>
    %c0_344 = arith.constant 0 : index
    %c3456 = arith.constant 3456 : index
    %340 = vector.load %arg10[%c0_344, %c3456] : memref<8x4096xf32, #tpu.memory_space<vmem>>, vector<8x64xf32>
    %341 = arith.addf %340, %339 : vector<8x64xf32>
    %c0_345 = arith.constant 0 : index
    %c3456_346 = arith.constant 3456 : index
    %342 = vector.load %arg10[%c0_345, %c3456_346] : memref<8x4096xf32, #tpu.memory_space<vmem>>, vector<8x64xf32>
    tpu.vector_store %arg10[%c0_345, %c3456_346], %341 {strides = array<i32>} : memref<8x4096xf32, #tpu.memory_space<vmem>>, vector<8x64xf32>,
    %c0_347 = arith.constant 0 : index
    %c3520 = arith.constant 3520 : index
    %343 = vector.load %arg10[%c0_347, %c3520] : memref<8x4096xf32, #tpu.memory_space<vmem>>, vector<8x64xf32>
    %344 = arith.addf %343, %339 : vector<8x64xf32>
    %c0_348 = arith.constant 0 : index
    %c3520_349 = arith.constant 3520 : index
    %345 = vector.load %arg10[%c0_348, %c3520_349] : memref<8x4096xf32, #tpu.memory_space<vmem>>, vector<8x64xf32>
    tpu.vector_store %arg10[%c0_348, %c3520_349], %344 {strides = array<i32>} : memref<8x4096xf32, #tpu.memory_space<vmem>>, vector<8x64xf32>,
    %c0_350 = arith.constant 0 : index
    %c0_351 = arith.constant 0 : index
    %c28 = arith.constant 28 : index
    %c0_352 = arith.constant 0 : index
    %346 = vector.load %arg2[%c0_350, %c0_351, %c28, %c0_352] : memref<1x4x32x32xf32, #tpu.memory_space<vmem>>, vector<1x4x1x32xf32>
    %347 = vector.shape_cast %346 : vector<1x4x1x32xf32> to vector<4x32xf32>
    %cst_353 = arith.constant 0.000000e+00 : f32
    %348 = vector.broadcast %cst_353 : f32 to vector<4x32xf32>
    %349 = arith.maximumf %347, %348 : vector<4x32xf32>
    %cst_354 = arith.constant dense<0.000000e+00> : vector<8x32xf32>
    %350 = tpu.matmul %8, %349, %cst_354 {dimension_numbers = #tpu.dot_dimension_numbers<[1], [0], [0], [1], [0, 0, 1, 1], [], []>} : vector<8x4xf32>, vector<4x32xf32>, vector<8x32xf32> -> vector<8x32xf32>
    %cst_355 = arith.constant dense<0.000000e+00> : vector<8x64xf32>
    %351 = tpu.matmul %350, %9, %cst_355 {dimension_numbers = #tpu.dot_dimension_numbers<[1], [0], [0], [1], [0, 0, 1, 1], [], []>} : vector<8x32xf32>, vector<32x64xf32>, vector<8x64xf32> -> vector<8x64xf32>
    %c0_356 = arith.constant 0 : index
    %c3584 = arith.constant 3584 : index
    %352 = vector.load %arg10[%c0_356, %c3584] : memref<8x4096xf32, #tpu.memory_space<vmem>>, vector<8x64xf32>
    %353 = arith.addf %352, %351 : vector<8x64xf32>
    %c0_357 = arith.constant 0 : index
    %c3584_358 = arith.constant 3584 : index
    %354 = vector.load %arg10[%c0_357, %c3584_358] : memref<8x4096xf32, #tpu.memory_space<vmem>>, vector<8x64xf32>
    tpu.vector_store %arg10[%c0_357, %c3584_358], %353 {strides = array<i32>} : memref<8x4096xf32, #tpu.memory_space<vmem>>, vector<8x64xf32>,
    %c0_359 = arith.constant 0 : index
    %c3648 = arith.constant 3648 : index
    %355 = vector.load %arg10[%c0_359, %c3648] : memref<8x4096xf32, #tpu.memory_space<vmem>>, vector<8x64xf32>
    %356 = arith.addf %355, %351 : vector<8x64xf32>
    %c0_360 = arith.constant 0 : index
    %c3648_361 = arith.constant 3648 : index
    %357 = vector.load %arg10[%c0_360, %c3648_361] : memref<8x4096xf32, #tpu.memory_space<vmem>>, vector<8x64xf32>
    tpu.vector_store %arg10[%c0_360, %c3648_361], %356 {strides = array<i32>} : memref<8x4096xf32, #tpu.memory_space<vmem>>, vector<8x64xf32>,
    %c0_362 = arith.constant 0 : index
    %c0_363 = arith.constant 0 : index
    %c29 = arith.constant 29 : index
    %c0_364 = arith.constant 0 : index
    %358 = vector.load %arg2[%c0_362, %c0_363, %c29, %c0_364] : memref<1x4x32x32xf32, #tpu.memory_space<vmem>>, vector<1x4x1x32xf32>
    %359 = vector.shape_cast %358 : vector<1x4x1x32xf32> to vector<4x32xf32>
    %cst_365 = arith.constant 0.000000e+00 : f32
    %360 = vector.broadcast %cst_365 : f32 to vector<4x32xf32>
    %361 = arith.maximumf %359, %360 : vector<4x32xf32>
    %cst_366 = arith.constant dense<0.000000e+00> : vector<8x32xf32>
    %362 = tpu.matmul %8, %361, %cst_366 {dimension_numbers = #tpu.dot_dimension_numbers<[1], [0], [0], [1], [0, 0, 1, 1], [], []>} : vector<8x4xf32>, vector<4x32xf32>, vector<8x32xf32> -> vector<8x32xf32>
    %cst_367 = arith.constant dense<0.000000e+00> : vector<8x64xf32>
    %363 = tpu.matmul %362, %9, %cst_367 {dimension_numbers = #tpu.dot_dimension_numbers<[1], [0], [0], [1], [0, 0, 1, 1], [], []>} : vector<8x32xf32>, vector<32x64xf32>, vector<8x64xf32> -> vector<8x64xf32>
    %c0_368 = arith.constant 0 : index
    %c3712 = arith.constant 3712 : index
    %364 = vector.load %arg10[%c0_368, %c3712] : memref<8x4096xf32, #tpu.memory_space<vmem>>, vector<8x64xf32>
    %365 = arith.addf %364, %363 : vector<8x64xf32>
    %c0_369 = arith.constant 0 : index
    %c3712_370 = arith.constant 3712 : index
    %366 = vector.load %arg10[%c0_369, %c3712_370] : memref<8x4096xf32, #tpu.memory_space<vmem>>, vector<8x64xf32>
    tpu.vector_store %arg10[%c0_369, %c3712_370], %365 {strides = array<i32>} : memref<8x4096xf32, #tpu.memory_space<vmem>>, vector<8x64xf32>,
    %c0_371 = arith.constant 0 : index
    %c3776 = arith.constant 3776 : index
    %367 = vector.load %arg10[%c0_371, %c3776] : memref<8x4096xf32, #tpu.memory_space<vmem>>, vector<8x64xf32>
    %368 = arith.addf %367, %363 : vector<8x64xf32>
    %c0_372 = arith.constant 0 : index
    %c3776_373 = arith.constant 3776 : index
    %369 = vector.load %arg10[%c0_372, %c3776_373] : memref<8x4096xf32, #tpu.memory_space<vmem>>, vector<8x64xf32>
    tpu.vector_store %arg10[%c0_372, %c3776_373], %368 {strides = array<i32>} : memref<8x4096xf32, #tpu.memory_space<vmem>>, vector<8x64xf32>,
    %c0_374 = arith.constant 0 : index
    %c0_375 = arith.constant 0 : index
    %c30 = arith.constant 30 : index
    %c0_376 = arith.constant 0 : index
    %370 = vector.load %arg2[%c0_374, %c0_375, %c30, %c0_376] : memref<1x4x32x32xf32, #tpu.memory_space<vmem>>, vector<1x4x1x32xf32>
    %371 = vector.shape_cast %370 : vector<1x4x1x32xf32> to vector<4x32xf32>
    %cst_377 = arith.constant 0.000000e+00 : f32
    %372 = vector.broadcast %cst_377 : f32 to vector<4x32xf32>
    %373 = arith.maximumf %371, %372 : vector<4x32xf32>
    %cst_378 = arith.constant dense<0.000000e+00> : vector<8x32xf32>
    %374 = tpu.matmul %8, %373, %cst_378 {dimension_numbers = #tpu.dot_dimension_numbers<[1], [0], [0], [1], [0, 0, 1, 1], [], []>} : vector<8x4xf32>, vector<4x32xf32>, vector<8x32xf32> -> vector<8x32xf32>
    %cst_379 = arith.constant dense<0.000000e+00> : vector<8x64xf32>
    %375 = tpu.matmul %374, %9, %cst_379 {dimension_numbers = #tpu.dot_dimension_numbers<[1], [0], [0], [1], [0, 0, 1, 1], [], []>} : vector<8x32xf32>, vector<32x64xf32>, vector<8x64xf32> -> vector<8x64xf32>
    %c0_380 = arith.constant 0 : index
    %c3840 = arith.constant 3840 : index
    %376 = vector.load %arg10[%c0_380, %c3840] : memref<8x4096xf32, #tpu.memory_space<vmem>>, vector<8x64xf32>
    %377 = arith.addf %376, %375 : vector<8x64xf32>
    %c0_381 = arith.constant 0 : index
    %c3840_382 = arith.constant 3840 : index
    %378 = vector.load %arg10[%c0_381, %c3840_382] : memref<8x4096xf32, #tpu.memory_space<vmem>>, vector<8x64xf32>
    tpu.vector_store %arg10[%c0_381, %c3840_382], %377 {strides = array<i32>} : memref<8x4096xf32, #tpu.memory_space<vmem>>, vector<8x64xf32>,
    %c0_383 = arith.constant 0 : index
    %c3904 = arith.constant 3904 : index
    %379 = vector.load %arg10[%c0_383, %c3904] : memref<8x4096xf32, #tpu.memory_space<vmem>>, vector<8x64xf32>
    %380 = arith.addf %379, %375 : vector<8x64xf32>
    %c0_384 = arith.constant 0 : index
    %c3904_385 = arith.constant 3904 : index
    %381 = vector.load %arg10[%c0_384, %c3904_385] : memref<8x4096xf32, #tpu.memory_space<vmem>>, vector<8x64xf32>
    tpu.vector_store %arg10[%c0_384, %c3904_385], %380 {strides = array<i32>} : memref<8x4096xf32, #tpu.memory_space<vmem>>, vector<8x64xf32>,
    %c0_386 = arith.constant 0 : index
    %c0_387 = arith.constant 0 : index
    %c31 = arith.constant 31 : index
    %c0_388 = arith.constant 0 : index
    %382 = vector.load %arg2[%c0_386, %c0_387, %c31, %c0_388] : memref<1x4x32x32xf32, #tpu.memory_space<vmem>>, vector<1x4x1x32xf32>
    %383 = vector.shape_cast %382 : vector<1x4x1x32xf32> to vector<4x32xf32>
    %cst_389 = arith.constant 0.000000e+00 : f32
    %384 = vector.broadcast %cst_389 : f32 to vector<4x32xf32>
    %385 = arith.maximumf %383, %384 : vector<4x32xf32>
    %cst_390 = arith.constant dense<0.000000e+00> : vector<8x32xf32>
    %386 = tpu.matmul %8, %385, %cst_390 {dimension_numbers = #tpu.dot_dimension_numbers<[1], [0], [0], [1], [0, 0, 1, 1], [], []>} : vector<8x4xf32>, vector<4x32xf32>, vector<8x32xf32> -> vector<8x32xf32>
    %cst_391 = arith.constant dense<0.000000e+00> : vector<8x64xf32>
    %387 = tpu.matmul %386, %9, %cst_391 {dimension_numbers = #tpu.dot_dimension_numbers<[1], [0], [0], [1], [0, 0, 1, 1], [], []>} : vector<8x32xf32>, vector<32x64xf32>, vector<8x64xf32> -> vector<8x64xf32>
    %c0_392 = arith.constant 0 : index
    %c3968 = arith.constant 3968 : index
    %388 = vector.load %arg10[%c0_392, %c3968] : memref<8x4096xf32, #tpu.memory_space<vmem>>, vector<8x64xf32>
    %389 = arith.addf %388, %387 : vector<8x64xf32>
    %c0_393 = arith.constant 0 : index
    %c3968_394 = arith.constant 3968 : index
    %390 = vector.load %arg10[%c0_393, %c3968_394] : memref<8x4096xf32, #tpu.memory_space<vmem>>, vector<8x64xf32>
    tpu.vector_store %arg10[%c0_393, %c3968_394], %389 {strides = array<i32>} : memref<8x4096xf32, #tpu.memory_space<vmem>>, vector<8x64xf32>,
    %c0_395 = arith.constant 0 : index
    %c4032 = arith.constant 4032 : index
    %391 = vector.load %arg10[%c0_395, %c4032] : memref<8x4096xf32, #tpu.memory_space<vmem>>, vector<8x64xf32>
    %392 = arith.addf %391, %387 : vector<8x64xf32>
    %c0_396 = arith.constant 0 : index
    %c4032_397 = arith.constant 4032 : index
    %393 = vector.load %arg10[%c0_396, %c4032_397] : memref<8x4096xf32, #tpu.memory_space<vmem>>, vector<8x64xf32>
    tpu.vector_store %arg10[%c0_396, %c4032_397], %392 {strides = array<i32>} : memref<8x4096xf32, #tpu.memory_space<vmem>>, vector<8x64xf32>,
    %c0_398 = arith.constant 0 : index
    %c0_399 = arith.constant 0 : index
    %394 = vector.load %arg10[%c0_398, %c0_399] : memref<8x4096xf32, #tpu.memory_space<vmem>>, vector<8x4096xf32>
    %cst_400 = arith.constant dense<0.000000e+00> : vector<8xf32>
    %395 = vector.multi_reduction <add>, %394, %cst_400 [1] : vector<8x4096xf32> to vector<8xf32>
    %396 = vector.shape_cast %395 : vector<8xf32> to vector<8x1xf32>
    %c0_401 = arith.constant 0 : index
    %c0_402 = arith.constant 0 : index
    %c0_403 = arith.constant 0 : index
    %c0_404 = arith.constant 0 : index
    %397 = vector.load %arg8[%c0_401, %c0_402, %c0_403, %c0_404] : memref<1x1x8x1xf32, #tpu.memory_space<vmem>>, vector<1x1x8x1xf32>
    %398 = vector.shape_cast %397 : vector<1x1x8x1xf32> to vector<8x1xf32>
    %399 = vector.shape_cast %396 : vector<8x1xf32> to vector<1x1x8x1xf32>
    tpu.vector_store %arg8[%c0_401, %c0_402, %c0_403, %c0_404], %399 {strides = array<i32>} : memref<1x1x8x1xf32, #tpu.memory_space<vmem>>, vector<1x1x8x1xf32>,
    %400 = arith.mulf %394, %394 : vector<8x4096xf32>
    %cst_405 = arith.constant dense<0.000000e+00> : vector<8xf32>
    %401 = vector.multi_reduction <add>, %400, %cst_405 [1] : vector<8x4096xf32> to vector<8xf32>
    %402 = vector.shape_cast %401 : vector<8xf32> to vector<8x1xf32>
    %c0_406 = arith.constant 0 : index
    %c0_407 = arith.constant 0 : index
    %c0_408 = arith.constant 0 : index
    %c0_409 = arith.constant 0 : index
    %403 = vector.load %arg9[%c0_406, %c0_407, %c0_408, %c0_409] : memref<1x1x8x1xf32, #tpu.memory_space<vmem>>, vector<1x1x8x1xf32>
    %404 = vector.shape_cast %403 : vector<1x1x8x1xf32> to vector<8x1xf32>
    %405 = vector.shape_cast %402 : vector<8x1xf32> to vector<1x1x8x1xf32>
    tpu.vector_store %arg9[%c0_406, %c0_407, %c0_408, %c0_409], %405 {strides = array<i32>} : memref<1x1x8x1xf32, #tpu.memory_space<vmem>>, vector<1x1x8x1xf32>,
    return
  }
  func.func @transform_0(%arg0: i32, %arg1: i32) -> (i32, i32, i32, i32) {
    %c0_i32 = arith.constant 0 : i32
    %c0_i32_0 = arith.constant 0 : i32
    %c0_i32_1 = arith.constant 0 : i32
    return %arg0, %c0_i32, %arg1, %c0_i32_0 : i32, i32, i32, i32
  }
  func.func @transform_1(%arg0: i32, %arg1: i32) -> (i32, i32, i32) {
    %c0_i32 = arith.constant 0 : i32
    %c0_i32_0 = arith.constant 0 : i32
    return %arg0, %c0_i32, %arg1 : i32, i32, i32
  }
  func.func @transform_2(%arg0: i32, %arg1: i32) -> (i32, i32) {
    %c0_i32 = arith.constant 0 : i32
    %c0_i32_0 = arith.constant 0 : i32
    %c0_i32_1 = arith.constant 0 : i32
    return %c0_i32, %c0_i32_0 : i32, i32
  }
  func.func @transform_3(%arg0: i32, %arg1: i32) -> (i32, i32) {
    %c0_i32 = arith.constant 0 : i32
    %c0_i32_0 = arith.constant 0 : i32
    %c0_i32_1 = arith.constant 0 : i32
    return %c0_i32, %c0_i32_0 : i32, i32
  }
  func.func @transform_4(%arg0: i32, %arg1: i32) -> (i32, i32) {
    %c0_i32 = arith.constant 0 : i32
    %c0_i32_0 = arith.constant 0 : i32
    %c0_i32_1 = arith.constant 0 : i32
    return %c0_i32, %c0_i32_0 : i32, i32
  }
  func.func @transform_5(%arg0: i32, %arg1: i32) -> (i32, i32) {
    %c0_i32 = arith.constant 0 : i32
    %c0_i32_0 = arith.constant 0 : i32
    %c0_i32_1 = arith.constant 0 : i32
    return %c0_i32, %c0_i32_0 : i32, i32
  }
  func.func @transform_6(%arg0: i32, %arg1: i32) -> (i32, i32, i32, i32) {
    %c0_i32 = arith.constant 0 : i32
    %c0_i32_0 = arith.constant 0 : i32
    %c0_i32_1 = arith.constant 0 : i32
    return %arg0, %arg1, %c0_i32, %c0_i32_0 : i32, i32, i32, i32
  }
  func.func @transform_7(%arg0: i32, %arg1: i32) -> (i32, i32, i32, i32) {
    %c0_i32 = arith.constant 0 : i32
    %c0_i32_0 = arith.constant 0 : i32
    %c0_i32_1 = arith.constant 0 : i32
    return %arg0, %arg1, %c0_i32, %c0_i32_0 : i32, i32, i32, i32
  }
}

</mosaic_0001>

<llo_original>
// kernel: tpu_custom_call.1
$region0: #{tpu_custom_call.1}
  #allocation0 [shape = 'u32[]', space=smem, size = 0x4, offset = 0x4, fixed_abs, tag = 'smem constant byte address 0x4 - core index']
  #allocation1 [shape = 'u32[144,128]{1,0:T(1,128)}', space=vmem, size = 0x12000, scoped, tag = 'internal scratch']
  #allocation2 [shape = 'f32[8,4096]{1,0:T(8,128)}', space=vmem, size = 0x20000, scoped, tag = 'scratch operand']
  %s0 = inlined_call_operand.hbm [shape: f32[2,4,32,32], index: 0, kind: input, shape index: {}]
  %s1 = inlined_call_operand.hbm [shape: f32[2,4,4096], index: 1, kind: input, shape index: {}]
  %s2 = inlined_call_operand.vmem [shape: f32[8,4], index: 2, kind: input, shape index: {}]
  %s3 = inlined_call_operand.vmem [shape: f32[8,4], index: 3, kind: input, shape index: {}]
  %s4 = inlined_call_operand.vmem [shape: f32[32,64], index: 4, kind: input, shape index: {}]
  %s5 = inlined_call_operand.vmem [shape: f32[8,1], index: 5, kind: input, shape index: {}]
  %s6 = inlined_call_operand.vmem [shape: f32[2,1,8,1], index: 6, kind: output, shape index: {0}]
  %s7 = inlined_call_operand.vmem [shape: f32[2,1,8,1], index: 7, kind: output, shape index: {1}]
  %8 = xla_tuple %s6, %s7
  %s9 = sld [smem:[#allocation0]]
  $region73: #{tpu_custom_call.1} parent=0
    _
  %s11 = ssub.s32 1, %s9
  %s12 = scalar_select 0, %s11, %s9
  $region1: #{tpu_custom_call.1} parent=0
    #allocation3 [shape = 'u8[131072]{0}', space=vmem, size = 0x20000, scoped, tag = 'input window, operand 0']
    #allocation4 [shape = 's32[2]{0}', space=sflag, size = 0x8, scoped, tag = 'scoped memory for tpu_custom_call.1']
    #allocation5 [shape = 'u8[131072]{0}', space=vmem, size = 0x20000, scoped, tag = 'input window, operand 1']
    #allocation6 [shape = 's32[2]{0}', space=sflag, size = 0x8, scoped, tag = 'scoped memory for tpu_custom_call.1']
    %13 = vsyncpa [#allocation4], 0
    %s14 = scalar_lea.sflag [#allocation4], 1
    %15 = vsyncpa %s14, 0
    %16 = vsyncpa [#allocation6], 0
    %s17 = scalar_lea.sflag [#allocation6], 1
    %18 = vsyncpa %s17, 0
    loop: start=0, step=1, limit=4
    $region2: #{tpu_custom_call.1} parent=1 // loop_pre_header
      _
    $region3: #{tpu_custom_call.1} parent=1 // loop_header
      %s20 = sphi 0, %s24
      %p21 = scmp.ge.s32.totalorder %s20, 4
      %s27 = sphi 0, %s39
      %s28 = sphi 0, %s35
      %s29 = sphi 0, %s27
      %s30 = sphi 0, %s28
      %s31 = sphi 0, %s29
      %s32 = sphi 0, %s30
      %s44 = sphi 0, %s46
      %s47 = sphi 0, %s44
      %s48 = sphi 0, %s47
      %s64 = sphi 0, %s48
      %s72 = sphi 0, %s74
      %s75 = sphi 0, %s72
      %s76 = sphi 0, %s75
      %s92 = sphi 0, %s76
      %s96 = sphi 0, %s96
      %s98 = sphi 0, %s96
      %s99 = sphi 0, %s98
      %s113 = sphi 0, %s99
      %s117 = sphi 0, %s117
      %s119 = sphi 0, %s117
      %s120 = sphi 0, %s119
      %s134 = sphi 0, %s120
      %s138 = sphi 0, %s138
      %s140 = sphi 0, %s138
      %s141 = sphi 0, %s140
      %s155 = sphi 0, %s141
      %s159 = sphi 0, %s159
      %s161 = sphi 0, %s159
      %s162 = sphi 0, %s161
      %s176 = sphi 0, %s162
      %s184 = sphi 0, %s186
      %s187 = sphi 0, %s184
      %s188 = sphi 0, %s187
      %s204 = sphi 0, %s188
      %s212 = sphi 0, %s214
      %s215 = sphi 0, %s212
      %s216 = sphi 0, %s215
      %s232 = sphi 0, %s216
    $region4: #{tpu_custom_call.1} parent=1 // loop_header_branch
      %23 = sbr.rel (%p21) target = $region8
    $region5: #{tpu_custom_call.1} parent=1 // loop_body
      %s25 = ssub.s32 %s20, 1
      %s26 = ssub.s32 %s20, 2
      %s33 = sadd.s32 1, %s28
      %p34 = scmp.ge.s32.totalorder %s33, 1
      %s35 = scalar_select %p34, 0, %s33
      %s36 = sadd.s32 1, %s27
      %s37 = scalar_select %p34, %s36, %s27
      %p38 = scmp.ge.s32.totalorder %s37, 2
      %s39 = scalar_select %p38, 0, %s37
      %s40 = ssub.s32 %s27, %s39
      %s41 = ssub.s32 %s28, %s35
      %s42 = sor.u32 %s40, %s41
      %p43 = scmp.eq.s32.totalorder %s42, 0
      %s45 = sadd.s32 %s44, 1
      %s46 = scalar_select %p43, %s44, %s45
      %p49 = pneg %p43
      %p50 = scmp.eq.s32.totalorder %s20, 1
      %p51 = por %p49, %p50
      %p52 = scmp.ne.s32.totalorder %s44, %s47
      %p53 = scmp.eq.s32.totalorder %s20, 0
      %p54 = por %p52, %p53
      %p55 = scmp.ne.s32.totalorder %s44, %s47
      %p56 = scmp.eq.s32.totalorder %s25, 1
      %p57 = por %p55, %p56
      %p58 = scmp.ne.s32.totalorder %s47, %s48
      %p59 = scmp.eq.s32.totalorder %s25, 0
      %p60 = por %p58, %p59
      %p61 = scmp.ne.s32.totalorder %s47, %s48
      %p62 = scmp.eq.s32.totalorder %s26, 1
      %p63 = por %p61, %p62
      %p65 = scmp.ne.s32.totalorder %s48, %s64
      %p66 = scmp.eq.s32.totalorder %s26, 0
      %p67 = por %p65, %p66
      %s68 = ssub.s32 %s27, %s39
      %s69 = ssub.s32 %s28, %s35
      %s70 = sor.u32 %s68, %s69
      %p71 = scmp.eq.s32.totalorder %s70, 0
      %s73 = sadd.s32 %s72, 1
      %s74 = scalar_select %p71, %s72, %s73
      %p77 = pneg %p71
      %p78 = scmp.eq.s32.totalorder %s20, 1
      %p79 = por %p77, %p78
      %p80 = scmp.ne.s32.totalorder %s72, %s75
      %p81 = scmp.eq.s32.totalorder %s20, 0
      %p82 = por %p80, %p81
      %p83 = scmp.ne.s32.totalorder %s72, %s75
      %p84 = scmp.eq.s32.totalorder %s25, 1
      %p85 = por %p83, %p84
      %p86 = scmp.ne.s32.totalorder %s75, %s76
      %p87 = scmp.eq.s32.totalorder %s25, 0
      %p88 = por %p86, %p87
      %p89 = scmp.ne.s32.totalorder %s75, %s76
      %p90 = scmp.eq.s32.totalorder %s26, 1
      %p91 = por %p89, %p90
      %p93 = scmp.ne.s32.totalorder %s76, %s92
      %p94 = scmp.eq.s32.totalorder %s26, 0
      %p95 = por %p93, %p94
      %s97 = sadd.s32 %s96, 1
      %p100 = scmp.eq.s32.totalorder %s20, 1
      %p101 = scmp.ne.s32.totalorder %s96, %s98
      %p102 = scmp.eq.s32.totalorder %s20, 0
      %p103 = por %p101, %p102
      %p104 = scmp.ne.s32.totalorder %s96, %s98
      %p105 = scmp.eq.s32.totalorder %s25, 1
      %p106 = por %p104, %p105
      %p107 = scmp.ne.s32.totalorder %s98, %s99
      %p108 = scmp.eq.s32.totalorder %s25, 0
      %p109 = por %p107, %p108
      %p110 = scmp.ne.s32.totalorder %s98, %s99
      %p111 = scmp.eq.s32.totalorder %s26, 1
      %p112 = por %p110, %p111
      %p114 = scmp.ne.s32.totalorder %s99, %s113
      %p115 = scmp.eq.s32.totalorder %s26, 0
      %p116 = por %p114, %p115
      %s118 = sadd.s32 %s117, 1
      %p121 = scmp.eq.s32.totalorder %s20, 1
      %p122 = scmp.ne.s32.totalorder %s117, %s119
      %p123 = scmp.eq.s32.totalorder %s20, 0
      %p124 = por %p122, %p123
      %p125 = scmp.ne.s32.totalorder %s117, %s119
      %p126 = scmp.eq.s32.totalorder %s25, 1
      %p127 = por %p125, %p126
      %p128 = scmp.ne.s32.totalorder %s119, %s120
      %p129 = scmp.eq.s32.totalorder %s25, 0
      %p130 = por %p128, %p129
      %p131 = scmp.ne.s32.totalorder %s119, %s120
      %p132 = scmp.eq.s32.totalorder %s26, 1
      %p133 = por %p131, %p132
      %p135 = scmp.ne.s32.totalorder %s120, %s134
      %p136 = scmp.eq.s32.totalorder %s26, 0
      %p137 = por %p135, %p136
      %s139 = sadd.s32 %s138, 1
      %p142 = scmp.eq.s32.totalorder %s20, 1
      %p143 = scmp.ne.s32.totalorder %s138, %s140
      %p144 = scmp.eq.s32.totalorder %s20, 0
      %p145 = por %p143, %p144
      %p146 = scmp.ne.s32.totalorder %s138, %s140
      %p147 = scmp.eq.s32.totalorder %s25, 1
      %p148 = por %p146, %p147
      %p149 = scmp.ne.s32.totalorder %s140, %s141
      %p150 = scmp.eq.s32.totalorder %s25, 0
      %p151 = por %p149, %p150
      %p152 = scmp.ne.s32.totalorder %s140, %s141
      %p153 = scmp.eq.s32.totalorder %s26, 1
      %p154 = por %p152, %p153
      %p156 = scmp.ne.s32.totalorder %s141, %s155
      %p157 = scmp.eq.s32.totalorder %s26, 0
      %p158 = por %p156, %p157
      %s160 = sadd.s32 %s159, 1
      %p163 = scmp.eq.s32.totalorder %s20, 1
      %p164 = scmp.ne.s32.totalorder %s159, %s161
      %p165 = scmp.eq.s32.totalorder %s20, 0
      %p166 = por %p164, %p165
      %p167 = scmp.ne.s32.totalorder %s159, %s161
      %p168 = scmp.eq.s32.totalorder %s25, 1
      %p169 = por %p167, %p168
      %p170 = scmp.ne.s32.totalorder %s161, %s162
      %p171 = scmp.eq.s32.totalorder %s25, 0
      %p172 = por %p170, %p171
      %p173 = scmp.ne.s32.totalorder %s161, %s162
      %p174 = scmp.eq.s32.totalorder %s26, 1
      %p175 = por %p173, %p174
      %p177 = scmp.ne.s32.totalorder %s162, %s176
      %p178 = scmp.eq.s32.totalorder %s26, 0
      %p179 = por %p177, %p178
      %s180 = ssub.s32 %s27, %s39
      %s181 = ssub.s32 %s28, %s35
      %s182 = sor.u32 %s180, %s181
      %p183 = scmp.eq.s32.totalorder %s182, 0
      %s185 = sadd.s32 %s184, 1
      %s186 = scalar_select %p183, %s184, %s185
      %p189 = pneg %p183
      %p190 = scmp.eq.s32.totalorder %s20, 1
      %p191 = por %p189, %p190
      %p192 = scmp.ne.s32.totalorder %s184, %s187
      %p193 = scmp.eq.s32.totalorder %s20, 0
      %p194 = por %p192, %p193
      %p195 = scmp.ne.s32.totalorder %s184, %s187
      %p196 = scmp.eq.s32.totalorder %s25, 1
      %p197 = por %p195, %p196
      %p198 = scmp.ne.s32.totalorder %s187, %s188
      %p199 = scmp.eq.s32.totalorder %s25, 0
      %p200 = por %p198, %p199
      %p201 = scmp.ne.s32.totalorder %s187, %s188
      %p202 = scmp.eq.s32.totalorder %s26, 1
      %p203 = por %p201, %p202
      %p205 = scmp.ne.s32.totalorder %s188, %s204
      %p206 = scmp.eq.s32.totalorder %s26, 0
      %p207 = por %p205, %p206
      %s208 = ssub.s32 %s27, %s39
      %s209 = ssub.s32 %s28, %s35
      %s210 = sor.u32 %s208, %s209
      %p211 = scmp.eq.s32.totalorder %s210, 0
      %s213 = sadd.s32 %s212, 1
      %s214 = scalar_select %p211, %s212, %s213
      %p217 = pneg %p211
      %p218 = scmp.eq.s32.totalorder %s20, 1
      %p219 = por %p217, %p218
      %p220 = scmp.ne.s32.totalorder %s212, %s215
      %p221 = scmp.eq.s32.totalorder %s20, 0
      %p222 = por %p220, %p221
      %p223 = scmp.ne.s32.totalorder %s212, %s215
      %p224 = scmp.eq.s32.totalorder %s25, 1
      %p225 = por %p223, %p224
      %p226 = scmp.ne.s32.totalorder %s215, %s216
      %p227 = scmp.eq.s32.totalorder %s25, 0
      %p228 = por %p226, %p227
      %p229 = scmp.ne.s32.totalorder %s215, %s216
      %p230 = scmp.eq.s32.totalorder %s26, 1
      %p231 = por %p229, %p230
      %p233 = scmp.ne.s32.totalorder %s216, %s232
      %p234 = scmp.eq.s32.totalorder %s26, 0
      %p235 = por %p233, %p234
      %p236 = scmp.le.s32.totalorder 1, %s20
      %p237 = scmp.lt.s32.totalorder %s20, 3
      %p238 = pnand %p236, %p237
      %p239 = pneg %p238
      // Predicated region
      $region9: #{tpu_custom_call.1} parent=5 // pred_check
        _
      $region10: #{tpu_custom_call.1} parent=5 // pred_check_branch
        %241 = sbr.rel (%p238) target = $region12
      $region11: #{tpu_custom_call.1} parent=5 // pred_region
        %s242 = ssub.s32 %s20, 1
        // Predicated region
        $region13: #{tpu_custom_call.1} parent=11 // pred_check
          %p243 = pneg %p109
        $region14: #{tpu_custom_call.1} parent=11 // pred_check_branch
          %245 = sbr.rel (%p243) target = $region16
        $region15: #{tpu_custom_call.1} parent=11 // pred_region
          _
        $region16: #{tpu_custom_call.1} parent=11 // pred_fallthru
          _
        // Predicated region
        $region17: #{tpu_custom_call.1} parent=11 // pred_check
          %p246 = pneg %p130
        $region18: #{tpu_custom_call.1} parent=11 // pred_check_branch
          %248 = sbr.rel (%p246) target = $region20
        $region19: #{tpu_custom_call.1} parent=11 // pred_region
          _
        $region20: #{tpu_custom_call.1} parent=11 // pred_fallthru
          _
        // Predicated region
        $region21: #{tpu_custom_call.1} parent=11 // pred_check
          %p249 = pneg %p151
        $region22: #{tpu_custom_call.1} parent=11 // pred_check_branch
          %251 = sbr.rel (%p249) target = $region24
        $region23: #{tpu_custom_call.1} parent=11 // pred_region
          _
        $region24: #{tpu_custom_call.1} parent=11 // pred_fallthru
          _
        // Predicated region
        $region25: #{tpu_custom_call.1} parent=11 // pred_check
          %p252 = pneg %p172
        $region26: #{tpu_custom_call.1} parent=11 // pred_check_branch
          %254 = sbr.rel (%p252) target = $region28
        $region27: #{tpu_custom_call.1} parent=11 // pred_region
          _
        $region28: #{tpu_custom_call.1} parent=11 // pred_fallthru
          _
      $region12: #{tpu_custom_call.1} parent=5 // pred_fallthru
        _
      %p255 = scmp.lt.s32.totalorder %s20, 2
      // Predicated region
      $region29: #{tpu_custom_call.1} parent=5 // pred_check
        %p256 = pneg %p255
      $region30: #{tpu_custom_call.1} parent=5 // pred_check_branch
        %258 = sbr.rel (%p256) target = $region32
      $region31: #{tpu_custom_call.1} parent=5 // pred_region
        // Predicated region
        $region33: #{tpu_custom_call.1} parent=31 // pred_check
          %p259 = pneg %p54
        $region34: #{tpu_custom_call.1} parent=31 // pred_check_branch
          %261 = sbr.rel (%p259) target = $region36
        $region35: #{tpu_custom_call.1} parent=31 // pred_region
          %s262 = sand.u32 %s44, 1
          %s263 = scalar_lea.sflag [#allocation4], %s262
          %s264 = sand.u32 %s44, 1
          %s265 = smul.addr %s264, 128
          %s266 = scalar_lea.vmem [#allocation3], %s265
          %s267 = smul.u32 4, %s28
          %s269 = ssub.s32 2048, 2048
          %270 = vsyncadd %s263, %s269
          %s271 = smul.addr %s27, 16
          %s272 = sadd.s32 %s267, %s271
          %s273 = smul.addr %s272, 128
          %s274 = scalar_lea.hbm %s0, %s273
          %s275 = sshll.u32 %s266, 4
          %s276 = int_to_ptr.vmem [resolvable:$true] %s275
          %281 = dma.hbm_to_vmem [thread:$0]  %s274, 2048, %s276, %s263, 128, 128, 8
        $region36: #{tpu_custom_call.1} parent=31 // pred_fallthru
          _
        // Predicated region
        $region37: #{tpu_custom_call.1} parent=31 // pred_check
          %p282 = pneg %p82
        $region38: #{tpu_custom_call.1} parent=31 // pred_check_branch
          %284 = sbr.rel (%p282) target = $region40
        $region39: #{tpu_custom_call.1} parent=31 // pred_region
          %s285 = sand.u32 %s72, 1
          %s286 = scalar_lea.sflag [#allocation6], %s285
          %s287 = sand.u32 %s72, 1
          %s288 = smul.addr %s287, 128
          %s289 = scalar_lea.vmem [#allocation5], %s288
          %s290 = smul.u32 32, %s28
          %s292 = ssub.s32 2048, 2048
          %293 = vsyncadd %s286, %s292
          %s294 = smul.addr %s27, 32
          %s295 = sadd.s32 %s290, %s294
          %s296 = smul.addr %s295, 64
          %s297 = scalar_lea.hbm %s1, %s296
          %s299 = sshll.u32 %s289, 4
          %s300 = int_to_ptr.vmem [resolvable:$true] %s299
          %302 = dma.hbm_to_vmem [thread:$0]  %s297, 2048, %s300, %s286
        $region40: #{tpu_custom_call.1} parent=31 // pred_fallthru
          _
      $region32: #{tpu_custom_call.1} parent=5 // pred_fallthru
        _
      %p303 = scmp.le.s32.totalorder 1, %s20
      %p304 = scmp.lt.s32.totalorder %s20, 3
      %p305 = pnand %p303, %p304
      %p306 = pneg %p305
      // Predicated region
      $region41: #{tpu_custom_call.1} parent=5 // pred_check
        _
      $region42: #{tpu_custom_call.1} parent=5 // pred_check_branch
        %308 = sbr.rel (%p305) target = $region44
      $region43: #{tpu_custom_call.1} parent=5 // pred_region
        %s309 = ssub.s32 %s20, 1
        %s310 = sand.u32 %s47, 1
        %s311 = scalar_lea.sflag [#allocation4], %s310
        %s312 = sand.u32 %s47, 1
        %s313 = smul.addr %s312, 128
        %s314 = scalar_lea.vmem [#allocation3], %s313
        // Predicated region
        $region45: #{tpu_custom_call.1} parent=43 // pred_check
          %p315 = pneg %p60
        $region46: #{tpu_custom_call.1} parent=43 // pred_check_branch
          %317 = sbr.rel (%p315) target = $region48
        $region47: #{tpu_custom_call.1} parent=43 // pred_region
          %318 = dma.done %s311, 2048
        $region48: #{tpu_custom_call.1} parent=43 // pred_fallthru
          _
        %s319 = sand.u32 %s75, 1
        %s320 = scalar_lea.sflag [#allocation6], %s319
        %s321 = sand.u32 %s75, 1
        %s322 = smul.addr %s321, 128
        %s323 = scalar_lea.vmem [#allocation5], %s322
        // Predicated region
        $region49: #{tpu_custom_call.1} parent=43 // pred_check
          %p324 = pneg %p88
        $region50: #{tpu_custom_call.1} parent=43 // pred_check_branch
          %326 = sbr.rel (%p324) target = $region52
        $region51: #{tpu_custom_call.1} parent=43 // pred_region
          %327 = dma.done %s320, 2048
        $region52: #{tpu_custom_call.1} parent=43 // pred_fallthru
          _
        %s328 = sand.u32 %s47, 1
        %s329 = scalar_lea.sflag [#allocation4], %s328
        %s330 = sand.u32 %s47, 1
        %s331 = smul.addr %s330, 128
        %s332 = scalar_lea.vmem [#allocation3], %s331
        %p333 = pneg %p60
        %p334 = pneg %p57
        %s335 = sand.u32 %s75, 1
        %s336 = scalar_lea.sflag [#allocation6], %s335
        %s337 = sand.u32 %s75, 1
        %s338 = smul.addr %s337, 128
        %s339 = scalar_lea.vmem [#allocation5], %s338
        %p340 = pneg %p88
        %p341 = pneg %p85
        %p342 = pneg %p109
        %p343 = pneg %p106
        %p344 = pneg %p130
        %p345 = pneg %p127
        %p346 = pneg %p151
        %p347 = pneg %p148
        %p348 = pneg %p172
        %p349 = pneg %p169
        %p350 = pneg %p200
        %p351 = pneg %p197
        %p352 = scmp.lt.s32.totalorder %s29, 1
        %s353 = scalar_select %p352, %s29, 1
        %p354 = scmp.lt.s32.totalorder %s30, 0
        %s355 = scalar_select %p354, %s30, 0
        %s356 = sadd.s32 %s355, %s353
        %s357 = smul.addr %s356, 8
        %s358 = scalar_lea.vmem %s6, %s357
        %p359 = pneg %p228
        %p360 = pneg %p225
        %p361 = scmp.lt.s32.totalorder %s29, 1
        %s362 = scalar_select %p361, %s29, 1
        %p363 = scmp.lt.s32.totalorder %s30, 0
        %s364 = scalar_select %p363, %s30, 0
        %s365 = sadd.s32 %s364, %s362
        %s366 = smul.addr %s365, 8
        %s367 = scalar_lea.vmem %s7, %s366
        %s368 = smul.u32 4, %s30
        %s369 = smul.u32 32, %s30
        %p370 = scmp.lt.s32.totalorder %s29, 1
        %s371 = scalar_select %p370, %s29, 1
        %p372 = scmp.lt.s32.totalorder %s30, 0
        %s373 = scalar_select %p372, %s30, 0
        %s374 = sadd.s32 %s373, %s371
        %s375 = smul.addr %s374, 8
        %s376 = scalar_lea.vmem %s6, %s375
        %p377 = scmp.lt.s32.totalorder %s29, 1
        %s378 = scalar_select %p377, %s29, 1
        %p379 = scmp.lt.s32.totalorder %s30, 0
        %s380 = scalar_select %p379, %s30, 0
        %s381 = sadd.s32 %s380, %s378
        %s382 = smul.addr %s381, 8
        %s383 = scalar_lea.vmem %s7, %s382
        %v384 = vld [vmem:[%s3] sm:$0xff]
        %v385 = vld [vmem:[%s323] sm:$0xff]
        %v386 = vld [vmem:[%s323 + $0x8] sm:$0xff]
        %v387 = vld [vmem:[%s323 + $0x10] sm:$0xff]
        %v388 = vld [vmem:[%s323 + $0x18] sm:$0xff]
        %v389 = vld [vmem:[%s323 + $0x20] sm:$0xff]
        %v390 = vld [vmem:[%s323 + $0x28] sm:$0xff]
        %v391 = vld [vmem:[%s323 + $0x30] sm:$0xff]
        %v392 = vld [vmem:[%s323 + $0x38] sm:$0xff]
        %v393 = vld [vmem:[%s323 + $0x40] sm:$0xff]
        %v394 = vld [vmem:[%s323 + $0x48] sm:$0xff]
        %v395 = vld [vmem:[%s323 + $0x50] sm:$0xff]
        %v396 = vld [vmem:[%s323 + $0x58] sm:$0xff]
        %v397 = vld [vmem:[%s323 + $0x60] sm:$0xff]
        %v398 = vld [vmem:[%s323 + $0x68] sm:$0xff]
        %v399 = vld [vmem:[%s323 + $0x70] sm:$0xff]
        %v400 = vld [vmem:[%s323 + $0x78] sm:$0xff]
        %v401 = vld [vmem:[%s5] sm:$0xff]
        %403 = vset.pattern.permute.xlu0 0
        %404 = vperm.xlu0 %403, %v401
        %v405 = vpop.permute.xlu0 %404
        %v423 = vcombine.high %v385, %v385
        %v424 = vcombine.high %v386, %v386
        %v425 = vcombine.high %v387, %v387
        %v426 = vcombine.high %v388, %v388
        %v427 = vcombine.high %v389, %v389
        %v428 = vcombine.high %v390, %v390
        %v429 = vcombine.high %v391, %v391
        %v430 = vcombine.high %v392, %v392
        %v431 = vcombine.high %v393, %v393
        %v432 = vcombine.high %v394, %v394
        %v433 = vcombine.high %v395, %v395
        %v434 = vcombine.high %v396, %v396
        %v435 = vcombine.high %v397, %v397
        %v436 = vcombine.high %v398, %v398
        %v437 = vcombine.high %v399, %v399
        %v438 = vcombine.high %v400, %v400
        %vm439 = vcmask 31744
        %v441 = vsel %vm439, %v384, 0
        %vm443 = vcmask 1043456
        %v444 = vsel %vm443, %v385, 0
        %v446 = vsel %vm443, %v423, 0
        %v448 = vsel %vm443, %v386, 0
        %v450 = vsel %vm443, %v424, 0
        %v452 = vsel %vm443, %v387, 0
        %v454 = vsel %vm443, %v425, 0
        %v456 = vsel %vm443, %v388, 0
        %v458 = vsel %vm443, %v426, 0
        %v460 = vsel %vm443, %v389, 0
        %v462 = vsel %vm443, %v427, 0
        %v464 = vsel %vm443, %v390, 0
        %v466 = vsel %vm443, %v428, 0
        %v468 = vsel %vm443, %v391, 0
        %v470 = vsel %vm443, %v429, 0
        %v472 = vsel %vm443, %v392, 0
        %v474 = vsel %vm443, %v430, 0
        %v476 = vsel %vm443, %v393, 0
        %v478 = vsel %vm443, %v431, 0
        %v480 = vsel %vm443, %v394, 0
        %v482 = vsel %vm443, %v432, 0
        %v484 = vsel %vm443, %v395, 0
        %v486 = vsel %vm443, %v433, 0
        %v488 = vsel %vm443, %v396, 0
        %v490 = vsel %vm443, %v434, 0
        %v492 = vsel %vm443, %v397, 0
        %v494 = vsel %vm443, %v435, 0
        %v496 = vsel %vm443, %v398, 0
        %v498 = vsel %vm443, %v436, 0
        %v500 = vsel %vm443, %v399, 0
        %v502 = vsel %vm443, %v437, 0
        %v504 = vsel %vm443, %v400, 0
        %v506 = vsel %vm443, %v438, 0
        %508 = vmatprep.subr.mxu0 %v446
        %509 = vmatpush1.msra.mxu0 %v444
        %510 = vmatprep.subr.mxu0 0.0
        %511 = vmatpush1.msra.mxu0 0.0
        %512 = vmatprep.subr.mxu0 0.0
        %513 = vmatpush1.msra.mxu0 0.0
        %514 = vmatprep.subr.mxu0 0.0
        %515 = vmatpush1.msra.mxu0 0.0
        %516 = vmatprep.subr.mxu0 0.0
        %517 = vmatpush1.msra.mxu0 0.0
        %518 = vmatprep.subr.mxu0 0.0
        %519 = vmatpush1.msra.mxu0 0.0
        %520 = vmatprep.subr.mxu0 0.0
        %521 = vmatpush1.msra.mxu0 0.0
        %522 = vmatprep.subr.mxu0 0.0
        %523 = vmatpush1.msra.mxu0 0.0
        %524 = vmatprep.subr.mxu0 0.0
        %525 = vmatpush1.msra.mxu0 0.0
        %526 = vmatprep.subr.mxu0 0.0
        %527 = vmatpush1.msra.mxu0 0.0
        %528 = vmatprep.subr.mxu0 0.0
        %529 = vmatpush1.msra.mxu0 0.0
        %530 = vmatprep.subr.mxu0 0.0
        %531 = vmatpush1.msra.mxu0 0.0
        %532 = vmatprep.subr.mxu0 0.0
        %533 = vmatpush1.msra.mxu0 0.0
        %534 = vmatprep.subr.mxu0 0.0
        %535 = vmatpush1.msra.mxu0 0.0
        %536 = vmatprep.subr.mxu0 0.0
        %537 = vmatpush1.msra.mxu0 0.0
        %538 = vmatprep.subr.mxu0 0.0
        %539 = vmatpush1.msra.mxu0 0.0
        %540 = vmatprep.subr.mxu0 0.0
        %541 = vmatpush1.msra.mxu0 0.0
        %542 = vmatprep.subr.mxu0 0.0
        %543 = vmatpush1.msra.mxu0 0.0
        %544 = vmatprep.subr.mxu0 0.0
        %545 = vmatpush1.msra.mxu0 0.0
        %546 = vmatprep.subr.mxu0 0.0
        %547 = vmatpush1.msra.mxu0 0.0
        %548 = vmatprep.subr.mxu0 0.0
        %549 = vmatpush1.msra.mxu0 0.0
        %550 = vmatprep.subr.mxu0 0.0
        %551 = vmatpush1.msra.mxu0 0.0
        %552 = vmatprep.subr.mxu0 0.0
        %553 = vmatpush1.msra.mxu0 0.0
        %554 = vmatprep.subr.mxu0 0.0
        %555 = vmatpush1.msra.mxu0 0.0
        %556 = vmatprep.subr.mxu0 0.0
        %557 = vmatpush1.msra.mxu0 0.0
        %558 = vmatprep.subr.mxu0 0.0
        %559 = vmatpush1.msra.mxu0 0.0
        %560 = vmatprep.subr.mxu0 0.0
        %561 = vmatpush1.msra.mxu0 0.0
        %562 = vmatprep.subr.mxu0 0.0
        %563 = vmatpush1.msra.mxu0 0.0
        %564 = vmatprep.subr.mxu0 0.0
        %565 = vmatpush1.msra.mxu0 0.0
        %566 = vmatprep.subr.mxu0 0.0
        %567 = vmatpush1.msra.mxu0 0.0
        %568 = vmatprep.subr.mxu0 0.0
        %569 = vmatpush1.msra.mxu0 0.0
        %570 = vmatprep.subr.mxu0 0.0
        %571 = vmatpush1.msra.mxu0 0.0
        %572 = vmatprep.mubr.f32.mxu0 0.0
        %573 = vmatmul.mubr.f32.gmra.mrb[0].mxu0 %v441
        %v574 = vpop.f32.mrb[0].mxu0
        %v575 = vadd.f32 %v405, %v574
        %v576 = vpop.f32.mrb[0].mxu0
        %v577 = vadd.f32 %v405, %v576
        %578 = vdwg.mxu0
        %579 = vmatprep.subr.mxu0 %v450
        %580 = vmatpush1.msra.mxu0 %v448
        %581 = vmatprep.subr.mxu0 0.0
        %582 = vmatpush1.msra.mxu0 0.0
        %583 = vmatprep.subr.mxu0 0.0
        %584 = vmatpush1.msra.mxu0 0.0
        %585 = vmatprep.subr.mxu0 0.0
        %586 = vmatpush1.msra.mxu0 0.0
        %587 = vmatprep.subr.mxu0 0.0
        %588 = vmatpush1.msra.mxu0 0.0
        %589 = vmatprep.subr.mxu0 0.0
        %590 = vmatpush1.msra.mxu0 0.0
        %591 = vmatprep.subr.mxu0 0.0
        %592 = vmatpush1.msra.mxu0 0.0
        %593 = vmatprep.subr.mxu0 0.0
        %594 = vmatpush1.msra.mxu0 0.0
        %595 = vmatprep.subr.mxu0 0.0
        %596 = vmatpush1.msra.mxu0 0.0
        %597 = vmatprep.subr.mxu0 0.0
        %598 = vmatpush1.msra.mxu0 0.0
        %599 = vmatprep.subr.mxu0 0.0
        %600 = vmatpush1.msra.mxu0 0.0
        %601 = vmatprep.subr.mxu0 0.0
        %602 = vmatpush1.msra.mxu0 0.0
        %603 = vmatprep.subr.mxu0 0.0
        %604 = vmatpush1.msra.mxu0 0.0
        %605 = vmatprep.subr.mxu0 0.0
        %606 = vmatpush1.msra.mxu0 0.0
        %607 = vmatprep.subr.mxu0 0.0
        %608 = vmatpush1.msra.mxu0 0.0
        %609 = vmatprep.subr.mxu0 0.0
        %610 = vmatpush1.msra.mxu0 0.0
        %611 = vmatprep.subr.mxu0 0.0
        %612 = vmatpush1.msra.mxu0 0.0
        %613 = vmatprep.subr.mxu0 0.0
        %614 = vmatpush1.msra.mxu0 0.0
        %615 = vmatprep.subr.mxu0 0.0
        %616 = vmatpush1.msra.mxu0 0.0
        %617 = vmatprep.subr.mxu0 0.0
        %618 = vmatpush1.msra.mxu0 0.0
        %619 = vmatprep.subr.mxu0 0.0
        %620 = vmatpush1.msra.mxu0 0.0
        %621 = vmatprep.subr.mxu0 0.0
        %622 = vmatpush1.msra.mxu0 0.0
        %623 = vmatprep.subr.mxu0 0.0
        %624 = vmatpush1.msra.mxu0 0.0
        %625 = vmatprep.subr.mxu0 0.0
        %626 = vmatpush1.msra.mxu0 0.0
        %627 = vmatprep.subr.mxu0 0.0
        %628 = vmatpush1.msra.mxu0 0.0
        %629 = vmatprep.subr.mxu0 0.0
        %630 = vmatpush1.msra.mxu0 0.0
        %631 = vmatprep.subr.mxu0 0.0
        %632 = vmatpush1.msra.mxu0 0.0
        %633 = vmatprep.subr.mxu0 0.0
        %634 = vmatpush1.msra.mxu0 0.0
        %635 = vmatprep.subr.mxu0 0.0
        %636 = vmatpush1.msra.mxu0 0.0
        %637 = vmatprep.subr.mxu0 0.0
        %638 = vmatpush1.msra.mxu0 0.0
        %639 = vmatprep.subr.mxu0 0.0
        %640 = vmatpush1.msra.mxu0 0.0
        %641 = vmatprep.subr.mxu0 0.0
        %642 = vmatpush1.msra.mxu0 0.0
        %643 = vmatprep.mubr.f32.mxu0 0.0
        %644 = vmatmul.mubr.f32.gmra.mrb[0].mxu0 %v441
        %v645 = vpop.f32.mrb[0].mxu0
        %v646 = vadd.f32 %v405, %v645
        %v647 = vpop.f32.mrb[0].mxu0
        %v648 = vadd.f32 %v405, %v647
        %649 = vdwg.mxu0
        %650 = vmatprep.subr.mxu0 %v454
        %651 = vmatpush1.msra.mxu0 %v452
        %652 = vmatprep.subr.mxu0 0.0
        %653 = vmatpush1.msra.mxu0 0.0
        %654 = vmatprep.subr.mxu0 0.0
        %655 = vmatpush1.msra.mxu0 0.0
        %656 = vmatprep.subr.mxu0 0.0
        %657 = vmatpush1.msra.mxu0 0.0
        %658 = vmatprep.subr.mxu0 0.0
        %659 = vmatpush1.msra.mxu0 0.0
        %660 = vmatprep.subr.mxu0 0.0
        %661 = vmatpush1.msra.mxu0 0.0
        %662 = vmatprep.subr.mxu0 0.0
        %663 = vmatpush1.msra.mxu0 0.0
        %664 = vmatprep.subr.mxu0 0.0
        %665 = vmatpush1.msra.mxu0 0.0
        %666 = vmatprep.subr.mxu0 0.0
        %667 = vmatpush1.msra.mxu0 0.0
        %668 = vmatprep.subr.mxu0 0.0
        %669 = vmatpush1.msra.mxu0 0.0
        %670 = vmatprep.subr.mxu0 0.0
        %671 = vmatpush1.msra.mxu0 0.0
        %672 = vmatprep.subr.mxu0 0.0
        %673 = vmatpush1.msra.mxu0 0.0
        %674 = vmatprep.subr.mxu0 0.0
        %675 = vmatpush1.msra.mxu0 0.0
        %676 = vmatprep.subr.mxu0 0.0
        %677 = vmatpush1.msra.mxu0 0.0
        %678 = vmatprep.subr.mxu0 0.0
        %679 = vmatpush1.msra.mxu0 0.0
        %680 = vmatprep.subr.mxu0 0.0
        %681 = vmatpush1.msra.mxu0 0.0
        %682 = vmatprep.subr.mxu0 0.0
        %683 = vmatpush1.msra.mxu0 0.0
        %684 = vmatprep.subr.mxu0 0.0
        %685 = vmatpush1.msra.mxu0 0.0
        %686 = vmatprep.subr.mxu0 0.0
        %687 = vmatpush1.msra.mxu0 0.0
        %688 = vmatprep.subr.mxu0 0.0
        %689 = vmatpush1.msra.mxu0 0.0
        %690 = vmatprep.subr.mxu0 0.0
        %691 = vmatpush1.msra.mxu0 0.0
        %692 = vmatprep.subr.mxu0 0.0
        %693 = vmatpush1.msra.mxu0 0.0
        %694 = vmatprep.subr.mxu0 0.0
        %695 = vmatpush1.msra.mxu0 0.0
        %696 = vmatprep.subr.mxu0 0.0
        %697 = vmatpush1.msra.mxu0 0.0
        %698 = vmatprep.subr.mxu0 0.0
        %699 = vmatpush1.msra.mxu0 0.0
        %700 = vmatprep.subr.mxu0 0.0
        %701 = vmatpush1.msra.mxu0 0.0
        %702 = vmatprep.subr.mxu0 0.0
        %703 = vmatpush1.msra.mxu0 0.0
        %704 = vmatprep.subr.mxu0 0.0
        %705 = vmatpush1.msra.mxu0 0.0
        %706 = vmatprep.subr.mxu0 0.0
        %707 = vmatpush1.msra.mxu0 0.0
        %708 = vmatprep.subr.mxu0 0.0
        %709 = vmatpush1.msra.mxu0 0.0
        %710 = vmatprep.subr.mxu0 0.0
        %711 = vmatpush1.msra.mxu0 0.0
        %712 = vmatprep.subr.mxu0 0.0
        %713 = vmatpush1.msra.mxu0 0.0
        %714 = vmatprep.mubr.f32.mxu0 0.0
        %715 = vmatmul.mubr.f32.gmra.mrb[0].mxu0 %v441
        %v716 = vpop.f32.mrb[0].mxu0
        %v717 = vadd.f32 %v405, %v716
        %v718 = vpop.f32.mrb[0].mxu0
        %v719 = vadd.f32 %v405, %v718
        %720 = vdwg.mxu0
        %721 = vmatprep.subr.mxu0 %v458
        %722 = vmatpush1.msra.mxu0 %v456
        %723 = vmatprep.subr.mxu0 0.0
        %724 = vmatpush1.msra.mxu0 0.0
        %725 = vmatprep.subr.mxu0 0.0
        %726 = vmatpush1.msra.mxu0 0.0
        %727 = vmatprep.subr.mxu0 0.0
        %728 = vmatpush1.msra.mxu0 0.0
        %729 = vmatprep.subr.mxu0 0.0
        %730 = vmatpush1.msra.mxu0 0.0
        %731 = vmatprep.subr.mxu0 0.0
        %732 = vmatpush1.msra.mxu0 0.0
        %733 = vmatprep.subr.mxu0 0.0
        %734 = vmatpush1.msra.mxu0 0.0
        %735 = vmatprep.subr.mxu0 0.0
        %736 = vmatpush1.msra.mxu0 0.0
        %737 = vmatprep.subr.mxu0 0.0
        %738 = vmatpush1.msra.mxu0 0.0
        %739 = vmatprep.subr.mxu0 0.0
        %740 = vmatpush1.msra.mxu0 0.0
        %741 = vmatprep.subr.mxu0 0.0
        %742 = vmatpush1.msra.mxu0 0.0
        %743 = vmatprep.subr.mxu0 0.0
        %744 = vmatpush1.msra.mxu0 0.0
        %745 = vmatprep.subr.mxu0 0.0
        %746 = vmatpush1.msra.mxu0 0.0
        %747 = vmatprep.subr.mxu0 0.0
        %748 = vmatpush1.msra.mxu0 0.0
        %749 = vmatprep.subr.mxu0 0.0
        %750 = vmatpush1.msra.mxu0 0.0
        %751 = vmatprep.subr.mxu0 0.0
        %752 = vmatpush1.msra.mxu0 0.0
        %753 = vmatprep.subr.mxu0 0.0
        %754 = vmatpush1.msra.mxu0 0.0
        %755 = vmatprep.subr.mxu0 0.0
        %756 = vmatpush1.msra.mxu0 0.0
        %757 = vmatprep.subr.mxu0 0.0
        %758 = vmatpush1.msra.mxu0 0.0
        %759 = vmatprep.subr.mxu0 0.0
        %760 = vmatpush1.msra.mxu0 0.0
        %761 = vmatprep.subr.mxu0 0.0
        %762 = vmatpush1.msra.mxu0 0.0
        %763 = vmatprep.subr.mxu0 0.0
        %764 = vmatpush1.msra.mxu0 0.0
        %765 = vmatprep.subr.mxu0 0.0
        %766 = vmatpush1.msra.mxu0 0.0
        %767 = vmatprep.subr.mxu0 0.0
        %768 = vmatpush1.msra.mxu0 0.0
        %769 = vmatprep.subr.mxu0 0.0
        %770 = vmatpush1.msra.mxu0 0.0
        %771 = vmatprep.subr.mxu0 0.0
        %772 = vmatpush1.msra.mxu0 0.0
        %773 = vmatprep.subr.mxu0 0.0
        %774 = vmatpush1.msra.mxu0 0.0
        %775 = vmatprep.subr.mxu0 0.0
        %776 = vmatpush1.msra.mxu0 0.0
        %777 = vmatprep.subr.mxu0 0.0
        %778 = vmatpush1.msra.mxu0 0.0
        %779 = vmatprep.subr.mxu0 0.0
        %780 = vmatpush1.msra.mxu0 0.0
        %781 = vmatprep.subr.mxu0 0.0
        %782 = vmatpush1.msra.mxu0 0.0
        %783 = vmatprep.subr.mxu0 0.0
        %784 = vmatpush1.msra.mxu0 0.0
        %785 = vmatprep.mubr.f32.mxu0 0.0
        %786 = vmatmul.mubr.f32.gmra.mrb[0].mxu0 %v441
        %v787 = vpop.f32.mrb[0].mxu0
        %v788 = vadd.f32 %v405, %v787
        %v789 = vpop.f32.mrb[0].mxu0
        %v790 = vadd.f32 %v405, %v789
        %791 = vdwg.mxu0
        %792 = vmatprep.subr.mxu0 %v462
        %793 = vmatpush1.msra.mxu0 %v460
        %794 = vmatprep.subr.mxu0 0.0
        %795 = vmatpush1.msra.mxu0 0.0
        %796 = vmatprep.subr.mxu0 0.0
        %797 = vmatpush1.msra.mxu0 0.0
        %798 = vmatprep.subr.mxu0 0.0
        %799 = vmatpush1.msra.mxu0 0.0
        %800 = vmatprep.subr.mxu0 0.0
        %801 = vmatpush1.msra.mxu0 0.0
        %802 = vmatprep.subr.mxu0 0.0
        %803 = vmatpush1.msra.mxu0 0.0
        %804 = vmatprep.subr.mxu0 0.0
        %805 = vmatpush1.msra.mxu0 0.0
        %806 = vmatprep.subr.mxu0 0.0
        %807 = vmatpush1.msra.mxu0 0.0
        %808 = vmatprep.subr.mxu0 0.0
        %809 = vmatpush1.msra.mxu0 0.0
        %810 = vmatprep.subr.mxu0 0.0
        %811 = vmatpush1.msra.mxu0 0.0
        %812 = vmatprep.subr.mxu0 0.0
        %813 = vmatpush1.msra.mxu0 0.0
        %814 = vmatprep.subr.mxu0 0.0
        %815 = vmatpush1.msra.mxu0 0.0
        %816 = vmatprep.subr.mxu0 0.0
        %817 = vmatpush1.msra.mxu0 0.0
        %818 = vmatprep.subr.mxu0 0.0
        %819 = vmatpush1.msra.mxu0 0.0
        %820 = vmatprep.subr.mxu0 0.0
        %821 = vmatpush1.msra.mxu0 0.0
        %822 = vmatprep.subr.mxu0 0.0
        %823 = vmatpush1.msra.mxu0 0.0
        %824 = vmatprep.subr.mxu0 0.0
        %825 = vmatpush1.msra.mxu0 0.0
        %826 = vmatprep.subr.mxu0 0.0
        %827 = vmatpush1.msra.mxu0 0.0
        %828 = vmatprep.subr.mxu0 0.0
        %829 = vmatpush1.msra.mxu0 0.0
        %830 = vmatprep.subr.mxu0 0.0
        %831 = vmatpush1.msra.mxu0 0.0
        %832 = vmatprep.subr.mxu0 0.0
        %833 = vmatpush1.msra.mxu0 0.0
        %834 = vmatprep.subr.mxu0 0.0
        %835 = vmatpush1.msra.mxu0 0.0
        %836 = vmatprep.subr.mxu0 0.0
        %837 = vmatpush1.msra.mxu0 0.0
        %838 = vmatprep.subr.mxu0 0.0
        %839 = vmatpush1.msra.mxu0 0.0
        %840 = vmatprep.subr.mxu0 0.0
        %841 = vmatpush1.msra.mxu0 0.0
        %842 = vmatprep.subr.mxu0 0.0
        %843 = vmatpush1.msra.mxu0 0.0
        %844 = vmatprep.subr.mxu0 0.0
        %845 = vmatpush1.msra.mxu0 0.0
        %846 = vmatprep.subr.mxu0 0.0
        %847 = vmatpush1.msra.mxu0 0.0
        %848 = vmatprep.subr.mxu0 0.0
        %849 = vmatpush1.msra.mxu0 0.0
        %850 = vmatprep.subr.mxu0 0.0
        %851 = vmatpush1.msra.mxu0 0.0
        %852 = vmatprep.subr.mxu0 0.0
        %853 = vmatpush1.msra.mxu0 0.0
        %854 = vmatprep.subr.mxu0 0.0
        %855 = vmatpush1.msra.mxu0 0.0
        %856 = vmatprep.mubr.f32.mxu0 0.0
        %857 = vmatmul.mubr.f32.gmra.mrb[0].mxu0 %v441
        %v858 = vpop.f32.mrb[0].mxu0
        %v859 = vadd.f32 %v405, %v858
        %v860 = vpop.f32.mrb[0].mxu0
        %v861 = vadd.f32 %v405, %v860
        %862 = vdwg.mxu0
        %863 = vmatprep.subr.mxu0 %v466
        %864 = vmatpush1.msra.mxu0 %v464
        %865 = vmatprep.subr.mxu0 0.0
        %866 = vmatpush1.msra.mxu0 0.0
        %867 = vmatprep.subr.mxu0 0.0
        %868 = vmatpush1.msra.mxu0 0.0
        %869 = vmatprep.subr.mxu0 0.0
        %870 = vmatpush1.msra.mxu0 0.0
        %871 = vmatprep.subr.mxu0 0.0
        %872 = vmatpush1.msra.mxu0 0.0
        %873 = vmatprep.subr.mxu0 0.0
        %874 = vmatpush1.msra.mxu0 0.0
        %875 = vmatprep.subr.mxu0 0.0
        %876 = vmatpush1.msra.mxu0 0.0
        %877 = vmatprep.subr.mxu0 0.0
        %878 = vmatpush1.msra.mxu0 0.0
        %879 = vmatprep.subr.mxu0 0.0
        %880 = vmatpush1.msra.mxu0 0.0
        %881 = vmatprep.subr.mxu0 0.0
        %882 = vmatpush1.msra.mxu0 0.0
        %883 = vmatprep.subr.mxu0 0.0
        %884 = vmatpush1.msra.mxu0 0.0
        %885 = vmatprep.subr.mxu0 0.0
        %886 = vmatpush1.msra.mxu0 0.0
        %887 = vmatprep.subr.mxu0 0.0
        %888 = vmatpush1.msra.mxu0 0.0
        %889 = vmatprep.subr.mxu0 0.0
        %890 = vmatpush1.msra.mxu0 0.0
        %891 = vmatprep.subr.mxu0 0.0
        %892 = vmatpush1.msra.mxu0 0.0
        %893 = vmatprep.subr.mxu0 0.0
        %894 = vmatpush1.msra.mxu0 0.0
        %895 = vmatprep.subr.mxu0 0.0
        %896 = vmatpush1.msra.mxu0 0.0
        %897 = vmatprep.subr.mxu0 0.0
        %898 = vmatpush1.msra.mxu0 0.0
        %899 = vmatprep.subr.mxu0 0.0
        %900 = vmatpush1.msra.mxu0 0.0
        %901 = vmatprep.subr.mxu0 0.0
        %902 = vmatpush1.msra.mxu0 0.0
        %903 = vmatprep.subr.mxu0 0.0
        %904 = vmatpush1.msra.mxu0 0.0
        %905 = vmatprep.subr.mxu0 0.0
        %906 = vmatpush1.msra.mxu0 0.0
        %907 = vmatprep.subr.mxu0 0.0
        %908 = vmatpush1.msra.mxu0 0.0
        %909 = vmatprep.subr.mxu0 0.0
        %910 = vmatpush1.msra.mxu0 0.0
        %911 = vmatprep.subr.mxu0 0.0
        %912 = vmatpush1.msra.mxu0 0.0
        %913 = vmatprep.subr.mxu0 0.0
        %914 = vmatpush1.msra.mxu0 0.0
        %915 = vmatprep.subr.mxu0 0.0
        %916 = vmatpush1.msra.mxu0 0.0
        %917 = vmatprep.subr.mxu0 0.0
        %918 = vmatpush1.msra.mxu0 0.0
        %919 = vmatprep.subr.mxu0 0.0
        %920 = vmatpush1.msra.mxu0 0.0
        %921 = vmatprep.subr.mxu0 0.0
        %922 = vmatpush1.msra.mxu0 0.0
        %923 = vmatprep.subr.mxu0 0.0
        %924 = vmatpush1.msra.mxu0 0.0
        %925 = vmatprep.subr.mxu0 0.0
        %926 = vmatpush1.msra.mxu0 0.0
        %927 = vmatprep.mubr.f32.mxu0 0.0
        %928 = vmatmul.mubr.f32.gmra.mrb[0].mxu0 %v441
        %v929 = vpop.f32.mrb[0].mxu0
        %v930 = vadd.f32 %v405, %v929
        %v931 = vpop.f32.mrb[0].mxu0
        %v932 = vadd.f32 %v405, %v931
        %933 = vdwg.mxu0
        %934 = vmatprep.subr.mxu0 %v470
        %935 = vmatpush1.msra.mxu0 %v468
        %936 = vmatprep.subr.mxu0 0.0
        %937 = vmatpush1.msra.mxu0 0.0
        %938 = vmatprep.subr.mxu0 0.0
        %939 = vmatpush1.msra.mxu0 0.0
        %940 = vmatprep.subr.mxu0 0.0
        %941 = vmatpush1.msra.mxu0 0.0
        %942 = vmatprep.subr.mxu0 0.0
        %943 = vmatpush1.msra.mxu0 0.0
        %944 = vmatprep.subr.mxu0 0.0
        %945 = vmatpush1.msra.mxu0 0.0
        %946 = vmatprep.subr.mxu0 0.0
        %947 = vmatpush1.msra.mxu0 0.0
        %948 = vmatprep.subr.mxu0 0.0
        %949 = vmatpush1.msra.mxu0 0.0
        %950 = vmatprep.subr.mxu0 0.0
        %951 = vmatpush1.msra.mxu0 0.0
        %952 = vmatprep.subr.mxu0 0.0
        %953 = vmatpush1.msra.mxu0 0.0
        %954 = vmatprep.subr.mxu0 0.0
        %955 = vmatpush1.msra.mxu0 0.0
        %956 = vmatprep.subr.mxu0 0.0
        %957 = vmatpush1.msra.mxu0 0.0
        %958 = vmatprep.subr.mxu0 0.0
        %959 = vmatpush1.msra.mxu0 0.0
        %960 = vmatprep.subr.mxu0 0.0
        %961 = vmatpush1.msra.mxu0 0.0
        %962 = vmatprep.subr.mxu0 0.0
        %963 = vmatpush1.msra.mxu0 0.0
        %964 = vmatprep.subr.mxu0 0.0
        %965 = vmatpush1.msra.mxu0 0.0
        %966 = vmatprep.subr.mxu0 0.0
        %967 = vmatpush1.msra.mxu0 0.0
        %968 = vmatprep.subr.mxu0 0.0
        %969 = vmatpush1.msra.mxu0 0.0
        %970 = vmatprep.subr.mxu0 0.0
        %971 = vmatpush1.msra.mxu0 0.0
        %972 = vmatprep.subr.mxu0 0.0
        %973 = vmatpush1.msra.mxu0 0.0
        %974 = vmatprep.subr.mxu0 0.0
        %975 = vmatpush1.msra.mxu0 0.0
        %976 = vmatprep.subr.mxu0 0.0
        %977 = vmatpush1.msra.mxu0 0.0
        %978 = vmatprep.subr.mxu0 0.0
        %979 = vmatpush1.msra.mxu0 0.0
        %980 = vmatprep.subr.mxu0 0.0
        %981 = vmatpush1.msra.mxu0 0.0
        %982 = vmatprep.subr.mxu0 0.0
        %983 = vmatpush1.msra.mxu0 0.0
        %984 = vmatprep.subr.mxu0 0.0
        %985 = vmatpush1.msra.mxu0 0.0
        %986 = vmatprep.subr.mxu0 0.0
        %987 = vmatpush1.msra.mxu0 0.0
        %988 = vmatprep.subr.mxu0 0.0
        %989 = vmatpush1.msra.mxu0 0.0
        %990 = vmatprep.subr.mxu0 0.0
        %991 = vmatpush1.msra.mxu0 0.0
        %992 = vmatprep.subr.mxu0 0.0
        %993 = vmatpush1.msra.mxu0 0.0
        %994 = vmatprep.subr.mxu0 0.0
        %995 = vmatpush1.msra.mxu0 0.0
        %996 = vmatprep.subr.mxu0 0.0
        %997 = vmatpush1.msra.mxu0 0.0
        %998 = vmatprep.mubr.f32.mxu0 0.0
        %999 = vmatmul.mubr.f32.gmra.mrb[0].mxu0 %v441
        %v1000 = vpop.f32.mrb[0].mxu0
        %v1001 = vadd.f32 %v405, %v1000
        %v1002 = vpop.f32.mrb[0].mxu0
        %v1003 = vadd.f32 %v405, %v1002
        %1004 = vdwg.mxu0
        %1005 = vmatprep.subr.mxu0 %v474
        %1006 = vmatpush1.msra.mxu0 %v472
        %1007 = vmatprep.subr.mxu0 0.0
        %1008 = vmatpush1.msra.mxu0 0.0
        %1009 = vmatprep.subr.mxu0 0.0
        %1010 = vmatpush1.msra.mxu0 0.0
        %1011 = vmatprep.subr.mxu0 0.0
        %1012 = vmatpush1.msra.mxu0 0.0
        %1013 = vmatprep.subr.mxu0 0.0
        %1014 = vmatpush1.msra.mxu0 0.0
        %1015 = vmatprep.subr.mxu0 0.0
        %1016 = vmatpush1.msra.mxu0 0.0
        %1017 = vmatprep.subr.mxu0 0.0
        %1018 = vmatpush1.msra.mxu0 0.0
        %1019 = vmatprep.subr.mxu0 0.0
        %1020 = vmatpush1.msra.mxu0 0.0
        %1021 = vmatprep.subr.mxu0 0.0
        %1022 = vmatpush1.msra.mxu0 0.0
        %1023 = vmatprep.subr.mxu0 0.0
        %1024 = vmatpush1.msra.mxu0 0.0
        %1025 = vmatprep.subr.mxu0 0.0
        %1026 = vmatpush1.msra.mxu0 0.0
        %1027 = vmatprep.subr.mxu0 0.0
        %1028 = vmatpush1.msra.mxu0 0.0
        %1029 = vmatprep.subr.mxu0 0.0
        %1030 = vmatpush1.msra.mxu0 0.0
        %1031 = vmatprep.subr.mxu0 0.0
        %1032 = vmatpush1.msra.mxu0 0.0
        %1033 = vmatprep.subr.mxu0 0.0
        %1034 = vmatpush1.msra.mxu0 0.0
        %1035 = vmatprep.subr.mxu0 0.0
        %1036 = vmatpush1.msra.mxu0 0.0
        %1037 = vmatprep.subr.mxu0 0.0
        %1038 = vmatpush1.msra.mxu0 0.0
        %1039 = vmatprep.subr.mxu0 0.0
        %1040 = vmatpush1.msra.mxu0 0.0
        %1041 = vmatprep.subr.mxu0 0.0
        %1042 = vmatpush1.msra.mxu0 0.0
        %1043 = vmatprep.subr.mxu0 0.0
        %1044 = vmatpush1.msra.mxu0 0.0
        %1045 = vmatprep.subr.mxu0 0.0
        %1046 = vmatpush1.msra.mxu0 0.0
        %1047 = vmatprep.subr.mxu0 0.0
        %1048 = vmatpush1.msra.mxu0 0.0
        %1049 = vmatprep.subr.mxu0 0.0
        %1050 = vmatpush1.msra.mxu0 0.0
        %1051 = vmatprep.subr.mxu0 0.0
        %1052 = vmatpush1.msra.mxu0 0.0
        %1053 = vmatprep.subr.mxu0 0.0
        %1054 = vmatpush1.msra.mxu0 0.0
        %1055 = vmatprep.subr.mxu0 0.0
        %1056 = vmatpush1.msra.mxu0 0.0
        %1057 = vmatprep.subr.mxu0 0.0
        %1058 = vmatpush1.msra.mxu0 0.0
        %1059 = vmatprep.subr.mxu0 0.0
        %1060 = vmatpush1.msra.mxu0 0.0
        %1061 = vmatprep.subr.mxu0 0.0
        %1062 = vmatpush1.msra.mxu0 0.0
        %1063 = vmatprep.subr.mxu0 0.0
        %1064 = vmatpush1.msra.mxu0 0.0
        %1065 = vmatprep.subr.mxu0 0.0
        %1066 = vmatpush1.msra.mxu0 0.0
        %1067 = vmatprep.subr.mxu0 0.0
        %1068 = vmatpush1.msra.mxu0 0.0
        %1069 = vmatprep.mubr.f32.mxu0 0.0
        %1070 = vmatmul.mubr.f32.gmra.mrb[0].mxu0 %v441
        %v1071 = vpop.f32.mrb[0].mxu0
        %v1072 = vadd.f32 %v405, %v1071
        %v1073 = vpop.f32.mrb[0].mxu0
        %v1074 = vadd.f32 %v405, %v1073
        %1075 = vdwg.mxu0
        %1076 = vmatprep.subr.mxu0 %v478
        %1077 = vmatpush1.msra.mxu0 %v476
        %1078 = vmatprep.subr.mxu0 0.0
        %1079 = vmatpush1.msra.mxu0 0.0
        %1080 = vmatprep.subr.mxu0 0.0
        %1081 = vmatpush1.msra.mxu0 0.0
        %1082 = vmatprep.subr.mxu0 0.0
        %1083 = vmatpush1.msra.mxu0 0.0
        %1084 = vmatprep.subr.mxu0 0.0
        %1085 = vmatpush1.msra.mxu0 0.0
        %1086 = vmatprep.subr.mxu0 0.0
        %1087 = vmatpush1.msra.mxu0 0.0
        %1088 = vmatprep.subr.mxu0 0.0
        %1089 = vmatpush1.msra.mxu0 0.0
        %1090 = vmatprep.subr.mxu0 0.0
        %1091 = vmatpush1.msra.mxu0 0.0
        %1092 = vmatprep.subr.mxu0 0.0
        %1093 = vmatpush1.msra.mxu0 0.0
        %1094 = vmatprep.subr.mxu0 0.0
        %1095 = vmatpush1.msra.mxu0 0.0
        %1096 = vmatprep.subr.mxu0 0.0
        %1097 = vmatpush1.msra.mxu0 0.0
        %1098 = vmatprep.subr.mxu0 0.0
        %1099 = vmatpush1.msra.mxu0 0.0
        %1100 = vmatprep.subr.mxu0 0.0
        %1101 = vmatpush1.msra.mxu0 0.0
        %1102 = vmatprep.subr.mxu0 0.0
        %1103 = vmatpush1.msra.mxu0 0.0
        %1104 = vmatprep.subr.mxu0 0.0
        %1105 = vmatpush1.msra.mxu0 0.0
        %1106 = vmatprep.subr.mxu0 0.0
        %1107 = vmatpush1.msra.mxu0 0.0
        %1108 = vmatprep.subr.mxu0 0.0
        %1109 = vmatpush1.msra.mxu0 0.0
        %1110 = vmatprep.subr.mxu0 0.0
        %1111 = vmatpush1.msra.mxu0 0.0
        %1112 = vmatprep.subr.mxu0 0.0
        %1113 = vmatpush1.msra.mxu0 0.0
        %1114 = vmatprep.subr.mxu0 0.0
        %1115 = vmatpush1.msra.mxu0 0.0
        %1116 = vmatprep.subr.mxu0 0.0
        %1117 = vmatpush1.msra.mxu0 0.0
        %1118 = vmatprep.subr.mxu0 0.0
        %1119 = vmatpush1.msra.mxu0 0.0
        %1120 = vmatprep.subr.mxu0 0.0
        %1121 = vmatpush1.msra.mxu0 0.0
        %1122 = vmatprep.subr.mxu0 0.0
        %1123 = vmatpush1.msra.mxu0 0.0
        %1124 = vmatprep.subr.mxu0 0.0
        %1125 = vmatpush1.msra.mxu0 0.0
        %1126 = vmatprep.subr.mxu0 0.0
        %1127 = vmatpush1.msra.mxu0 0.0
        %1128 = vmatprep.subr.mxu0 0.0
        %1129 = vmatpush1.msra.mxu0 0.0
        %1130 = vmatprep.subr.mxu0 0.0
        %1131 = vmatpush1.msra.mxu0 0.0
        %1132 = vmatprep.subr.mxu0 0.0
        %1133 = vmatpush1.msra.mxu0 0.0
        %1134 = vmatprep.subr.mxu0 0.0
        %1135 = vmatpush1.msra.mxu0 0.0
        %1136 = vmatprep.subr.mxu0 0.0
        %1137 = vmatpush1.msra.mxu0 0.0
        %1138 = vmatprep.subr.mxu0 0.0
        %1139 = vmatpush1.msra.mxu0 0.0
        %1140 = vmatprep.mubr.f32.mxu0 0.0
        %1141 = vmatmul.mubr.f32.gmra.mrb[0].mxu0 %v441
        %v1142 = vpop.f32.mrb[0].mxu0
        %v1143 = vadd.f32 %v405, %v1142
        %v1144 = vpop.f32.mrb[0].mxu0
        %v1145 = vadd.f32 %v405, %v1144
        %1146 = vdwg.mxu0
        %1147 = vmatprep.subr.mxu0 %v482
        %1148 = vmatpush1.msra.mxu0 %v480
        %1149 = vmatprep.subr.mxu0 0.0
        %1150 = vmatpush1.msra.mxu0 0.0
        %1151 = vmatprep.subr.mxu0 0.0
        %1152 = vmatpush1.msra.mxu0 0.0
        %1153 = vmatprep.subr.mxu0 0.0
        %1154 = vmatpush1.msra.mxu0 0.0
        %1155 = vmatprep.subr.mxu0 0.0
        %1156 = vmatpush1.msra.mxu0 0.0
        %1157 = vmatprep.subr.mxu0 0.0
        %1158 = vmatpush1.msra.mxu0 0.0
        %1159 = vmatprep.subr.mxu0 0.0
        %1160 = vmatpush1.msra.mxu0 0.0
        %1161 = vmatprep.subr.mxu0 0.0
        %1162 = vmatpush1.msra.mxu0 0.0
        %1163 = vmatprep.subr.mxu0 0.0
        %1164 = vmatpush1.msra.mxu0 0.0
        %1165 = vmatprep.subr.mxu0 0.0
        %1166 = vmatpush1.msra.mxu0 0.0
        %1167 = vmatprep.subr.mxu0 0.0
        %1168 = vmatpush1.msra.mxu0 0.0
        %1169 = vmatprep.subr.mxu0 0.0
        %1170 = vmatpush1.msra.mxu0 0.0
        %1171 = vmatprep.subr.mxu0 0.0
        %1172 = vmatpush1.msra.mxu0 0.0
        %1173 = vmatprep.subr.mxu0 0.0
        %1174 = vmatpush1.msra.mxu0 0.0
        %1175 = vmatprep.subr.mxu0 0.0
        %1176 = vmatpush1.msra.mxu0 0.0
        %1177 = vmatprep.subr.mxu0 0.0
        %1178 = vmatpush1.msra.mxu0 0.0
        %1179 = vmatprep.subr.mxu0 0.0
        %1180 = vmatpush1.msra.mxu0 0.0
        %1181 = vmatprep.subr.mxu0 0.0
        %1182 = vmatpush1.msra.mxu0 0.0
        %1183 = vmatprep.subr.mxu0 0.0
        %1184 = vmatpush1.msra.mxu0 0.0
        %1185 = vmatprep.subr.mxu0 0.0
        %1186 = vmatpush1.msra.mxu0 0.0
        %1187 = vmatprep.subr.mxu0 0.0
        %1188 = vmatpush1.msra.mxu0 0.0
        %1189 = vmatprep.subr.mxu0 0.0
        %1190 = vmatpush1.msra.mxu0 0.0
        %1191 = vmatprep.subr.mxu0 0.0
        %1192 = vmatpush1.msra.mxu0 0.0
        %1193 = vmatprep.subr.mxu0 0.0
        %1194 = vmatpush1.msra.mxu0 0.0
        %1195 = vmatprep.subr.mxu0 0.0
        %1196 = vmatpush1.msra.mxu0 0.0
        %1197 = vmatprep.subr.mxu0 0.0
        %1198 = vmatpush1.msra.mxu0 0.0
        %1199 = vmatprep.subr.mxu0 0.0
        %1200 = vmatpush1.msra.mxu0 0.0
        %1201 = vmatprep.subr.mxu0 0.0
        %1202 = vmatpush1.msra.mxu0 0.0
        %1203 = vmatprep.subr.mxu0 0.0
        %1204 = vmatpush1.msra.mxu0 0.0
        %1205 = vmatprep.subr.mxu0 0.0
        %1206 = vmatpush1.msra.mxu0 0.0
        %1207 = vmatprep.subr.mxu0 0.0
        %1208 = vmatpush1.msra.mxu0 0.0
        %1209 = vmatprep.subr.mxu0 0.0
        %1210 = vmatpush1.msra.mxu0 0.0
        %1211 = vmatprep.mubr.f32.mxu0 0.0
        %1212 = vmatmul.mubr.f32.gmra.mrb[0].mxu0 %v441
        %v1213 = vpop.f32.mrb[0].mxu0
        %v1214 = vadd.f32 %v405, %v1213
        %v1215 = vpop.f32.mrb[0].mxu0
        %v1216 = vadd.f32 %v405, %v1215
        %1217 = vdwg.mxu0
        %1218 = vmatprep.subr.mxu0 %v486
        %1219 = vmatpush1.msra.mxu0 %v484
        %1220 = vmatprep.subr.mxu0 0.0
        %1221 = vmatpush1.msra.mxu0 0.0
        %1222 = vmatprep.subr.mxu0 0.0
        %1223 = vmatpush1.msra.mxu0 0.0
        %1224 = vmatprep.subr.mxu0 0.0
        %1225 = vmatpush1.msra.mxu0 0.0
        %1226 = vmatprep.subr.mxu0 0.0
        %1227 = vmatpush1.msra.mxu0 0.0
        %1228 = vmatprep.subr.mxu0 0.0
        %1229 = vmatpush1.msra.mxu0 0.0
        %1230 = vmatprep.subr.mxu0 0.0
        %1231 = vmatpush1.msra.mxu0 0.0
        %1232 = vmatprep.subr.mxu0 0.0
        %1233 = vmatpush1.msra.mxu0 0.0
        %1234 = vmatprep.subr.mxu0 0.0
        %1235 = vmatpush1.msra.mxu0 0.0
        %1236 = vmatprep.subr.mxu0 0.0
        %1237 = vmatpush1.msra.mxu0 0.0
        %1238 = vmatprep.subr.mxu0 0.0
        %1239 = vmatpush1.msra.mxu0 0.0
        %1240 = vmatprep.subr.mxu0 0.0
        %1241 = vmatpush1.msra.mxu0 0.0
        %1242 = vmatprep.subr.mxu0 0.0
        %1243 = vmatpush1.msra.mxu0 0.0
        %1244 = vmatprep.subr.mxu0 0.0
        %1245 = vmatpush1.msra.mxu0 0.0
        %1246 = vmatprep.subr.mxu0 0.0
        %1247 = vmatpush1.msra.mxu0 0.0
        %1248 = vmatprep.subr.mxu0 0.0
        %1249 = vmatpush1.msra.mxu0 0.0
        %1250 = vmatprep.subr.mxu0 0.0
        %1251 = vmatpush1.msra.mxu0 0.0
        %1252 = vmatprep.subr.mxu0 0.0
        %1253 = vmatpush1.msra.mxu0 0.0
        %1254 = vmatprep.subr.mxu0 0.0
        %1255 = vmatpush1.msra.mxu0 0.0
        %1256 = vmatprep.subr.mxu0 0.0
        %1257 = vmatpush1.msra.mxu0 0.0
        %1258 = vmatprep.subr.mxu0 0.0
        %1259 = vmatpush1.msra.mxu0 0.0
        %1260 = vmatprep.subr.mxu0 0.0
        %1261 = vmatpush1.msra.mxu0 0.0
        %1262 = vmatprep.subr.mxu0 0.0
        %1263 = vmatpush1.msra.mxu0 0.0
        %1264 = vmatprep.subr.mxu0 0.0
        %1265 = vmatpush1.msra.mxu0 0.0
        %1266 = vmatprep.subr.mxu0 0.0
        %1267 = vmatpush1.msra.mxu0 0.0
        %1268 = vmatprep.subr.mxu0 0.0
        %1269 = vmatpush1.msra.mxu0 0.0
        %1270 = vmatprep.subr.mxu0 0.0
        %1271 = vmatpush1.msra.mxu0 0.0
        %1272 = vmatprep.subr.mxu0 0.0
        %1273 = vmatpush1.msra.mxu0 0.0
        %1274 = vmatprep.subr.mxu0 0.0
        %1275 = vmatpush1.msra.mxu0 0.0
        %1276 = vmatprep.subr.mxu0 0.0
        %1277 = vmatpush1.msra.mxu0 0.0
        %1278 = vmatprep.subr.mxu0 0.0
        %1279 = vmatpush1.msra.mxu0 0.0
        %1280 = vmatprep.subr.mxu0 0.0
        %1281 = vmatpush1.msra.mxu0 0.0
        %1282 = vmatprep.mubr.f32.mxu0 0.0
        %1283 = vmatmul.mubr.f32.gmra.mrb[0].mxu0 %v441
        %v1284 = vpop.f32.mrb[0].mxu0
        %v1285 = vadd.f32 %v405, %v1284
        %v1286 = vpop.f32.mrb[0].mxu0
        %v1287 = vadd.f32 %v405, %v1286
        %1288 = vdwg.mxu0
        %1289 = vmatprep.subr.mxu0 %v490
        %1290 = vmatpush1.msra.mxu0 %v488
        %1291 = vmatprep.subr.mxu0 0.0
        %1292 = vmatpush1.msra.mxu0 0.0
        %1293 = vmatprep.subr.mxu0 0.0
        %1294 = vmatpush1.msra.mxu0 0.0
        %1295 = vmatprep.subr.mxu0 0.0
        %1296 = vmatpush1.msra.mxu0 0.0
        %1297 = vmatprep.subr.mxu0 0.0
        %1298 = vmatpush1.msra.mxu0 0.0
        %1299 = vmatprep.subr.mxu0 0.0
        %1300 = vmatpush1.msra.mxu0 0.0
        %1301 = vmatprep.subr.mxu0 0.0
        %1302 = vmatpush1.msra.mxu0 0.0
        %1303 = vmatprep.subr.mxu0 0.0
        %1304 = vmatpush1.msra.mxu0 0.0
        %1305 = vmatprep.subr.mxu0 0.0
        %1306 = vmatpush1.msra.mxu0 0.0
        %1307 = vmatprep.subr.mxu0 0.0
        %1308 = vmatpush1.msra.mxu0 0.0
        %1309 = vmatprep.subr.mxu0 0.0
        %1310 = vmatpush1.msra.mxu0 0.0
        %1311 = vmatprep.subr.mxu0 0.0
        %1312 = vmatpush1.msra.mxu0 0.0
        %1313 = vmatprep.subr.mxu0 0.0
        %1314 = vmatpush1.msra.mxu0 0.0
        %1315 = vmatprep.subr.mxu0 0.0
        %1316 = vmatpush1.msra.mxu0 0.0
        %1317 = vmatprep.subr.mxu0 0.0
        %1318 = vmatpush1.msra.mxu0 0.0
        %1319 = vmatprep.subr.mxu0 0.0
        %1320 = vmatpush1.msra.mxu0 0.0
        %1321 = vmatprep.subr.mxu0 0.0
        %1322 = vmatpush1.msra.mxu0 0.0
        %1323 = vmatprep.subr.mxu0 0.0
        %1324 = vmatpush1.msra.mxu0 0.0
        %1325 = vmatprep.subr.mxu0 0.0
        %1326 = vmatpush1.msra.mxu0 0.0
        %1327 = vmatprep.subr.mxu0 0.0
        %1328 = vmatpush1.msra.mxu0 0.0
        %1329 = vmatprep.subr.mxu0 0.0
        %1330 = vmatpush1.msra.mxu0 0.0
        %1331 = vmatprep.subr.mxu0 0.0
        %1332 = vmatpush1.msra.mxu0 0.0
        %1333 = vmatprep.subr.mxu0 0.0
        %1334 = vmatpush1.msra.mxu0 0.0
        %1335 = vmatprep.subr.mxu0 0.0
        %1336 = vmatpush1.msra.mxu0 0.0
        %1337 = vmatprep.subr.mxu0 0.0
        %1338 = vmatpush1.msra.mxu0 0.0
        %1339 = vmatprep.subr.mxu0 0.0
        %1340 = vmatpush1.msra.mxu0 0.0
        %1341 = vmatprep.subr.mxu0 0.0
        %1342 = vmatpush1.msra.mxu0 0.0
        %1343 = vmatprep.subr.mxu0 0.0
        %1344 = vmatpush1.msra.mxu0 0.0
        %1345 = vmatprep.subr.mxu0 0.0
        %1346 = vmatpush1.msra.mxu0 0.0
        %1347 = vmatprep.subr.mxu0 0.0
        %1348 = vmatpush1.msra.mxu0 0.0
        %1349 = vmatprep.subr.mxu0 0.0
        %1350 = vmatpush1.msra.mxu0 0.0
        %1351 = vmatprep.subr.mxu0 0.0
        %1352 = vmatpush1.msra.mxu0 0.0
        %1353 = vmatprep.mubr.f32.mxu0 0.0
        %1354 = vmatmul.mubr.f32.gmra.mrb[0].mxu0 %v441
        %v1355 = vpop.f32.mrb[0].mxu0
        %v1356 = vadd.f32 %v405, %v1355
        %v1357 = vpop.f32.mrb[0].mxu0
        %v1358 = vadd.f32 %v405, %v1357
        %1359 = vdwg.mxu0
        %1360 = vmatprep.subr.mxu0 %v494
        %1361 = vmatpush1.msra.mxu0 %v492
        %1362 = vmatprep.subr.mxu0 0.0
        %1363 = vmatpush1.msra.mxu0 0.0
        %1364 = vmatprep.subr.mxu0 0.0
        %1365 = vmatpush1.msra.mxu0 0.0
        %1366 = vmatprep.subr.mxu0 0.0
        %1367 = vmatpush1.msra.mxu0 0.0
        %1368 = vmatprep.subr.mxu0 0.0
        %1369 = vmatpush1.msra.mxu0 0.0
        %1370 = vmatprep.subr.mxu0 0.0
        %1371 = vmatpush1.msra.mxu0 0.0
        %1372 = vmatprep.subr.mxu0 0.0
        %1373 = vmatpush1.msra.mxu0 0.0
        %1374 = vmatprep.subr.mxu0 0.0
        %1375 = vmatpush1.msra.mxu0 0.0
        %1376 = vmatprep.subr.mxu0 0.0
        %1377 = vmatpush1.msra.mxu0 0.0
        %1378 = vmatprep.subr.mxu0 0.0
        %1379 = vmatpush1.msra.mxu0 0.0
        %1380 = vmatprep.subr.mxu0 0.0
        %1381 = vmatpush1.msra.mxu0 0.0
        %1382 = vmatprep.subr.mxu0 0.0
        %1383 = vmatpush1.msra.mxu0 0.0
        %1384 = vmatprep.subr.mxu0 0.0
        %1385 = vmatpush1.msra.mxu0 0.0
        %1386 = vmatprep.subr.mxu0 0.0
        %1387 = vmatpush1.msra.mxu0 0.0
        %1388 = vmatprep.subr.mxu0 0.0
        %1389 = vmatpush1.msra.mxu0 0.0
        %1390 = vmatprep.subr.mxu0 0.0
        %1391 = vmatpush1.msra.mxu0 0.0
        %1392 = vmatprep.subr.mxu0 0.0
        %1393 = vmatpush1.msra.mxu0 0.0
        %1394 = vmatprep.subr.mxu0 0.0
        %1395 = vmatpush1.msra.mxu0 0.0
        %1396 = vmatprep.subr.mxu0 0.0
        %1397 = vmatpush1.msra.mxu0 0.0
        %1398 = vmatprep.subr.mxu0 0.0
        %1399 = vmatpush1.msra.mxu0 0.0
        %1400 = vmatprep.subr.mxu0 0.0
        %1401 = vmatpush1.msra.mxu0 0.0
        %1402 = vmatprep.subr.mxu0 0.0
        %1403 = vmatpush1.msra.mxu0 0.0
        %1404 = vmatprep.subr.mxu0 0.0
        %1405 = vmatpush1.msra.mxu0 0.0
        %1406 = vmatprep.subr.mxu0 0.0
        %1407 = vmatpush1.msra.mxu0 0.0
        %1408 = vmatprep.subr.mxu0 0.0
        %1409 = vmatpush1.msra.mxu0 0.0
        %1410 = vmatprep.subr.mxu0 0.0
        %1411 = vmatpush1.msra.mxu0 0.0
        %1412 = vmatprep.subr.mxu0 0.0
        %1413 = vmatpush1.msra.mxu0 0.0
        %1414 = vmatprep.subr.mxu0 0.0
        %1415 = vmatpush1.msra.mxu0 0.0
        %1416 = vmatprep.subr.mxu0 0.0
        %1417 = vmatpush1.msra.mxu0 0.0
        %1418 = vmatprep.subr.mxu0 0.0
        %1419 = vmatpush1.msra.mxu0 0.0
        %1420 = vmatprep.subr.mxu0 0.0
        %1421 = vmatpush1.msra.mxu0 0.0
        %1422 = vmatprep.subr.mxu0 0.0
        %1423 = vmatpush1.msra.mxu0 0.0
        %1424 = vmatprep.mubr.f32.mxu0 0.0
        %1425 = vmatmul.mubr.f32.gmra.mrb[0].mxu0 %v441
        %v1426 = vpop.f32.mrb[0].mxu0
        %v1427 = vadd.f32 %v405, %v1426
        %v1428 = vpop.f32.mrb[0].mxu0
        %v1429 = vadd.f32 %v405, %v1428
        %1430 = vdwg.mxu0
        %1431 = vmatprep.subr.mxu0 %v498
        %1432 = vmatpush1.msra.mxu0 %v496
        %1433 = vmatprep.subr.mxu0 0.0
        %1434 = vmatpush1.msra.mxu0 0.0
        %1435 = vmatprep.subr.mxu0 0.0
        %1436 = vmatpush1.msra.mxu0 0.0
        %1437 = vmatprep.subr.mxu0 0.0
        %1438 = vmatpush1.msra.mxu0 0.0
        %1439 = vmatprep.subr.mxu0 0.0
        %1440 = vmatpush1.msra.mxu0 0.0
        %1441 = vmatprep.subr.mxu0 0.0
        %1442 = vmatpush1.msra.mxu0 0.0
        %1443 = vmatprep.subr.mxu0 0.0
        %1444 = vmatpush1.msra.mxu0 0.0
        %1445 = vmatprep.subr.mxu0 0.0
        %1446 = vmatpush1.msra.mxu0 0.0
        %1447 = vmatprep.subr.mxu0 0.0
        %1448 = vmatpush1.msra.mxu0 0.0
        %1449 = vmatprep.subr.mxu0 0.0
        %1450 = vmatpush1.msra.mxu0 0.0
        %1451 = vmatprep.subr.mxu0 0.0
        %1452 = vmatpush1.msra.mxu0 0.0
        %1453 = vmatprep.subr.mxu0 0.0
        %1454 = vmatpush1.msra.mxu0 0.0
        %1455 = vmatprep.subr.mxu0 0.0
        %1456 = vmatpush1.msra.mxu0 0.0
        %1457 = vmatprep.subr.mxu0 0.0
        %1458 = vmatpush1.msra.mxu0 0.0
        %1459 = vmatprep.subr.mxu0 0.0
        %1460 = vmatpush1.msra.mxu0 0.0
        %1461 = vmatprep.subr.mxu0 0.0
        %1462 = vmatpush1.msra.mxu0 0.0
        %1463 = vmatprep.subr.mxu0 0.0
        %1464 = vmatpush1.msra.mxu0 0.0
        %1465 = vmatprep.subr.mxu0 0.0
        %1466 = vmatpush1.msra.mxu0 0.0
        %1467 = vmatprep.subr.mxu0 0.0
        %1468 = vmatpush1.msra.mxu0 0.0
        %1469 = vmatprep.subr.mxu0 0.0
        %1470 = vmatpush1.msra.mxu0 0.0
        %1471 = vmatprep.subr.mxu0 0.0
        %1472 = vmatpush1.msra.mxu0 0.0
        %1473 = vmatprep.subr.mxu0 0.0
        %1474 = vmatpush1.msra.mxu0 0.0
        %1475 = vmatprep.subr.mxu0 0.0
        %1476 = vmatpush1.msra.mxu0 0.0
        %1477 = vmatprep.subr.mxu0 0.0
        %1478 = vmatpush1.msra.mxu0 0.0
        %1479 = vmatprep.subr.mxu0 0.0
        %1480 = vmatpush1.msra.mxu0 0.0
        %1481 = vmatprep.subr.mxu0 0.0
        %1482 = vmatpush1.msra.mxu0 0.0
        %1483 = vmatprep.subr.mxu0 0.0
        %1484 = vmatpush1.msra.mxu0 0.0
        %1485 = vmatprep.subr.mxu0 0.0
        %1486 = vmatpush1.msra.mxu0 0.0
        %1487 = vmatprep.subr.mxu0 0.0
        %1488 = vmatpush1.msra.mxu0 0.0
        %1489 = vmatprep.subr.mxu0 0.0
        %1490 = vmatpush1.msra.mxu0 0.0
        %1491 = vmatprep.subr.mxu0 0.0
        %1492 = vmatpush1.msra.mxu0 0.0
        %1493 = vmatprep.subr.mxu0 0.0
        %1494 = vmatpush1.msra.mxu0 0.0
        %1495 = vmatprep.mubr.f32.mxu0 0.0
        %1496 = vmatmul.mubr.f32.gmra.mrb[0].mxu0 %v441
        %v1497 = vpop.f32.mrb[0].mxu0
        %v1498 = vadd.f32 %v405, %v1497
        %v1499 = vpop.f32.mrb[0].mxu0
        %v1500 = vadd.f32 %v405, %v1499
        %1501 = vdwg.mxu0
        %1502 = vmatprep.subr.mxu0 %v502
        %1503 = vmatpush1.msra.mxu0 %v500
        %1504 = vmatprep.subr.mxu0 0.0
        %1505 = vmatpush1.msra.mxu0 0.0
        %1506 = vmatprep.subr.mxu0 0.0
        %1507 = vmatpush1.msra.mxu0 0.0
        %1508 = vmatprep.subr.mxu0 0.0
        %1509 = vmatpush1.msra.mxu0 0.0
        %1510 = vmatprep.subr.mxu0 0.0
        %1511 = vmatpush1.msra.mxu0 0.0
        %1512 = vmatprep.subr.mxu0 0.0
        %1513 = vmatpush1.msra.mxu0 0.0
        %1514 = vmatprep.subr.mxu0 0.0
        %1515 = vmatpush1.msra.mxu0 0.0
        %1516 = vmatprep.subr.mxu0 0.0
        %1517 = vmatpush1.msra.mxu0 0.0
        %1518 = vmatprep.subr.mxu0 0.0
        %1519 = vmatpush1.msra.mxu0 0.0
        %1520 = vmatprep.subr.mxu0 0.0
        %1521 = vmatpush1.msra.mxu0 0.0
        %1522 = vmatprep.subr.mxu0 0.0
        %1523 = vmatpush1.msra.mxu0 0.0
        %1524 = vmatprep.subr.mxu0 0.0
        %1525 = vmatpush1.msra.mxu0 0.0
        %1526 = vmatprep.subr.mxu0 0.0
        %1527 = vmatpush1.msra.mxu0 0.0
        %1528 = vmatprep.subr.mxu0 0.0
        %1529 = vmatpush1.msra.mxu0 0.0
        %1530 = vmatprep.subr.mxu0 0.0
        %1531 = vmatpush1.msra.mxu0 0.0
        %1532 = vmatprep.subr.mxu0 0.0
        %1533 = vmatpush1.msra.mxu0 0.0
        %1534 = vmatprep.subr.mxu0 0.0
        %1535 = vmatpush1.msra.mxu0 0.0
        %1536 = vmatprep.subr.mxu0 0.0
        %1537 = vmatpush1.msra.mxu0 0.0
        %1538 = vmatprep.subr.mxu0 0.0
        %1539 = vmatpush1.msra.mxu0 0.0
        %1540 = vmatprep.subr.mxu0 0.0
        %1541 = vmatpush1.msra.mxu0 0.0
        %1542 = vmatprep.subr.mxu0 0.0
        %1543 = vmatpush1.msra.mxu0 0.0
        %1544 = vmatprep.subr.mxu0 0.0
        %1545 = vmatpush1.msra.mxu0 0.0
        %1546 = vmatprep.subr.mxu0 0.0
        %1547 = vmatpush1.msra.mxu0 0.0
        %1548 = vmatprep.subr.mxu0 0.0
        %1549 = vmatpush1.msra.mxu0 0.0
        %1550 = vmatprep.subr.mxu0 0.0
        %1551 = vmatpush1.msra.mxu0 0.0
        %1552 = vmatprep.subr.mxu0 0.0
        %1553 = vmatpush1.msra.mxu0 0.0
        %1554 = vmatprep.subr.mxu0 0.0
        %1555 = vmatpush1.msra.mxu0 0.0
        %1556 = vmatprep.subr.mxu0 0.0
        %1557 = vmatpush1.msra.mxu0 0.0
        %1558 = vmatprep.subr.mxu0 0.0
        %1559 = vmatpush1.msra.mxu0 0.0
        %1560 = vmatprep.subr.mxu0 0.0
        %1561 = vmatpush1.msra.mxu0 0.0
        %1562 = vmatprep.subr.mxu0 0.0
        %1563 = vmatpush1.msra.mxu0 0.0
        %1564 = vmatprep.subr.mxu0 0.0
        %1565 = vmatpush1.msra.mxu0 0.0
        %1566 = vmatprep.mubr.f32.mxu0 0.0
        %1567 = vmatmul.mubr.f32.gmra.mrb[0].mxu0 %v441
        %v1568 = vpop.f32.mrb[0].mxu0
        %v1569 = vadd.f32 %v405, %v1568
        %v1570 = vpop.f32.mrb[0].mxu0
        %v1571 = vadd.f32 %v405, %v1570
        %1572 = vdwg.mxu0
        %1573 = vmatprep.subr.mxu0 %v506
        %1574 = vmatpush1.msra.mxu0 %v504
        %1575 = vmatprep.subr.mxu0 0.0
        %1576 = vmatpush1.msra.mxu0 0.0
        %1577 = vmatprep.subr.mxu0 0.0
        %1578 = vmatpush1.msra.mxu0 0.0
        %1579 = vmatprep.subr.mxu0 0.0
        %1580 = vmatpush1.msra.mxu0 0.0
        %1581 = vmatprep.subr.mxu0 0.0
        %1582 = vmatpush1.msra.mxu0 0.0
        %1583 = vmatprep.subr.mxu0 0.0
        %1584 = vmatpush1.msra.mxu0 0.0
        %1585 = vmatprep.subr.mxu0 0.0
        %1586 = vmatpush1.msra.mxu0 0.0
        %1587 = vmatprep.subr.mxu0 0.0
        %1588 = vmatpush1.msra.mxu0 0.0
        %1589 = vmatprep.subr.mxu0 0.0
        %1590 = vmatpush1.msra.mxu0 0.0
        %1591 = vmatprep.subr.mxu0 0.0
        %1592 = vmatpush1.msra.mxu0 0.0
        %1593 = vmatprep.subr.mxu0 0.0
        %1594 = vmatpush1.msra.mxu0 0.0
        %1595 = vmatprep.subr.mxu0 0.0
        %1596 = vmatpush1.msra.mxu0 0.0
        %1597 = vmatprep.subr.mxu0 0.0
        %1598 = vmatpush1.msra.mxu0 0.0
        %1599 = vmatprep.subr.mxu0 0.0
        %1600 = vmatpush1.msra.mxu0 0.0
        %1601 = vmatprep.subr.mxu0 0.0
        %1602 = vmatpush1.msra.mxu0 0.0
        %1603 = vmatprep.subr.mxu0 0.0
        %1604 = vmatpush1.msra.mxu0 0.0
        %1605 = vmatprep.subr.mxu0 0.0
        %1606 = vmatpush1.msra.mxu0 0.0
        %1607 = vmatprep.subr.mxu0 0.0
        %1608 = vmatpush1.msra.mxu0 0.0
        %1609 = vmatprep.subr.mxu0 0.0
        %1610 = vmatpush1.msra.mxu0 0.0
        %1611 = vmatprep.subr.mxu0 0.0
        %1612 = vmatpush1.msra.mxu0 0.0
        %1613 = vmatprep.subr.mxu0 0.0
        %1614 = vmatpush1.msra.mxu0 0.0
        %1615 = vmatprep.subr.mxu0 0.0
        %1616 = vmatpush1.msra.mxu0 0.0
        %1617 = vmatprep.subr.mxu0 0.0
        %1618 = vmatpush1.msra.mxu0 0.0
        %1619 = vmatprep.subr.mxu0 0.0
        %1620 = vmatpush1.msra.mxu0 0.0
        %1621 = vmatprep.subr.mxu0 0.0
        %1622 = vmatpush1.msra.mxu0 0.0
        %1623 = vmatprep.subr.mxu0 0.0
        %1624 = vmatpush1.msra.mxu0 0.0
        %1625 = vmatprep.subr.mxu0 0.0
        %1626 = vmatpush1.msra.mxu0 0.0
        %1627 = vmatprep.subr.mxu0 0.0
        %1628 = vmatpush1.msra.mxu0 0.0
        %1629 = vmatprep.subr.mxu0 0.0
        %1630 = vmatpush1.msra.mxu0 0.0
        %1631 = vmatprep.subr.mxu0 0.0
        %1632 = vmatpush1.msra.mxu0 0.0
        %1633 = vmatprep.subr.mxu0 0.0
        %1634 = vmatpush1.msra.mxu0 0.0
        %1635 = vmatprep.subr.mxu0 0.0
        %1636 = vmatpush1.msra.mxu0 0.0
        %1637 = vmatprep.mubr.f32.mxu0 0.0
        %1638 = vmatmul.mubr.f32.gmra.mrb[0].mxu0 %v441
        %v1639 = vpop.f32.mrb[0].mxu0
        %v1640 = vadd.f32 %v405, %v1639
        %v1641 = vpop.f32.mrb[0].mxu0
        %v1642 = vadd.f32 %v405, %v1641
        %1643 = vdwg.mxu0
        %1644 = vst [vmem:[#allocation2] sm:$0xff] %v575
        %1645 = vst [vmem:[#allocation2 + $0x8] sm:$0xff] %v577
        %1646 = vst [vmem:[#allocation2 + $0x10] sm:$0xff] %v646
        %1647 = vst [vmem:[#allocation2 + $0x18] sm:$0xff] %v648
        %1648 = vst [vmem:[#allocation2 + $0x20] sm:$0xff] %v717
        %1649 = vst [vmem:[#allocation2 + $0x28] sm:$0xff] %v719
        %1650 = vst [vmem:[#allocation2 + $0x30] sm:$0xff] %v788
        %1651 = vst [vmem:[#allocation2 + $0x38] sm:$0xff] %v790
        %1652 = vst [vmem:[#allocation2 + $0x40] sm:$0xff] %v859
        %1653 = vst [vmem:[#allocation2 + $0x48] sm:$0xff] %v861
        %1654 = vst [vmem:[#allocation2 + $0x50] sm:$0xff] %v930
        %1655 = vst [vmem:[#allocation2 + $0x58] sm:$0xff] %v932
        %1656 = vst [vmem:[#allocation2 + $0x60] sm:$0xff] %v1001
        %1657 = vst [vmem:[#allocation2 + $0x68] sm:$0xff] %v1003
        %1658 = vst [vmem:[#allocation2 + $0x70] sm:$0xff] %v1072
        %1659 = vst [vmem:[#allocation2 + $0x78] sm:$0xff] %v1074
        %1660 = vst [vmem:[#allocation2 + $0x80] sm:$0xff] %v1143
        %1661 = vst [vmem:[#allocation2 + $0x88] sm:$0xff] %v1145
        %1662 = vst [vmem:[#allocation2 + $0x90] sm:$0xff] %v1214
        %1663 = vst [vmem:[#allocation2 + $0x98] sm:$0xff] %v1216
        %1664 = vst [vmem:[#allocation2 + $0xa0] sm:$0xff] %v1285
        %1665 = vst [vmem:[#allocation2 + $0xa8] sm:$0xff] %v1287
        %1666 = vst [vmem:[#allocation2 + $0xb0] sm:$0xff] %v1356
        %1667 = vst [vmem:[#allocation2 + $0xb8] sm:$0xff] %v1358
        %1668 = vst [vmem:[#allocation2 + $0xc0] sm:$0xff] %v1427
        %1669 = vst [vmem:[#allocation2 + $0xc8] sm:$0xff] %v1429
        %1670 = vst [vmem:[#allocation2 + $0xd0] sm:$0xff] %v1498
        %1671 = vst [vmem:[#allocation2 + $0xd8] sm:$0xff] %v1500
        %1672 = vst [vmem:[#allocation2 + $0xe0] sm:$0xff] %v1569
        %1673 = vst [vmem:[#allocation2 + $0xe8] sm:$0xff] %v1571
        %1674 = vst [vmem:[#allocation2 + $0xf0] sm:$0xff] %v1640
        %1675 = vst [vmem:[#allocation2 + $0xf8] sm:$0xff] %v1642
        %v1676 = vld [vmem:[%s2] sm:$0xff]
        %v1677 = vld [vmem:[%s4] sm:$0xff]
        %v1678 = vld [vmem:[%s4 + $0x8] sm:$0xff]
        %v1679 = vld [vmem:[%s4 + $0x10] sm:$0xff]
        %v1680 = vld [vmem:[%s4 + $0x18] sm:$0xff]
        %v1681 = vld [vmem:[%s314] sm:$0x1]
        %v1682 = vld [vmem:[%s314 + $0x20] sm:$0x1]
        %v1683 = vld [vmem:[%s314 + $0x40] sm:$0x1]
        %v1684 = vld [vmem:[%s314 + $0x60] sm:$0x1]
        %v1685 = vmax.f32 %v1681, 0.0
        %v1686 = vmax.f32 %v1682, 0.0
        %v1687 = vmax.f32 %v1683, 0.0
        %v1688 = vmax.f32 %v1684, 0.0
        %v1693 = vrot.slane %v1686, 7
        %vm1694 = vcmask 1041409
        %v1695 = vsel %vm1694, %v1693, %v1685
        %v1696 = vrot.slane %v1687, 6
        %vm1697 = vcmask 1042434
        %v1698 = vsel %vm1697, %v1696, %v1695
        %v1699 = vrot.slane %v1688, 5
        %vm1700 = vcmask 1043459
        %v1701 = vsel %vm1700, %v1699, %v1698
        %v1703 = vsel %vm439, %v1676, 0
        %v1705 = vsel %vm443, %v1701, 0
        %1707 = vmatprep.subr.mxu0 0.0
        %1708 = vmatpush1.msra.mxu0 %v1705
        %1709 = vmatprep.subr.mxu0 0.0
        %1710 = vmatpush1.msra.mxu0 0.0
        %1711 = vmatprep.subr.mxu0 0.0
        %1712 = vmatpush1.msra.mxu0 0.0
        %1713 = vmatprep.subr.mxu0 0.0
        %1714 = vmatpush1.msra.mxu0 0.0
        %1715 = vmatprep.subr.mxu0 0.0
        %1716 = vmatpush1.msra.mxu0 0.0
        %1717 = vmatprep.subr.mxu0 0.0
        %1718 = vmatpush1.msra.mxu0 0.0
        %1719 = vmatprep.subr.mxu0 0.0
        %1720 = vmatpush1.msra.mxu0 0.0
        %1721 = vmatprep.subr.mxu0 0.0
        %1722 = vmatpush1.msra.mxu0 0.0
        %1723 = vmatprep.subr.mxu0 0.0
        %1724 = vmatpush1.msra.mxu0 0.0
        %1725 = vmatprep.subr.mxu0 0.0
        %1726 = vmatpush1.msra.mxu0 0.0
        %1727 = vmatprep.subr.mxu0 0.0
        %1728 = vmatpush1.msra.mxu0 0.0
        %1729 = vmatprep.subr.mxu0 0.0
        %1730 = vmatpush1.msra.mxu0 0.0
        %1731 = vmatprep.subr.mxu0 0.0
        %1732 = vmatpush1.msra.mxu0 0.0
        %1733 = vmatprep.subr.mxu0 0.0
        %1734 = vmatpush1.msra.mxu0 0.0
        %1735 = vmatprep.subr.mxu0 0.0
        %1736 = vmatpush1.msra.mxu0 0.0
        %1737 = vmatprep.subr.mxu0 0.0
        %1738 = vmatpush1.msra.mxu0 0.0
        %1739 = vmatprep.subr.mxu0 0.0
        %1740 = vmatpush1.msra.mxu0 0.0
        %1741 = vmatprep.subr.mxu0 0.0
        %1742 = vmatpush1.msra.mxu0 0.0
        %1743 = vmatprep.subr.mxu0 0.0
        %1744 = vmatpush1.msra.mxu0 0.0
        %1745 = vmatprep.subr.mxu0 0.0
        %1746 = vmatpush1.msra.mxu0 0.0
        %1747 = vmatprep.subr.mxu0 0.0
        %1748 = vmatpush1.msra.mxu0 0.0
        %1749 = vmatprep.subr.mxu0 0.0
        %1750 = vmatpush1.msra.mxu0 0.0
        %1751 = vmatprep.subr.mxu0 0.0
        %1752 = vmatpush1.msra.mxu0 0.0
        %1753 = vmatprep.subr.mxu0 0.0
        %1754 = vmatpush1.msra.mxu0 0.0
        %1755 = vmatprep.subr.mxu0 0.0
        %1756 = vmatpush1.msra.mxu0 0.0
        %1757 = vmatprep.subr.mxu0 0.0
        %1758 = vmatpush1.msra.mxu0 0.0
        %1759 = vmatprep.subr.mxu0 0.0
        %1760 = vmatpush1.msra.mxu0 0.0
        %1761 = vmatprep.subr.mxu0 0.0
        %1762 = vmatpush1.msra.mxu0 0.0
        %1763 = vmatprep.subr.mxu0 0.0
        %1764 = vmatpush1.msra.mxu0 0.0
        %1765 = vmatprep.subr.mxu0 0.0
        %1766 = vmatpush1.msra.mxu0 0.0
        %1767 = vmatprep.subr.mxu0 0.0
        %1768 = vmatpush1.msra.mxu0 0.0
        %1769 = vmatprep.subr.mxu0 0.0
        %1770 = vmatpush1.msra.mxu0 0.0
        %1771 = vmatprep.mubr.f32.mxu0 0.0
        %1772 = vmatmul.mubr.f32.gmra.mrb[0].mxu0 %v1703
        %v1773 = vpop.f32.mrb[0].mxu0
        %v1774 = vadd.f32 0.0, %v1773
        %v1775 = vpop.f32.mrb[0].mxu0
        %1776 = vdwg.mxu0
        %vm1777 = vcmask 261120
        %v1779 = vsel %vm1777, %v1774, 0
        %1781 = vmatprep.subr.mxu0 0.0
        %1782 = vmatpush1.msra.mxu0 %v1677
        %1783 = vmatprep.subr.mxu0 0.0
        %1784 = vmatpush1.msra.mxu0 %v1678
        %1785 = vmatprep.subr.mxu0 0.0
        %1786 = vmatpush1.msra.mxu0 %v1679
        %1787 = vmatprep.subr.mxu0 0.0
        %1788 = vmatpush1.msra.mxu0 %v1680
        %1789 = vmatprep.subr.mxu0 0.0
        %1790 = vmatpush1.msra.mxu0 0.0
        %1791 = vmatprep.subr.mxu0 0.0
        %1792 = vmatpush1.msra.mxu0 0.0
        %1793 = vmatprep.subr.mxu0 0.0
        %1794 = vmatpush1.msra.mxu0 0.0
        %1795 = vmatprep.subr.mxu0 0.0
        %1796 = vmatpush1.msra.mxu0 0.0
        %1797 = vmatprep.subr.mxu0 0.0
        %1798 = vmatpush1.msra.mxu0 0.0
        %1799 = vmatprep.subr.mxu0 0.0
        %1800 = vmatpush1.msra.mxu0 0.0
        %1801 = vmatprep.subr.mxu0 0.0
        %1802 = vmatpush1.msra.mxu0 0.0
        %1803 = vmatprep.subr.mxu0 0.0
        %1804 = vmatpush1.msra.mxu0 0.0
        %1805 = vmatprep.subr.mxu0 0.0
        %1806 = vmatpush1.msra.mxu0 0.0
        %1807 = vmatprep.subr.mxu0 0.0
        %1808 = vmatpush1.msra.mxu0 0.0
        %1809 = vmatprep.subr.mxu0 0.0
        %1810 = vmatpush1.msra.mxu0 0.0
        %1811 = vmatprep.subr.mxu0 0.0
        %1812 = vmatpush1.msra.mxu0 0.0
        %1813 = vmatprep.subr.mxu0 0.0
        %1814 = vmatpush1.msra.mxu0 0.0
        %1815 = vmatprep.subr.mxu0 0.0
        %1816 = vmatpush1.msra.mxu0 0.0
        %1817 = vmatprep.subr.mxu0 0.0
        %1818 = vmatpush1.msra.mxu0 0.0
        %1819 = vmatprep.subr.mxu0 0.0
        %1820 = vmatpush1.msra.mxu0 0.0
        %1821 = vmatprep.subr.mxu0 0.0
        %1822 = vmatpush1.msra.mxu0 0.0
        %1823 = vmatprep.subr.mxu0 0.0
        %1824 = vmatpush1.msra.mxu0 0.0
        %1825 = vmatprep.subr.mxu0 0.0
        %1826 = vmatpush1.msra.mxu0 0.0
        %1827 = vmatprep.subr.mxu0 0.0
        %1828 = vmatpush1.msra.mxu0 0.0
        %1829 = vmatprep.subr.mxu0 0.0
        %1830 = vmatpush1.msra.mxu0 0.0
        %1831 = vmatprep.subr.mxu0 0.0
        %1832 = vmatpush1.msra.mxu0 0.0
        %1833 = vmatprep.subr.mxu0 0.0
        %1834 = vmatpush1.msra.mxu0 0.0
        %1835 = vmatprep.subr.mxu0 0.0
        %1836 = vmatpush1.msra.mxu0 0.0
        %1837 = vmatprep.subr.mxu0 0.0
        %1838 = vmatpush1.msra.mxu0 0.0
        %1839 = vmatprep.subr.mxu0 0.0
        %1840 = vmatpush1.msra.mxu0 0.0
        %1841 = vmatprep.subr.mxu0 0.0
        %1842 = vmatpush1.msra.mxu0 0.0
        %1843 = vmatprep.subr.mxu0 0.0
        %1844 = vmatpush1.msra.mxu0 0.0
        %1845 = vmatprep.mubr.f32.mxu0 0.0
        %1846 = vmatmul.mubr.f32.gmra.mrb[0].mxu0 %v1779
        %v1847 = vpop.f32.mrb[0].mxu0
        %v1848 = vadd.f32 0.0, %v1847
        %v1849 = vpop.f32.mrb[0].mxu0
        %1850 = vdwg.mxu0
        %v1851 = vld [vmem:[#allocation2] sm:$0xff]
        %v1852 = vadd.f32 %v1851, %v1848
        %vm1853 = vcmask 523264
        %1854 = vst.msk [vmem:[#allocation2] sm:$0xff] %vm1853, %v1852
        %v1855 = vld [vmem:[#allocation2] sm:$0xff]
        %1857 = vrot.lane.b32.xlu0 %v1848, 64
        %v1858 = vpop.permute.xlu0 %1857
        %v1860 = vadd.f32 %v1855, %v1858
        %vm1861 = vcmask 1048064
        %1862 = vst.msk [vmem:[#allocation2] sm:$0xff] %vm1861, %v1860
        %v1863 = vld [vmem:[%s314 + $0x1] sm:$0x1]
        %v1864 = vld [vmem:[%s314 + $0x21] sm:$0x1]
        %v1865 = vld [vmem:[%s314 + $0x41] sm:$0x1]
        %v1866 = vld [vmem:[%s314 + $0x61] sm:$0x1]
        %v1867 = vmax.f32 %v1863, 0.0
        %v1868 = vmax.f32 %v1864, 0.0
        %v1869 = vmax.f32 %v1865, 0.0
        %v1870 = vmax.f32 %v1866, 0.0
        %v1875 = vrot.slane %v1868, 7
        %v1876 = vsel %vm1694, %v1875, %v1867
        %v1877 = vrot.slane %v1869, 6
        %v1878 = vsel %vm1697, %v1877, %v1876
        %v1879 = vrot.slane %v1870, 5
        %v1880 = vsel %vm1700, %v1879, %v1878
        %v1881 = vsel %vm443, %v1880, 0
        %1883 = vmatprep.subr.mxu0 0.0
        %1884 = vmatpush1.msra.mxu0 %v1881
        %1885 = vmatprep.subr.mxu0 0.0
        %1886 = vmatpush1.msra.mxu0 0.0
        %1887 = vmatprep.subr.mxu0 0.0
        %1888 = vmatpush1.msra.mxu0 0.0
        %1889 = vmatprep.subr.mxu0 0.0
        %1890 = vmatpush1.msra.mxu0 0.0
        %1891 = vmatprep.subr.mxu0 0.0
        %1892 = vmatpush1.msra.mxu0 0.0
        %1893 = vmatprep.subr.mxu0 0.0
        %1894 = vmatpush1.msra.mxu0 0.0
        %1895 = vmatprep.subr.mxu0 0.0
        %1896 = vmatpush1.msra.mxu0 0.0
        %1897 = vmatprep.subr.mxu0 0.0
        %1898 = vmatpush1.msra.mxu0 0.0
        %1899 = vmatprep.subr.mxu0 0.0
        %1900 = vmatpush1.msra.mxu0 0.0
        %1901 = vmatprep.subr.mxu0 0.0
        %1902 = vmatpush1.msra.mxu0 0.0
        %1903 = vmatprep.subr.mxu0 0.0
        %1904 = vmatpush1.msra.mxu0 0.0
        %1905 = vmatprep.subr.mxu0 0.0
        %1906 = vmatpush1.msra.mxu0 0.0
        %1907 = vmatprep.subr.mxu0 0.0
        %1908 = vmatpush1.msra.mxu0 0.0
        %1909 = vmatprep.subr.mxu0 0.0
        %1910 = vmatpush1.msra.mxu0 0.0
        %1911 = vmatprep.subr.mxu0 0.0
        %1912 = vmatpush1.msra.mxu0 0.0
        %1913 = vmatprep.subr.mxu0 0.0
        %1914 = vmatpush1.msra.mxu0 0.0
        %1915 = vmatprep.subr.mxu0 0.0
        %1916 = vmatpush1.msra.mxu0 0.0
        %1917 = vmatprep.subr.mxu0 0.0
        %1918 = vmatpush1.msra.mxu0 0.0
        %1919 = vmatprep.subr.mxu0 0.0
        %1920 = vmatpush1.msra.mxu0 0.0
        %1921 = vmatprep.subr.mxu0 0.0
        %1922 = vmatpush1.msra.mxu0 0.0
        %1923 = vmatprep.subr.mxu0 0.0
        %1924 = vmatpush1.msra.mxu0 0.0
        %1925 = vmatprep.subr.mxu0 0.0
        %1926 = vmatpush1.msra.mxu0 0.0
        %1927 = vmatprep.subr.mxu0 0.0
        %1928 = vmatpush1.msra.mxu0 0.0
        %1929 = vmatprep.subr.mxu0 0.0
        %1930 = vmatpush1.msra.mxu0 0.0
        %1931 = vmatprep.subr.mxu0 0.0
        %1932 = vmatpush1.msra.mxu0 0.0
        %1933 = vmatprep.subr.mxu0 0.0
        %1934 = vmatpush1.msra.mxu0 0.0
        %1935 = vmatprep.subr.mxu0 0.0
        %1936 = vmatpush1.msra.mxu0 0.0
        %1937 = vmatprep.subr.mxu0 0.0
        %1938 = vmatpush1.msra.mxu0 0.0
        %1939 = vmatprep.subr.mxu0 0.0
        %1940 = vmatpush1.msra.mxu0 0.0
        %1941 = vmatprep.subr.mxu0 0.0
        %1942 = vmatpush1.msra.mxu0 0.0
        %1943 = vmatprep.subr.mxu0 0.0
        %1944 = vmatpush1.msra.mxu0 0.0
        %1945 = vmatprep.subr.mxu0 0.0
        %1946 = vmatpush1.msra.mxu0 0.0
        %1947 = vmatprep.mubr.f32.mxu0 0.0
        %1948 = vmatmul.mubr.f32.gmra.mrb[0].mxu0 %v1703
        %v1949 = vpop.f32.mrb[0].mxu0
        %v1950 = vadd.f32 0.0, %v1949
        %v1951 = vpop.f32.mrb[0].mxu0
        %1952 = vdwg.mxu0
        %v1954 = vsel %vm1777, %v1950, 0
        %1956 = vmatprep.subr.mxu0 0.0
        %1957 = vmatpush1.msra.mxu0 %v1677
        %1958 = vmatprep.subr.mxu0 0.0
        %1959 = vmatpush1.msra.mxu0 %v1678
        %1960 = vmatprep.subr.mxu0 0.0
        %1961 = vmatpush1.msra.mxu0 %v1679
        %1962 = vmatprep.subr.mxu0 0.0
        %1963 = vmatpush1.msra.mxu0 %v1680
        %1964 = vmatprep.subr.mxu0 0.0
        %1965 = vmatpush1.msra.mxu0 0.0
        %1966 = vmatprep.subr.mxu0 0.0
        %1967 = vmatpush1.msra.mxu0 0.0
        %1968 = vmatprep.subr.mxu0 0.0
        %1969 = vmatpush1.msra.mxu0 0.0
        %1970 = vmatprep.subr.mxu0 0.0
        %1971 = vmatpush1.msra.mxu0 0.0
        %1972 = vmatprep.subr.mxu0 0.0
        %1973 = vmatpush1.msra.mxu0 0.0
        %1974 = vmatprep.subr.mxu0 0.0
        %1975 = vmatpush1.msra.mxu0 0.0
        %1976 = vmatprep.subr.mxu0 0.0
        %1977 = vmatpush1.msra.mxu0 0.0
        %1978 = vmatprep.subr.mxu0 0.0
        %1979 = vmatpush1.msra.mxu0 0.0
        %1980 = vmatprep.subr.mxu0 0.0
        %1981 = vmatpush1.msra.mxu0 0.0
        %1982 = vmatprep.subr.mxu0 0.0
        %1983 = vmatpush1.msra.mxu0 0.0
        %1984 = vmatprep.subr.mxu0 0.0
        %1985 = vmatpush1.msra.mxu0 0.0
        %1986 = vmatprep.subr.mxu0 0.0
        %1987 = vmatpush1.msra.mxu0 0.0
        %1988 = vmatprep.subr.mxu0 0.0
        %1989 = vmatpush1.msra.mxu0 0.0
        %1990 = vmatprep.subr.mxu0 0.0
        %1991 = vmatpush1.msra.mxu0 0.0
        %1992 = vmatprep.subr.mxu0 0.0
        %1993 = vmatpush1.msra.mxu0 0.0
        %1994 = vmatprep.subr.mxu0 0.0
        %1995 = vmatpush1.msra.mxu0 0.0
        %1996 = vmatprep.subr.mxu0 0.0
        %1997 = vmatpush1.msra.mxu0 0.0
        %1998 = vmatprep.subr.mxu0 0.0
        %1999 = vmatpush1.msra.mxu0 0.0
        %2000 = vmatprep.subr.mxu0 0.0
        %2001 = vmatpush1.msra.mxu0 0.0
        %2002 = vmatprep.subr.mxu0 0.0
        %2003 = vmatpush1.msra.mxu0 0.0
        %2004 = vmatprep.subr.mxu0 0.0
        %2005 = vmatpush1.msra.mxu0 0.0
        %2006 = vmatprep.subr.mxu0 0.0
        %2007 = vmatpush1.msra.mxu0 0.0
        %2008 = vmatprep.subr.mxu0 0.0
        %2009 = vmatpush1.msra.mxu0 0.0
        %2010 = vmatprep.subr.mxu0 0.0
        %2011 = vmatpush1.msra.mxu0 0.0
        %2012 = vmatprep.subr.mxu0 0.0
        %2013 = vmatpush1.msra.mxu0 0.0
        %2014 = vmatprep.subr.mxu0 0.0
        %2015 = vmatpush1.msra.mxu0 0.0
        %2016 = vmatprep.subr.mxu0 0.0
        %2017 = vmatpush1.msra.mxu0 0.0
        %2018 = vmatprep.subr.mxu0 0.0
        %2019 = vmatpush1.msra.mxu0 0.0
        %2020 = vmatprep.mubr.f32.mxu0 0.0
        %2021 = vmatmul.mubr.f32.gmra.mrb[0].mxu0 %v1954
        %v2022 = vpop.f32.mrb[0].mxu0
        %v2023 = vadd.f32 0.0, %v2022
        %v2024 = vpop.f32.mrb[0].mxu0
        %2025 = vdwg.mxu0
        %v2026 = vld [vmem:[#allocation2 + $0x8] sm:$0xff]
        %v2027 = vadd.f32 %v2026, %v2023
        %2028 = vst.msk [vmem:[#allocation2 + $0x8] sm:$0xff] %vm1853, %v2027
        %v2029 = vld [vmem:[#allocation2 + $0x8] sm:$0xff]
        %2031 = vrot.lane.b32.xlu0 %v2023, 64
        %v2032 = vpop.permute.xlu0 %2031
        %v2034 = vadd.f32 %v2029, %v2032
        %2035 = vst.msk [vmem:[#allocation2 + $0x8] sm:$0xff] %vm1861, %v2034
        %v2036 = vld [vmem:[%s314 + $0x2] sm:$0x1]
        %v2037 = vld [vmem:[%s314 + $0x22] sm:$0x1]
        %v2038 = vld [vmem:[%s314 + $0x42] sm:$0x1]
        %v2039 = vld [vmem:[%s314 + $0x62] sm:$0x1]
        %v2040 = vmax.f32 %v2036, 0.0
        %v2041 = vmax.f32 %v2037, 0.0
        %v2042 = vmax.f32 %v2038, 0.0
        %v2043 = vmax.f32 %v2039, 0.0
        %v2048 = vrot.slane %v2041, 7
        %v2049 = vsel %vm1694, %v2048, %v2040
        %v2050 = vrot.slane %v2042, 6
        %v2051 = vsel %vm1697, %v2050, %v2049
        %v2052 = vrot.slane %v2043, 5
        %v2053 = vsel %vm1700, %v2052, %v2051
        %v2054 = vsel %vm443, %v2053, 0
        %2056 = vmatprep.subr.mxu0 0.0
        %2057 = vmatpush1.msra.mxu0 %v2054
        %2058 = vmatprep.subr.mxu0 0.0
        %2059 = vmatpush1.msra.mxu0 0.0
        %2060 = vmatprep.subr.mxu0 0.0
        %2061 = vmatpush1.msra.mxu0 0.0
        %2062 = vmatprep.subr.mxu0 0.0
        %2063 = vmatpush1.msra.mxu0 0.0
        %2064 = vmatprep.subr.mxu0 0.0
        %2065 = vmatpush1.msra.mxu0 0.0
        %2066 = vmatprep.subr.mxu0 0.0
        %2067 = vmatpush1.msra.mxu0 0.0
        %2068 = vmatprep.subr.mxu0 0.0
        %2069 = vmatpush1.msra.mxu0 0.0
        %2070 = vmatprep.subr.mxu0 0.0
        %2071 = vmatpush1.msra.mxu0 0.0
        %2072 = vmatprep.subr.mxu0 0.0
        %2073 = vmatpush1.msra.mxu0 0.0
        %2074 = vmatprep.subr.mxu0 0.0
        %2075 = vmatpush1.msra.mxu0 0.0
        %2076 = vmatprep.subr.mxu0 0.0
        %2077 = vmatpush1.msra.mxu0 0.0
        %2078 = vmatprep.subr.mxu0 0.0
        %2079 = vmatpush1.msra.mxu0 0.0
        %2080 = vmatprep.subr.mxu0 0.0
        %2081 = vmatpush1.msra.mxu0 0.0
        %2082 = vmatprep.subr.mxu0 0.0
        %2083 = vmatpush1.msra.mxu0 0.0
        %2084 = vmatprep.subr.mxu0 0.0
        %2085 = vmatpush1.msra.mxu0 0.0
        %2086 = vmatprep.subr.mxu0 0.0
        %2087 = vmatpush1.msra.mxu0 0.0
        %2088 = vmatprep.subr.mxu0 0.0
        %2089 = vmatpush1.msra.mxu0 0.0
        %2090 = vmatprep.subr.mxu0 0.0
        %2091 = vmatpush1.msra.mxu0 0.0
        %2092 = vmatprep.subr.mxu0 0.0
        %2093 = vmatpush1.msra.mxu0 0.0
        %2094 = vmatprep.subr.mxu0 0.0
        %2095 = vmatpush1.msra.mxu0 0.0
        %2096 = vmatprep.subr.mxu0 0.0
        %2097 = vmatpush1.msra.mxu0 0.0
        %2098 = vmatprep.subr.mxu0 0.0
        %2099 = vmatpush1.msra.mxu0 0.0
        %2100 = vmatprep.subr.mxu0 0.0
        %2101 = vmatpush1.msra.mxu0 0.0
        %2102 = vmatprep.subr.mxu0 0.0
        %2103 = vmatpush1.msra.mxu0 0.0
        %2104 = vmatprep.subr.mxu0 0.0
        %2105 = vmatpush1.msra.mxu0 0.0
        %2106 = vmatprep.subr.mxu0 0.0
        %2107 = vmatpush1.msra.mxu0 0.0
        %2108 = vmatprep.subr.mxu0 0.0
        %2109 = vmatpush1.msra.mxu0 0.0
        %2110 = vmatprep.subr.mxu0 0.0
        %2111 = vmatpush1.msra.mxu0 0.0
        %2112 = vmatprep.subr.mxu0 0.0
        %2113 = vmatpush1.msra.mxu0 0.0
        %2114 = vmatprep.subr.mxu0 0.0
        %2115 = vmatpush1.msra.mxu0 0.0
        %2116 = vmatprep.subr.mxu0 0.0
        %2117 = vmatpush1.msra.mxu0 0.0
        %2118 = vmatprep.subr.mxu0 0.0
        %2119 = vmatpush1.msra.mxu0 0.0
        %2120 = vmatprep.mubr.f32.mxu0 0.0
        %2121 = vmatmul.mubr.f32.gmra.mrb[0].mxu0 %v1703
        %v2122 = vpop.f32.mrb[0].mxu0
        %v2123 = vadd.f32 0.0, %v2122
        %v2124 = vpop.f32.mrb[0].mxu0
        %2125 = vdwg.mxu0
        %v2127 = vsel %vm1777, %v2123, 0
        %2129 = vmatprep.subr.mxu0 0.0
        %2130 = vmatpush1.msra.mxu0 %v1677
        %2131 = vmatprep.subr.mxu0 0.0
        %2132 = vmatpush1.msra.mxu0 %v1678
        %2133 = vmatprep.subr.mxu0 0.0
        %2134 = vmatpush1.msra.mxu0 %v1679
        %2135 = vmatprep.subr.mxu0 0.0
        %2136 = vmatpush1.msra.mxu0 %v1680
        %2137 = vmatprep.subr.mxu0 0.0
        %2138 = vmatpush1.msra.mxu0 0.0
        %2139 = vmatprep.subr.mxu0 0.0
        %2140 = vmatpush1.msra.mxu0 0.0
        %2141 = vmatprep.subr.mxu0 0.0
        %2142 = vmatpush1.msra.mxu0 0.0
        %2143 = vmatprep.subr.mxu0 0.0
        %2144 = vmatpush1.msra.mxu0 0.0
        %2145 = vmatprep.subr.mxu0 0.0
        %2146 = vmatpush1.msra.mxu0 0.0
        %2147 = vmatprep.subr.mxu0 0.0
        %2148 = vmatpush1.msra.mxu0 0.0
        %2149 = vmatprep.subr.mxu0 0.0
        %2150 = vmatpush1.msra.mxu0 0.0
        %2151 = vmatprep.subr.mxu0 0.0
        %2152 = vmatpush1.msra.mxu0 0.0
        %2153 = vmatprep.subr.mxu0 0.0
        %2154 = vmatpush1.msra.mxu0 0.0
        %2155 = vmatprep.subr.mxu0 0.0
        %2156 = vmatpush1.msra.mxu0 0.0
        %2157 = vmatprep.subr.mxu0 0.0
        %2158 = vmatpush1.msra.mxu0 0.0
        %2159 = vmatprep.subr.mxu0 0.0
        %2160 = vmatpush1.msra.mxu0 0.0
        %2161 = vmatprep.subr.mxu0 0.0
        %2162 = vmatpush1.msra.mxu0 0.0
        %2163 = vmatprep.subr.mxu0 0.0
        %2164 = vmatpush1.msra.mxu0 0.0
        %2165 = vmatprep.subr.mxu0 0.0
        %2166 = vmatpush1.msra.mxu0 0.0
        %2167 = vmatprep.subr.mxu0 0.0
        %2168 = vmatpush1.msra.mxu0 0.0
        %2169 = vmatprep.subr.mxu0 0.0
        %2170 = vmatpush1.msra.mxu0 0.0
        %2171 = vmatprep.subr.mxu0 0.0
        %2172 = vmatpush1.msra.mxu0 0.0
        %2173 = vmatprep.subr.mxu0 0.0
        %2174 = vmatpush1.msra.mxu0 0.0
        %2175 = vmatprep.subr.mxu0 0.0
        %2176 = vmatpush1.msra.mxu0 0.0
        %2177 = vmatprep.subr.mxu0 0.0
        %2178 = vmatpush1.msra.mxu0 0.0
        %2179 = vmatprep.subr.mxu0 0.0
        %2180 = vmatpush1.msra.mxu0 0.0
        %2181 = vmatprep.subr.mxu0 0.0
        %2182 = vmatpush1.msra.mxu0 0.0
        %2183 = vmatprep.subr.mxu0 0.0
        %2184 = vmatpush1.msra.mxu0 0.0
        %2185 = vmatprep.subr.mxu0 0.0
        %2186 = vmatpush1.msra.mxu0 0.0
        %2187 = vmatprep.subr.mxu0 0.0
        %2188 = vmatpush1.msra.mxu0 0.0
        %2189 = vmatprep.subr.mxu0 0.0
        %2190 = vmatpush1.msra.mxu0 0.0
        %2191 = vmatprep.subr.mxu0 0.0
        %2192 = vmatpush1.msra.mxu0 0.0
        %2193 = vmatprep.mubr.f32.mxu0 0.0
        %2194 = vmatmul.mubr.f32.gmra.mrb[0].mxu0 %v2127
        %v2195 = vpop.f32.mrb[0].mxu0
        %v2196 = vadd.f32 0.0, %v2195
        %v2197 = vpop.f32.mrb[0].mxu0
        %2198 = vdwg.mxu0
        %v2199 = vld [vmem:[#allocation2 + $0x10] sm:$0xff]
        %v2200 = vadd.f32 %v2199, %v2196
        %2201 = vst.msk [vmem:[#allocation2 + $0x10] sm:$0xff] %vm1853, %v2200
        %v2202 = vld [vmem:[#allocation2 + $0x10] sm:$0xff]
        %2204 = vrot.lane.b32.xlu0 %v2196, 64
        %v2205 = vpop.permute.xlu0 %2204
        %v2207 = vadd.f32 %v2202, %v2205
        %2208 = vst.msk [vmem:[#allocation2 + $0x10] sm:$0xff] %vm1861, %v2207
        %v2209 = vld [vmem:[%s314 + $0x3] sm:$0x1]
        %v2210 = vld [vmem:[%s314 + $0x23] sm:$0x1]
        %v2211 = vld [vmem:[%s314 + $0x43] sm:$0x1]
        %v2212 = vld [vmem:[%s314 + $0x63] sm:$0x1]
        %v2213 = vmax.f32 %v2209, 0.0
        %v2214 = vmax.f32 %v2210, 0.0
        %v2215 = vmax.f32 %v2211, 0.0
        %v2216 = vmax.f32 %v2212, 0.0
        %v2221 = vrot.slane %v2214, 7
        %v2222 = vsel %vm1694, %v2221, %v2213
        %v2223 = vrot.slane %v2215, 6
        %v2224 = vsel %vm1697, %v2223, %v2222
        %v2225 = vrot.slane %v2216, 5
        %v2226 = vsel %vm1700, %v2225, %v2224
        %v2227 = vsel %vm443, %v2226, 0
        %2229 = vmatprep.subr.mxu0 0.0
        %2230 = vmatpush1.msra.mxu0 %v2227
        %2231 = vmatprep.subr.mxu0 0.0
        %2232 = vmatpush1.msra.mxu0 0.0
        %2233 = vmatprep.subr.mxu0 0.0
        %2234 = vmatpush1.msra.mxu0 0.0
        %2235 = vmatprep.subr.mxu0 0.0
        %2236 = vmatpush1.msra.mxu0 0.0
        %2237 = vmatprep.subr.mxu0 0.0
        %2238 = vmatpush1.msra.mxu0 0.0
        %2239 = vmatprep.subr.mxu0 0.0
        %2240 = vmatpush1.msra.mxu0 0.0
        %2241 = vmatprep.subr.mxu0 0.0
        %2242 = vmatpush1.msra.mxu0 0.0
        %2243 = vmatprep.subr.mxu0 0.0
        %2244 = vmatpush1.msra.mxu0 0.0
        %2245 = vmatprep.subr.mxu0 0.0
        %2246 = vmatpush1.msra.mxu0 0.0
        %2247 = vmatprep.subr.mxu0 0.0
        %2248 = vmatpush1.msra.mxu0 0.0
        %2249 = vmatprep.subr.mxu0 0.0
        %2250 = vmatpush1.msra.mxu0 0.0
        %2251 = vmatprep.subr.mxu0 0.0
        %2252 = vmatpush1.msra.mxu0 0.0
        %2253 = vmatprep.subr.mxu0 0.0
        %2254 = vmatpush1.msra.mxu0 0.0
        %2255 = vmatprep.subr.mxu0 0.0
        %2256 = vmatpush1.msra.mxu0 0.0
        %2257 = vmatprep.subr.mxu0 0.0
        %2258 = vmatpush1.msra.mxu0 0.0
        %2259 = vmatprep.subr.mxu0 0.0
        %2260 = vmatpush1.msra.mxu0 0.0
        %2261 = vmatprep.subr.mxu0 0.0
        %2262 = vmatpush1.msra.mxu0 0.0
        %2263 = vmatprep.subr.mxu0 0.0
        %2264 = vmatpush1.msra.mxu0 0.0
        %2265 = vmatprep.subr.mxu0 0.0
        %2266 = vmatpush1.msra.mxu0 0.0
        %2267 = vmatprep.subr.mxu0 0.0
        %2268 = vmatpush1.msra.mxu0 0.0
        %2269 = vmatprep.subr.mxu0 0.0
        %2270 = vmatpush1.msra.mxu0 0.0
        %2271 = vmatprep.subr.mxu0 0.0
        %2272 = vmatpush1.msra.mxu0 0.0
        %2273 = vmatprep.subr.mxu0 0.0
        %2274 = vmatpush1.msra.mxu0 0.0
        %2275 = vmatprep.subr.mxu0 0.0
        %2276 = vmatpush1.msra.mxu0 0.0
        %2277 = vmatprep.subr.mxu0 0.0
        %2278 = vmatpush1.msra.mxu0 0.0
        %2279 = vmatprep.subr.mxu0 0.0
        %2280 = vmatpush1.msra.mxu0 0.0
        %2281 = vmatprep.subr.mxu0 0.0
        %2282 = vmatpush1.msra.mxu0 0.0
        %2283 = vmatprep.subr.mxu0 0.0
        %2284 = vmatpush1.msra.mxu0 0.0
        %2285 = vmatprep.subr.mxu0 0.0
        %2286 = vmatpush1.msra.mxu0 0.0
        %2287 = vmatprep.subr.mxu0 0.0
        %2288 = vmatpush1.msra.mxu0 0.0
        %2289 = vmatprep.subr.mxu0 0.0
        %2290 = vmatpush1.msra.mxu0 0.0
        %2291 = vmatprep.subr.mxu0 0.0
        %2292 = vmatpush1.msra.mxu0 0.0
        %2293 = vmatprep.mubr.f32.mxu0 0.0
        %2294 = vmatmul.mubr.f32.gmra.mrb[0].mxu0 %v1703
        %v2295 = vpop.f32.mrb[0].mxu0
        %v2296 = vadd.f32 0.0, %v2295
        %v2297 = vpop.f32.mrb[0].mxu0
        %2298 = vdwg.mxu0
        %v2300 = vsel %vm1777, %v2296, 0
        %2302 = vmatprep.subr.mxu0 0.0
        %2303 = vmatpush1.msra.mxu0 %v1677
        %2304 = vmatprep.subr.mxu0 0.0
        %2305 = vmatpush1.msra.mxu0 %v1678
        %2306 = vmatprep.subr.mxu0 0.0
        %2307 = vmatpush1.msra.mxu0 %v1679
        %2308 = vmatprep.subr.mxu0 0.0
        %2309 = vmatpush1.msra.mxu0 %v1680
        %2310 = vmatprep.subr.mxu0 0.0
        %2311 = vmatpush1.msra.mxu0 0.0
        %2312 = vmatprep.subr.mxu0 0.0
        %2313 = vmatpush1.msra.mxu0 0.0
        %2314 = vmatprep.subr.mxu0 0.0
        %2315 = vmatpush1.msra.mxu0 0.0
        %2316 = vmatprep.subr.mxu0 0.0
        %2317 = vmatpush1.msra.mxu0 0.0
        %2318 = vmatprep.subr.mxu0 0.0
        %2319 = vmatpush1.msra.mxu0 0.0
        %2320 = vmatprep.subr.mxu0 0.0
        %2321 = vmatpush1.msra.mxu0 0.0
        %2322 = vmatprep.subr.mxu0 0.0
        %2323 = vmatpush1.msra.mxu0 0.0
        %2324 = vmatprep.subr.mxu0 0.0
        %2325 = vmatpush1.msra.mxu0 0.0
        %2326 = vmatprep.subr.mxu0 0.0
        %2327 = vmatpush1.msra.mxu0 0.0
        %2328 = vmatprep.subr.mxu0 0.0
        %2329 = vmatpush1.msra.mxu0 0.0
        %2330 = vmatprep.subr.mxu0 0.0
        %2331 = vmatpush1.msra.mxu0 0.0
        %2332 = vmatprep.subr.mxu0 0.0
        %2333 = vmatpush1.msra.mxu0 0.0
        %2334 = vmatprep.subr.mxu0 0.0
        %2335 = vmatpush1.msra.mxu0 0.0
        %2336 = vmatprep.subr.mxu0 0.0
        %2337 = vmatpush1.msra.mxu0 0.0
        %2338 = vmatprep.subr.mxu0 0.0
        %2339 = vmatpush1.msra.mxu0 0.0
        %2340 = vmatprep.subr.mxu0 0.0
        %2341 = vmatpush1.msra.mxu0 0.0
        %2342 = vmatprep.subr.mxu0 0.0
        %2343 = vmatpush1.msra.mxu0 0.0
        %2344 = vmatprep.subr.mxu0 0.0
        %2345 = vmatpush1.msra.mxu0 0.0
        %2346 = vmatprep.subr.mxu0 0.0
        %2347 = vmatpush1.msra.mxu0 0.0
        %2348 = vmatprep.subr.mxu0 0.0
        %2349 = vmatpush1.msra.mxu0 0.0
        %2350 = vmatprep.subr.mxu0 0.0
        %2351 = vmatpush1.msra.mxu0 0.0
        %2352 = vmatprep.subr.mxu0 0.0
        %2353 = vmatpush1.msra.mxu0 0.0
        %2354 = vmatprep.subr.mxu0 0.0
        %2355 = vmatpush1.msra.mxu0 0.0
        %2356 = vmatprep.subr.mxu0 0.0
        %2357 = vmatpush1.msra.mxu0 0.0
        %2358 = vmatprep.subr.mxu0 0.0
        %2359 = vmatpush1.msra.mxu0 0.0
        %2360 = vmatprep.subr.mxu0 0.0
        %2361 = vmatpush1.msra.mxu0 0.0
        %2362 = vmatprep.subr.mxu0 0.0
        %2363 = vmatpush1.msra.mxu0 0.0
        %2364 = vmatprep.subr.mxu0 0.0
        %2365 = vmatpush1.msra.mxu0 0.0
        %2366 = vmatprep.mubr.f32.mxu0 0.0
        %2367 = vmatmul.mubr.f32.gmra.mrb[0].mxu0 %v2300
        %v2368 = vpop.f32.mrb[0].mxu0
        %v2369 = vadd.f32 0.0, %v2368
        %v2370 = vpop.f32.mrb[0].mxu0
        %2371 = vdwg.mxu0
        %v2372 = vld [vmem:[#allocation2 + $0x18] sm:$0xff]
        %v2373 = vadd.f32 %v2372, %v2369
        %2374 = vst.msk [vmem:[#allocation2 + $0x18] sm:$0xff] %vm1853, %v2373
        %v2375 = vld [vmem:[#allocation2 + $0x18] sm:$0xff]
        %2377 = vrot.lane.b32.xlu0 %v2369, 64
        %v2378 = vpop.permute.xlu0 %2377
        %v2380 = vadd.f32 %v2375, %v2378
        %2381 = vst.msk [vmem:[#allocation2 + $0x18] sm:$0xff] %vm1861, %v2380
        %v2382 = vld [vmem:[%s314 + $0x4] sm:$0x1]
        %v2383 = vld [vmem:[%s314 + $0x24] sm:$0x1]
        %v2384 = vld [vmem:[%s314 + $0x44] sm:$0x1]
        %v2385 = vld [vmem:[%s314 + $0x64] sm:$0x1]
        %v2386 = vmax.f32 %v2382, 0.0
        %v2387 = vmax.f32 %v2383, 0.0
        %v2388 = vmax.f32 %v2384, 0.0
        %v2389 = vmax.f32 %v2385, 0.0
        %v2394 = vrot.slane %v2387, 7
        %v2395 = vsel %vm1694, %v2394, %v2386
        %v2396 = vrot.slane %v2388, 6
        %v2397 = vsel %vm1697, %v2396, %v2395
        %v2398 = vrot.slane %v2389, 5
        %v2399 = vsel %vm1700, %v2398, %v2397
        %v2400 = vsel %vm443, %v2399, 0
        %2402 = vmatprep.subr.mxu0 0.0
        %2403 = vmatpush1.msra.mxu0 %v2400
        %2404 = vmatprep.subr.mxu0 0.0
        %2405 = vmatpush1.msra.mxu0 0.0
        %2406 = vmatprep.subr.mxu0 0.0
        %2407 = vmatpush1.msra.mxu0 0.0
        %2408 = vmatprep.subr.mxu0 0.0
        %2409 = vmatpush1.msra.mxu0 0.0
        %2410 = vmatprep.subr.mxu0 0.0
        %2411 = vmatpush1.msra.mxu0 0.0
        %2412 = vmatprep.subr.mxu0 0.0
        %2413 = vmatpush1.msra.mxu0 0.0
        %2414 = vmatprep.subr.mxu0 0.0
        %2415 = vmatpush1.msra.mxu0 0.0
        %2416 = vmatprep.subr.mxu0 0.0
        %2417 = vmatpush1.msra.mxu0 0.0
        %2418 = vmatprep.subr.mxu0 0.0
        %2419 = vmatpush1.msra.mxu0 0.0
        %2420 = vmatprep.subr.mxu0 0.0
        %2421 = vmatpush1.msra.mxu0 0.0
        %2422 = vmatprep.subr.mxu0 0.0
        %2423 = vmatpush1.msra.mxu0 0.0
        %2424 = vmatprep.subr.mxu0 0.0
        %2425 = vmatpush1.msra.mxu0 0.0
        %2426 = vmatprep.subr.mxu0 0.0
        %2427 = vmatpush1.msra.mxu0 0.0
        %2428 = vmatprep.subr.mxu0 0.0
        %2429 = vmatpush1.msra.mxu0 0.0
        %2430 = vmatprep.subr.mxu0 0.0
        %2431 = vmatpush1.msra.mxu0 0.0
        %2432 = vmatprep.subr.mxu0 0.0
        %2433 = vmatpush1.msra.mxu0 0.0
        %2434 = vmatprep.subr.mxu0 0.0
        %2435 = vmatpush1.msra.mxu0 0.0
        %2436 = vmatprep.subr.mxu0 0.0
        %2437 = vmatpush1.msra.mxu0 0.0
        %2438 = vmatprep.subr.mxu0 0.0
        %2439 = vmatpush1.msra.mxu0 0.0
        %2440 = vmatprep.subr.mxu0 0.0
        %2441 = vmatpush1.msra.mxu0 0.0
        %2442 = vmatprep.subr.mxu0 0.0
        %2443 = vmatpush1.msra.mxu0 0.0
        %2444 = vmatprep.subr.mxu0 0.0
        %2445 = vmatpush1.msra.mxu0 0.0
        %2446 = vmatprep.subr.mxu0 0.0
        %2447 = vmatpush1.msra.mxu0 0.0
        %2448 = vmatprep.subr.mxu0 0.0
        %2449 = vmatpush1.msra.mxu0 0.0
        %2450 = vmatprep.subr.mxu0 0.0
        %2451 = vmatpush1.msra.mxu0 0.0
        %2452 = vmatprep.subr.mxu0 0.0
        %2453 = vmatpush1.msra.mxu0 0.0
        %2454 = vmatprep.subr.mxu0 0.0
        %2455 = vmatpush1.msra.mxu0 0.0
        %2456 = vmatprep.subr.mxu0 0.0
        %2457 = vmatpush1.msra.mxu0 0.0
        %2458 = vmatprep.subr.mxu0 0.0
        %2459 = vmatpush1.msra.mxu0 0.0
        %2460 = vmatprep.subr.mxu0 0.0
        %2461 = vmatpush1.msra.mxu0 0.0
        %2462 = vmatprep.subr.mxu0 0.0
        %2463 = vmatpush1.msra.mxu0 0.0
        %2464 = vmatprep.subr.mxu0 0.0
        %2465 = vmatpush1.msra.mxu0 0.0
        %2466 = vmatprep.mubr.f32.mxu0 0.0
        %2467 = vmatmul.mubr.f32.gmra.mrb[0].mxu0 %v1703
        %v2468 = vpop.f32.mrb[0].mxu0
        %v2469 = vadd.f32 0.0, %v2468
        %v2470 = vpop.f32.mrb[0].mxu0
        %2471 = vdwg.mxu0
        %v2473 = vsel %vm1777, %v2469, 0
        %2475 = vmatprep.subr.mxu0 0.0
        %2476 = vmatpush1.msra.mxu0 %v1677
        %2477 = vmatprep.subr.mxu0 0.0
        %2478 = vmatpush1.msra.mxu0 %v1678
        %2479 = vmatprep.subr.mxu0 0.0
        %2480 = vmatpush1.msra.mxu0 %v1679
        %2481 = vmatprep.subr.mxu0 0.0
        %2482 = vmatpush1.msra.mxu0 %v1680
        %2483 = vmatprep.subr.mxu0 0.0
        %2484 = vmatpush1.msra.mxu0 0.0
        %2485 = vmatprep.subr.mxu0 0.0
        %2486 = vmatpush1.msra.mxu0 0.0
        %2487 = vmatprep.subr.mxu0 0.0
        %2488 = vmatpush1.msra.mxu0 0.0
        %2489 = vmatprep.subr.mxu0 0.0
        %2490 = vmatpush1.msra.mxu0 0.0
        %2491 = vmatprep.subr.mxu0 0.0
        %2492 = vmatpush1.msra.mxu0 0.0
        %2493 = vmatprep.subr.mxu0 0.0
        %2494 = vmatpush1.msra.mxu0 0.0
        %2495 = vmatprep.subr.mxu0 0.0
        %2496 = vmatpush1.msra.mxu0 0.0
        %2497 = vmatprep.subr.mxu0 0.0
        %2498 = vmatpush1.msra.mxu0 0.0
        %2499 = vmatprep.subr.mxu0 0.0
        %2500 = vmatpush1.msra.mxu0 0.0
        %2501 = vmatprep.subr.mxu0 0.0
        %2502 = vmatpush1.msra.mxu0 0.0
        %2503 = vmatprep.subr.mxu0 0.0
        %2504 = vmatpush1.msra.mxu0 0.0
        %2505 = vmatprep.subr.mxu0 0.0
        %2506 = vmatpush1.msra.mxu0 0.0
        %2507 = vmatprep.subr.mxu0 0.0
        %2508 = vmatpush1.msra.mxu0 0.0
        %2509 = vmatprep.subr.mxu0 0.0
        %2510 = vmatpush1.msra.mxu0 0.0
        %2511 = vmatprep.subr.mxu0 0.0
        %2512 = vmatpush1.msra.mxu0 0.0
        %2513 = vmatprep.subr.mxu0 0.0
        %2514 = vmatpush1.msra.mxu0 0.0
        %2515 = vmatprep.subr.mxu0 0.0
        %2516 = vmatpush1.msra.mxu0 0.0
        %2517 = vmatprep.subr.mxu0 0.0
        %2518 = vmatpush1.msra.mxu0 0.0
        %2519 = vmatprep.subr.mxu0 0.0
        %2520 = vmatpush1.msra.mxu0 0.0
        %2521 = vmatprep.subr.mxu0 0.0
        %2522 = vmatpush1.msra.mxu0 0.0
        %2523 = vmatprep.subr.mxu0 0.0
        %2524 = vmatpush1.msra.mxu0 0.0
        %2525 = vmatprep.subr.mxu0 0.0
        %2526 = vmatpush1.msra.mxu0 0.0
        %2527 = vmatprep.subr.mxu0 0.0
        %2528 = vmatpush1.msra.mxu0 0.0
        %2529 = vmatprep.subr.mxu0 0.0
        %2530 = vmatpush1.msra.mxu0 0.0
        %2531 = vmatprep.subr.mxu0 0.0
        %2532 = vmatpush1.msra.mxu0 0.0
        %2533 = vmatprep.subr.mxu0 0.0
        %2534 = vmatpush1.msra.mxu0 0.0
        %2535 = vmatprep.subr.mxu0 0.0
        %2536 = vmatpush1.msra.mxu0 0.0
        %2537 = vmatprep.subr.mxu0 0.0
        %2538 = vmatpush1.msra.mxu0 0.0
        %2539 = vmatprep.mubr.f32.mxu0 0.0
        %2540 = vmatmul.mubr.f32.gmra.mrb[0].mxu0 %v2473
        %v2541 = vpop.f32.mrb[0].mxu0
        %v2542 = vadd.f32 0.0, %v2541
        %v2543 = vpop.f32.mrb[0].mxu0
        %2544 = vdwg.mxu0
        %v2545 = vld [vmem:[#allocation2 + $0x20] sm:$0xff]
        %v2546 = vadd.f32 %v2545, %v2542
        %2547 = vst.msk [vmem:[#allocation2 + $0x20] sm:$0xff] %vm1853, %v2546
        %v2548 = vld [vmem:[#allocation2 + $0x20] sm:$0xff]
        %2550 = vrot.lane.b32.xlu0 %v2542, 64
        %v2551 = vpop.permute.xlu0 %2550
        %v2553 = vadd.f32 %v2548, %v2551
        %2554 = vst.msk [vmem:[#allocation2 + $0x20] sm:$0xff] %vm1861, %v2553
        %v2555 = vld [vmem:[%s314 + $0x5] sm:$0x1]
        %v2556 = vld [vmem:[%s314 + $0x25] sm:$0x1]
        %v2557 = vld [vmem:[%s314 + $0x45] sm:$0x1]
        %v2558 = vld [vmem:[%s314 + $0x65] sm:$0x1]
        %v2559 = vmax.f32 %v2555, 0.0
        %v2560 = vmax.f32 %v2556, 0.0
        %v2561 = vmax.f32 %v2557, 0.0
        %v2562 = vmax.f32 %v2558, 0.0
        %v2567 = vrot.slane %v2560, 7
        %v2568 = vsel %vm1694, %v2567, %v2559
        %v2569 = vrot.slane %v2561, 6
        %v2570 = vsel %vm1697, %v2569, %v2568
        %v2571 = vrot.slane %v2562, 5
        %v2572 = vsel %vm1700, %v2571, %v2570
        %v2573 = vsel %vm443, %v2572, 0
        %2575 = vmatprep.subr.mxu0 0.0
        %2576 = vmatpush1.msra.mxu0 %v2573
        %2577 = vmatprep.subr.mxu0 0.0
        %2578 = vmatpush1.msra.mxu0 0.0
        %2579 = vmatprep.subr.mxu0 0.0
        %2580 = vmatpush1.msra.mxu0 0.0
        %2581 = vmatprep.subr.mxu0 0.0
        %2582 = vmatpush1.msra.mxu0 0.0
        %2583 = vmatprep.subr.mxu0 0.0
        %2584 = vmatpush1.msra.mxu0 0.0
        %2585 = vmatprep.subr.mxu0 0.0
        %2586 = vmatpush1.msra.mxu0 0.0
        %2587 = vmatprep.subr.mxu0 0.0
        %2588 = vmatpush1.msra.mxu0 0.0
        %2589 = vmatprep.subr.mxu0 0.0
        %2590 = vmatpush1.msra.mxu0 0.0
        %2591 = vmatprep.subr.mxu0 0.0
        %2592 = vmatpush1.msra.mxu0 0.0
        %2593 = vmatprep.subr.mxu0 0.0
        %2594 = vmatpush1.msra.mxu0 0.0
        %2595 = vmatprep.subr.mxu0 0.0
        %2596 = vmatpush1.msra.mxu0 0.0
        %2597 = vmatprep.subr.mxu0 0.0
        %2598 = vmatpush1.msra.mxu0 0.0
        %2599 = vmatprep.subr.mxu0 0.0
        %2600 = vmatpush1.msra.mxu0 0.0
        %2601 = vmatprep.subr.mxu0 0.0
        %2602 = vmatpush1.msra.mxu0 0.0
        %2603 = vmatprep.subr.mxu0 0.0
        %2604 = vmatpush1.msra.mxu0 0.0
        %2605 = vmatprep.subr.mxu0 0.0
        %2606 = vmatpush1.msra.mxu0 0.0
        %2607 = vmatprep.subr.mxu0 0.0
        %2608 = vmatpush1.msra.mxu0 0.0
        %2609 = vmatprep.subr.mxu0 0.0
        %2610 = vmatpush1.msra.mxu0 0.0
        %2611 = vmatprep.subr.mxu0 0.0
        %2612 = vmatpush1.msra.mxu0 0.0
        %2613 = vmatprep.subr.mxu0 0.0
        %2614 = vmatpush1.msra.mxu0 0.0
        %2615 = vmatprep.subr.mxu0 0.0
        %2616 = vmatpush1.msra.mxu0 0.0
        %2617 = vmatprep.subr.mxu0 0.0
        %2618 = vmatpush1.msra.mxu0 0.0
        %2619 = vmatprep.subr.mxu0 0.0
        %2620 = vmatpush1.msra.mxu0 0.0
        %2621 = vmatprep.subr.mxu0 0.0
        %2622 = vmatpush1.msra.mxu0 0.0
        %2623 = vmatprep.subr.mxu0 0.0
        %2624 = vmatpush1.msra.mxu0 0.0
        %2625 = vmatprep.subr.mxu0 0.0
        %2626 = vmatpush1.msra.mxu0 0.0
        %2627 = vmatprep.subr.mxu0 0.0
        %2628 = vmatpush1.msra.mxu0 0.0
        %2629 = vmatprep.subr.mxu0 0.0
        %2630 = vmatpush1.msra.mxu0 0.0
        %2631 = vmatprep.subr.mxu0 0.0
        %2632 = vmatpush1.msra.mxu0 0.0
        %2633 = vmatprep.subr.mxu0 0.0
        %2634 = vmatpush1.msra.mxu0 0.0
        %2635 = vmatprep.subr.mxu0 0.0
        %2636 = vmatpush1.msra.mxu0 0.0
        %2637 = vmatprep.subr.mxu0 0.0
        %2638 = vmatpush1.msra.mxu0 0.0
        %2639 = vmatprep.mubr.f32.mxu0 0.0
        %2640 = vmatmul.mubr.f32.gmra.mrb[0].mxu0 %v1703
        %v2641 = vpop.f32.mrb[0].mxu0
        %v2642 = vadd.f32 0.0, %v2641
        %v2643 = vpop.f32.mrb[0].mxu0
        %2644 = vdwg.mxu0
        %v2646 = vsel %vm1777, %v2642, 0
        %2648 = vmatprep.subr.mxu0 0.0
        %2649 = vmatpush1.msra.mxu0 %v1677
        %2650 = vmatprep.subr.mxu0 0.0
        %2651 = vmatpush1.msra.mxu0 %v1678
        %2652 = vmatprep.subr.mxu0 0.0
        %2653 = vmatpush1.msra.mxu0 %v1679
        %2654 = vmatprep.subr.mxu0 0.0
        %2655 = vmatpush1.msra.mxu0 %v1680
        %2656 = vmatprep.subr.mxu0 0.0
        %2657 = vmatpush1.msra.mxu0 0.0
        %2658 = vmatprep.subr.mxu0 0.0
        %2659 = vmatpush1.msra.mxu0 0.0
        %2660 = vmatprep.subr.mxu0 0.0
        %2661 = vmatpush1.msra.mxu0 0.0
        %2662 = vmatprep.subr.mxu0 0.0
        %2663 = vmatpush1.msra.mxu0 0.0
        %2664 = vmatprep.subr.mxu0 0.0
        %2665 = vmatpush1.msra.mxu0 0.0
        %2666 = vmatprep.subr.mxu0 0.0
        %2667 = vmatpush1.msra.mxu0 0.0
        %2668 = vmatprep.subr.mxu0 0.0
        %2669 = vmatpush1.msra.mxu0 0.0
        %2670 = vmatprep.subr.mxu0 0.0
        %2671 = vmatpush1.msra.mxu0 0.0
        %2672 = vmatprep.subr.mxu0 0.0
        %2673 = vmatpush1.msra.mxu0 0.0
        %2674 = vmatprep.subr.mxu0 0.0
        %2675 = vmatpush1.msra.mxu0 0.0
        %2676 = vmatprep.subr.mxu0 0.0
        %2677 = vmatpush1.msra.mxu0 0.0
        %2678 = vmatprep.subr.mxu0 0.0
        %2679 = vmatpush1.msra.mxu0 0.0
        %2680 = vmatprep.subr.mxu0 0.0
        %2681 = vmatpush1.msra.mxu0 0.0
        %2682 = vmatprep.subr.mxu0 0.0
        %2683 = vmatpush1.msra.mxu0 0.0
        %2684 = vmatprep.subr.mxu0 0.0
        %2685 = vmatpush1.msra.mxu0 0.0
        %2686 = vmatprep.subr.mxu0 0.0
        %2687 = vmatpush1.msra.mxu0 0.0
        %2688 = vmatprep.subr.mxu0 0.0
        %2689 = vmatpush1.msra.mxu0 0.0
        %2690 = vmatprep.subr.mxu0 0.0
        %2691 = vmatpush1.msra.mxu0 0.0
        %2692 = vmatprep.subr.mxu0 0.0
        %2693 = vmatpush1.msra.mxu0 0.0
        %2694 = vmatprep.subr.mxu0 0.0
        %2695 = vmatpush1.msra.mxu0 0.0
        %2696 = vmatprep.subr.mxu0 0.0
        %2697 = vmatpush1.msra.mxu0 0.0
        %2698 = vmatprep.subr.mxu0 0.0
        %2699 = vmatpush1.msra.mxu0 0.0
        %2700 = vmatprep.subr.mxu0 0.0
        %2701 = vmatpush1.msra.mxu0 0.0
        %2702 = vmatprep.subr.mxu0 0.0
        %2703 = vmatpush1.msra.mxu0 0.0
        %2704 = vmatprep.subr.mxu0 0.0
        %2705 = vmatpush1.msra.mxu0 0.0
        %2706 = vmatprep.subr.mxu0 0.0
        %2707 = vmatpush1.msra.mxu0 0.0
        %2708 = vmatprep.subr.mxu0 0.0
        %2709 = vmatpush1.msra.mxu0 0.0
        %2710 = vmatprep.subr.mxu0 0.0
        %2711 = vmatpush1.msra.mxu0 0.0
        %2712 = vmatprep.mubr.f32.mxu0 0.0
        %2713 = vmatmul.mubr.f32.gmra.mrb[0].mxu0 %v2646
        %v2714 = vpop.f32.mrb[0].mxu0
        %v2715 = vadd.f32 0.0, %v2714
        %v2716 = vpop.f32.mrb[0].mxu0
        %2717 = vdwg.mxu0
        %v2718 = vld [vmem:[#allocation2 + $0x28] sm:$0xff]
        %v2719 = vadd.f32 %v2718, %v2715
        %2720 = vst.msk [vmem:[#allocation2 + $0x28] sm:$0xff] %vm1853, %v2719
        %v2721 = vld [vmem:[#allocation2 + $0x28] sm:$0xff]
        %2723 = vrot.lane.b32.xlu0 %v2715, 64
        %v2724 = vpop.permute.xlu0 %2723
        %v2726 = vadd.f32 %v2721, %v2724
        %2727 = vst.msk [vmem:[#allocation2 + $0x28] sm:$0xff] %vm1861, %v2726
        %v2728 = vld [vmem:[%s314 + $0x6] sm:$0x1]
        %v2729 = vld [vmem:[%s314 + $0x26] sm:$0x1]
        %v2730 = vld [vmem:[%s314 + $0x46] sm:$0x1]
        %v2731 = vld [vmem:[%s314 + $0x66] sm:$0x1]
        %v2732 = vmax.f32 %v2728, 0.0
        %v2733 = vmax.f32 %v2729, 0.0
        %v2734 = vmax.f32 %v2730, 0.0
        %v2735 = vmax.f32 %v2731, 0.0
        %v2740 = vrot.slane %v2733, 7
        %v2741 = vsel %vm1694, %v2740, %v2732
        %v2742 = vrot.slane %v2734, 6
        %v2743 = vsel %vm1697, %v2742, %v2741
        %v2744 = vrot.slane %v2735, 5
        %v2745 = vsel %vm1700, %v2744, %v2743
        %v2746 = vsel %vm443, %v2745, 0
        %2748 = vmatprep.subr.mxu0 0.0
        %2749 = vmatpush1.msra.mxu0 %v2746
        %2750 = vmatprep.subr.mxu0 0.0
        %2751 = vmatpush1.msra.mxu0 0.0
        %2752 = vmatprep.subr.mxu0 0.0
        %2753 = vmatpush1.msra.mxu0 0.0
        %2754 = vmatprep.subr.mxu0 0.0
        %2755 = vmatpush1.msra.mxu0 0.0
        %2756 = vmatprep.subr.mxu0 0.0
        %2757 = vmatpush1.msra.mxu0 0.0
        %2758 = vmatprep.subr.mxu0 0.0
        %2759 = vmatpush1.msra.mxu0 0.0
        %2760 = vmatprep.subr.mxu0 0.0
        %2761 = vmatpush1.msra.mxu0 0.0
        %2762 = vmatprep.subr.mxu0 0.0
        %2763 = vmatpush1.msra.mxu0 0.0
        %2764 = vmatprep.subr.mxu0 0.0
        %2765 = vmatpush1.msra.mxu0 0.0
        %2766 = vmatprep.subr.mxu0 0.0
        %2767 = vmatpush1.msra.mxu0 0.0
        %2768 = vmatprep.subr.mxu0 0.0
        %2769 = vmatpush1.msra.mxu0 0.0
        %2770 = vmatprep.subr.mxu0 0.0
        %2771 = vmatpush1.msra.mxu0 0.0
        %2772 = vmatprep.subr.mxu0 0.0
        %2773 = vmatpush1.msra.mxu0 0.0
        %2774 = vmatprep.subr.mxu0 0.0
        %2775 = vmatpush1.msra.mxu0 0.0
        %2776 = vmatprep.subr.mxu0 0.0
        %2777 = vmatpush1.msra.mxu0 0.0
        %2778 = vmatprep.subr.mxu0 0.0
        %2779 = vmatpush1.msra.mxu0 0.0
        %2780 = vmatprep.subr.mxu0 0.0
        %2781 = vmatpush1.msra.mxu0 0.0
        %2782 = vmatprep.subr.mxu0 0.0
        %2783 = vmatpush1.msra.mxu0 0.0
        %2784 = vmatprep.subr.mxu0 0.0
        %2785 = vmatpush1.msra.mxu0 0.0
        %2786 = vmatprep.subr.mxu0 0.0
        %2787 = vmatpush1.msra.mxu0 0.0
        %2788 = vmatprep.subr.mxu0 0.0
        %2789 = vmatpush1.msra.mxu0 0.0
        %2790 = vmatprep.subr.mxu0 0.0
        %2791 = vmatpush1.msra.mxu0 0.0
        %2792 = vmatprep.subr.mxu0 0.0
        %2793 = vmatpush1.msra.mxu0 0.0
        %2794 = vmatprep.subr.mxu0 0.0
        %2795 = vmatpush1.msra.mxu0 0.0
        %2796 = vmatprep.subr.mxu0 0.0
        %2797 = vmatpush1.msra.mxu0 0.0
        %2798 = vmatprep.subr.mxu0 0.0
        %2799 = vmatpush1.msra.mxu0 0.0
        %2800 = vmatprep.subr.mxu0 0.0
        %2801 = vmatpush1.msra.mxu0 0.0
        %2802 = vmatprep.subr.mxu0 0.0
        %2803 = vmatpush1.msra.mxu0 0.0
        %2804 = vmatprep.subr.mxu0 0.0
        %2805 = vmatpush1.msra.mxu0 0.0
        %2806 = vmatprep.subr.mxu0 0.0
        %2807 = vmatpush1.msra.mxu0 0.0
        %2808 = vmatprep.subr.mxu0 0.0
        %2809 = vmatpush1.msra.mxu0 0.0
        %2810 = vmatprep.subr.mxu0 0.0
        %2811 = vmatpush1.msra.mxu0 0.0
        %2812 = vmatprep.mubr.f32.mxu0 0.0
        %2813 = vmatmul.mubr.f32.gmra.mrb[0].mxu0 %v1703
        %v2814 = vpop.f32.mrb[0].mxu0
        %v2815 = vadd.f32 0.0, %v2814
        %v2816 = vpop.f32.mrb[0].mxu0
        %2817 = vdwg.mxu0
        %v2819 = vsel %vm1777, %v2815, 0
        %2821 = vmatprep.subr.mxu0 0.0
        %2822 = vmatpush1.msra.mxu0 %v1677
        %2823 = vmatprep.subr.mxu0 0.0
        %2824 = vmatpush1.msra.mxu0 %v1678
        %2825 = vmatprep.subr.mxu0 0.0
        %2826 = vmatpush1.msra.mxu0 %v1679
        %2827 = vmatprep.subr.mxu0 0.0
        %2828 = vmatpush1.msra.mxu0 %v1680
        %2829 = vmatprep.subr.mxu0 0.0
        %2830 = vmatpush1.msra.mxu0 0.0
        %2831 = vmatprep.subr.mxu0 0.0
        %2832 = vmatpush1.msra.mxu0 0.0
        %2833 = vmatprep.subr.mxu0 0.0
        %2834 = vmatpush1.msra.mxu0 0.0
        %2835 = vmatprep.subr.mxu0 0.0
        %2836 = vmatpush1.msra.mxu0 0.0
        %2837 = vmatprep.subr.mxu0 0.0
        %2838 = vmatpush1.msra.mxu0 0.0
        %2839 = vmatprep.subr.mxu0 0.0
        %2840 = vmatpush1.msra.mxu0 0.0
        %2841 = vmatprep.subr.mxu0 0.0
        %2842 = vmatpush1.msra.mxu0 0.0
        %2843 = vmatprep.subr.mxu0 0.0
        %2844 = vmatpush1.msra.mxu0 0.0
        %2845 = vmatprep.subr.mxu0 0.0
        %2846 = vmatpush1.msra.mxu0 0.0
        %2847 = vmatprep.subr.mxu0 0.0
        %2848 = vmatpush1.msra.mxu0 0.0
        %2849 = vmatprep.subr.mxu0 0.0
        %2850 = vmatpush1.msra.mxu0 0.0
        %2851 = vmatprep.subr.mxu0 0.0
        %2852 = vmatpush1.msra.mxu0 0.0
        %2853 = vmatprep.subr.mxu0 0.0
        %2854 = vmatpush1.msra.mxu0 0.0
        %2855 = vmatprep.subr.mxu0 0.0
        %2856 = vmatpush1.msra.mxu0 0.0
        %2857 = vmatprep.subr.mxu0 0.0
        %2858 = vmatpush1.msra.mxu0 0.0
        %2859 = vmatprep.subr.mxu0 0.0
        %2860 = vmatpush1.msra.mxu0 0.0
        %2861 = vmatprep.subr.mxu0 0.0
        %2862 = vmatpush1.msra.mxu0 0.0
        %2863 = vmatprep.subr.mxu0 0.0
        %2864 = vmatpush1.msra.mxu0 0.0
        %2865 = vmatprep.subr.mxu0 0.0
        %2866 = vmatpush1.msra.mxu0 0.0
        %2867 = vmatprep.subr.mxu0 0.0
        %2868 = vmatpush1.msra.mxu0 0.0
        %2869 = vmatprep.subr.mxu0 0.0
        %2870 = vmatpush1.msra.mxu0 0.0
        %2871 = vmatprep.subr.mxu0 0.0
        %2872 = vmatpush1.msra.mxu0 0.0
        %2873 = vmatprep.subr.mxu0 0.0
        %2874 = vmatpush1.msra.mxu0 0.0
        %2875 = vmatprep.subr.mxu0 0.0
        %2876 = vmatpush1.msra.mxu0 0.0
        %2877 = vmatprep.subr.mxu0 0.0
        %2878 = vmatpush1.msra.mxu0 0.0
        %2879 = vmatprep.subr.mxu0 0.0
        %2880 = vmatpush1.msra.mxu0 0.0
        %2881 = vmatprep.subr.mxu0 0.0
        %2882 = vmatpush1.msra.mxu0 0.0
        %2883 = vmatprep.subr.mxu0 0.0
        %2884 = vmatpush1.msra.mxu0 0.0
        %2885 = vmatprep.mubr.f32.mxu0 0.0
        %2886 = vmatmul.mubr.f32.gmra.mrb[0].mxu0 %v2819
        %v2887 = vpop.f32.mrb[0].mxu0
        %v2888 = vadd.f32 0.0, %v2887
        %v2889 = vpop.f32.mrb[0].mxu0
        %2890 = vdwg.mxu0
        %v2891 = vld [vmem:[#allocation2 + $0x30] sm:$0xff]
        %v2892 = vadd.f32 %v2891, %v2888
        %2893 = vst.msk [vmem:[#allocation2 + $0x30] sm:$0xff] %vm1853, %v2892
        %v2894 = vld [vmem:[#allocation2 + $0x30] sm:$0xff]
        %2896 = vrot.lane.b32.xlu0 %v2888, 64
        %v2897 = vpop.permute.xlu0 %2896
        %v2899 = vadd.f32 %v2894, %v2897
        %2900 = vst.msk [vmem:[#allocation2 + $0x30] sm:$0xff] %vm1861, %v2899
        %v2901 = vld [vmem:[%s314 + $0x7] sm:$0x1]
        %v2902 = vld [vmem:[%s314 + $0x27] sm:$0x1]
        %v2903 = vld [vmem:[%s314 + $0x47] sm:$0x1]
        %v2904 = vld [vmem:[%s314 + $0x67] sm:$0x1]
        %v2905 = vmax.f32 %v2901, 0.0
        %v2906 = vmax.f32 %v2902, 0.0
        %v2907 = vmax.f32 %v2903, 0.0
        %v2908 = vmax.f32 %v2904, 0.0
        %v2913 = vrot.slane %v2906, 7
        %v2914 = vsel %vm1694, %v2913, %v2905
        %v2915 = vrot.slane %v2907, 6
        %v2916 = vsel %vm1697, %v2915, %v2914
        %v2917 = vrot.slane %v2908, 5
        %v2918 = vsel %vm1700, %v2917, %v2916
        %v2919 = vsel %vm443, %v2918, 0
        %2921 = vmatprep.subr.mxu0 0.0
        %2922 = vmatpush1.msra.mxu0 %v2919
        %2923 = vmatprep.subr.mxu0 0.0
        %2924 = vmatpush1.msra.mxu0 0.0
        %2925 = vmatprep.subr.mxu0 0.0
        %2926 = vmatpush1.msra.mxu0 0.0
        %2927 = vmatprep.subr.mxu0 0.0
        %2928 = vmatpush1.msra.mxu0 0.0
        %2929 = vmatprep.subr.mxu0 0.0
        %2930 = vmatpush1.msra.mxu0 0.0
        %2931 = vmatprep.subr.mxu0 0.0
        %2932 = vmatpush1.msra.mxu0 0.0
        %2933 = vmatprep.subr.mxu0 0.0
        %2934 = vmatpush1.msra.mxu0 0.0
        %2935 = vmatprep.subr.mxu0 0.0
        %2936 = vmatpush1.msra.mxu0 0.0
        %2937 = vmatprep.subr.mxu0 0.0
        %2938 = vmatpush1.msra.mxu0 0.0
        %2939 = vmatprep.subr.mxu0 0.0
        %2940 = vmatpush1.msra.mxu0 0.0
        %2941 = vmatprep.subr.mxu0 0.0
        %2942 = vmatpush1.msra.mxu0 0.0
        %2943 = vmatprep.subr.mxu0 0.0
        %2944 = vmatpush1.msra.mxu0 0.0
        %2945 = vmatprep.subr.mxu0 0.0
        %2946 = vmatpush1.msra.mxu0 0.0
        %2947 = vmatprep.subr.mxu0 0.0
        %2948 = vmatpush1.msra.mxu0 0.0
        %2949 = vmatprep.subr.mxu0 0.0
        %2950 = vmatpush1.msra.mxu0 0.0
        %2951 = vmatprep.subr.mxu0 0.0
        %2952 = vmatpush1.msra.mxu0 0.0
        %2953 = vmatprep.subr.mxu0 0.0
        %2954 = vmatpush1.msra.mxu0 0.0
        %2955 = vmatprep.subr.mxu0 0.0
        %2956 = vmatpush1.msra.mxu0 0.0
        %2957 = vmatprep.subr.mxu0 0.0
        %2958 = vmatpush1.msra.mxu0 0.0
        %2959 = vmatprep.subr.mxu0 0.0
        %2960 = vmatpush1.msra.mxu0 0.0
        %2961 = vmatprep.subr.mxu0 0.0
        %2962 = vmatpush1.msra.mxu0 0.0
        %2963 = vmatprep.subr.mxu0 0.0
        %2964 = vmatpush1.msra.mxu0 0.0
        %2965 = vmatprep.subr.mxu0 0.0
        %2966 = vmatpush1.msra.mxu0 0.0
        %2967 = vmatprep.subr.mxu0 0.0
        %2968 = vmatpush1.msra.mxu0 0.0
        %2969 = vmatprep.subr.mxu0 0.0
        %2970 = vmatpush1.msra.mxu0 0.0
        %2971 = vmatprep.subr.mxu0 0.0
        %2972 = vmatpush1.msra.mxu0 0.0
        %2973 = vmatprep.subr.mxu0 0.0
        %2974 = vmatpush1.msra.mxu0 0.0
        %2975 = vmatprep.subr.mxu0 0.0
        %2976 = vmatpush1.msra.mxu0 0.0
        %2977 = vmatprep.subr.mxu0 0.0
        %2978 = vmatpush1.msra.mxu0 0.0
        %2979 = vmatprep.subr.mxu0 0.0
        %2980 = vmatpush1.msra.mxu0 0.0
        %2981 = vmatprep.subr.mxu0 0.0
        %2982 = vmatpush1.msra.mxu0 0.0
        %2983 = vmatprep.subr.mxu0 0.0
        %2984 = vmatpush1.msra.mxu0 0.0
        %2985 = vmatprep.mubr.f32.mxu0 0.0
        %2986 = vmatmul.mubr.f32.gmra.mrb[0].mxu0 %v1703
        %v2987 = vpop.f32.mrb[0].mxu0
        %v2988 = vadd.f32 0.0, %v2987
        %v2989 = vpop.f32.mrb[0].mxu0
        %2990 = vdwg.mxu0
        %v2992 = vsel %vm1777, %v2988, 0
        %2994 = vmatprep.subr.mxu0 0.0
        %2995 = vmatpush1.msra.mxu0 %v1677
        %2996 = vmatprep.subr.mxu0 0.0
        %2997 = vmatpush1.msra.mxu0 %v1678
        %2998 = vmatprep.subr.mxu0 0.0
        %2999 = vmatpush1.msra.mxu0 %v1679
        %3000 = vmatprep.subr.mxu0 0.0
        %3001 = vmatpush1.msra.mxu0 %v1680
        %3002 = vmatprep.subr.mxu0 0.0
        %3003 = vmatpush1.msra.mxu0 0.0
        %3004 = vmatprep.subr.mxu0 0.0
        %3005 = vmatpush1.msra.mxu0 0.0
        %3006 = vmatprep.subr.mxu0 0.0
        %3007 = vmatpush1.msra.mxu0 0.0
        %3008 = vmatprep.subr.mxu0 0.0
        %3009 = vmatpush1.msra.mxu0 0.0
        %3010 = vmatprep.subr.mxu0 0.0
        %3011 = vmatpush1.msra.mxu0 0.0
        %3012 = vmatprep.subr.mxu0 0.0
        %3013 = vmatpush1.msra.mxu0 0.0
        %3014 = vmatprep.subr.mxu0 0.0
        %3015 = vmatpush1.msra.mxu0 0.0
        %3016 = vmatprep.subr.mxu0 0.0
        %3017 = vmatpush1.msra.mxu0 0.0
        %3018 = vmatprep.subr.mxu0 0.0
        %3019 = vmatpush1.msra.mxu0 0.0
        %3020 = vmatprep.subr.mxu0 0.0
        %3021 = vmatpush1.msra.mxu0 0.0
        %3022 = vmatprep.subr.mxu0 0.0
        %3023 = vmatpush1.msra.mxu0 0.0
        %3024 = vmatprep.subr.mxu0 0.0
        %3025 = vmatpush1.msra.mxu0 0.0
        %3026 = vmatprep.subr.mxu0 0.0
        %3027 = vmatpush1.msra.mxu0 0.0
        %3028 = vmatprep.subr.mxu0 0.0
        %3029 = vmatpush1.msra.mxu0 0.0
        %3030 = vmatprep.subr.mxu0 0.0
        %3031 = vmatpush1.msra.mxu0 0.0
        %3032 = vmatprep.subr.mxu0 0.0
        %3033 = vmatpush1.msra.mxu0 0.0
        %3034 = vmatprep.subr.mxu0 0.0
        %3035 = vmatpush1.msra.mxu0 0.0
        %3036 = vmatprep.subr.mxu0 0.0
        %3037 = vmatpush1.msra.mxu0 0.0
        %3038 = vmatprep.subr.mxu0 0.0
        %3039 = vmatpush1.msra.mxu0 0.0
        %3040 = vmatprep.subr.mxu0 0.0
        %3041 = vmatpush1.msra.mxu0 0.0
        %3042 = vmatprep.subr.mxu0 0.0
        %3043 = vmatpush1.msra.mxu0 0.0
        %3044 = vmatprep.subr.mxu0 0.0
        %3045 = vmatpush1.msra.mxu0 0.0
        %3046 = vmatprep.subr.mxu0 0.0
        %3047 = vmatpush1.msra.mxu0 0.0
        %3048 = vmatprep.subr.mxu0 0.0
        %3049 = vmatpush1.msra.mxu0 0.0
        %3050 = vmatprep.subr.mxu0 0.0
        %3051 = vmatpush1.msra.mxu0 0.0
        %3052 = vmatprep.subr.mxu0 0.0
        %3053 = vmatpush1.msra.mxu0 0.0
        %3054 = vmatprep.subr.mxu0 0.0
        %3055 = vmatpush1.msra.mxu0 0.0
        %3056 = vmatprep.subr.mxu0 0.0
        %3057 = vmatpush1.msra.mxu0 0.0
        %3058 = vmatprep.mubr.f32.mxu0 0.0
        %3059 = vmatmul.mubr.f32.gmra.mrb[0].mxu0 %v2992
        %v3060 = vpop.f32.mrb[0].mxu0
        %v3061 = vadd.f32 0.0, %v3060
        %v3062 = vpop.f32.mrb[0].mxu0
        %3063 = vdwg.mxu0
        %v3064 = vld [vmem:[#allocation2 + $0x38] sm:$0xff]
        %v3065 = vadd.f32 %v3064, %v3061
        %3066 = vst.msk [vmem:[#allocation2 + $0x38] sm:$0xff] %vm1853, %v3065
        %v3067 = vld [vmem:[#allocation2 + $0x38] sm:$0xff]
        %3069 = vrot.lane.b32.xlu0 %v3061, 64
        %v3070 = vpop.permute.xlu0 %3069
        %v3072 = vadd.f32 %v3067, %v3070
        %3073 = vst.msk [vmem:[#allocation2 + $0x38] sm:$0xff] %vm1861, %v3072
        %v3074 = vld [vmem:[%s314 + $0x8] sm:$0x1]
        %v3075 = vld [vmem:[%s314 + $0x28] sm:$0x1]
        %v3076 = vld [vmem:[%s314 + $0x48] sm:$0x1]
        %v3077 = vld [vmem:[%s314 + $0x68] sm:$0x1]
        %v3078 = vmax.f32 %v3074, 0.0
        %v3079 = vmax.f32 %v3075, 0.0
        %v3080 = vmax.f32 %v3076, 0.0
        %v3081 = vmax.f32 %v3077, 0.0
        %v3086 = vrot.slane %v3079, 7
        %v3087 = vsel %vm1694, %v3086, %v3078
        %v3088 = vrot.slane %v3080, 6
        %v3089 = vsel %vm1697, %v3088, %v3087
        %v3090 = vrot.slane %v3081, 5
        %v3091 = vsel %vm1700, %v3090, %v3089
        %v3092 = vsel %vm443, %v3091, 0
        %3094 = vmatprep.subr.mxu0 0.0
        %3095 = vmatpush1.msra.mxu0 %v3092
        %3096 = vmatprep.subr.mxu0 0.0
        %3097 = vmatpush1.msra.mxu0 0.0
        %3098 = vmatprep.subr.mxu0 0.0
        %3099 = vmatpush1.msra.mxu0 0.0
        %3100 = vmatprep.subr.mxu0 0.0
        %3101 = vmatpush1.msra.mxu0 0.0
        %3102 = vmatprep.subr.mxu0 0.0
        %3103 = vmatpush1.msra.mxu0 0.0
        %3104 = vmatprep.subr.mxu0 0.0
        %3105 = vmatpush1.msra.mxu0 0.0
        %3106 = vmatprep.subr.mxu0 0.0
        %3107 = vmatpush1.msra.mxu0 0.0
        %3108 = vmatprep.subr.mxu0 0.0
        %3109 = vmatpush1.msra.mxu0 0.0
        %3110 = vmatprep.subr.mxu0 0.0
        %3111 = vmatpush1.msra.mxu0 0.0
        %3112 = vmatprep.subr.mxu0 0.0
        %3113 = vmatpush1.msra.mxu0 0.0
        %3114 = vmatprep.subr.mxu0 0.0
        %3115 = vmatpush1.msra.mxu0 0.0
        %3116 = vmatprep.subr.mxu0 0.0
        %3117 = vmatpush1.msra.mxu0 0.0
        %3118 = vmatprep.subr.mxu0 0.0
        %3119 = vmatpush1.msra.mxu0 0.0
        %3120 = vmatprep.subr.mxu0 0.0
        %3121 = vmatpush1.msra.mxu0 0.0
        %3122 = vmatprep.subr.mxu0 0.0
        %3123 = vmatpush1.msra.mxu0 0.0
        %3124 = vmatprep.subr.mxu0 0.0
        %3125 = vmatpush1.msra.mxu0 0.0
        %3126 = vmatprep.subr.mxu0 0.0
        %3127 = vmatpush1.msra.mxu0 0.0
        %3128 = vmatprep.subr.mxu0 0.0
        %3129 = vmatpush1.msra.mxu0 0.0
        %3130 = vmatprep.subr.mxu0 0.0
        %3131 = vmatpush1.msra.mxu0 0.0
        %3132 = vmatprep.subr.mxu0 0.0
        %3133 = vmatpush1.msra.mxu0 0.0
        %3134 = vmatprep.subr.mxu0 0.0
        %3135 = vmatpush1.msra.mxu0 0.0
        %3136 = vmatprep.subr.mxu0 0.0
        %3137 = vmatpush1.msra.mxu0 0.0
        %3138 = vmatprep.subr.mxu0 0.0
        %3139 = vmatpush1.msra.mxu0 0.0
        %3140 = vmatprep.subr.mxu0 0.0
        %3141 = vmatpush1.msra.mxu0 0.0
        %3142 = vmatprep.subr.mxu0 0.0
        %3143 = vmatpush1.msra.mxu0 0.0
        %3144 = vmatprep.subr.mxu0 0.0
        %3145 = vmatpush1.msra.mxu0 0.0
        %3146 = vmatprep.subr.mxu0 0.0
        %3147 = vmatpush1.msra.mxu0 0.0
        %3148 = vmatprep.subr.mxu0 0.0
        %3149 = vmatpush1.msra.mxu0 0.0
        %3150 = vmatprep.subr.mxu0 0.0
        %3151 = vmatpush1.msra.mxu0 0.0
        %3152 = vmatprep.subr.mxu0 0.0
        %3153 = vmatpush1.msra.mxu0 0.0
        %3154 = vmatprep.subr.mxu0 0.0
        %3155 = vmatpush1.msra.mxu0 0.0
        %3156 = vmatprep.subr.mxu0 0.0
        %3157 = vmatpush1.msra.mxu0 0.0
        %3158 = vmatprep.mubr.f32.mxu0 0.0
        %3159 = vmatmul.mubr.f32.gmra.mrb[0].mxu0 %v1703
        %v3160 = vpop.f32.mrb[0].mxu0
        %v3161 = vadd.f32 0.0, %v3160
        %v3162 = vpop.f32.mrb[0].mxu0
        %3163 = vdwg.mxu0
        %v3165 = vsel %vm1777, %v3161, 0
        %3167 = vmatprep.subr.mxu0 0.0
        %3168 = vmatpush1.msra.mxu0 %v1677
        %3169 = vmatprep.subr.mxu0 0.0
        %3170 = vmatpush1.msra.mxu0 %v1678
        %3171 = vmatprep.subr.mxu0 0.0
        %3172 = vmatpush1.msra.mxu0 %v1679
        %3173 = vmatprep.subr.mxu0 0.0
        %3174 = vmatpush1.msra.mxu0 %v1680
        %3175 = vmatprep.subr.mxu0 0.0
        %3176 = vmatpush1.msra.mxu0 0.0
        %3177 = vmatprep.subr.mxu0 0.0
        %3178 = vmatpush1.msra.mxu0 0.0
        %3179 = vmatprep.subr.mxu0 0.0
        %3180 = vmatpush1.msra.mxu0 0.0
        %3181 = vmatprep.subr.mxu0 0.0
        %3182 = vmatpush1.msra.mxu0 0.0
        %3183 = vmatprep.subr.mxu0 0.0
        %3184 = vmatpush1.msra.mxu0 0.0
        %3185 = vmatprep.subr.mxu0 0.0
        %3186 = vmatpush1.msra.mxu0 0.0
        %3187 = vmatprep.subr.mxu0 0.0
        %3188 = vmatpush1.msra.mxu0 0.0
        %3189 = vmatprep.subr.mxu0 0.0
        %3190 = vmatpush1.msra.mxu0 0.0
        %3191 = vmatprep.subr.mxu0 0.0
        %3192 = vmatpush1.msra.mxu0 0.0
        %3193 = vmatprep.subr.mxu0 0.0
        %3194 = vmatpush1.msra.mxu0 0.0
        %3195 = vmatprep.subr.mxu0 0.0
        %3196 = vmatpush1.msra.mxu0 0.0
        %3197 = vmatprep.subr.mxu0 0.0
        %3198 = vmatpush1.msra.mxu0 0.0
        %3199 = vmatprep.subr.mxu0 0.0
        %3200 = vmatpush1.msra.mxu0 0.0
        %3201 = vmatprep.subr.mxu0 0.0
        %3202 = vmatpush1.msra.mxu0 0.0
        %3203 = vmatprep.subr.mxu0 0.0
        %3204 = vmatpush1.msra.mxu0 0.0
        %3205 = vmatprep.subr.mxu0 0.0
        %3206 = vmatpush1.msra.mxu0 0.0
        %3207 = vmatprep.subr.mxu0 0.0
        %3208 = vmatpush1.msra.mxu0 0.0
        %3209 = vmatprep.subr.mxu0 0.0
        %3210 = vmatpush1.msra.mxu0 0.0
        %3211 = vmatprep.subr.mxu0 0.0
        %3212 = vmatpush1.msra.mxu0 0.0
        %3213 = vmatprep.subr.mxu0 0.0
        %3214 = vmatpush1.msra.mxu0 0.0
        %3215 = vmatprep.subr.mxu0 0.0
        %3216 = vmatpush1.msra.mxu0 0.0
        %3217 = vmatprep.subr.mxu0 0.0
        %3218 = vmatpush1.msra.mxu0 0.0
        %3219 = vmatprep.subr.mxu0 0.0
        %3220 = vmatpush1.msra.mxu0 0.0
        %3221 = vmatprep.subr.mxu0 0.0
        %3222 = vmatpush1.msra.mxu0 0.0
        %3223 = vmatprep.subr.mxu0 0.0
        %3224 = vmatpush1.msra.mxu0 0.0
        %3225 = vmatprep.subr.mxu0 0.0
        %3226 = vmatpush1.msra.mxu0 0.0
        %3227 = vmatprep.subr.mxu0 0.0
        %3228 = vmatpush1.msra.mxu0 0.0
        %3229 = vmatprep.subr.mxu0 0.0
        %3230 = vmatpush1.msra.mxu0 0.0
        %3231 = vmatprep.mubr.f32.mxu0 0.0
        %3232 = vmatmul.mubr.f32.gmra.mrb[0].mxu0 %v3165
        %v3233 = vpop.f32.mrb[0].mxu0
        %v3234 = vadd.f32 0.0, %v3233
        %v3235 = vpop.f32.mrb[0].mxu0
        %3236 = vdwg.mxu0
        %v3237 = vld [vmem:[#allocation2 + $0x40] sm:$0xff]
        %v3238 = vadd.f32 %v3237, %v3234
        %3239 = vst.msk [vmem:[#allocation2 + $0x40] sm:$0xff] %vm1853, %v3238
        %v3240 = vld [vmem:[#allocation2 + $0x40] sm:$0xff]
        %3242 = vrot.lane.b32.xlu0 %v3234, 64
        %v3243 = vpop.permute.xlu0 %3242
        %v3245 = vadd.f32 %v3240, %v3243
        %3246 = vst.msk [vmem:[#allocation2 + $0x40] sm:$0xff] %vm1861, %v3245
        %v3247 = vld [vmem:[%s314 + $0x9] sm:$0x1]
        %v3248 = vld [vmem:[%s314 + $0x29] sm:$0x1]
        %v3249 = vld [vmem:[%s314 + $0x49] sm:$0x1]
        %v3250 = vld [vmem:[%s314 + $0x69] sm:$0x1]
        %v3251 = vmax.f32 %v3247, 0.0
        %v3252 = vmax.f32 %v3248, 0.0
        %v3253 = vmax.f32 %v3249, 0.0
        %v3254 = vmax.f32 %v3250, 0.0
        %v3259 = vrot.slane %v3252, 7
        %v3260 = vsel %vm1694, %v3259, %v3251
        %v3261 = vrot.slane %v3253, 6
        %v3262 = vsel %vm1697, %v3261, %v3260
        %v3263 = vrot.slane %v3254, 5
        %v3264 = vsel %vm1700, %v3263, %v3262
        %v3265 = vsel %vm443, %v3264, 0
        %3267 = vmatprep.subr.mxu0 0.0
        %3268 = vmatpush1.msra.mxu0 %v3265
        %3269 = vmatprep.subr.mxu0 0.0
        %3270 = vmatpush1.msra.mxu0 0.0
        %3271 = vmatprep.subr.mxu0 0.0
        %3272 = vmatpush1.msra.mxu0 0.0
        %3273 = vmatprep.subr.mxu0 0.0
        %3274 = vmatpush1.msra.mxu0 0.0
        %3275 = vmatprep.subr.mxu0 0.0
        %3276 = vmatpush1.msra.mxu0 0.0
        %3277 = vmatprep.subr.mxu0 0.0
        %3278 = vmatpush1.msra.mxu0 0.0
        %3279 = vmatprep.subr.mxu0 0.0
        %3280 = vmatpush1.msra.mxu0 0.0
        %3281 = vmatprep.subr.mxu0 0.0
        %3282 = vmatpush1.msra.mxu0 0.0
        %3283 = vmatprep.subr.mxu0 0.0
        %3284 = vmatpush1.msra.mxu0 0.0
        %3285 = vmatprep.subr.mxu0 0.0
        %3286 = vmatpush1.msra.mxu0 0.0
        %3287 = vmatprep.subr.mxu0 0.0
        %3288 = vmatpush1.msra.mxu0 0.0
        %3289 = vmatprep.subr.mxu0 0.0
        %3290 = vmatpush1.msra.mxu0 0.0
        %3291 = vmatprep.subr.mxu0 0.0
        %3292 = vmatpush1.msra.mxu0 0.0
        %3293 = vmatprep.subr.mxu0 0.0
        %3294 = vmatpush1.msra.mxu0 0.0
        %3295 = vmatprep.subr.mxu0 0.0
        %3296 = vmatpush1.msra.mxu0 0.0
        %3297 = vmatprep.subr.mxu0 0.0
        %3298 = vmatpush1.msra.mxu0 0.0
        %3299 = vmatprep.subr.mxu0 0.0
        %3300 = vmatpush1.msra.mxu0 0.0
        %3301 = vmatprep.subr.mxu0 0.0
        %3302 = vmatpush1.msra.mxu0 0.0
        %3303 = vmatprep.subr.mxu0 0.0
        %3304 = vmatpush1.msra.mxu0 0.0
        %3305 = vmatprep.subr.mxu0 0.0
        %3306 = vmatpush1.msra.mxu0 0.0
        %3307 = vmatprep.subr.mxu0 0.0
        %3308 = vmatpush1.msra.mxu0 0.0
        %3309 = vmatprep.subr.mxu0 0.0
        %3310 = vmatpush1.msra.mxu0 0.0
        %3311 = vmatprep.subr.mxu0 0.0
        %3312 = vmatpush1.msra.mxu0 0.0
        %3313 = vmatprep.subr.mxu0 0.0
        %3314 = vmatpush1.msra.mxu0 0.0
        %3315 = vmatprep.subr.mxu0 0.0
        %3316 = vmatpush1.msra.mxu0 0.0
        %3317 = vmatprep.subr.mxu0 0.0
        %3318 = vmatpush1.msra.mxu0 0.0
        %3319 = vmatprep.subr.mxu0 0.0
        %3320 = vmatpush1.msra.mxu0 0.0
        %3321 = vmatprep.subr.mxu0 0.0
        %3322 = vmatpush1.msra.mxu0 0.0
        %3323 = vmatprep.subr.mxu0 0.0
        %3324 = vmatpush1.msra.mxu0 0.0
        %3325 = vmatprep.subr.mxu0 0.0
        %3326 = vmatpush1.msra.mxu0 0.0
        %3327 = vmatprep.subr.mxu0 0.0
        %3328 = vmatpush1.msra.mxu0 0.0
        %3329 = vmatprep.subr.mxu0 0.0
        %3330 = vmatpush1.msra.mxu0 0.0
        %3331 = vmatprep.mubr.f32.mxu0 0.0
        %3332 = vmatmul.mubr.f32.gmra.mrb[0].mxu0 %v1703
        %v3333 = vpop.f32.mrb[0].mxu0
        %v3334 = vadd.f32 0.0, %v3333
        %v3335 = vpop.f32.mrb[0].mxu0
        %3336 = vdwg.mxu0
        %v3338 = vsel %vm1777, %v3334, 0
        %3340 = vmatprep.subr.mxu0 0.0
        %3341 = vmatpush1.msra.mxu0 %v1677
        %3342 = vmatprep.subr.mxu0 0.0
        %3343 = vmatpush1.msra.mxu0 %v1678
        %3344 = vmatprep.subr.mxu0 0.0
        %3345 = vmatpush1.msra.mxu0 %v1679
        %3346 = vmatprep.subr.mxu0 0.0
        %3347 = vmatpush1.msra.mxu0 %v1680
        %3348 = vmatprep.subr.mxu0 0.0
        %3349 = vmatpush1.msra.mxu0 0.0
        %3350 = vmatprep.subr.mxu0 0.0
        %3351 = vmatpush1.msra.mxu0 0.0
        %3352 = vmatprep.subr.mxu0 0.0
        %3353 = vmatpush1.msra.mxu0 0.0
        %3354 = vmatprep.subr.mxu0 0.0
        %3355 = vmatpush1.msra.mxu0 0.0
        %3356 = vmatprep.subr.mxu0 0.0
        %3357 = vmatpush1.msra.mxu0 0.0
        %3358 = vmatprep.subr.mxu0 0.0
        %3359 = vmatpush1.msra.mxu0 0.0
        %3360 = vmatprep.subr.mxu0 0.0
        %3361 = vmatpush1.msra.mxu0 0.0
        %3362 = vmatprep.subr.mxu0 0.0
        %3363 = vmatpush1.msra.mxu0 0.0
        %3364 = vmatprep.subr.mxu0 0.0
        %3365 = vmatpush1.msra.mxu0 0.0
        %3366 = vmatprep.subr.mxu0 0.0
        %3367 = vmatpush1.msra.mxu0 0.0
        %3368 = vmatprep.subr.mxu0 0.0
        %3369 = vmatpush1.msra.mxu0 0.0
        %3370 = vmatprep.subr.mxu0 0.0
        %3371 = vmatpush1.msra.mxu0 0.0
        %3372 = vmatprep.subr.mxu0 0.0
        %3373 = vmatpush1.msra.mxu0 0.0
        %3374 = vmatprep.subr.mxu0 0.0
        %3375 = vmatpush1.msra.mxu0 0.0
        %3376 = vmatprep.subr.mxu0 0.0
        %3377 = vmatpush1.msra.mxu0 0.0
        %3378 = vmatprep.subr.mxu0 0.0
        %3379 = vmatpush1.msra.mxu0 0.0
        %3380 = vmatprep.subr.mxu0 0.0
        %3381 = vmatpush1.msra.mxu0 0.0
        %3382 = vmatprep.subr.mxu0 0.0
        %3383 = vmatpush1.msra.mxu0 0.0
        %3384 = vmatprep.subr.mxu0 0.0
        %3385 = vmatpush1.msra.mxu0 0.0
        %3386 = vmatprep.subr.mxu0 0.0
        %3387 = vmatpush1.msra.mxu0 0.0
        %3388 = vmatprep.subr.mxu0 0.0
        %3389 = vmatpush1.msra.mxu0 0.0
        %3390 = vmatprep.subr.mxu0 0.0
        %3391 = vmatpush1.msra.mxu0 0.0
        %3392 = vmatprep.subr.mxu0 0.0
        %3393 = vmatpush1.msra.mxu0 0.0
        %3394 = vmatprep.subr.mxu0 0.0
        %3395 = vmatpush1.msra.mxu0 0.0
        %3396 = vmatprep.subr.mxu0 0.0
        %3397 = vmatpush1.msra.mxu0 0.0
        %3398 = vmatprep.subr.mxu0 0.0
        %3399 = vmatpush1.msra.mxu0 0.0
        %3400 = vmatprep.subr.mxu0 0.0
        %3401 = vmatpush1.msra.mxu0 0.0
        %3402 = vmatprep.subr.mxu0 0.0
        %3403 = vmatpush1.msra.mxu0 0.0
        %3404 = vmatprep.mubr.f32.mxu0 0.0
        %3405 = vmatmul.mubr.f32.gmra.mrb[0].mxu0 %v3338
        %v3406 = vpop.f32.mrb[0].mxu0
        %v3407 = vadd.f32 0.0, %v3406
        %v3408 = vpop.f32.mrb[0].mxu0
        %3409 = vdwg.mxu0
        %v3410 = vld [vmem:[#allocation2 + $0x48] sm:$0xff]
        %v3411 = vadd.f32 %v3410, %v3407
        %3412 = vst.msk [vmem:[#allocation2 + $0x48] sm:$0xff] %vm1853, %v3411
        %v3413 = vld [vmem:[#allocation2 + $0x48] sm:$0xff]
        %3415 = vrot.lane.b32.xlu0 %v3407, 64
        %v3416 = vpop.permute.xlu0 %3415
        %v3418 = vadd.f32 %v3413, %v3416
        %3419 = vst.msk [vmem:[#allocation2 + $0x48] sm:$0xff] %vm1861, %v3418
        %v3420 = vld [vmem:[%s314 + $0xa] sm:$0x1]
        %v3421 = vld [vmem:[%s314 + $0x2a] sm:$0x1]
        %v3422 = vld [vmem:[%s314 + $0x4a] sm:$0x1]
        %v3423 = vld [vmem:[%s314 + $0x6a] sm:$0x1]
        %v3424 = vmax.f32 %v3420, 0.0
        %v3425 = vmax.f32 %v3421, 0.0
        %v3426 = vmax.f32 %v3422, 0.0
        %v3427 = vmax.f32 %v3423, 0.0
        %v3432 = vrot.slane %v3425, 7
        %v3433 = vsel %vm1694, %v3432, %v3424
        %v3434 = vrot.slane %v3426, 6
        %v3435 = vsel %vm1697, %v3434, %v3433
        %v3436 = vrot.slane %v3427, 5
        %v3437 = vsel %vm1700, %v3436, %v3435
        %v3438 = vsel %vm443, %v3437, 0
        %3440 = vmatprep.subr.mxu0 0.0
        %3441 = vmatpush1.msra.mxu0 %v3438
        %3442 = vmatprep.subr.mxu0 0.0
        %3443 = vmatpush1.msra.mxu0 0.0
        %3444 = vmatprep.subr.mxu0 0.0
        %3445 = vmatpush1.msra.mxu0 0.0
        %3446 = vmatprep.subr.mxu0 0.0
        %3447 = vmatpush1.msra.mxu0 0.0
        %3448 = vmatprep.subr.mxu0 0.0
        %3449 = vmatpush1.msra.mxu0 0.0
        %3450 = vmatprep.subr.mxu0 0.0
        %3451 = vmatpush1.msra.mxu0 0.0
        %3452 = vmatprep.subr.mxu0 0.0
        %3453 = vmatpush1.msra.mxu0 0.0
        %3454 = vmatprep.subr.mxu0 0.0
        %3455 = vmatpush1.msra.mxu0 0.0
        %3456 = vmatprep.subr.mxu0 0.0
        %3457 = vmatpush1.msra.mxu0 0.0
        %3458 = vmatprep.subr.mxu0 0.0
        %3459 = vmatpush1.msra.mxu0 0.0
        %3460 = vmatprep.subr.mxu0 0.0
        %3461 = vmatpush1.msra.mxu0 0.0
        %3462 = vmatprep.subr.mxu0 0.0
        %3463 = vmatpush1.msra.mxu0 0.0
        %3464 = vmatprep.subr.mxu0 0.0
        %3465 = vmatpush1.msra.mxu0 0.0
        %3466 = vmatprep.subr.mxu0 0.0
        %3467 = vmatpush1.msra.mxu0 0.0
        %3468 = vmatprep.subr.mxu0 0.0
        %3469 = vmatpush1.msra.mxu0 0.0
        %3470 = vmatprep.subr.mxu0 0.0
        %3471 = vmatpush1.msra.mxu0 0.0
        %3472 = vmatprep.subr.mxu0 0.0
        %3473 = vmatpush1.msra.mxu0 0.0
        %3474 = vmatprep.subr.mxu0 0.0
        %3475 = vmatpush1.msra.mxu0 0.0
        %3476 = vmatprep.subr.mxu0 0.0
        %3477 = vmatpush1.msra.mxu0 0.0
        %3478 = vmatprep.subr.mxu0 0.0
        %3479 = vmatpush1.msra.mxu0 0.0
        %3480 = vmatprep.subr.mxu0 0.0
        %3481 = vmatpush1.msra.mxu0 0.0
        %3482 = vmatprep.subr.mxu0 0.0
        %3483 = vmatpush1.msra.mxu0 0.0
        %3484 = vmatprep.subr.mxu0 0.0
        %3485 = vmatpush1.msra.mxu0 0.0
        %3486 = vmatprep.subr.mxu0 0.0
        %3487 = vmatpush1.msra.mxu0 0.0
        %3488 = vmatprep.subr.mxu0 0.0
        %3489 = vmatpush1.msra.mxu0 0.0
        %3490 = vmatprep.subr.mxu0 0.0
        %3491 = vmatpush1.msra.mxu0 0.0
        %3492 = vmatprep.subr.mxu0 0.0
        %3493 = vmatpush1.msra.mxu0 0.0
        %3494 = vmatprep.subr.mxu0 0.0
        %3495 = vmatpush1.msra.mxu0 0.0
        %3496 = vmatprep.subr.mxu0 0.0
        %3497 = vmatpush1.msra.mxu0 0.0
        %3498 = vmatprep.subr.mxu0 0.0
        %3499 = vmatpush1.msra.mxu0 0.0
        %3500 = vmatprep.subr.mxu0 0.0
        %3501 = vmatpush1.msra.mxu0 0.0
        %3502 = vmatprep.subr.mxu0 0.0
        %3503 = vmatpush1.msra.mxu0 0.0
        %3504 = vmatprep.mubr.f32.mxu0 0.0
        %3505 = vmatmul.mubr.f32.gmra.mrb[0].mxu0 %v1703
        %v3506 = vpop.f32.mrb[0].mxu0
        %v3507 = vadd.f32 0.0, %v3506
        %v3508 = vpop.f32.mrb[0].mxu0
        %3509 = vdwg.mxu0
        %v3511 = vsel %vm1777, %v3507, 0
        %3513 = vmatprep.subr.mxu0 0.0
        %3514 = vmatpush1.msra.mxu0 %v1677
        %3515 = vmatprep.subr.mxu0 0.0
        %3516 = vmatpush1.msra.mxu0 %v1678
        %3517 = vmatprep.subr.mxu0 0.0
        %3518 = vmatpush1.msra.mxu0 %v1679
        %3519 = vmatprep.subr.mxu0 0.0
        %3520 = vmatpush1.msra.mxu0 %v1680
        %3521 = vmatprep.subr.mxu0 0.0
        %3522 = vmatpush1.msra.mxu0 0.0
        %3523 = vmatprep.subr.mxu0 0.0
        %3524 = vmatpush1.msra.mxu0 0.0
        %3525 = vmatprep.subr.mxu0 0.0
        %3526 = vmatpush1.msra.mxu0 0.0
        %3527 = vmatprep.subr.mxu0 0.0
        %3528 = vmatpush1.msra.mxu0 0.0
        %3529 = vmatprep.subr.mxu0 0.0
        %3530 = vmatpush1.msra.mxu0 0.0
        %3531 = vmatprep.subr.mxu0 0.0
        %3532 = vmatpush1.msra.mxu0 0.0
        %3533 = vmatprep.subr.mxu0 0.0
        %3534 = vmatpush1.msra.mxu0 0.0
        %3535 = vmatprep.subr.mxu0 0.0
        %3536 = vmatpush1.msra.mxu0 0.0
        %3537 = vmatprep.subr.mxu0 0.0
        %3538 = vmatpush1.msra.mxu0 0.0
        %3539 = vmatprep.subr.mxu0 0.0
        %3540 = vmatpush1.msra.mxu0 0.0
        %3541 = vmatprep.subr.mxu0 0.0
        %3542 = vmatpush1.msra.mxu0 0.0
        %3543 = vmatprep.subr.mxu0 0.0
        %3544 = vmatpush1.msra.mxu0 0.0
        %3545 = vmatprep.subr.mxu0 0.0
        %3546 = vmatpush1.msra.mxu0 0.0
        %3547 = vmatprep.subr.mxu0 0.0
        %3548 = vmatpush1.msra.mxu0 0.0
        %3549 = vmatprep.subr.mxu0 0.0
        %3550 = vmatpush1.msra.mxu0 0.0
        %3551 = vmatprep.subr.mxu0 0.0
        %3552 = vmatpush1.msra.mxu0 0.0
        %3553 = vmatprep.subr.mxu0 0.0
        %3554 = vmatpush1.msra.mxu0 0.0
        %3555 = vmatprep.subr.mxu0 0.0
        %3556 = vmatpush1.msra.mxu0 0.0
        %3557 = vmatprep.subr.mxu0 0.0
        %3558 = vmatpush1.msra.mxu0 0.0
        %3559 = vmatprep.subr.mxu0 0.0
        %3560 = vmatpush1.msra.mxu0 0.0
        %3561 = vmatprep.subr.mxu0 0.0
        %3562 = vmatpush1.msra.mxu0 0.0
        %3563 = vmatprep.subr.mxu0 0.0
        %3564 = vmatpush1.msra.mxu0 0.0
        %3565 = vmatprep.subr.mxu0 0.0
        %3566 = vmatpush1.msra.mxu0 0.0
        %3567 = vmatprep.subr.mxu0 0.0
        %3568 = vmatpush1.msra.mxu0 0.0
        %3569 = vmatprep.subr.mxu0 0.0
        %3570 = vmatpush1.msra.mxu0 0.0
        %3571 = vmatprep.subr.mxu0 0.0
        %3572 = vmatpush1.msra.mxu0 0.0
        %3573 = vmatprep.subr.mxu0 0.0
        %3574 = vmatpush1.msra.mxu0 0.0
        %3575 = vmatprep.subr.mxu0 0.0
        %3576 = vmatpush1.msra.mxu0 0.0
        %3577 = vmatprep.mubr.f32.mxu0 0.0
        %3578 = vmatmul.mubr.f32.gmra.mrb[0].mxu0 %v3511
        %v3579 = vpop.f32.mrb[0].mxu0
        %v3580 = vadd.f32 0.0, %v3579
        %v3581 = vpop.f32.mrb[0].mxu0
        %3582 = vdwg.mxu0
        %v3583 = vld [vmem:[#allocation2 + $0x50] sm:$0xff]
        %v3584 = vadd.f32 %v3583, %v3580
        %3585 = vst.msk [vmem:[#allocation2 + $0x50] sm:$0xff] %vm1853, %v3584
        %v3586 = vld [vmem:[#allocation2 + $0x50] sm:$0xff]
        %3588 = vrot.lane.b32.xlu0 %v3580, 64
        %v3589 = vpop.permute.xlu0 %3588
        %v3591 = vadd.f32 %v3586, %v3589
        %3592 = vst.msk [vmem:[#allocation2 + $0x50] sm:$0xff] %vm1861, %v3591
        %v3593 = vld [vmem:[%s314 + $0xb] sm:$0x1]
        %v3594 = vld [vmem:[%s314 + $0x2b] sm:$0x1]
        %v3595 = vld [vmem:[%s314 + $0x4b] sm:$0x1]
        %v3596 = vld [vmem:[%s314 + $0x6b] sm:$0x1]
        %v3597 = vmax.f32 %v3593, 0.0
        %v3598 = vmax.f32 %v3594, 0.0
        %v3599 = vmax.f32 %v3595, 0.0
        %v3600 = vmax.f32 %v3596, 0.0
        %v3605 = vrot.slane %v3598, 7
        %v3606 = vsel %vm1694, %v3605, %v3597
        %v3607 = vrot.slane %v3599, 6
        %v3608 = vsel %vm1697, %v3607, %v3606
        %v3609 = vrot.slane %v3600, 5
        %v3610 = vsel %vm1700, %v3609, %v3608
        %v3611 = vsel %vm443, %v3610, 0
        %3613 = vmatprep.subr.mxu0 0.0
        %3614 = vmatpush1.msra.mxu0 %v3611
        %3615 = vmatprep.subr.mxu0 0.0
        %3616 = vmatpush1.msra.mxu0 0.0
        %3617 = vmatprep.subr.mxu0 0.0
        %3618 = vmatpush1.msra.mxu0 0.0
        %3619 = vmatprep.subr.mxu0 0.0
        %3620 = vmatpush1.msra.mxu0 0.0
        %3621 = vmatprep.subr.mxu0 0.0
        %3622 = vmatpush1.msra.mxu0 0.0
        %3623 = vmatprep.subr.mxu0 0.0
        %3624 = vmatpush1.msra.mxu0 0.0
        %3625 = vmatprep.subr.mxu0 0.0
        %3626 = vmatpush1.msra.mxu0 0.0
        %3627 = vmatprep.subr.mxu0 0.0
        %3628 = vmatpush1.msra.mxu0 0.0
        %3629 = vmatprep.subr.mxu0 0.0
        %3630 = vmatpush1.msra.mxu0 0.0
        %3631 = vmatprep.subr.mxu0 0.0
        %3632 = vmatpush1.msra.mxu0 0.0
        %3633 = vmatprep.subr.mxu0 0.0
        %3634 = vmatpush1.msra.mxu0 0.0
        %3635 = vmatprep.subr.mxu0 0.0
        %3636 = vmatpush1.msra.mxu0 0.0
        %3637 = vmatprep.subr.mxu0 0.0
        %3638 = vmatpush1.msra.mxu0 0.0
        %3639 = vmatprep.subr.mxu0 0.0
        %3640 = vmatpush1.msra.mxu0 0.0
        %3641 = vmatprep.subr.mxu0 0.0
        %3642 = vmatpush1.msra.mxu0 0.0
        %3643 = vmatprep.subr.mxu0 0.0
        %3644 = vmatpush1.msra.mxu0 0.0
        %3645 = vmatprep.subr.mxu0 0.0
        %3646 = vmatpush1.msra.mxu0 0.0
        %3647 = vmatprep.subr.mxu0 0.0
        %3648 = vmatpush1.msra.mxu0 0.0
        %3649 = vmatprep.subr.mxu0 0.0
        %3650 = vmatpush1.msra.mxu0 0.0
        %3651 = vmatprep.subr.mxu0 0.0
        %3652 = vmatpush1.msra.mxu0 0.0
        %3653 = vmatprep.subr.mxu0 0.0
        %3654 = vmatpush1.msra.mxu0 0.0
        %3655 = vmatprep.subr.mxu0 0.0
        %3656 = vmatpush1.msra.mxu0 0.0
        %3657 = vmatprep.subr.mxu0 0.0
        %3658 = vmatpush1.msra.mxu0 0.0
        %3659 = vmatprep.subr.mxu0 0.0
        %3660 = vmatpush1.msra.mxu0 0.0
        %3661 = vmatprep.subr.mxu0 0.0
        %3662 = vmatpush1.msra.mxu0 0.0
        %3663 = vmatprep.subr.mxu0 0.0
        %3664 = vmatpush1.msra.mxu0 0.0
        %3665 = vmatprep.subr.mxu0 0.0
        %3666 = vmatpush1.msra.mxu0 0.0
        %3667 = vmatprep.subr.mxu0 0.0
        %3668 = vmatpush1.msra.mxu0 0.0
        %3669 = vmatprep.subr.mxu0 0.0
        %3670 = vmatpush1.msra.mxu0 0.0
        %3671 = vmatprep.subr.mxu0 0.0
        %3672 = vmatpush1.msra.mxu0 0.0
        %3673 = vmatprep.subr.mxu0 0.0
        %3674 = vmatpush1.msra.mxu0 0.0
        %3675 = vmatprep.subr.mxu0 0.0
        %3676 = vmatpush1.msra.mxu0 0.0
        %3677 = vmatprep.mubr.f32.mxu0 0.0
        %3678 = vmatmul.mubr.f32.gmra.mrb[0].mxu0 %v1703
        %v3679 = vpop.f32.mrb[0].mxu0
        %v3680 = vadd.f32 0.0, %v3679
        %v3681 = vpop.f32.mrb[0].mxu0
        %3682 = vdwg.mxu0
        %v3684 = vsel %vm1777, %v3680, 0
        %3686 = vmatprep.subr.mxu0 0.0
        %3687 = vmatpush1.msra.mxu0 %v1677
        %3688 = vmatprep.subr.mxu0 0.0
        %3689 = vmatpush1.msra.mxu0 %v1678
        %3690 = vmatprep.subr.mxu0 0.0
        %3691 = vmatpush1.msra.mxu0 %v1679
        %3692 = vmatprep.subr.mxu0 0.0
        %3693 = vmatpush1.msra.mxu0 %v1680
        %3694 = vmatprep.subr.mxu0 0.0
        %3695 = vmatpush1.msra.mxu0 0.0
        %3696 = vmatprep.subr.mxu0 0.0
        %3697 = vmatpush1.msra.mxu0 0.0
        %3698 = vmatprep.subr.mxu0 0.0
        %3699 = vmatpush1.msra.mxu0 0.0
        %3700 = vmatprep.subr.mxu0 0.0
        %3701 = vmatpush1.msra.mxu0 0.0
        %3702 = vmatprep.subr.mxu0 0.0
        %3703 = vmatpush1.msra.mxu0 0.0
        %3704 = vmatprep.subr.mxu0 0.0
        %3705 = vmatpush1.msra.mxu0 0.0
        %3706 = vmatprep.subr.mxu0 0.0
        %3707 = vmatpush1.msra.mxu0 0.0
        %3708 = vmatprep.subr.mxu0 0.0
        %3709 = vmatpush1.msra.mxu0 0.0
        %3710 = vmatprep.subr.mxu0 0.0
        %3711 = vmatpush1.msra.mxu0 0.0
        %3712 = vmatprep.subr.mxu0 0.0
        %3713 = vmatpush1.msra.mxu0 0.0
        %3714 = vmatprep.subr.mxu0 0.0
        %3715 = vmatpush1.msra.mxu0 0.0
        %3716 = vmatprep.subr.mxu0 0.0
        %3717 = vmatpush1.msra.mxu0 0.0
        %3718 = vmatprep.subr.mxu0 0.0
        %3719 = vmatpush1.msra.mxu0 0.0
        %3720 = vmatprep.subr.mxu0 0.0
        %3721 = vmatpush1.msra.mxu0 0.0
        %3722 = vmatprep.subr.mxu0 0.0
        %3723 = vmatpush1.msra.mxu0 0.0
        %3724 = vmatprep.subr.mxu0 0.0
        %3725 = vmatpush1.msra.mxu0 0.0
        %3726 = vmatprep.subr.mxu0 0.0
        %3727 = vmatpush1.msra.mxu0 0.0
        %3728 = vmatprep.subr.mxu0 0.0
        %3729 = vmatpush1.msra.mxu0 0.0
        %3730 = vmatprep.subr.mxu0 0.0
        %3731 = vmatpush1.msra.mxu0 0.0
        %3732 = vmatprep.subr.mxu0 0.0
        %3733 = vmatpush1.msra.mxu0 0.0
        %3734 = vmatprep.subr.mxu0 0.0
        %3735 = vmatpush1.msra.mxu0 0.0
        %3736 = vmatprep.subr.mxu0 0.0
        %3737 = vmatpush1.msra.mxu0 0.0
        %3738 = vmatprep.subr.mxu0 0.0
        %3739 = vmatpush1.msra.mxu0 0.0
        %3740 = vmatprep.subr.mxu0 0.0
        %3741 = vmatpush1.msra.mxu0 0.0
        %3742 = vmatprep.subr.mxu0 0.0
        %3743 = vmatpush1.msra.mxu0 0.0
        %3744 = vmatprep.subr.mxu0 0.0
        %3745 = vmatpush1.msra.mxu0 0.0
        %3746 = vmatprep.subr.mxu0 0.0
        %3747 = vmatpush1.msra.mxu0 0.0
        %3748 = vmatprep.subr.mxu0 0.0
        %3749 = vmatpush1.msra.mxu0 0.0
        %3750 = vmatprep.mubr.f32.mxu0 0.0
        %3751 = vmatmul.mubr.f32.gmra.mrb[0].mxu0 %v3684
        %v3752 = vpop.f32.mrb[0].mxu0
        %v3753 = vadd.f32 0.0, %v3752
        %v3754 = vpop.f32.mrb[0].mxu0
        %3755 = vdwg.mxu0
        %v3756 = vld [vmem:[#allocation2 + $0x58] sm:$0xff]
        %v3757 = vadd.f32 %v3756, %v3753
        %3758 = vst.msk [vmem:[#allocation2 + $0x58] sm:$0xff] %vm1853, %v3757
        %v3759 = vld [vmem:[#allocation2 + $0x58] sm:$0xff]
        %3761 = vrot.lane.b32.xlu0 %v3753, 64
        %v3762 = vpop.permute.xlu0 %3761
        %v3764 = vadd.f32 %v3759, %v3762
        %3765 = vst.msk [vmem:[#allocation2 + $0x58] sm:$0xff] %vm1861, %v3764
        %v3766 = vld [vmem:[%s314 + $0xc] sm:$0x1]
        %v3767 = vld [vmem:[%s314 + $0x2c] sm:$0x1]
        %v3768 = vld [vmem:[%s314 + $0x4c] sm:$0x1]
        %v3769 = vld [vmem:[%s314 + $0x6c] sm:$0x1]
        %v3770 = vmax.f32 %v3766, 0.0
        %v3771 = vmax.f32 %v3767, 0.0
        %v3772 = vmax.f32 %v3768, 0.0
        %v3773 = vmax.f32 %v3769, 0.0
        %v3778 = vrot.slane %v3771, 7
        %v3779 = vsel %vm1694, %v3778, %v3770
        %v3780 = vrot.slane %v3772, 6
        %v3781 = vsel %vm1697, %v3780, %v3779
        %v3782 = vrot.slane %v3773, 5
        %v3783 = vsel %vm1700, %v3782, %v3781
        %v3784 = vsel %vm443, %v3783, 0
        %3786 = vmatprep.subr.mxu0 0.0
        %3787 = vmatpush1.msra.mxu0 %v3784
        %3788 = vmatprep.subr.mxu0 0.0
        %3789 = vmatpush1.msra.mxu0 0.0
        %3790 = vmatprep.subr.mxu0 0.0
        %3791 = vmatpush1.msra.mxu0 0.0
        %3792 = vmatprep.subr.mxu0 0.0
        %3793 = vmatpush1.msra.mxu0 0.0
        %3794 = vmatprep.subr.mxu0 0.0
        %3795 = vmatpush1.msra.mxu0 0.0
        %3796 = vmatprep.subr.mxu0 0.0
        %3797 = vmatpush1.msra.mxu0 0.0
        %3798 = vmatprep.subr.mxu0 0.0
        %3799 = vmatpush1.msra.mxu0 0.0
        %3800 = vmatprep.subr.mxu0 0.0
        %3801 = vmatpush1.msra.mxu0 0.0
        %3802 = vmatprep.subr.mxu0 0.0
        %3803 = vmatpush1.msra.mxu0 0.0
        %3804 = vmatprep.subr.mxu0 0.0
        %3805 = vmatpush1.msra.mxu0 0.0
        %3806 = vmatprep.subr.mxu0 0.0
        %3807 = vmatpush1.msra.mxu0 0.0
        %3808 = vmatprep.subr.mxu0 0.0
        %3809 = vmatpush1.msra.mxu0 0.0
        %3810 = vmatprep.subr.mxu0 0.0
        %3811 = vmatpush1.msra.mxu0 0.0
        %3812 = vmatprep.subr.mxu0 0.0
        %3813 = vmatpush1.msra.mxu0 0.0
        %3814 = vmatprep.subr.mxu0 0.0
        %3815 = vmatpush1.msra.mxu0 0.0
        %3816 = vmatprep.subr.mxu0 0.0
        %3817 = vmatpush1.msra.mxu0 0.0
        %3818 = vmatprep.subr.mxu0 0.0
        %3819 = vmatpush1.msra.mxu0 0.0
        %3820 = vmatprep.subr.mxu0 0.0
        %3821 = vmatpush1.msra.mxu0 0.0
        %3822 = vmatprep.subr.mxu0 0.0
        %3823 = vmatpush1.msra.mxu0 0.0
        %3824 = vmatprep.subr.mxu0 0.0
        %3825 = vmatpush1.msra.mxu0 0.0
        %3826 = vmatprep.subr.mxu0 0.0
        %3827 = vmatpush1.msra.mxu0 0.0
        %3828 = vmatprep.subr.mxu0 0.0
        %3829 = vmatpush1.msra.mxu0 0.0
        %3830 = vmatprep.subr.mxu0 0.0
        %3831 = vmatpush1.msra.mxu0 0.0
        %3832 = vmatprep.subr.mxu0 0.0
        %3833 = vmatpush1.msra.mxu0 0.0
        %3834 = vmatprep.subr.mxu0 0.0
        %3835 = vmatpush1.msra.mxu0 0.0
        %3836 = vmatprep.subr.mxu0 0.0
        %3837 = vmatpush1.msra.mxu0 0.0
        %3838 = vmatprep.subr.mxu0 0.0
        %3839 = vmatpush1.msra.mxu0 0.0
        %3840 = vmatprep.subr.mxu0 0.0
        %3841 = vmatpush1.msra.mxu0 0.0
        %3842 = vmatprep.subr.mxu0 0.0
        %3843 = vmatpush1.msra.mxu0 0.0
        %3844 = vmatprep.subr.mxu0 0.0
        %3845 = vmatpush1.msra.mxu0 0.0
        %3846 = vmatprep.subr.mxu0 0.0
        %3847 = vmatpush1.msra.mxu0 0.0
        %3848 = vmatprep.subr.mxu0 0.0
        %3849 = vmatpush1.msra.mxu0 0.0
        %3850 = vmatprep.mubr.f32.mxu0 0.0
        %3851 = vmatmul.mubr.f32.gmra.mrb[0].mxu0 %v1703
        %v3852 = vpop.f32.mrb[0].mxu0
        %v3853 = vadd.f32 0.0, %v3852
        %v3854 = vpop.f32.mrb[0].mxu0
        %3855 = vdwg.mxu0
        %v3857 = vsel %vm1777, %v3853, 0
        %3859 = vmatprep.subr.mxu0 0.0
        %3860 = vmatpush1.msra.mxu0 %v1677
        %3861 = vmatprep.subr.mxu0 0.0
        %3862 = vmatpush1.msra.mxu0 %v1678
        %3863 = vmatprep.subr.mxu0 0.0
        %3864 = vmatpush1.msra.mxu0 %v1679
        %3865 = vmatprep.subr.mxu0 0.0
        %3866 = vmatpush1.msra.mxu0 %v1680
        %3867 = vmatprep.subr.mxu0 0.0
        %3868 = vmatpush1.msra.mxu0 0.0
        %3869 = vmatprep.subr.mxu0 0.0
        %3870 = vmatpush1.msra.mxu0 0.0
        %3871 = vmatprep.subr.mxu0 0.0
        %3872 = vmatpush1.msra.mxu0 0.0
        %3873 = vmatprep.subr.mxu0 0.0
        %3874 = vmatpush1.msra.mxu0 0.0
        %3875 = vmatprep.subr.mxu0 0.0
        %3876 = vmatpush1.msra.mxu0 0.0
        %3877 = vmatprep.subr.mxu0 0.0
        %3878 = vmatpush1.msra.mxu0 0.0
        %3879 = vmatprep.subr.mxu0 0.0
        %3880 = vmatpush1.msra.mxu0 0.0
        %3881 = vmatprep.subr.mxu0 0.0
        %3882 = vmatpush1.msra.mxu0 0.0
        %3883 = vmatprep.subr.mxu0 0.0
        %3884 = vmatpush1.msra.mxu0 0.0
        %3885 = vmatprep.subr.mxu0 0.0
        %3886 = vmatpush1.msra.mxu0 0.0
        %3887 = vmatprep.subr.mxu0 0.0
        %3888 = vmatpush1.msra.mxu0 0.0
        %3889 = vmatprep.subr.mxu0 0.0
        %3890 = vmatpush1.msra.mxu0 0.0
        %3891 = vmatprep.subr.mxu0 0.0
        %3892 = vmatpush1.msra.mxu0 0.0
        %3893 = vmatprep.subr.mxu0 0.0
        %3894 = vmatpush1.msra.mxu0 0.0
        %3895 = vmatprep.subr.mxu0 0.0
        %3896 = vmatpush1.msra.mxu0 0.0
        %3897 = vmatprep.subr.mxu0 0.0
        %3898 = vmatpush1.msra.mxu0 0.0
        %3899 = vmatprep.subr.mxu0 0.0
        %3900 = vmatpush1.msra.mxu0 0.0
        %3901 = vmatprep.subr.mxu0 0.0
        %3902 = vmatpush1.msra.mxu0 0.0
        %3903 = vmatprep.subr.mxu0 0.0
        %3904 = vmatpush1.msra.mxu0 0.0
        %3905 = vmatprep.subr.mxu0 0.0
        %3906 = vmatpush1.msra.mxu0 0.0
        %3907 = vmatprep.subr.mxu0 0.0
        %3908 = vmatpush1.msra.mxu0 0.0
        %3909 = vmatprep.subr.mxu0 0.0
        %3910 = vmatpush1.msra.mxu0 0.0
        %3911 = vmatprep.subr.mxu0 0.0
        %3912 = vmatpush1.msra.mxu0 0.0
        %3913 = vmatprep.subr.mxu0 0.0
        %3914 = vmatpush1.msra.mxu0 0.0
        %3915 = vmatprep.subr.mxu0 0.0
        %3916 = vmatpush1.msra.mxu0 0.0
        %3917 = vmatprep.subr.mxu0 0.0
        %3918 = vmatpush1.msra.mxu0 0.0
        %3919 = vmatprep.subr.mxu0 0.0
        %3920 = vmatpush1.msra.mxu0 0.0
        %3921 = vmatprep.subr.mxu0 0.0
        %3922 = vmatpush1.msra.mxu0 0.0
        %3923 = vmatprep.mubr.f32.mxu0 0.0
        %3924 = vmatmul.mubr.f32.gmra.mrb[0].mxu0 %v3857
        %v3925 = vpop.f32.mrb[0].mxu0
        %v3926 = vadd.f32 0.0, %v3925
        %v3927 = vpop.f32.mrb[0].mxu0
        %3928 = vdwg.mxu0
        %v3929 = vld [vmem:[#allocation2 + $0x60] sm:$0xff]
        %v3930 = vadd.f32 %v3929, %v3926
        %3931 = vst.msk [vmem:[#allocation2 + $0x60] sm:$0xff] %vm1853, %v3930
        %v3932 = vld [vmem:[#allocation2 + $0x60] sm:$0xff]
        %3934 = vrot.lane.b32.xlu0 %v3926, 64
        %v3935 = vpop.permute.xlu0 %3934
        %v3937 = vadd.f32 %v3932, %v3935
        %3938 = vst.msk [vmem:[#allocation2 + $0x60] sm:$0xff] %vm1861, %v3937
        %v3939 = vld [vmem:[%s314 + $0xd] sm:$0x1]
        %v3940 = vld [vmem:[%s314 + $0x2d] sm:$0x1]
        %v3941 = vld [vmem:[%s314 + $0x4d] sm:$0x1]
        %v3942 = vld [vmem:[%s314 + $0x6d] sm:$0x1]
        %v3943 = vmax.f32 %v3939, 0.0
        %v3944 = vmax.f32 %v3940, 0.0
        %v3945 = vmax.f32 %v3941, 0.0
        %v3946 = vmax.f32 %v3942, 0.0
        %v3951 = vrot.slane %v3944, 7
        %v3952 = vsel %vm1694, %v3951, %v3943
        %v3953 = vrot.slane %v3945, 6
        %v3954 = vsel %vm1697, %v3953, %v3952
        %v3955 = vrot.slane %v3946, 5
        %v3956 = vsel %vm1700, %v3955, %v3954
        %v3957 = vsel %vm443, %v3956, 0
        %3959 = vmatprep.subr.mxu0 0.0
        %3960 = vmatpush1.msra.mxu0 %v3957
        %3961 = vmatprep.subr.mxu0 0.0
        %3962 = vmatpush1.msra.mxu0 0.0
        %3963 = vmatprep.subr.mxu0 0.0
        %3964 = vmatpush1.msra.mxu0 0.0
        %3965 = vmatprep.subr.mxu0 0.0
        %3966 = vmatpush1.msra.mxu0 0.0
        %3967 = vmatprep.subr.mxu0 0.0
        %3968 = vmatpush1.msra.mxu0 0.0
        %3969 = vmatprep.subr.mxu0 0.0
        %3970 = vmatpush1.msra.mxu0 0.0
        %3971 = vmatprep.subr.mxu0 0.0
        %3972 = vmatpush1.msra.mxu0 0.0
        %3973 = vmatprep.subr.mxu0 0.0
        %3974 = vmatpush1.msra.mxu0 0.0
        %3975 = vmatprep.subr.mxu0 0.0
        %3976 = vmatpush1.msra.mxu0 0.0
        %3977 = vmatprep.subr.mxu0 0.0
        %3978 = vmatpush1.msra.mxu0 0.0
        %3979 = vmatprep.subr.mxu0 0.0
        %3980 = vmatpush1.msra.mxu0 0.0
        %3981 = vmatprep.subr.mxu0 0.0
        %3982 = vmatpush1.msra.mxu0 0.0
        %3983 = vmatprep.subr.mxu0 0.0
        %3984 = vmatpush1.msra.mxu0 0.0
        %3985 = vmatprep.subr.mxu0 0.0
        %3986 = vmatpush1.msra.mxu0 0.0
        %3987 = vmatprep.subr.mxu0 0.0
        %3988 = vmatpush1.msra.mxu0 0.0
        %3989 = vmatprep.subr.mxu0 0.0
        %3990 = vmatpush1.msra.mxu0 0.0
        %3991 = vmatprep.subr.mxu0 0.0
        %3992 = vmatpush1.msra.mxu0 0.0
        %3993 = vmatprep.subr.mxu0 0.0
        %3994 = vmatpush1.msra.mxu0 0.0
        %3995 = vmatprep.subr.mxu0 0.0
        %3996 = vmatpush1.msra.mxu0 0.0
        %3997 = vmatprep.subr.mxu0 0.0
        %3998 = vmatpush1.msra.mxu0 0.0
        %3999 = vmatprep.subr.mxu0 0.0
        %4000 = vmatpush1.msra.mxu0 0.0
        %4001 = vmatprep.subr.mxu0 0.0
        %4002 = vmatpush1.msra.mxu0 0.0
        %4003 = vmatprep.subr.mxu0 0.0
        %4004 = vmatpush1.msra.mxu0 0.0
        %4005 = vmatprep.subr.mxu0 0.0
        %4006 = vmatpush1.msra.mxu0 0.0
        %4007 = vmatprep.subr.mxu0 0.0
        %4008 = vmatpush1.msra.mxu0 0.0
        %4009 = vmatprep.subr.mxu0 0.0
        %4010 = vmatpush1.msra.mxu0 0.0
        %4011 = vmatprep.subr.mxu0 0.0
        %4012 = vmatpush1.msra.mxu0 0.0
        %4013 = vmatprep.subr.mxu0 0.0
        %4014 = vmatpush1.msra.mxu0 0.0
        %4015 = vmatprep.subr.mxu0 0.0
        %4016 = vmatpush1.msra.mxu0 0.0
        %4017 = vmatprep.subr.mxu0 0.0
        %4018 = vmatpush1.msra.mxu0 0.0
        %4019 = vmatprep.subr.mxu0 0.0
        %4020 = vmatpush1.msra.mxu0 0.0
        %4021 = vmatprep.subr.mxu0 0.0
        %4022 = vmatpush1.msra.mxu0 0.0
        %4023 = vmatprep.mubr.f32.mxu0 0.0
        %4024 = vmatmul.mubr.f32.gmra.mrb[0].mxu0 %v1703
        %v4025 = vpop.f32.mrb[0].mxu0
        %v4026 = vadd.f32 0.0, %v4025
        %v4027 = vpop.f32.mrb[0].mxu0
        %4028 = vdwg.mxu0
        %v4030 = vsel %vm1777, %v4026, 0
        %4032 = vmatprep.subr.mxu0 0.0
        %4033 = vmatpush1.msra.mxu0 %v1677
        %4034 = vmatprep.subr.mxu0 0.0
        %4035 = vmatpush1.msra.mxu0 %v1678
        %4036 = vmatprep.subr.mxu0 0.0
        %4037 = vmatpush1.msra.mxu0 %v1679
        %4038 = vmatprep.subr.mxu0 0.0
        %4039 = vmatpush1.msra.mxu0 %v1680
        %4040 = vmatprep.subr.mxu0 0.0
        %4041 = vmatpush1.msra.mxu0 0.0
        %4042 = vmatprep.subr.mxu0 0.0
        %4043 = vmatpush1.msra.mxu0 0.0
        %4044 = vmatprep.subr.mxu0 0.0
        %4045 = vmatpush1.msra.mxu0 0.0
        %4046 = vmatprep.subr.mxu0 0.0
        %4047 = vmatpush1.msra.mxu0 0.0
        %4048 = vmatprep.subr.mxu0 0.0
        %4049 = vmatpush1.msra.mxu0 0.0
        %4050 = vmatprep.subr.mxu0 0.0
        %4051 = vmatpush1.msra.mxu0 0.0
        %4052 = vmatprep.subr.mxu0 0.0
        %4053 = vmatpush1.msra.mxu0 0.0
        %4054 = vmatprep.subr.mxu0 0.0
        %4055 = vmatpush1.msra.mxu0 0.0
        %4056 = vmatprep.subr.mxu0 0.0
        %4057 = vmatpush1.msra.mxu0 0.0
        %4058 = vmatprep.subr.mxu0 0.0
        %4059 = vmatpush1.msra.mxu0 0.0
        %4060 = vmatprep.subr.mxu0 0.0
        %4061 = vmatpush1.msra.mxu0 0.0
        %4062 = vmatprep.subr.mxu0 0.0
        %4063 = vmatpush1.msra.mxu0 0.0
        %4064 = vmatprep.subr.mxu0 0.0
        %4065 = vmatpush1.msra.mxu0 0.0
        %4066 = vmatprep.subr.mxu0 0.0
        %4067 = vmatpush1.msra.mxu0 0.0
        %4068 = vmatprep.subr.mxu0 0.0
        %4069 = vmatpush1.msra.mxu0 0.0
        %4070 = vmatprep.subr.mxu0 0.0
        %4071 = vmatpush1.msra.mxu0 0.0
        %4072 = vmatprep.subr.mxu0 0.0
        %4073 = vmatpush1.msra.mxu0 0.0
        %4074 = vmatprep.subr.mxu0 0.0
        %4075 = vmatpush1.msra.mxu0 0.0
        %4076 = vmatprep.subr.mxu0 0.0
        %4077 = vmatpush1.msra.mxu0 0.0
        %4078 = vmatprep.subr.mxu0 0.0
        %4079 = vmatpush1.msra.mxu0 0.0
        %4080 = vmatprep.subr.mxu0 0.0
        %4081 = vmatpush1.msra.mxu0 0.0
        %4082 = vmatprep.subr.mxu0 0.0
        %4083 = vmatpush1.msra.mxu0 0.0
        %4084 = vmatprep.subr.mxu0 0.0
        %4085 = vmatpush1.msra.mxu0 0.0
        %4086 = vmatprep.subr.mxu0 0.0
        %4087 = vmatpush1.msra.mxu0 0.0
        %4088 = vmatprep.subr.mxu0 0.0
        %4089 = vmatpush1.msra.mxu0 0.0
        %4090 = vmatprep.subr.mxu0 0.0
        %4091 = vmatpush1.msra.mxu0 0.0
        %4092 = vmatprep.subr.mxu0 0.0
        %4093 = vmatpush1.msra.mxu0 0.0
        %4094 = vmatprep.subr.mxu0 0.0
        %4095 = vmatpush1.msra.mxu0 0.0
        %4096 = vmatprep.mubr.f32.mxu0 0.0
        %4097 = vmatmul.mubr.f32.gmra.mrb[0].mxu0 %v4030
        %v4098 = vpop.f32.mrb[0].mxu0
        %v4099 = vadd.f32 0.0, %v4098
        %v4100 = vpop.f32.mrb[0].mxu0
        %4101 = vdwg.mxu0
        %v4102 = vld [vmem:[#allocation2 + $0x68] sm:$0xff]
        %v4103 = vadd.f32 %v4102, %v4099
        %4104 = vst.msk [vmem:[#allocation2 + $0x68] sm:$0xff] %vm1853, %v4103
        %v4105 = vld [vmem:[#allocation2 + $0x68] sm:$0xff]
        %4107 = vrot.lane.b32.xlu0 %v4099, 64
        %v4108 = vpop.permute.xlu0 %4107
        %v4110 = vadd.f32 %v4105, %v4108
        %4111 = vst.msk [vmem:[#allocation2 + $0x68] sm:$0xff] %vm1861, %v4110
        %v4112 = vld [vmem:[%s314 + $0xe] sm:$0x1]
        %v4113 = vld [vmem:[%s314 + $0x2e] sm:$0x1]
        %v4114 = vld [vmem:[%s314 + $0x4e] sm:$0x1]
        %v4115 = vld [vmem:[%s314 + $0x6e] sm:$0x1]
        %v4116 = vmax.f32 %v4112, 0.0
        %v4117 = vmax.f32 %v4113, 0.0
        %v4118 = vmax.f32 %v4114, 0.0
        %v4119 = vmax.f32 %v4115, 0.0
        %v4124 = vrot.slane %v4117, 7
        %v4125 = vsel %vm1694, %v4124, %v4116
        %v4126 = vrot.slane %v4118, 6
        %v4127 = vsel %vm1697, %v4126, %v4125
        %v4128 = vrot.slane %v4119, 5
        %v4129 = vsel %vm1700, %v4128, %v4127
        %v4130 = vsel %vm443, %v4129, 0
        %4132 = vmatprep.subr.mxu0 0.0
        %4133 = vmatpush1.msra.mxu0 %v4130
        %4134 = vmatprep.subr.mxu0 0.0
        %4135 = vmatpush1.msra.mxu0 0.0
        %4136 = vmatprep.subr.mxu0 0.0
        %4137 = vmatpush1.msra.mxu0 0.0
        %4138 = vmatprep.subr.mxu0 0.0
        %4139 = vmatpush1.msra.mxu0 0.0
        %4140 = vmatprep.subr.mxu0 0.0
        %4141 = vmatpush1.msra.mxu0 0.0
        %4142 = vmatprep.subr.mxu0 0.0
        %4143 = vmatpush1.msra.mxu0 0.0
        %4144 = vmatprep.subr.mxu0 0.0
        %4145 = vmatpush1.msra.mxu0 0.0
        %4146 = vmatprep.subr.mxu0 0.0
        %4147 = vmatpush1.msra.mxu0 0.0
        %4148 = vmatprep.subr.mxu0 0.0
        %4149 = vmatpush1.msra.mxu0 0.0
        %4150 = vmatprep.subr.mxu0 0.0
        %4151 = vmatpush1.msra.mxu0 0.0
        %4152 = vmatprep.subr.mxu0 0.0
        %4153 = vmatpush1.msra.mxu0 0.0
        %4154 = vmatprep.subr.mxu0 0.0
        %4155 = vmatpush1.msra.mxu0 0.0
        %4156 = vmatprep.subr.mxu0 0.0
        %4157 = vmatpush1.msra.mxu0 0.0
        %4158 = vmatprep.subr.mxu0 0.0
        %4159 = vmatpush1.msra.mxu0 0.0
        %4160 = vmatprep.subr.mxu0 0.0
        %4161 = vmatpush1.msra.mxu0 0.0
        %4162 = vmatprep.subr.mxu0 0.0
        %4163 = vmatpush1.msra.mxu0 0.0
        %4164 = vmatprep.subr.mxu0 0.0
        %4165 = vmatpush1.msra.mxu0 0.0
        %4166 = vmatprep.subr.mxu0 0.0
        %4167 = vmatpush1.msra.mxu0 0.0
        %4168 = vmatprep.subr.mxu0 0.0
        %4169 = vmatpush1.msra.mxu0 0.0
        %4170 = vmatprep.subr.mxu0 0.0
        %4171 = vmatpush1.msra.mxu0 0.0
        %4172 = vmatprep.subr.mxu0 0.0
        %4173 = vmatpush1.msra.mxu0 0.0
        %4174 = vmatprep.subr.mxu0 0.0
        %4175 = vmatpush1.msra.mxu0 0.0
        %4176 = vmatprep.subr.mxu0 0.0
        %4177 = vmatpush1.msra.mxu0 0.0
        %4178 = vmatprep.subr.mxu0 0.0
        %4179 = vmatpush1.msra.mxu0 0.0
        %4180 = vmatprep.subr.mxu0 0.0
        %4181 = vmatpush1.msra.mxu0 0.0
        %4182 = vmatprep.subr.mxu0 0.0
        %4183 = vmatpush1.msra.mxu0 0.0
        %4184 = vmatprep.subr.mxu0 0.0
        %4185 = vmatpush1.msra.mxu0 0.0
        %4186 = vmatprep.subr.mxu0 0.0
        %4187 = vmatpush1.msra.mxu0 0.0
        %4188 = vmatprep.subr.mxu0 0.0
        %4189 = vmatpush1.msra.mxu0 0.0
        %4190 = vmatprep.subr.mxu0 0.0
        %4191 = vmatpush1.msra.mxu0 0.0
        %4192 = vmatprep.subr.mxu0 0.0
        %4193 = vmatpush1.msra.mxu0 0.0
        %4194 = vmatprep.subr.mxu0 0.0
        %4195 = vmatpush1.msra.mxu0 0.0
        %4196 = vmatprep.mubr.f32.mxu0 0.0
        %4197 = vmatmul.mubr.f32.gmra.mrb[0].mxu0 %v1703
        %v4198 = vpop.f32.mrb[0].mxu0
        %v4199 = vadd.f32 0.0, %v4198
        %v4200 = vpop.f32.mrb[0].mxu0
        %4201 = vdwg.mxu0
        %v4203 = vsel %vm1777, %v4199, 0
        %4205 = vmatprep.subr.mxu0 0.0
        %4206 = vmatpush1.msra.mxu0 %v1677
        %4207 = vmatprep.subr.mxu0 0.0
        %4208 = vmatpush1.msra.mxu0 %v1678
        %4209 = vmatprep.subr.mxu0 0.0
        %4210 = vmatpush1.msra.mxu0 %v1679
        %4211 = vmatprep.subr.mxu0 0.0
        %4212 = vmatpush1.msra.mxu0 %v1680
        %4213 = vmatprep.subr.mxu0 0.0
        %4214 = vmatpush1.msra.mxu0 0.0
        %4215 = vmatprep.subr.mxu0 0.0
        %4216 = vmatpush1.msra.mxu0 0.0
        %4217 = vmatprep.subr.mxu0 0.0
        %4218 = vmatpush1.msra.mxu0 0.0
        %4219 = vmatprep.subr.mxu0 0.0
        %4220 = vmatpush1.msra.mxu0 0.0
        %4221 = vmatprep.subr.mxu0 0.0
        %4222 = vmatpush1.msra.mxu0 0.0
        %4223 = vmatprep.subr.mxu0 0.0
        %4224 = vmatpush1.msra.mxu0 0.0
        %4225 = vmatprep.subr.mxu0 0.0
        %4226 = vmatpush1.msra.mxu0 0.0
        %4227 = vmatprep.subr.mxu0 0.0
        %4228 = vmatpush1.msra.mxu0 0.0
        %4229 = vmatprep.subr.mxu0 0.0
        %4230 = vmatpush1.msra.mxu0 0.0
        %4231 = vmatprep.subr.mxu0 0.0
        %4232 = vmatpush1.msra.mxu0 0.0
        %4233 = vmatprep.subr.mxu0 0.0
        %4234 = vmatpush1.msra.mxu0 0.0
        %4235 = vmatprep.subr.mxu0 0.0
        %4236 = vmatpush1.msra.mxu0 0.0
        %4237 = vmatprep.subr.mxu0 0.0
        %4238 = vmatpush1.msra.mxu0 0.0
        %4239 = vmatprep.subr.mxu0 0.0
        %4240 = vmatpush1.msra.mxu0 0.0
        %4241 = vmatprep.subr.mxu0 0.0
        %4242 = vmatpush1.msra.mxu0 0.0
        %4243 = vmatprep.subr.mxu0 0.0
        %4244 = vmatpush1.msra.mxu0 0.0
        %4245 = vmatprep.subr.mxu0 0.0
        %4246 = vmatpush1.msra.mxu0 0.0
        %4247 = vmatprep.subr.mxu0 0.0
        %4248 = vmatpush1.msra.mxu0 0.0
        %4249 = vmatprep.subr.mxu0 0.0
        %4250 = vmatpush1.msra.mxu0 0.0
        %4251 = vmatprep.subr.mxu0 0.0
        %4252 = vmatpush1.msra.mxu0 0.0
        %4253 = vmatprep.subr.mxu0 0.0
        %4254 = vmatpush1.msra.mxu0 0.0
        %4255 = vmatprep.subr.mxu0 0.0
        %4256 = vmatpush1.msra.mxu0 0.0
        %4257 = vmatprep.subr.mxu0 0.0
        %4258 = vmatpush1.msra.mxu0 0.0
        %4259 = vmatprep.subr.mxu0 0.0
        %4260 = vmatpush1.msra.mxu0 0.0
        %4261 = vmatprep.subr.mxu0 0.0
        %4262 = vmatpush1.msra.mxu0 0.0
        %4263 = vmatprep.subr.mxu0 0.0
        %4264 = vmatpush1.msra.mxu0 0.0
        %4265 = vmatprep.subr.mxu0 0.0
        %4266 = vmatpush1.msra.mxu0 0.0
        %4267 = vmatprep.subr.mxu0 0.0
        %4268 = vmatpush1.msra.mxu0 0.0
        %4269 = vmatprep.mubr.f32.mxu0 0.0
        %4270 = vmatmul.mubr.f32.gmra.mrb[0].mxu0 %v4203
        %v4271 = vpop.f32.mrb[0].mxu0
        %v4272 = vadd.f32 0.0, %v4271
        %v4273 = vpop.f32.mrb[0].mxu0
        %4274 = vdwg.mxu0
        %v4275 = vld [vmem:[#allocation2 + $0x70] sm:$0xff]
        %v4276 = vadd.f32 %v4275, %v4272
        %4277 = vst.msk [vmem:[#allocation2 + $0x70] sm:$0xff] %vm1853, %v4276
        %v4278 = vld [vmem:[#allocation2 + $0x70] sm:$0xff]
        %4280 = vrot.lane.b32.xlu0 %v4272, 64
        %v4281 = vpop.permute.xlu0 %4280
        %v4283 = vadd.f32 %v4278, %v4281
        %4284 = vst.msk [vmem:[#allocation2 + $0x70] sm:$0xff] %vm1861, %v4283
        %v4285 = vld [vmem:[%s314 + $0xf] sm:$0x1]
        %v4286 = vld [vmem:[%s314 + $0x2f] sm:$0x1]
        %v4287 = vld [vmem:[%s314 + $0x4f] sm:$0x1]
        %v4288 = vld [vmem:[%s314 + $0x6f] sm:$0x1]
        %v4289 = vmax.f32 %v4285, 0.0
        %v4290 = vmax.f32 %v4286, 0.0
        %v4291 = vmax.f32 %v4287, 0.0
        %v4292 = vmax.f32 %v4288, 0.0
        %v4297 = vrot.slane %v4290, 7
        %v4298 = vsel %vm1694, %v4297, %v4289
        %v4299 = vrot.slane %v4291, 6
        %v4300 = vsel %vm1697, %v4299, %v4298
        %v4301 = vrot.slane %v4292, 5
        %v4302 = vsel %vm1700, %v4301, %v4300
        %v4303 = vsel %vm443, %v4302, 0
        %4305 = vmatprep.subr.mxu0 0.0
        %4306 = vmatpush1.msra.mxu0 %v4303
        %4307 = vmatprep.subr.mxu0 0.0
        %4308 = vmatpush1.msra.mxu0 0.0
        %4309 = vmatprep.subr.mxu0 0.0
        %4310 = vmatpush1.msra.mxu0 0.0
        %4311 = vmatprep.subr.mxu0 0.0
        %4312 = vmatpush1.msra.mxu0 0.0
        %4313 = vmatprep.subr.mxu0 0.0
        %4314 = vmatpush1.msra.mxu0 0.0
        %4315 = vmatprep.subr.mxu0 0.0
        %4316 = vmatpush1.msra.mxu0 0.0
        %4317 = vmatprep.subr.mxu0 0.0
        %4318 = vmatpush1.msra.mxu0 0.0
        %4319 = vmatprep.subr.mxu0 0.0
        %4320 = vmatpush1.msra.mxu0 0.0
        %4321 = vmatprep.subr.mxu0 0.0
        %4322 = vmatpush1.msra.mxu0 0.0
        %4323 = vmatprep.subr.mxu0 0.0
        %4324 = vmatpush1.msra.mxu0 0.0
        %4325 = vmatprep.subr.mxu0 0.0
        %4326 = vmatpush1.msra.mxu0 0.0
        %4327 = vmatprep.subr.mxu0 0.0
        %4328 = vmatpush1.msra.mxu0 0.0
        %4329 = vmatprep.subr.mxu0 0.0
        %4330 = vmatpush1.msra.mxu0 0.0
        %4331 = vmatprep.subr.mxu0 0.0
        %4332 = vmatpush1.msra.mxu0 0.0
        %4333 = vmatprep.subr.mxu0 0.0
        %4334 = vmatpush1.msra.mxu0 0.0
        %4335 = vmatprep.subr.mxu0 0.0
        %4336 = vmatpush1.msra.mxu0 0.0
        %4337 = vmatprep.subr.mxu0 0.0
        %4338 = vmatpush1.msra.mxu0 0.0
        %4339 = vmatprep.subr.mxu0 0.0
        %4340 = vmatpush1.msra.mxu0 0.0
        %4341 = vmatprep.subr.mxu0 0.0
        %4342 = vmatpush1.msra.mxu0 0.0
        %4343 = vmatprep.subr.mxu0 0.0
        %4344 = vmatpush1.msra.mxu0 0.0
        %4345 = vmatprep.subr.mxu0 0.0
        %4346 = vmatpush1.msra.mxu0 0.0
        %4347 = vmatprep.subr.mxu0 0.0
        %4348 = vmatpush1.msra.mxu0 0.0
        %4349 = vmatprep.subr.mxu0 0.0
        %4350 = vmatpush1.msra.mxu0 0.0
        %4351 = vmatprep.subr.mxu0 0.0
        %4352 = vmatpush1.msra.mxu0 0.0
        %4353 = vmatprep.subr.mxu0 0.0
        %4354 = vmatpush1.msra.mxu0 0.0
        %4355 = vmatprep.subr.mxu0 0.0
        %4356 = vmatpush1.msra.mxu0 0.0
        %4357 = vmatprep.subr.mxu0 0.0
        %4358 = vmatpush1.msra.mxu0 0.0
        %4359 = vmatprep.subr.mxu0 0.0
        %4360 = vmatpush1.msra.mxu0 0.0
        %4361 = vmatprep.subr.mxu0 0.0
        %4362 = vmatpush1.msra.mxu0 0.0
        %4363 = vmatprep.subr.mxu0 0.0
        %4364 = vmatpush1.msra.mxu0 0.0
        %4365 = vmatprep.subr.mxu0 0.0
        %4366 = vmatpush1.msra.mxu0 0.0
        %4367 = vmatprep.subr.mxu0 0.0
        %4368 = vmatpush1.msra.mxu0 0.0
        %4369 = vmatprep.mubr.f32.mxu0 0.0
        %4370 = vmatmul.mubr.f32.gmra.mrb[0].mxu0 %v1703
        %v4371 = vpop.f32.mrb[0].mxu0
        %v4372 = vadd.f32 0.0, %v4371
        %v4373 = vpop.f32.mrb[0].mxu0
        %4374 = vdwg.mxu0
        %v4376 = vsel %vm1777, %v4372, 0
        %4378 = vmatprep.subr.mxu0 0.0
        %4379 = vmatpush1.msra.mxu0 %v1677
        %4380 = vmatprep.subr.mxu0 0.0
        %4381 = vmatpush1.msra.mxu0 %v1678
        %4382 = vmatprep.subr.mxu0 0.0
        %4383 = vmatpush1.msra.mxu0 %v1679
        %4384 = vmatprep.subr.mxu0 0.0
        %4385 = vmatpush1.msra.mxu0 %v1680
        %4386 = vmatprep.subr.mxu0 0.0
        %4387 = vmatpush1.msra.mxu0 0.0
        %4388 = vmatprep.subr.mxu0 0.0
        %4389 = vmatpush1.msra.mxu0 0.0
        %4390 = vmatprep.subr.mxu0 0.0
        %4391 = vmatpush1.msra.mxu0 0.0
        %4392 = vmatprep.subr.mxu0 0.0
        %4393 = vmatpush1.msra.mxu0 0.0
        %4394 = vmatprep.subr.mxu0 0.0
        %4395 = vmatpush1.msra.mxu0 0.0
        %4396 = vmatprep.subr.mxu0 0.0
        %4397 = vmatpush1.msra.mxu0 0.0
        %4398 = vmatprep.subr.mxu0 0.0
        %4399 = vmatpush1.msra.mxu0 0.0
        %4400 = vmatprep.subr.mxu0 0.0
        %4401 = vmatpush1.msra.mxu0 0.0
        %4402 = vmatprep.subr.mxu0 0.0
        %4403 = vmatpush1.msra.mxu0 0.0
        %4404 = vmatprep.subr.mxu0 0.0
        %4405 = vmatpush1.msra.mxu0 0.0
        %4406 = vmatprep.subr.mxu0 0.0
        %4407 = vmatpush1.msra.mxu0 0.0
        %4408 = vmatprep.subr.mxu0 0.0
        %4409 = vmatpush1.msra.mxu0 0.0
        %4410 = vmatprep.subr.mxu0 0.0
        %4411 = vmatpush1.msra.mxu0 0.0
        %4412 = vmatprep.subr.mxu0 0.0
        %4413 = vmatpush1.msra.mxu0 0.0
        %4414 = vmatprep.subr.mxu0 0.0
        %4415 = vmatpush1.msra.mxu0 0.0
        %4416 = vmatprep.subr.mxu0 0.0
        %4417 = vmatpush1.msra.mxu0 0.0
        %4418 = vmatprep.subr.mxu0 0.0
        %4419 = vmatpush1.msra.mxu0 0.0
        %4420 = vmatprep.subr.mxu0 0.0
        %4421 = vmatpush1.msra.mxu0 0.0
        %4422 = vmatprep.subr.mxu0 0.0
        %4423 = vmatpush1.msra.mxu0 0.0
        %4424 = vmatprep.subr.mxu0 0.0
        %4425 = vmatpush1.msra.mxu0 0.0
        %4426 = vmatprep.subr.mxu0 0.0
        %4427 = vmatpush1.msra.mxu0 0.0
        %4428 = vmatprep.subr.mxu0 0.0
        %4429 = vmatpush1.msra.mxu0 0.0
        %4430 = vmatprep.subr.mxu0 0.0
        %4431 = vmatpush1.msra.mxu0 0.0
        %4432 = vmatprep.subr.mxu0 0.0
        %4433 = vmatpush1.msra.mxu0 0.0
        %4434 = vmatprep.subr.mxu0 0.0
        %4435 = vmatpush1.msra.mxu0 0.0
        %4436 = vmatprep.subr.mxu0 0.0
        %4437 = vmatpush1.msra.mxu0 0.0
        %4438 = vmatprep.subr.mxu0 0.0
        %4439 = vmatpush1.msra.mxu0 0.0
        %4440 = vmatprep.subr.mxu0 0.0
        %4441 = vmatpush1.msra.mxu0 0.0
        %4442 = vmatprep.mubr.f32.mxu0 0.0
        %4443 = vmatmul.mubr.f32.gmra.mrb[0].mxu0 %v4376
        %v4444 = vpop.f32.mrb[0].mxu0
        %v4445 = vadd.f32 0.0, %v4444
        %v4446 = vpop.f32.mrb[0].mxu0
        %4447 = vdwg.mxu0
        %v4448 = vld [vmem:[#allocation2 + $0x78] sm:$0xff]
        %v4449 = vadd.f32 %v4448, %v4445
        %4450 = vst.msk [vmem:[#allocation2 + $0x78] sm:$0xff] %vm1853, %v4449
        %v4451 = vld [vmem:[#allocation2 + $0x78] sm:$0xff]
        %4453 = vrot.lane.b32.xlu0 %v4445, 64
        %v4454 = vpop.permute.xlu0 %4453
        %v4456 = vadd.f32 %v4451, %v4454
        %4457 = vst.msk [vmem:[#allocation2 + $0x78] sm:$0xff] %vm1861, %v4456
        %v4458 = vld [vmem:[%s314 + $0x10] sm:$0x1]
        %v4459 = vld [vmem:[%s314 + $0x30] sm:$0x1]
        %v4460 = vld [vmem:[%s314 + $0x50] sm:$0x1]
        %v4461 = vld [vmem:[%s314 + $0x70] sm:$0x1]
        %v4462 = vmax.f32 %v4458, 0.0
        %v4463 = vmax.f32 %v4459, 0.0
        %v4464 = vmax.f32 %v4460, 0.0
        %v4465 = vmax.f32 %v4461, 0.0
        %v4470 = vrot.slane %v4463, 7
        %v4471 = vsel %vm1694, %v4470, %v4462
        %v4472 = vrot.slane %v4464, 6
        %v4473 = vsel %vm1697, %v4472, %v4471
        %v4474 = vrot.slane %v4465, 5
        %v4475 = vsel %vm1700, %v4474, %v4473
        %v4476 = vsel %vm443, %v4475, 0
        %4478 = vmatprep.subr.mxu0 0.0
        %4479 = vmatpush1.msra.mxu0 %v4476
        %4480 = vmatprep.subr.mxu0 0.0
        %4481 = vmatpush1.msra.mxu0 0.0
        %4482 = vmatprep.subr.mxu0 0.0
        %4483 = vmatpush1.msra.mxu0 0.0
        %4484 = vmatprep.subr.mxu0 0.0
        %4485 = vmatpush1.msra.mxu0 0.0
        %4486 = vmatprep.subr.mxu0 0.0
        %4487 = vmatpush1.msra.mxu0 0.0
        %4488 = vmatprep.subr.mxu0 0.0
        %4489 = vmatpush1.msra.mxu0 0.0
        %4490 = vmatprep.subr.mxu0 0.0
        %4491 = vmatpush1.msra.mxu0 0.0
        %4492 = vmatprep.subr.mxu0 0.0
        %4493 = vmatpush1.msra.mxu0 0.0
        %4494 = vmatprep.subr.mxu0 0.0
        %4495 = vmatpush1.msra.mxu0 0.0
        %4496 = vmatprep.subr.mxu0 0.0
        %4497 = vmatpush1.msra.mxu0 0.0
        %4498 = vmatprep.subr.mxu0 0.0
        %4499 = vmatpush1.msra.mxu0 0.0
        %4500 = vmatprep.subr.mxu0 0.0
        %4501 = vmatpush1.msra.mxu0 0.0
        %4502 = vmatprep.subr.mxu0 0.0
        %4503 = vmatpush1.msra.mxu0 0.0
        %4504 = vmatprep.subr.mxu0 0.0
        %4505 = vmatpush1.msra.mxu0 0.0
        %4506 = vmatprep.subr.mxu0 0.0
        %4507 = vmatpush1.msra.mxu0 0.0
        %4508 = vmatprep.subr.mxu0 0.0
        %4509 = vmatpush1.msra.mxu0 0.0
        %4510 = vmatprep.subr.mxu0 0.0
        %4511 = vmatpush1.msra.mxu0 0.0
        %4512 = vmatprep.subr.mxu0 0.0
        %4513 = vmatpush1.msra.mxu0 0.0
        %4514 = vmatprep.subr.mxu0 0.0
        %4515 = vmatpush1.msra.mxu0 0.0
        %4516 = vmatprep.subr.mxu0 0.0
        %4517 = vmatpush1.msra.mxu0 0.0
        %4518 = vmatprep.subr.mxu0 0.0
        %4519 = vmatpush1.msra.mxu0 0.0
        %4520 = vmatprep.subr.mxu0 0.0
        %4521 = vmatpush1.msra.mxu0 0.0
        %4522 = vmatprep.subr.mxu0 0.0
        %4523 = vmatpush1.msra.mxu0 0.0
        %4524 = vmatprep.subr.mxu0 0.0
        %4525 = vmatpush1.msra.mxu0 0.0
        %4526 = vmatprep.subr.mxu0 0.0
        %4527 = vmatpush1.msra.mxu0 0.0
        %4528 = vmatprep.subr.mxu0 0.0
        %4529 = vmatpush1.msra.mxu0 0.0
        %4530 = vmatprep.subr.mxu0 0.0
        %4531 = vmatpush1.msra.mxu0 0.0
        %4532 = vmatprep.subr.mxu0 0.0
        %4533 = vmatpush1.msra.mxu0 0.0
        %4534 = vmatprep.subr.mxu0 0.0
        %4535 = vmatpush1.msra.mxu0 0.0
        %4536 = vmatprep.subr.mxu0 0.0
        %4537 = vmatpush1.msra.mxu0 0.0
        %4538 = vmatprep.subr.mxu0 0.0
        %4539 = vmatpush1.msra.mxu0 0.0
        %4540 = vmatprep.subr.mxu0 0.0
        %4541 = vmatpush1.msra.mxu0 0.0
        %4542 = vmatprep.mubr.f32.mxu0 0.0
        %4543 = vmatmul.mubr.f32.gmra.mrb[0].mxu0 %v1703
        %v4544 = vpop.f32.mrb[0].mxu0
        %v4545 = vadd.f32 0.0, %v4544
        %v4546 = vpop.f32.mrb[0].mxu0
        %4547 = vdwg.mxu0
        %v4549 = vsel %vm1777, %v4545, 0
        %4551 = vmatprep.subr.mxu0 0.0
        %4552 = vmatpush1.msra.mxu0 %v1677
        %4553 = vmatprep.subr.mxu0 0.0
        %4554 = vmatpush1.msra.mxu0 %v1678
        %4555 = vmatprep.subr.mxu0 0.0
        %4556 = vmatpush1.msra.mxu0 %v1679
        %4557 = vmatprep.subr.mxu0 0.0
        %4558 = vmatpush1.msra.mxu0 %v1680
        %4559 = vmatprep.subr.mxu0 0.0
        %4560 = vmatpush1.msra.mxu0 0.0
        %4561 = vmatprep.subr.mxu0 0.0
        %4562 = vmatpush1.msra.mxu0 0.0
        %4563 = vmatprep.subr.mxu0 0.0
        %4564 = vmatpush1.msra.mxu0 0.0
        %4565 = vmatprep.subr.mxu0 0.0
        %4566 = vmatpush1.msra.mxu0 0.0
        %4567 = vmatprep.subr.mxu0 0.0
        %4568 = vmatpush1.msra.mxu0 0.0
        %4569 = vmatprep.subr.mxu0 0.0
        %4570 = vmatpush1.msra.mxu0 0.0
        %4571 = vmatprep.subr.mxu0 0.0
        %4572 = vmatpush1.msra.mxu0 0.0
        %4573 = vmatprep.subr.mxu0 0.0
        %4574 = vmatpush1.msra.mxu0 0.0
        %4575 = vmatprep.subr.mxu0 0.0
        %4576 = vmatpush1.msra.mxu0 0.0
        %4577 = vmatprep.subr.mxu0 0.0
        %4578 = vmatpush1.msra.mxu0 0.0
        %4579 = vmatprep.subr.mxu0 0.0
        %4580 = vmatpush1.msra.mxu0 0.0
        %4581 = vmatprep.subr.mxu0 0.0
        %4582 = vmatpush1.msra.mxu0 0.0
        %4583 = vmatprep.subr.mxu0 0.0
        %4584 = vmatpush1.msra.mxu0 0.0
        %4585 = vmatprep.subr.mxu0 0.0
        %4586 = vmatpush1.msra.mxu0 0.0
        %4587 = vmatprep.subr.mxu0 0.0
        %4588 = vmatpush1.msra.mxu0 0.0
        %4589 = vmatprep.subr.mxu0 0.0
        %4590 = vmatpush1.msra.mxu0 0.0
        %4591 = vmatprep.subr.mxu0 0.0
        %4592 = vmatpush1.msra.mxu0 0.0
        %4593 = vmatprep.subr.mxu0 0.0
        %4594 = vmatpush1.msra.mxu0 0.0
        %4595 = vmatprep.subr.mxu0 0.0
        %4596 = vmatpush1.msra.mxu0 0.0
        %4597 = vmatprep.subr.mxu0 0.0
        %4598 = vmatpush1.msra.mxu0 0.0
        %4599 = vmatprep.subr.mxu0 0.0
        %4600 = vmatpush1.msra.mxu0 0.0
        %4601 = vmatprep.subr.mxu0 0.0
        %4602 = vmatpush1.msra.mxu0 0.0
        %4603 = vmatprep.subr.mxu0 0.0
        %4604 = vmatpush1.msra.mxu0 0.0
        %4605 = vmatprep.subr.mxu0 0.0
        %4606 = vmatpush1.msra.mxu0 0.0
        %4607 = vmatprep.subr.mxu0 0.0
        %4608 = vmatpush1.msra.mxu0 0.0
        %4609 = vmatprep.subr.mxu0 0.0
        %4610 = vmatpush1.msra.mxu0 0.0
        %4611 = vmatprep.subr.mxu0 0.0
        %4612 = vmatpush1.msra.mxu0 0.0
        %4613 = vmatprep.subr.mxu0 0.0
        %4614 = vmatpush1.msra.mxu0 0.0
        %4615 = vmatprep.mubr.f32.mxu0 0.0
        %4616 = vmatmul.mubr.f32.gmra.mrb[0].mxu0 %v4549
        %v4617 = vpop.f32.mrb[0].mxu0
        %v4618 = vadd.f32 0.0, %v4617
        %v4619 = vpop.f32.mrb[0].mxu0
        %4620 = vdwg.mxu0
        %v4621 = vld [vmem:[#allocation2 + $0x80] sm:$0xff]
        %v4622 = vadd.f32 %v4621, %v4618
        %4623 = vst.msk [vmem:[#allocation2 + $0x80] sm:$0xff] %vm1853, %v4622
        %v4624 = vld [vmem:[#allocation2 + $0x80] sm:$0xff]
        %4626 = vrot.lane.b32.xlu0 %v4618, 64
        %v4627 = vpop.permute.xlu0 %4626
        %v4629 = vadd.f32 %v4624, %v4627
        %4630 = vst.msk [vmem:[#allocation2 + $0x80] sm:$0xff] %vm1861, %v4629
        %v4631 = vld [vmem:[%s314 + $0x11] sm:$0x1]
        %v4632 = vld [vmem:[%s314 + $0x31] sm:$0x1]
        %v4633 = vld [vmem:[%s314 + $0x51] sm:$0x1]
        %v4634 = vld [vmem:[%s314 + $0x71] sm:$0x1]
        %v4635 = vmax.f32 %v4631, 0.0
        %v4636 = vmax.f32 %v4632, 0.0
        %v4637 = vmax.f32 %v4633, 0.0
        %v4638 = vmax.f32 %v4634, 0.0
        %v4643 = vrot.slane %v4636, 7
        %v4644 = vsel %vm1694, %v4643, %v4635
        %v4645 = vrot.slane %v4637, 6
        %v4646 = vsel %vm1697, %v4645, %v4644
        %v4647 = vrot.slane %v4638, 5
        %v4648 = vsel %vm1700, %v4647, %v4646
        %v4649 = vsel %vm443, %v4648, 0
        %4651 = vmatprep.subr.mxu0 0.0
        %4652 = vmatpush1.msra.mxu0 %v4649
        %4653 = vmatprep.subr.mxu0 0.0
        %4654 = vmatpush1.msra.mxu0 0.0
        %4655 = vmatprep.subr.mxu0 0.0
        %4656 = vmatpush1.msra.mxu0 0.0
        %4657 = vmatprep.subr.mxu0 0.0
        %4658 = vmatpush1.msra.mxu0 0.0
        %4659 = vmatprep.subr.mxu0 0.0
        %4660 = vmatpush1.msra.mxu0 0.0
        %4661 = vmatprep.subr.mxu0 0.0
        %4662 = vmatpush1.msra.mxu0 0.0
        %4663 = vmatprep.subr.mxu0 0.0
        %4664 = vmatpush1.msra.mxu0 0.0
        %4665 = vmatprep.subr.mxu0 0.0
        %4666 = vmatpush1.msra.mxu0 0.0
        %4667 = vmatprep.subr.mxu0 0.0
        %4668 = vmatpush1.msra.mxu0 0.0
        %4669 = vmatprep.subr.mxu0 0.0
        %4670 = vmatpush1.msra.mxu0 0.0
        %4671 = vmatprep.subr.mxu0 0.0
        %4672 = vmatpush1.msra.mxu0 0.0
        %4673 = vmatprep.subr.mxu0 0.0
        %4674 = vmatpush1.msra.mxu0 0.0
        %4675 = vmatprep.subr.mxu0 0.0
        %4676 = vmatpush1.msra.mxu0 0.0
        %4677 = vmatprep.subr.mxu0 0.0
        %4678 = vmatpush1.msra.mxu0 0.0
        %4679 = vmatprep.subr.mxu0 0.0
        %4680 = vmatpush1.msra.mxu0 0.0
        %4681 = vmatprep.subr.mxu0 0.0
        %4682 = vmatpush1.msra.mxu0 0.0
        %4683 = vmatprep.subr.mxu0 0.0
        %4684 = vmatpush1.msra.mxu0 0.0
        %4685 = vmatprep.subr.mxu0 0.0
        %4686 = vmatpush1.msra.mxu0 0.0
        %4687 = vmatprep.subr.mxu0 0.0
        %4688 = vmatpush1.msra.mxu0 0.0
        %4689 = vmatprep.subr.mxu0 0.0
        %4690 = vmatpush1.msra.mxu0 0.0
        %4691 = vmatprep.subr.mxu0 0.0
        %4692 = vmatpush1.msra.mxu0 0.0
        %4693 = vmatprep.subr.mxu0 0.0
        %4694 = vmatpush1.msra.mxu0 0.0
        %4695 = vmatprep.subr.mxu0 0.0
        %4696 = vmatpush1.msra.mxu0 0.0
        %4697 = vmatprep.subr.mxu0 0.0
        %4698 = vmatpush1.msra.mxu0 0.0
        %4699 = vmatprep.subr.mxu0 0.0
        %4700 = vmatpush1.msra.mxu0 0.0
        %4701 = vmatprep.subr.mxu0 0.0
        %4702 = vmatpush1.msra.mxu0 0.0
        %4703 = vmatprep.subr.mxu0 0.0
        %4704 = vmatpush1.msra.mxu0 0.0
        %4705 = vmatprep.subr.mxu0 0.0
        %4706 = vmatpush1.msra.mxu0 0.0
        %4707 = vmatprep.subr.mxu0 0.0
        %4708 = vmatpush1.msra.mxu0 0.0
        %4709 = vmatprep.subr.mxu0 0.0
        %4710 = vmatpush1.msra.mxu0 0.0
        %4711 = vmatprep.subr.mxu0 0.0
        %4712 = vmatpush1.msra.mxu0 0.0
        %4713 = vmatprep.subr.mxu0 0.0
        %4714 = vmatpush1.msra.mxu0 0.0
        %4715 = vmatprep.mubr.f32.mxu0 0.0
        %4716 = vmatmul.mubr.f32.gmra.mrb[0].mxu0 %v1703
        %v4717 = vpop.f32.mrb[0].mxu0
        %v4718 = vadd.f32 0.0, %v4717
        %v4719 = vpop.f32.mrb[0].mxu0
        %4720 = vdwg.mxu0
        %v4722 = vsel %vm1777, %v4718, 0
        %4724 = vmatprep.subr.mxu0 0.0
        %4725 = vmatpush1.msra.mxu0 %v1677
        %4726 = vmatprep.subr.mxu0 0.0
        %4727 = vmatpush1.msra.mxu0 %v1678
        %4728 = vmatprep.subr.mxu0 0.0
        %4729 = vmatpush1.msra.mxu0 %v1679
        %4730 = vmatprep.subr.mxu0 0.0
        %4731 = vmatpush1.msra.mxu0 %v1680
        %4732 = vmatprep.subr.mxu0 0.0
        %4733 = vmatpush1.msra.mxu0 0.0
        %4734 = vmatprep.subr.mxu0 0.0
        %4735 = vmatpush1.msra.mxu0 0.0
        %4736 = vmatprep.subr.mxu0 0.0
        %4737 = vmatpush1.msra.mxu0 0.0
        %4738 = vmatprep.subr.mxu0 0.0
        %4739 = vmatpush1.msra.mxu0 0.0
        %4740 = vmatprep.subr.mxu0 0.0
        %4741 = vmatpush1.msra.mxu0 0.0
        %4742 = vmatprep.subr.mxu0 0.0
        %4743 = vmatpush1.msra.mxu0 0.0
        %4744 = vmatprep.subr.mxu0 0.0
        %4745 = vmatpush1.msra.mxu0 0.0
        %4746 = vmatprep.subr.mxu0 0.0
        %4747 = vmatpush1.msra.mxu0 0.0
        %4748 = vmatprep.subr.mxu0 0.0
        %4749 = vmatpush1.msra.mxu0 0.0
        %4750 = vmatprep.subr.mxu0 0.0
        %4751 = vmatpush1.msra.mxu0 0.0
        %4752 = vmatprep.subr.mxu0 0.0
        %4753 = vmatpush1.msra.mxu0 0.0
        %4754 = vmatprep.subr.mxu0 0.0
        %4755 = vmatpush1.msra.mxu0 0.0
        %4756 = vmatprep.subr.mxu0 0.0
        %4757 = vmatpush1.msra.mxu0 0.0
        %4758 = vmatprep.subr.mxu0 0.0
        %4759 = vmatpush1.msra.mxu0 0.0
        %4760 = vmatprep.subr.mxu0 0.0
        %4761 = vmatpush1.msra.mxu0 0.0
        %4762 = vmatprep.subr.mxu0 0.0
        %4763 = vmatpush1.msra.mxu0 0.0
        %4764 = vmatprep.subr.mxu0 0.0
        %4765 = vmatpush1.msra.mxu0 0.0
        %4766 = vmatprep.subr.mxu0 0.0
        %4767 = vmatpush1.msra.mxu0 0.0
        %4768 = vmatprep.subr.mxu0 0.0
        %4769 = vmatpush1.msra.mxu0 0.0
        %4770 = vmatprep.subr.mxu0 0.0
        %4771 = vmatpush1.msra.mxu0 0.0
        %4772 = vmatprep.subr.mxu0 0.0
        %4773 = vmatpush1.msra.mxu0 0.0
        %4774 = vmatprep.subr.mxu0 0.0
        %4775 = vmatpush1.msra.mxu0 0.0
        %4776 = vmatprep.subr.mxu0 0.0
        %4777 = vmatpush1.msra.mxu0 0.0
        %4778 = vmatprep.subr.mxu0 0.0
        %4779 = vmatpush1.msra.mxu0 0.0
        %4780 = vmatprep.subr.mxu0 0.0
        %4781 = vmatpush1.msra.mxu0 0.0
        %4782 = vmatprep.subr.mxu0 0.0
        %4783 = vmatpush1.msra.mxu0 0.0
        %4784 = vmatprep.subr.mxu0 0.0
        %4785 = vmatpush1.msra.mxu0 0.0
        %4786 = vmatprep.subr.mxu0 0.0
        %4787 = vmatpush1.msra.mxu0 0.0
        %4788 = vmatprep.mubr.f32.mxu0 0.0
        %4789 = vmatmul.mubr.f32.gmra.mrb[0].mxu0 %v4722
        %v4790 = vpop.f32.mrb[0].mxu0
        %v4791 = vadd.f32 0.0, %v4790
        %v4792 = vpop.f32.mrb[0].mxu0
        %4793 = vdwg.mxu0
        %v4794 = vld [vmem:[#allocation2 + $0x88] sm:$0xff]
        %v4795 = vadd.f32 %v4794, %v4791
        %4796 = vst.msk [vmem:[#allocation2 + $0x88] sm:$0xff] %vm1853, %v4795
        %v4797 = vld [vmem:[#allocation2 + $0x88] sm:$0xff]
        %4799 = vrot.lane.b32.xlu0 %v4791, 64
        %v4800 = vpop.permute.xlu0 %4799
        %v4802 = vadd.f32 %v4797, %v4800
        %4803 = vst.msk [vmem:[#allocation2 + $0x88] sm:$0xff] %vm1861, %v4802
        %v4804 = vld [vmem:[%s314 + $0x12] sm:$0x1]
        %v4805 = vld [vmem:[%s314 + $0x32] sm:$0x1]
        %v4806 = vld [vmem:[%s314 + $0x52] sm:$0x1]
        %v4807 = vld [vmem:[%s314 + $0x72] sm:$0x1]
        %v4808 = vmax.f32 %v4804, 0.0
        %v4809 = vmax.f32 %v4805, 0.0
        %v4810 = vmax.f32 %v4806, 0.0
        %v4811 = vmax.f32 %v4807, 0.0
        %v4816 = vrot.slane %v4809, 7
        %v4817 = vsel %vm1694, %v4816, %v4808
        %v4818 = vrot.slane %v4810, 6
        %v4819 = vsel %vm1697, %v4818, %v4817
        %v4820 = vrot.slane %v4811, 5
        %v4821 = vsel %vm1700, %v4820, %v4819
        %v4822 = vsel %vm443, %v4821, 0
        %4824 = vmatprep.subr.mxu0 0.0
        %4825 = vmatpush1.msra.mxu0 %v4822
        %4826 = vmatprep.subr.mxu0 0.0
        %4827 = vmatpush1.msra.mxu0 0.0
        %4828 = vmatprep.subr.mxu0 0.0
        %4829 = vmatpush1.msra.mxu0 0.0
        %4830 = vmatprep.subr.mxu0 0.0
        %4831 = vmatpush1.msra.mxu0 0.0
        %4832 = vmatprep.subr.mxu0 0.0
        %4833 = vmatpush1.msra.mxu0 0.0
        %4834 = vmatprep.subr.mxu0 0.0
        %4835 = vmatpush1.msra.mxu0 0.0
        %4836 = vmatprep.subr.mxu0 0.0
        %4837 = vmatpush1.msra.mxu0 0.0
        %4838 = vmatprep.subr.mxu0 0.0
        %4839 = vmatpush1.msra.mxu0 0.0
        %4840 = vmatprep.subr.mxu0 0.0
        %4841 = vmatpush1.msra.mxu0 0.0
        %4842 = vmatprep.subr.mxu0 0.0
        %4843 = vmatpush1.msra.mxu0 0.0
        %4844 = vmatprep.subr.mxu0 0.0
        %4845 = vmatpush1.msra.mxu0 0.0
        %4846 = vmatprep.subr.mxu0 0.0
        %4847 = vmatpush1.msra.mxu0 0.0
        %4848 = vmatprep.subr.mxu0 0.0
        %4849 = vmatpush1.msra.mxu0 0.0
        %4850 = vmatprep.subr.mxu0 0.0
        %4851 = vmatpush1.msra.mxu0 0.0
        %4852 = vmatprep.subr.mxu0 0.0
        %4853 = vmatpush1.msra.mxu0 0.0
        %4854 = vmatprep.subr.mxu0 0.0
        %4855 = vmatpush1.msra.mxu0 0.0
        %4856 = vmatprep.subr.mxu0 0.0
        %4857 = vmatpush1.msra.mxu0 0.0
        %4858 = vmatprep.subr.mxu0 0.0
        %4859 = vmatpush1.msra.mxu0 0.0
        %4860 = vmatprep.subr.mxu0 0.0
        %4861 = vmatpush1.msra.mxu0 0.0
        %4862 = vmatprep.subr.mxu0 0.0
        %4863 = vmatpush1.msra.mxu0 0.0
        %4864 = vmatprep.subr.mxu0 0.0
        %4865 = vmatpush1.msra.mxu0 0.0
        %4866 = vmatprep.subr.mxu0 0.0
        %4867 = vmatpush1.msra.mxu0 0.0
        %4868 = vmatprep.subr.mxu0 0.0
        %4869 = vmatpush1.msra.mxu0 0.0
        %4870 = vmatprep.subr.mxu0 0.0
        %4871 = vmatpush1.msra.mxu0 0.0
        %4872 = vmatprep.subr.mxu0 0.0
        %4873 = vmatpush1.msra.mxu0 0.0
        %4874 = vmatprep.subr.mxu0 0.0
        %4875 = vmatpush1.msra.mxu0 0.0
        %4876 = vmatprep.subr.mxu0 0.0
        %4877 = vmatpush1.msra.mxu0 0.0
        %4878 = vmatprep.subr.mxu0 0.0
        %4879 = vmatpush1.msra.mxu0 0.0
        %4880 = vmatprep.subr.mxu0 0.0
        %4881 = vmatpush1.msra.mxu0 0.0
        %4882 = vmatprep.subr.mxu0 0.0
        %4883 = vmatpush1.msra.mxu0 0.0
        %4884 = vmatprep.subr.mxu0 0.0
        %4885 = vmatpush1.msra.mxu0 0.0
        %4886 = vmatprep.subr.mxu0 0.0
        %4887 = vmatpush1.msra.mxu0 0.0
        %4888 = vmatprep.mubr.f32.mxu0 0.0
        %4889 = vmatmul.mubr.f32.gmra.mrb[0].mxu0 %v1703
        %v4890 = vpop.f32.mrb[0].mxu0
        %v4891 = vadd.f32 0.0, %v4890
        %v4892 = vpop.f32.mrb[0].mxu0
        %4893 = vdwg.mxu0
        %v4895 = vsel %vm1777, %v4891, 0
        %4897 = vmatprep.subr.mxu0 0.0
        %4898 = vmatpush1.msra.mxu0 %v1677
        %4899 = vmatprep.subr.mxu0 0.0
        %4900 = vmatpush1.msra.mxu0 %v1678
        %4901 = vmatprep.subr.mxu0 0.0
        %4902 = vmatpush1.msra.mxu0 %v1679
        %4903 = vmatprep.subr.mxu0 0.0
        %4904 = vmatpush1.msra.mxu0 %v1680
        %4905 = vmatprep.subr.mxu0 0.0
        %4906 = vmatpush1.msra.mxu0 0.0
        %4907 = vmatprep.subr.mxu0 0.0
        %4908 = vmatpush1.msra.mxu0 0.0
        %4909 = vmatprep.subr.mxu0 0.0
        %4910 = vmatpush1.msra.mxu0 0.0
        %4911 = vmatprep.subr.mxu0 0.0
        %4912 = vmatpush1.msra.mxu0 0.0
        %4913 = vmatprep.subr.mxu0 0.0
        %4914 = vmatpush1.msra.mxu0 0.0
        %4915 = vmatprep.subr.mxu0 0.0
        %4916 = vmatpush1.msra.mxu0 0.0
        %4917 = vmatprep.subr.mxu0 0.0
        %4918 = vmatpush1.msra.mxu0 0.0
        %4919 = vmatprep.subr.mxu0 0.0
        %4920 = vmatpush1.msra.mxu0 0.0
        %4921 = vmatprep.subr.mxu0 0.0
        %4922 = vmatpush1.msra.mxu0 0.0
        %4923 = vmatprep.subr.mxu0 0.0
        %4924 = vmatpush1.msra.mxu0 0.0
        %4925 = vmatprep.subr.mxu0 0.0
        %4926 = vmatpush1.msra.mxu0 0.0
        %4927 = vmatprep.subr.mxu0 0.0
        %4928 = vmatpush1.msra.mxu0 0.0
        %4929 = vmatprep.subr.mxu0 0.0
        %4930 = vmatpush1.msra.mxu0 0.0
        %4931 = vmatprep.subr.mxu0 0.0
        %4932 = vmatpush1.msra.mxu0 0.0
        %4933 = vmatprep.subr.mxu0 0.0
        %4934 = vmatpush1.msra.mxu0 0.0
        %4935 = vmatprep.subr.mxu0 0.0
        %4936 = vmatpush1.msra.mxu0 0.0
        %4937 = vmatprep.subr.mxu0 0.0
        %4938 = vmatpush1.msra.mxu0 0.0
        %4939 = vmatprep.subr.mxu0 0.0
        %4940 = vmatpush1.msra.mxu0 0.0
        %4941 = vmatprep.subr.mxu0 0.0
        %4942 = vmatpush1.msra.mxu0 0.0
        %4943 = vmatprep.subr.mxu0 0.0
        %4944 = vmatpush1.msra.mxu0 0.0
        %4945 = vmatprep.subr.mxu0 0.0
        %4946 = vmatpush1.msra.mxu0 0.0
        %4947 = vmatprep.subr.mxu0 0.0
        %4948 = vmatpush1.msra.mxu0 0.0
        %4949 = vmatprep.subr.mxu0 0.0
        %4950 = vmatpush1.msra.mxu0 0.0
        %4951 = vmatprep.subr.mxu0 0.0
        %4952 = vmatpush1.msra.mxu0 0.0
        %4953 = vmatprep.subr.mxu0 0.0
        %4954 = vmatpush1.msra.mxu0 0.0
        %4955 = vmatprep.subr.mxu0 0.0
        %4956 = vmatpush1.msra.mxu0 0.0
        %4957 = vmatprep.subr.mxu0 0.0
        %4958 = vmatpush1.msra.mxu0 0.0
        %4959 = vmatprep.subr.mxu0 0.0
        %4960 = vmatpush1.msra.mxu0 0.0
        %4961 = vmatprep.mubr.f32.mxu0 0.0
        %4962 = vmatmul.mubr.f32.gmra.mrb[0].mxu0 %v4895
        %v4963 = vpop.f32.mrb[0].mxu0
        %v4964 = vadd.f32 0.0, %v4963
        %v4965 = vpop.f32.mrb[0].mxu0
        %4966 = vdwg.mxu0
        %v4967 = vld [vmem:[#allocation2 + $0x90] sm:$0xff]
        %v4968 = vadd.f32 %v4967, %v4964
        %4969 = vst.msk [vmem:[#allocation2 + $0x90] sm:$0xff] %vm1853, %v4968
        %v4970 = vld [vmem:[#allocation2 + $0x90] sm:$0xff]
        %4972 = vrot.lane.b32.xlu0 %v4964, 64
        %v4973 = vpop.permute.xlu0 %4972
        %v4975 = vadd.f32 %v4970, %v4973
        %4976 = vst.msk [vmem:[#allocation2 + $0x90] sm:$0xff] %vm1861, %v4975
        %v4977 = vld [vmem:[%s314 + $0x13] sm:$0x1]
        %v4978 = vld [vmem:[%s314 + $0x33] sm:$0x1]
        %v4979 = vld [vmem:[%s314 + $0x53] sm:$0x1]
        %v4980 = vld [vmem:[%s314 + $0x73] sm:$0x1]
        %v4981 = vmax.f32 %v4977, 0.0
        %v4982 = vmax.f32 %v4978, 0.0
        %v4983 = vmax.f32 %v4979, 0.0
        %v4984 = vmax.f32 %v4980, 0.0
        %v4989 = vrot.slane %v4982, 7
        %v4990 = vsel %vm1694, %v4989, %v4981
        %v4991 = vrot.slane %v4983, 6
        %v4992 = vsel %vm1697, %v4991, %v4990
        %v4993 = vrot.slane %v4984, 5
        %v4994 = vsel %vm1700, %v4993, %v4992
        %v4995 = vsel %vm443, %v4994, 0
        %4997 = vmatprep.subr.mxu0 0.0
        %4998 = vmatpush1.msra.mxu0 %v4995
        %4999 = vmatprep.subr.mxu0 0.0
        %5000 = vmatpush1.msra.mxu0 0.0
        %5001 = vmatprep.subr.mxu0 0.0
        %5002 = vmatpush1.msra.mxu0 0.0
        %5003 = vmatprep.subr.mxu0 0.0
        %5004 = vmatpush1.msra.mxu0 0.0
        %5005 = vmatprep.subr.mxu0 0.0
        %5006 = vmatpush1.msra.mxu0 0.0
        %5007 = vmatprep.subr.mxu0 0.0
        %5008 = vmatpush1.msra.mxu0 0.0
        %5009 = vmatprep.subr.mxu0 0.0
        %5010 = vmatpush1.msra.mxu0 0.0
        %5011 = vmatprep.subr.mxu0 0.0
        %5012 = vmatpush1.msra.mxu0 0.0
        %5013 = vmatprep.subr.mxu0 0.0
        %5014 = vmatpush1.msra.mxu0 0.0
        %5015 = vmatprep.subr.mxu0 0.0
        %5016 = vmatpush1.msra.mxu0 0.0
        %5017 = vmatprep.subr.mxu0 0.0
        %5018 = vmatpush1.msra.mxu0 0.0
        %5019 = vmatprep.subr.mxu0 0.0
        %5020 = vmatpush1.msra.mxu0 0.0
        %5021 = vmatprep.subr.mxu0 0.0
        %5022 = vmatpush1.msra.mxu0 0.0
        %5023 = vmatprep.subr.mxu0 0.0
        %5024 = vmatpush1.msra.mxu0 0.0
        %5025 = vmatprep.subr.mxu0 0.0
        %5026 = vmatpush1.msra.mxu0 0.0
        %5027 = vmatprep.subr.mxu0 0.0
        %5028 = vmatpush1.msra.mxu0 0.0
        %5029 = vmatprep.subr.mxu0 0.0
        %5030 = vmatpush1.msra.mxu0 0.0
        %5031 = vmatprep.subr.mxu0 0.0
        %5032 = vmatpush1.msra.mxu0 0.0
        %5033 = vmatprep.subr.mxu0 0.0
        %5034 = vmatpush1.msra.mxu0 0.0
        %5035 = vmatprep.subr.mxu0 0.0
        %5036 = vmatpush1.msra.mxu0 0.0
        %5037 = vmatprep.subr.mxu0 0.0
        %5038 = vmatpush1.msra.mxu0 0.0
        %5039 = vmatprep.subr.mxu0 0.0
        %5040 = vmatpush1.msra.mxu0 0.0
        %5041 = vmatprep.subr.mxu0 0.0
        %5042 = vmatpush1.msra.mxu0 0.0
        %5043 = vmatprep.subr.mxu0 0.0
        %5044 = vmatpush1.msra.mxu0 0.0
        %5045 = vmatprep.subr.mxu0 0.0
        %5046 = vmatpush1.msra.mxu0 0.0
        %5047 = vmatprep.subr.mxu0 0.0
        %5048 = vmatpush1.msra.mxu0 0.0
        %5049 = vmatprep.subr.mxu0 0.0
        %5050 = vmatpush1.msra.mxu0 0.0
        %5051 = vmatprep.subr.mxu0 0.0
        %5052 = vmatpush1.msra.mxu0 0.0
        %5053 = vmatprep.subr.mxu0 0.0
        %5054 = vmatpush1.msra.mxu0 0.0
        %5055 = vmatprep.subr.mxu0 0.0
        %5056 = vmatpush1.msra.mxu0 0.0
        %5057 = vmatprep.subr.mxu0 0.0
        %5058 = vmatpush1.msra.mxu0 0.0
        %5059 = vmatprep.subr.mxu0 0.0
        %5060 = vmatpush1.msra.mxu0 0.0
        %5061 = vmatprep.mubr.f32.mxu0 0.0
        %5062 = vmatmul.mubr.f32.gmra.mrb[0].mxu0 %v1703
        %v5063 = vpop.f32.mrb[0].mxu0
        %v5064 = vadd.f32 0.0, %v5063
        %v5065 = vpop.f32.mrb[0].mxu0
        %5066 = vdwg.mxu0
        %v5068 = vsel %vm1777, %v5064, 0
        %5070 = vmatprep.subr.mxu0 0.0
        %5071 = vmatpush1.msra.mxu0 %v1677
        %5072 = vmatprep.subr.mxu0 0.0
        %5073 = vmatpush1.msra.mxu0 %v1678
        %5074 = vmatprep.subr.mxu0 0.0
        %5075 = vmatpush1.msra.mxu0 %v1679
        %5076 = vmatprep.subr.mxu0 0.0
        %5077 = vmatpush1.msra.mxu0 %v1680
        %5078 = vmatprep.subr.mxu0 0.0
        %5079 = vmatpush1.msra.mxu0 0.0
        %5080 = vmatprep.subr.mxu0 0.0
        %5081 = vmatpush1.msra.mxu0 0.0
        %5082 = vmatprep.subr.mxu0 0.0
        %5083 = vmatpush1.msra.mxu0 0.0
        %5084 = vmatprep.subr.mxu0 0.0
        %5085 = vmatpush1.msra.mxu0 0.0
        %5086 = vmatprep.subr.mxu0 0.0
        %5087 = vmatpush1.msra.mxu0 0.0
        %5088 = vmatprep.subr.mxu0 0.0
        %5089 = vmatpush1.msra.mxu0 0.0
        %5090 = vmatprep.subr.mxu0 0.0
        %5091 = vmatpush1.msra.mxu0 0.0
        %5092 = vmatprep.subr.mxu0 0.0
        %5093 = vmatpush1.msra.mxu0 0.0
        %5094 = vmatprep.subr.mxu0 0.0
        %5095 = vmatpush1.msra.mxu0 0.0
        %5096 = vmatprep.subr.mxu0 0.0
        %5097 = vmatpush1.msra.mxu0 0.0
        %5098 = vmatprep.subr.mxu0 0.0
        %5099 = vmatpush1.msra.mxu0 0.0
        %5100 = vmatprep.subr.mxu0 0.0
        %5101 = vmatpush1.msra.mxu0 0.0
        %5102 = vmatprep.subr.mxu0 0.0
        %5103 = vmatpush1.msra.mxu0 0.0
        %5104 = vmatprep.subr.mxu0 0.0
        %5105 = vmatpush1.msra.mxu0 0.0
        %5106 = vmatprep.subr.mxu0 0.0
        %5107 = vmatpush1.msra.mxu0 0.0
        %5108 = vmatprep.subr.mxu0 0.0
        %5109 = vmatpush1.msra.mxu0 0.0
        %5110 = vmatprep.subr.mxu0 0.0
        %5111 = vmatpush1.msra.mxu0 0.0
        %5112 = vmatprep.subr.mxu0 0.0
        %5113 = vmatpush1.msra.mxu0 0.0
        %5114 = vmatprep.subr.mxu0 0.0
        %5115 = vmatpush1.msra.mxu0 0.0
        %5116 = vmatprep.subr.mxu0 0.0
        %5117 = vmatpush1.msra.mxu0 0.0
        %5118 = vmatprep.subr.mxu0 0.0
        %5119 = vmatpush1.msra.mxu0 0.0
        %5120 = vmatprep.subr.mxu0 0.0
        %5121 = vmatpush1.msra.mxu0 0.0
        %5122 = vmatprep.subr.mxu0 0.0
        %5123 = vmatpush1.msra.mxu0 0.0
        %5124 = vmatprep.subr.mxu0 0.0
        %5125 = vmatpush1.msra.mxu0 0.0
        %5126 = vmatprep.subr.mxu0 0.0
        %5127 = vmatpush1.msra.mxu0 0.0
        %5128 = vmatprep.subr.mxu0 0.0
        %5129 = vmatpush1.msra.mxu0 0.0
        %5130 = vmatprep.subr.mxu0 0.0
        %5131 = vmatpush1.msra.mxu0 0.0
        %5132 = vmatprep.subr.mxu0 0.0
        %5133 = vmatpush1.msra.mxu0 0.0
        %5134 = vmatprep.mubr.f32.mxu0 0.0
        %5135 = vmatmul.mubr.f32.gmra.mrb[0].mxu0 %v5068
        %v5136 = vpop.f32.mrb[0].mxu0
        %v5137 = vadd.f32 0.0, %v5136
        %v5138 = vpop.f32.mrb[0].mxu0
        %5139 = vdwg.mxu0
        %v5140 = vld [vmem:[#allocation2 + $0x98] sm:$0xff]
        %v5141 = vadd.f32 %v5140, %v5137
        %5142 = vst.msk [vmem:[#allocation2 + $0x98] sm:$0xff] %vm1853, %v5141
        %v5143 = vld [vmem:[#allocation2 + $0x98] sm:$0xff]
        %5145 = vrot.lane.b32.xlu0 %v5137, 64
        %v5146 = vpop.permute.xlu0 %5145
        %v5148 = vadd.f32 %v5143, %v5146
        %5149 = vst.msk [vmem:[#allocation2 + $0x98] sm:$0xff] %vm1861, %v5148
        %v5150 = vld [vmem:[%s314 + $0x14] sm:$0x1]
        %v5151 = vld [vmem:[%s314 + $0x34] sm:$0x1]
        %v5152 = vld [vmem:[%s314 + $0x54] sm:$0x1]
        %v5153 = vld [vmem:[%s314 + $0x74] sm:$0x1]
        %v5154 = vmax.f32 %v5150, 0.0
        %v5155 = vmax.f32 %v5151, 0.0
        %v5156 = vmax.f32 %v5152, 0.0
        %v5157 = vmax.f32 %v5153, 0.0
        %v5162 = vrot.slane %v5155, 7
        %v5163 = vsel %vm1694, %v5162, %v5154
        %v5164 = vrot.slane %v5156, 6
        %v5165 = vsel %vm1697, %v5164, %v5163
        %v5166 = vrot.slane %v5157, 5
        %v5167 = vsel %vm1700, %v5166, %v5165
        %v5168 = vsel %vm443, %v5167, 0
        %5170 = vmatprep.subr.mxu0 0.0
        %5171 = vmatpush1.msra.mxu0 %v5168
        %5172 = vmatprep.subr.mxu0 0.0
        %5173 = vmatpush1.msra.mxu0 0.0
        %5174 = vmatprep.subr.mxu0 0.0
        %5175 = vmatpush1.msra.mxu0 0.0
        %5176 = vmatprep.subr.mxu0 0.0
        %5177 = vmatpush1.msra.mxu0 0.0
        %5178 = vmatprep.subr.mxu0 0.0
        %5179 = vmatpush1.msra.mxu0 0.0
        %5180 = vmatprep.subr.mxu0 0.0
        %5181 = vmatpush1.msra.mxu0 0.0
        %5182 = vmatprep.subr.mxu0 0.0
        %5183 = vmatpush1.msra.mxu0 0.0
        %5184 = vmatprep.subr.mxu0 0.0
        %5185 = vmatpush1.msra.mxu0 0.0
        %5186 = vmatprep.subr.mxu0 0.0
        %5187 = vmatpush1.msra.mxu0 0.0
        %5188 = vmatprep.subr.mxu0 0.0
        %5189 = vmatpush1.msra.mxu0 0.0
        %5190 = vmatprep.subr.mxu0 0.0
        %5191 = vmatpush1.msra.mxu0 0.0
        %5192 = vmatprep.subr.mxu0 0.0
        %5193 = vmatpush1.msra.mxu0 0.0
        %5194 = vmatprep.subr.mxu0 0.0
        %5195 = vmatpush1.msra.mxu0 0.0
        %5196 = vmatprep.subr.mxu0 0.0
        %5197 = vmatpush1.msra.mxu0 0.0
        %5198 = vmatprep.subr.mxu0 0.0
        %5199 = vmatpush1.msra.mxu0 0.0
        %5200 = vmatprep.subr.mxu0 0.0
        %5201 = vmatpush1.msra.mxu0 0.0
        %5202 = vmatprep.subr.mxu0 0.0
        %5203 = vmatpush1.msra.mxu0 0.0
        %5204 = vmatprep.subr.mxu0 0.0
        %5205 = vmatpush1.msra.mxu0 0.0
        %5206 = vmatprep.subr.mxu0 0.0
        %5207 = vmatpush1.msra.mxu0 0.0
        %5208 = vmatprep.subr.mxu0 0.0
        %5209 = vmatpush1.msra.mxu0 0.0
        %5210 = vmatprep.subr.mxu0 0.0
        %5211 = vmatpush1.msra.mxu0 0.0
        %5212 = vmatprep.subr.mxu0 0.0
        %5213 = vmatpush1.msra.mxu0 0.0
        %5214 = vmatprep.subr.mxu0 0.0
        %5215 = vmatpush1.msra.mxu0 0.0
        %5216 = vmatprep.subr.mxu0 0.0
        %5217 = vmatpush1.msra.mxu0 0.0
        %5218 = vmatprep.subr.mxu0 0.0
        %5219 = vmatpush1.msra.mxu0 0.0
        %5220 = vmatprep.subr.mxu0 0.0
        %5221 = vmatpush1.msra.mxu0 0.0
        %5222 = vmatprep.subr.mxu0 0.0
        %5223 = vmatpush1.msra.mxu0 0.0
        %5224 = vmatprep.subr.mxu0 0.0
        %5225 = vmatpush1.msra.mxu0 0.0
        %5226 = vmatprep.subr.mxu0 0.0
        %5227 = vmatpush1.msra.mxu0 0.0
        %5228 = vmatprep.subr.mxu0 0.0
        %5229 = vmatpush1.msra.mxu0 0.0
        %5230 = vmatprep.subr.mxu0 0.0
        %5231 = vmatpush1.msra.mxu0 0.0
        %5232 = vmatprep.subr.mxu0 0.0
        %5233 = vmatpush1.msra.mxu0 0.0
        %5234 = vmatprep.mubr.f32.mxu0 0.0
        %5235 = vmatmul.mubr.f32.gmra.mrb[0].mxu0 %v1703
        %v5236 = vpop.f32.mrb[0].mxu0
        %v5237 = vadd.f32 0.0, %v5236
        %v5238 = vpop.f32.mrb[0].mxu0
        %5239 = vdwg.mxu0
        %v5241 = vsel %vm1777, %v5237, 0
        %5243 = vmatprep.subr.mxu0 0.0
        %5244 = vmatpush1.msra.mxu0 %v1677
        %5245 = vmatprep.subr.mxu0 0.0
        %5246 = vmatpush1.msra.mxu0 %v1678
        %5247 = vmatprep.subr.mxu0 0.0
        %5248 = vmatpush1.msra.mxu0 %v1679
        %5249 = vmatprep.subr.mxu0 0.0
        %5250 = vmatpush1.msra.mxu0 %v1680
        %5251 = vmatprep.subr.mxu0 0.0
        %5252 = vmatpush1.msra.mxu0 0.0
        %5253 = vmatprep.subr.mxu0 0.0
        %5254 = vmatpush1.msra.mxu0 0.0
        %5255 = vmatprep.subr.mxu0 0.0
        %5256 = vmatpush1.msra.mxu0 0.0
        %5257 = vmatprep.subr.mxu0 0.0
        %5258 = vmatpush1.msra.mxu0 0.0
        %5259 = vmatprep.subr.mxu0 0.0
        %5260 = vmatpush1.msra.mxu0 0.0
        %5261 = vmatprep.subr.mxu0 0.0
        %5262 = vmatpush1.msra.mxu0 0.0
        %5263 = vmatprep.subr.mxu0 0.0
        %5264 = vmatpush1.msra.mxu0 0.0
        %5265 = vmatprep.subr.mxu0 0.0
        %5266 = vmatpush1.msra.mxu0 0.0
        %5267 = vmatprep.subr.mxu0 0.0
        %5268 = vmatpush1.msra.mxu0 0.0
        %5269 = vmatprep.subr.mxu0 0.0
        %5270 = vmatpush1.msra.mxu0 0.0
        %5271 = vmatprep.subr.mxu0 0.0
        %5272 = vmatpush1.msra.mxu0 0.0
        %5273 = vmatprep.subr.mxu0 0.0
        %5274 = vmatpush1.msra.mxu0 0.0
        %5275 = vmatprep.subr.mxu0 0.0
        %5276 = vmatpush1.msra.mxu0 0.0
        %5277 = vmatprep.subr.mxu0 0.0
        %5278 = vmatpush1.msra.mxu0 0.0
        %5279 = vmatprep.subr.mxu0 0.0
        %5280 = vmatpush1.msra.mxu0 0.0
        %5281 = vmatprep.subr.mxu0 0.0
        %5282 = vmatpush1.msra.mxu0 0.0
        %5283 = vmatprep.subr.mxu0 0.0
        %5284 = vmatpush1.msra.mxu0 0.0
        %5285 = vmatprep.subr.mxu0 0.0
        %5286 = vmatpush1.msra.mxu0 0.0
        %5287 = vmatprep.subr.mxu0 0.0
        %5288 = vmatpush1.msra.mxu0 0.0
        %5289 = vmatprep.subr.mxu0 0.0
        %5290 = vmatpush1.msra.mxu0 0.0
        %5291 = vmatprep.subr.mxu0 0.0
        %5292 = vmatpush1.msra.mxu0 0.0
        %5293 = vmatprep.subr.mxu0 0.0
        %5294 = vmatpush1.msra.mxu0 0.0
        %5295 = vmatprep.subr.mxu0 0.0
        %5296 = vmatpush1.msra.mxu0 0.0
        %5297 = vmatprep.subr.mxu0 0.0
        %5298 = vmatpush1.msra.mxu0 0.0
        %5299 = vmatprep.subr.mxu0 0.0
        %5300 = vmatpush1.msra.mxu0 0.0
        %5301 = vmatprep.subr.mxu0 0.0
        %5302 = vmatpush1.msra.mxu0 0.0
        %5303 = vmatprep.subr.mxu0 0.0
        %5304 = vmatpush1.msra.mxu0 0.0
        %5305 = vmatprep.subr.mxu0 0.0
        %5306 = vmatpush1.msra.mxu0 0.0
        %5307 = vmatprep.mubr.f32.mxu0 0.0
        %5308 = vmatmul.mubr.f32.gmra.mrb[0].mxu0 %v5241
        %v5309 = vpop.f32.mrb[0].mxu0
        %v5310 = vadd.f32 0.0, %v5309
        %v5311 = vpop.f32.mrb[0].mxu0
        %5312 = vdwg.mxu0
        %v5313 = vld [vmem:[#allocation2 + $0xa0] sm:$0xff]
        %v5314 = vadd.f32 %v5313, %v5310
        %5315 = vst.msk [vmem:[#allocation2 + $0xa0] sm:$0xff] %vm1853, %v5314
        %v5316 = vld [vmem:[#allocation2 + $0xa0] sm:$0xff]
        %5318 = vrot.lane.b32.xlu0 %v5310, 64
        %v5319 = vpop.permute.xlu0 %5318
        %v5321 = vadd.f32 %v5316, %v5319
        %5322 = vst.msk [vmem:[#allocation2 + $0xa0] sm:$0xff] %vm1861, %v5321
        %v5323 = vld [vmem:[%s314 + $0x15] sm:$0x1]
        %v5324 = vld [vmem:[%s314 + $0x35] sm:$0x1]
        %v5325 = vld [vmem:[%s314 + $0x55] sm:$0x1]
        %v5326 = vld [vmem:[%s314 + $0x75] sm:$0x1]
        %v5327 = vmax.f32 %v5323, 0.0
        %v5328 = vmax.f32 %v5324, 0.0
        %v5329 = vmax.f32 %v5325, 0.0
        %v5330 = vmax.f32 %v5326, 0.0
        %v5335 = vrot.slane %v5328, 7
        %v5336 = vsel %vm1694, %v5335, %v5327
        %v5337 = vrot.slane %v5329, 6
        %v5338 = vsel %vm1697, %v5337, %v5336
        %v5339 = vrot.slane %v5330, 5
        %v5340 = vsel %vm1700, %v5339, %v5338
        %v5341 = vsel %vm443, %v5340, 0
        %5343 = vmatprep.subr.mxu0 0.0
        %5344 = vmatpush1.msra.mxu0 %v5341
        %5345 = vmatprep.subr.mxu0 0.0
        %5346 = vmatpush1.msra.mxu0 0.0
        %5347 = vmatprep.subr.mxu0 0.0
        %5348 = vmatpush1.msra.mxu0 0.0
        %5349 = vmatprep.subr.mxu0 0.0
        %5350 = vmatpush1.msra.mxu0 0.0
        %5351 = vmatprep.subr.mxu0 0.0
        %5352 = vmatpush1.msra.mxu0 0.0
        %5353 = vmatprep.subr.mxu0 0.0
        %5354 = vmatpush1.msra.mxu0 0.0
        %5355 = vmatprep.subr.mxu0 0.0
        %5356 = vmatpush1.msra.mxu0 0.0
        %5357 = vmatprep.subr.mxu0 0.0
        %5358 = vmatpush1.msra.mxu0 0.0
        %5359 = vmatprep.subr.mxu0 0.0
        %5360 = vmatpush1.msra.mxu0 0.0
        %5361 = vmatprep.subr.mxu0 0.0
        %5362 = vmatpush1.msra.mxu0 0.0
        %5363 = vmatprep.subr.mxu0 0.0
        %5364 = vmatpush1.msra.mxu0 0.0
        %5365 = vmatprep.subr.mxu0 0.0
        %5366 = vmatpush1.msra.mxu0 0.0
        %5367 = vmatprep.subr.mxu0 0.0
        %5368 = vmatpush1.msra.mxu0 0.0
        %5369 = vmatprep.subr.mxu0 0.0
        %5370 = vmatpush1.msra.mxu0 0.0
        %5371 = vmatprep.subr.mxu0 0.0
        %5372 = vmatpush1.msra.mxu0 0.0
        %5373 = vmatprep.subr.mxu0 0.0
        %5374 = vmatpush1.msra.mxu0 0.0
        %5375 = vmatprep.subr.mxu0 0.0
        %5376 = vmatpush1.msra.mxu0 0.0
        %5377 = vmatprep.subr.mxu0 0.0
        %5378 = vmatpush1.msra.mxu0 0.0
        %5379 = vmatprep.subr.mxu0 0.0
        %5380 = vmatpush1.msra.mxu0 0.0
        %5381 = vmatprep.subr.mxu0 0.0
        %5382 = vmatpush1.msra.mxu0 0.0
        %5383 = vmatprep.subr.mxu0 0.0
        %5384 = vmatpush1.msra.mxu0 0.0
        %5385 = vmatprep.subr.mxu0 0.0
        %5386 = vmatpush1.msra.mxu0 0.0
        %5387 = vmatprep.subr.mxu0 0.0
        %5388 = vmatpush1.msra.mxu0 0.0
        %5389 = vmatprep.subr.mxu0 0.0
        %5390 = vmatpush1.msra.mxu0 0.0
        %5391 = vmatprep.subr.mxu0 0.0
        %5392 = vmatpush1.msra.mxu0 0.0
        %5393 = vmatprep.subr.mxu0 0.0
        %5394 = vmatpush1.msra.mxu0 0.0
        %5395 = vmatprep.subr.mxu0 0.0
        %5396 = vmatpush1.msra.mxu0 0.0
        %5397 = vmatprep.subr.mxu0 0.0
        %5398 = vmatpush1.msra.mxu0 0.0
        %5399 = vmatprep.subr.mxu0 0.0
        %5400 = vmatpush1.msra.mxu0 0.0
        %5401 = vmatprep.subr.mxu0 0.0
        %5402 = vmatpush1.msra.mxu0 0.0
        %5403 = vmatprep.subr.mxu0 0.0
        %5404 = vmatpush1.msra.mxu0 0.0
        %5405 = vmatprep.subr.mxu0 0.0
        %5406 = vmatpush1.msra.mxu0 0.0
        %5407 = vmatprep.mubr.f32.mxu0 0.0
        %5408 = vmatmul.mubr.f32.gmra.mrb[0].mxu0 %v1703
        %v5409 = vpop.f32.mrb[0].mxu0
        %v5410 = vadd.f32 0.0, %v5409
        %v5411 = vpop.f32.mrb[0].mxu0
        %5412 = vdwg.mxu0
        %v5414 = vsel %vm1777, %v5410, 0
        %5416 = vmatprep.subr.mxu0 0.0
        %5417 = vmatpush1.msra.mxu0 %v1677
        %5418 = vmatprep.subr.mxu0 0.0
        %5419 = vmatpush1.msra.mxu0 %v1678
        %5420 = vmatprep.subr.mxu0 0.0
        %5421 = vmatpush1.msra.mxu0 %v1679
        %5422 = vmatprep.subr.mxu0 0.0
        %5423 = vmatpush1.msra.mxu0 %v1680
        %5424 = vmatprep.subr.mxu0 0.0
        %5425 = vmatpush1.msra.mxu0 0.0
        %5426 = vmatprep.subr.mxu0 0.0
        %5427 = vmatpush1.msra.mxu0 0.0
        %5428 = vmatprep.subr.mxu0 0.0
        %5429 = vmatpush1.msra.mxu0 0.0
        %5430 = vmatprep.subr.mxu0 0.0
        %5431 = vmatpush1.msra.mxu0 0.0
        %5432 = vmatprep.subr.mxu0 0.0
        %5433 = vmatpush1.msra.mxu0 0.0
        %5434 = vmatprep.subr.mxu0 0.0
        %5435 = vmatpush1.msra.mxu0 0.0
        %5436 = vmatprep.subr.mxu0 0.0
        %5437 = vmatpush1.msra.mxu0 0.0
        %5438 = vmatprep.subr.mxu0 0.0
        %5439 = vmatpush1.msra.mxu0 0.0
        %5440 = vmatprep.subr.mxu0 0.0
        %5441 = vmatpush1.msra.mxu0 0.0
        %5442 = vmatprep.subr.mxu0 0.0
        %5443 = vmatpush1.msra.mxu0 0.0
        %5444 = vmatprep.subr.mxu0 0.0
        %5445 = vmatpush1.msra.mxu0 0.0
        %5446 = vmatprep.subr.mxu0 0.0
        %5447 = vmatpush1.msra.mxu0 0.0
        %5448 = vmatprep.subr.mxu0 0.0
        %5449 = vmatpush1.msra.mxu0 0.0
        %5450 = vmatprep.subr.mxu0 0.0
        %5451 = vmatpush1.msra.mxu0 0.0
        %5452 = vmatprep.subr.mxu0 0.0
        %5453 = vmatpush1.msra.mxu0 0.0
        %5454 = vmatprep.subr.mxu0 0.0
        %5455 = vmatpush1.msra.mxu0 0.0
        %5456 = vmatprep.subr.mxu0 0.0
        %5457 = vmatpush1.msra.mxu0 0.0
        %5458 = vmatprep.subr.mxu0 0.0
        %5459 = vmatpush1.msra.mxu0 0.0
        %5460 = vmatprep.subr.mxu0 0.0
        %5461 = vmatpush1.msra.mxu0 0.0
        %5462 = vmatprep.subr.mxu0 0.0
        %5463 = vmatpush1.msra.mxu0 0.0
        %5464 = vmatprep.subr.mxu0 0.0
        %5465 = vmatpush1.msra.mxu0 0.0
        %5466 = vmatprep.subr.mxu0 0.0
        %5467 = vmatpush1.msra.mxu0 0.0
        %5468 = vmatprep.subr.mxu0 0.0
        %5469 = vmatpush1.msra.mxu0 0.0
        %5470 = vmatprep.subr.mxu0 0.0
        %5471 = vmatpush1.msra.mxu0 0.0
        %5472 = vmatprep.subr.mxu0 0.0
        %5473 = vmatpush1.msra.mxu0 0.0
        %5474 = vmatprep.subr.mxu0 0.0
        %5475 = vmatpush1.msra.mxu0 0.0
        %5476 = vmatprep.subr.mxu0 0.0
        %5477 = vmatpush1.msra.mxu0 0.0
        %5478 = vmatprep.subr.mxu0 0.0
        %5479 = vmatpush1.msra.mxu0 0.0
        %5480 = vmatprep.mubr.f32.mxu0 0.0
        %5481 = vmatmul.mubr.f32.gmra.mrb[0].mxu0 %v5414
        %v5482 = vpop.f32.mrb[0].mxu0
        %v5483 = vadd.f32 0.0, %v5482
        %v5484 = vpop.f32.mrb[0].mxu0
        %5485 = vdwg.mxu0
        %v5486 = vld [vmem:[#allocation2 + $0xa8] sm:$0xff]
        %v5487 = vadd.f32 %v5486, %v5483
        %5488 = vst.msk [vmem:[#allocation2 + $0xa8] sm:$0xff] %vm1853, %v5487
        %v5489 = vld [vmem:[#allocation2 + $0xa8] sm:$0xff]
        %5491 = vrot.lane.b32.xlu0 %v5483, 64
        %v5492 = vpop.permute.xlu0 %5491
        %v5494 = vadd.f32 %v5489, %v5492
        %5495 = vst.msk [vmem:[#allocation2 + $0xa8] sm:$0xff] %vm1861, %v5494
        %v5496 = vld [vmem:[%s314 + $0x16] sm:$0x1]
        %v5497 = vld [vmem:[%s314 + $0x36] sm:$0x1]
        %v5498 = vld [vmem:[%s314 + $0x56] sm:$0x1]
        %v5499 = vld [vmem:[%s314 + $0x76] sm:$0x1]
        %v5500 = vmax.f32 %v5496, 0.0
        %v5501 = vmax.f32 %v5497, 0.0
        %v5502 = vmax.f32 %v5498, 0.0
        %v5503 = vmax.f32 %v5499, 0.0
        %v5508 = vrot.slane %v5501, 7
        %v5509 = vsel %vm1694, %v5508, %v5500
        %v5510 = vrot.slane %v5502, 6
        %v5511 = vsel %vm1697, %v5510, %v5509
        %v5512 = vrot.slane %v5503, 5
        %v5513 = vsel %vm1700, %v5512, %v5511
        %v5514 = vsel %vm443, %v5513, 0
        %5516 = vmatprep.subr.mxu0 0.0
        %5517 = vmatpush1.msra.mxu0 %v5514
        %5518 = vmatprep.subr.mxu0 0.0
        %5519 = vmatpush1.msra.mxu0 0.0
        %5520 = vmatprep.subr.mxu0 0.0
        %5521 = vmatpush1.msra.mxu0 0.0
        %5522 = vmatprep.subr.mxu0 0.0
        %5523 = vmatpush1.msra.mxu0 0.0
        %5524 = vmatprep.subr.mxu0 0.0
        %5525 = vmatpush1.msra.mxu0 0.0
        %5526 = vmatprep.subr.mxu0 0.0
        %5527 = vmatpush1.msra.mxu0 0.0
        %5528 = vmatprep.subr.mxu0 0.0
        %5529 = vmatpush1.msra.mxu0 0.0
        %5530 = vmatprep.subr.mxu0 0.0
        %5531 = vmatpush1.msra.mxu0 0.0
        %5532 = vmatprep.subr.mxu0 0.0
        %5533 = vmatpush1.msra.mxu0 0.0
        %5534 = vmatprep.subr.mxu0 0.0
        %5535 = vmatpush1.msra.mxu0 0.0
        %5536 = vmatprep.subr.mxu0 0.0
        %5537 = vmatpush1.msra.mxu0 0.0
        %5538 = vmatprep.subr.mxu0 0.0
        %5539 = vmatpush1.msra.mxu0 0.0
        %5540 = vmatprep.subr.mxu0 0.0
        %5541 = vmatpush1.msra.mxu0 0.0
        %5542 = vmatprep.subr.mxu0 0.0
        %5543 = vmatpush1.msra.mxu0 0.0
        %5544 = vmatprep.subr.mxu0 0.0
        %5545 = vmatpush1.msra.mxu0 0.0
        %5546 = vmatprep.subr.mxu0 0.0
        %5547 = vmatpush1.msra.mxu0 0.0
        %5548 = vmatprep.subr.mxu0 0.0
        %5549 = vmatpush1.msra.mxu0 0.0
        %5550 = vmatprep.subr.mxu0 0.0
        %5551 = vmatpush1.msra.mxu0 0.0
        %5552 = vmatprep.subr.mxu0 0.0
        %5553 = vmatpush1.msra.mxu0 0.0
        %5554 = vmatprep.subr.mxu0 0.0
        %5555 = vmatpush1.msra.mxu0 0.0
        %5556 = vmatprep.subr.mxu0 0.0
        %5557 = vmatpush1.msra.mxu0 0.0
        %5558 = vmatprep.subr.mxu0 0.0
        %5559 = vmatpush1.msra.mxu0 0.0
        %5560 = vmatprep.subr.mxu0 0.0
        %5561 = vmatpush1.msra.mxu0 0.0
        %5562 = vmatprep.subr.mxu0 0.0
        %5563 = vmatpush1.msra.mxu0 0.0
        %5564 = vmatprep.subr.mxu0 0.0
        %5565 = vmatpush1.msra.mxu0 0.0
        %5566 = vmatprep.subr.mxu0 0.0
        %5567 = vmatpush1.msra.mxu0 0.0
        %5568 = vmatprep.subr.mxu0 0.0
        %5569 = vmatpush1.msra.mxu0 0.0
        %5570 = vmatprep.subr.mxu0 0.0
        %5571 = vmatpush1.msra.mxu0 0.0
        %5572 = vmatprep.subr.mxu0 0.0
        %5573 = vmatpush1.msra.mxu0 0.0
        %5574 = vmatprep.subr.mxu0 0.0
        %5575 = vmatpush1.msra.mxu0 0.0
        %5576 = vmatprep.subr.mxu0 0.0
        %5577 = vmatpush1.msra.mxu0 0.0
        %5578 = vmatprep.subr.mxu0 0.0
        %5579 = vmatpush1.msra.mxu0 0.0
        %5580 = vmatprep.mubr.f32.mxu0 0.0
        %5581 = vmatmul.mubr.f32.gmra.mrb[0].mxu0 %v1703
        %v5582 = vpop.f32.mrb[0].mxu0
        %v5583 = vadd.f32 0.0, %v5582
        %v5584 = vpop.f32.mrb[0].mxu0
        %5585 = vdwg.mxu0
        %v5587 = vsel %vm1777, %v5583, 0
        %5589 = vmatprep.subr.mxu0 0.0
        %5590 = vmatpush1.msra.mxu0 %v1677
        %5591 = vmatprep.subr.mxu0 0.0
        %5592 = vmatpush1.msra.mxu0 %v1678
        %5593 = vmatprep.subr.mxu0 0.0
        %5594 = vmatpush1.msra.mxu0 %v1679
        %5595 = vmatprep.subr.mxu0 0.0
        %5596 = vmatpush1.msra.mxu0 %v1680
        %5597 = vmatprep.subr.mxu0 0.0
        %5598 = vmatpush1.msra.mxu0 0.0
        %5599 = vmatprep.subr.mxu0 0.0
        %5600 = vmatpush1.msra.mxu0 0.0
        %5601 = vmatprep.subr.mxu0 0.0
        %5602 = vmatpush1.msra.mxu0 0.0
        %5603 = vmatprep.subr.mxu0 0.0
        %5604 = vmatpush1.msra.mxu0 0.0
        %5605 = vmatprep.subr.mxu0 0.0
        %5606 = vmatpush1.msra.mxu0 0.0
        %5607 = vmatprep.subr.mxu0 0.0
        %5608 = vmatpush1.msra.mxu0 0.0
        %5609 = vmatprep.subr.mxu0 0.0
        %5610 = vmatpush1.msra.mxu0 0.0
        %5611 = vmatprep.subr.mxu0 0.0
        %5612 = vmatpush1.msra.mxu0 0.0
        %5613 = vmatprep.subr.mxu0 0.0
        %5614 = vmatpush1.msra.mxu0 0.0
        %5615 = vmatprep.subr.mxu0 0.0
        %5616 = vmatpush1.msra.mxu0 0.0
        %5617 = vmatprep.subr.mxu0 0.0
        %5618 = vmatpush1.msra.mxu0 0.0
        %5619 = vmatprep.subr.mxu0 0.0
        %5620 = vmatpush1.msra.mxu0 0.0
        %5621 = vmatprep.subr.mxu0 0.0
        %5622 = vmatpush1.msra.mxu0 0.0
        %5623 = vmatprep.subr.mxu0 0.0
        %5624 = vmatpush1.msra.mxu0 0.0
        %5625 = vmatprep.subr.mxu0 0.0
        %5626 = vmatpush1.msra.mxu0 0.0
        %5627 = vmatprep.subr.mxu0 0.0
        %5628 = vmatpush1.msra.mxu0 0.0
        %5629 = vmatprep.subr.mxu0 0.0
        %5630 = vmatpush1.msra.mxu0 0.0
        %5631 = vmatprep.subr.mxu0 0.0
        %5632 = vmatpush1.msra.mxu0 0.0
        %5633 = vmatprep.subr.mxu0 0.0
        %5634 = vmatpush1.msra.mxu0 0.0
        %5635 = vmatprep.subr.mxu0 0.0
        %5636 = vmatpush1.msra.mxu0 0.0
        %5637 = vmatprep.subr.mxu0 0.0
        %5638 = vmatpush1.msra.mxu0 0.0
        %5639 = vmatprep.subr.mxu0 0.0
        %5640 = vmatpush1.msra.mxu0 0.0
        %5641 = vmatprep.subr.mxu0 0.0
        %5642 = vmatpush1.msra.mxu0 0.0
        %5643 = vmatprep.subr.mxu0 0.0
        %5644 = vmatpush1.msra.mxu0 0.0
        %5645 = vmatprep.subr.mxu0 0.0
        %5646 = vmatpush1.msra.mxu0 0.0
        %5647 = vmatprep.subr.mxu0 0.0
        %5648 = vmatpush1.msra.mxu0 0.0
        %5649 = vmatprep.subr.mxu0 0.0
        %5650 = vmatpush1.msra.mxu0 0.0
        %5651 = vmatprep.subr.mxu0 0.0
        %5652 = vmatpush1.msra.mxu0 0.0
        %5653 = vmatprep.mubr.f32.mxu0 0.0
        %5654 = vmatmul.mubr.f32.gmra.mrb[0].mxu0 %v5587
        %v5655 = vpop.f32.mrb[0].mxu0
        %v5656 = vadd.f32 0.0, %v5655
        %v5657 = vpop.f32.mrb[0].mxu0
        %5658 = vdwg.mxu0
        %v5659 = vld [vmem:[#allocation2 + $0xb0] sm:$0xff]
        %v5660 = vadd.f32 %v5659, %v5656
        %5661 = vst.msk [vmem:[#allocation2 + $0xb0] sm:$0xff] %vm1853, %v5660
        %v5662 = vld [vmem:[#allocation2 + $0xb0] sm:$0xff]
        %5664 = vrot.lane.b32.xlu0 %v5656, 64
        %v5665 = vpop.permute.xlu0 %5664
        %v5667 = vadd.f32 %v5662, %v5665
        %5668 = vst.msk [vmem:[#allocation2 + $0xb0] sm:$0xff] %vm1861, %v5667
        %v5669 = vld [vmem:[%s314 + $0x17] sm:$0x1]
        %v5670 = vld [vmem:[%s314 + $0x37] sm:$0x1]
        %v5671 = vld [vmem:[%s314 + $0x57] sm:$0x1]
        %v5672 = vld [vmem:[%s314 + $0x77] sm:$0x1]
        %v5673 = vmax.f32 %v5669, 0.0
        %v5674 = vmax.f32 %v5670, 0.0
        %v5675 = vmax.f32 %v5671, 0.0
        %v5676 = vmax.f32 %v5672, 0.0
        %v5681 = vrot.slane %v5674, 7
        %v5682 = vsel %vm1694, %v5681, %v5673
        %v5683 = vrot.slane %v5675, 6
        %v5684 = vsel %vm1697, %v5683, %v5682
        %v5685 = vrot.slane %v5676, 5
        %v5686 = vsel %vm1700, %v5685, %v5684
        %v5687 = vsel %vm443, %v5686, 0
        %5689 = vmatprep.subr.mxu0 0.0
        %5690 = vmatpush1.msra.mxu0 %v5687
        %5691 = vmatprep.subr.mxu0 0.0
        %5692 = vmatpush1.msra.mxu0 0.0
        %5693 = vmatprep.subr.mxu0 0.0
        %5694 = vmatpush1.msra.mxu0 0.0
        %5695 = vmatprep.subr.mxu0 0.0
        %5696 = vmatpush1.msra.mxu0 0.0
        %5697 = vmatprep.subr.mxu0 0.0
        %5698 = vmatpush1.msra.mxu0 0.0
        %5699 = vmatprep.subr.mxu0 0.0
        %5700 = vmatpush1.msra.mxu0 0.0
        %5701 = vmatprep.subr.mxu0 0.0
        %5702 = vmatpush1.msra.mxu0 0.0
        %5703 = vmatprep.subr.mxu0 0.0
        %5704 = vmatpush1.msra.mxu0 0.0
        %5705 = vmatprep.subr.mxu0 0.0
        %5706 = vmatpush1.msra.mxu0 0.0
        %5707 = vmatprep.subr.mxu0 0.0
        %5708 = vmatpush1.msra.mxu0 0.0
        %5709 = vmatprep.subr.mxu0 0.0
        %5710 = vmatpush1.msra.mxu0 0.0
        %5711 = vmatprep.subr.mxu0 0.0
        %5712 = vmatpush1.msra.mxu0 0.0
        %5713 = vmatprep.subr.mxu0 0.0
        %5714 = vmatpush1.msra.mxu0 0.0
        %5715 = vmatprep.subr.mxu0 0.0
        %5716 = vmatpush1.msra.mxu0 0.0
        %5717 = vmatprep.subr.mxu0 0.0
        %5718 = vmatpush1.msra.mxu0 0.0
        %5719 = vmatprep.subr.mxu0 0.0
        %5720 = vmatpush1.msra.mxu0 0.0
        %5721 = vmatprep.subr.mxu0 0.0
        %5722 = vmatpush1.msra.mxu0 0.0
        %5723 = vmatprep.subr.mxu0 0.0
        %5724 = vmatpush1.msra.mxu0 0.0
        %5725 = vmatprep.subr.mxu0 0.0
        %5726 = vmatpush1.msra.mxu0 0.0
        %5727 = vmatprep.subr.mxu0 0.0
        %5728 = vmatpush1.msra.mxu0 0.0
        %5729 = vmatprep.subr.mxu0 0.0
        %5730 = vmatpush1.msra.mxu0 0.0
        %5731 = vmatprep.subr.mxu0 0.0
        %5732 = vmatpush1.msra.mxu0 0.0
        %5733 = vmatprep.subr.mxu0 0.0
        %5734 = vmatpush1.msra.mxu0 0.0
        %5735 = vmatprep.subr.mxu0 0.0
        %5736 = vmatpush1.msra.mxu0 0.0
        %5737 = vmatprep.subr.mxu0 0.0
        %5738 = vmatpush1.msra.mxu0 0.0
        %5739 = vmatprep.subr.mxu0 0.0
        %5740 = vmatpush1.msra.mxu0 0.0
        %5741 = vmatprep.subr.mxu0 0.0
        %5742 = vmatpush1.msra.mxu0 0.0
        %5743 = vmatprep.subr.mxu0 0.0
        %5744 = vmatpush1.msra.mxu0 0.0
        %5745 = vmatprep.subr.mxu0 0.0
        %5746 = vmatpush1.msra.mxu0 0.0
        %5747 = vmatprep.subr.mxu0 0.0
        %5748 = vmatpush1.msra.mxu0 0.0
        %5749 = vmatprep.subr.mxu0 0.0
        %5750 = vmatpush1.msra.mxu0 0.0
        %5751 = vmatprep.subr.mxu0 0.0
        %5752 = vmatpush1.msra.mxu0 0.0
        %5753 = vmatprep.mubr.f32.mxu0 0.0
        %5754 = vmatmul.mubr.f32.gmra.mrb[0].mxu0 %v1703
        %v5755 = vpop.f32.mrb[0].mxu0
        %v5756 = vadd.f32 0.0, %v5755
        %v5757 = vpop.f32.mrb[0].mxu0
        %5758 = vdwg.mxu0
        %v5760 = vsel %vm1777, %v5756, 0
        %5762 = vmatprep.subr.mxu0 0.0
        %5763 = vmatpush1.msra.mxu0 %v1677
        %5764 = vmatprep.subr.mxu0 0.0
        %5765 = vmatpush1.msra.mxu0 %v1678
        %5766 = vmatprep.subr.mxu0 0.0
        %5767 = vmatpush1.msra.mxu0 %v1679
        %5768 = vmatprep.subr.mxu0 0.0
        %5769 = vmatpush1.msra.mxu0 %v1680
        %5770 = vmatprep.subr.mxu0 0.0
        %5771 = vmatpush1.msra.mxu0 0.0
        %5772 = vmatprep.subr.mxu0 0.0
        %5773 = vmatpush1.msra.mxu0 0.0
        %5774 = vmatprep.subr.mxu0 0.0
        %5775 = vmatpush1.msra.mxu0 0.0
        %5776 = vmatprep.subr.mxu0 0.0
        %5777 = vmatpush1.msra.mxu0 0.0
        %5778 = vmatprep.subr.mxu0 0.0
        %5779 = vmatpush1.msra.mxu0 0.0
        %5780 = vmatprep.subr.mxu0 0.0
        %5781 = vmatpush1.msra.mxu0 0.0
        %5782 = vmatprep.subr.mxu0 0.0
        %5783 = vmatpush1.msra.mxu0 0.0
        %5784 = vmatprep.subr.mxu0 0.0
        %5785 = vmatpush1.msra.mxu0 0.0
        %5786 = vmatprep.subr.mxu0 0.0
        %5787 = vmatpush1.msra.mxu0 0.0
        %5788 = vmatprep.subr.mxu0 0.0
        %5789 = vmatpush1.msra.mxu0 0.0
        %5790 = vmatprep.subr.mxu0 0.0
        %5791 = vmatpush1.msra.mxu0 0.0
        %5792 = vmatprep.subr.mxu0 0.0
        %5793 = vmatpush1.msra.mxu0 0.0
        %5794 = vmatprep.subr.mxu0 0.0
        %5795 = vmatpush1.msra.mxu0 0.0
        %5796 = vmatprep.subr.mxu0 0.0
        %5797 = vmatpush1.msra.mxu0 0.0
        %5798 = vmatprep.subr.mxu0 0.0
        %5799 = vmatpush1.msra.mxu0 0.0
        %5800 = vmatprep.subr.mxu0 0.0
        %5801 = vmatpush1.msra.mxu0 0.0
        %5802 = vmatprep.subr.mxu0 0.0
        %5803 = vmatpush1.msra.mxu0 0.0
        %5804 = vmatprep.subr.mxu0 0.0
        %5805 = vmatpush1.msra.mxu0 0.0
        %5806 = vmatprep.subr.mxu0 0.0
        %5807 = vmatpush1.msra.mxu0 0.0
        %5808 = vmatprep.subr.mxu0 0.0
        %5809 = vmatpush1.msra.mxu0 0.0
        %5810 = vmatprep.subr.mxu0 0.0
        %5811 = vmatpush1.msra.mxu0 0.0
        %5812 = vmatprep.subr.mxu0 0.0
        %5813 = vmatpush1.msra.mxu0 0.0
        %5814 = vmatprep.subr.mxu0 0.0
        %5815 = vmatpush1.msra.mxu0 0.0
        %5816 = vmatprep.subr.mxu0 0.0
        %5817 = vmatpush1.msra.mxu0 0.0
        %5818 = vmatprep.subr.mxu0 0.0
        %5819 = vmatpush1.msra.mxu0 0.0
        %5820 = vmatprep.subr.mxu0 0.0
        %5821 = vmatpush1.msra.mxu0 0.0
        %5822 = vmatprep.subr.mxu0 0.0
        %5823 = vmatpush1.msra.mxu0 0.0
        %5824 = vmatprep.subr.mxu0 0.0
        %5825 = vmatpush1.msra.mxu0 0.0
        %5826 = vmatprep.mubr.f32.mxu0 0.0
        %5827 = vmatmul.mubr.f32.gmra.mrb[0].mxu0 %v5760
        %v5828 = vpop.f32.mrb[0].mxu0
        %v5829 = vadd.f32 0.0, %v5828
        %v5830 = vpop.f32.mrb[0].mxu0
        %5831 = vdwg.mxu0
        %v5832 = vld [vmem:[#allocation2 + $0xb8] sm:$0xff]
        %v5833 = vadd.f32 %v5832, %v5829
        %5834 = vst.msk [vmem:[#allocation2 + $0xb8] sm:$0xff] %vm1853, %v5833
        %v5835 = vld [vmem:[#allocation2 + $0xb8] sm:$0xff]
        %5837 = vrot.lane.b32.xlu0 %v5829, 64
        %v5838 = vpop.permute.xlu0 %5837
        %v5840 = vadd.f32 %v5835, %v5838
        %5841 = vst.msk [vmem:[#allocation2 + $0xb8] sm:$0xff] %vm1861, %v5840
        %v5842 = vld [vmem:[%s314 + $0x18] sm:$0x1]
        %v5843 = vld [vmem:[%s314 + $0x38] sm:$0x1]
        %v5844 = vld [vmem:[%s314 + $0x58] sm:$0x1]
        %v5845 = vld [vmem:[%s314 + $0x78] sm:$0x1]
        %v5846 = vmax.f32 %v5842, 0.0
        %v5847 = vmax.f32 %v5843, 0.0
        %v5848 = vmax.f32 %v5844, 0.0
        %v5849 = vmax.f32 %v5845, 0.0
        %v5854 = vrot.slane %v5847, 7
        %v5855 = vsel %vm1694, %v5854, %v5846
        %v5856 = vrot.slane %v5848, 6
        %v5857 = vsel %vm1697, %v5856, %v5855
        %v5858 = vrot.slane %v5849, 5
        %v5859 = vsel %vm1700, %v5858, %v5857
        %v5860 = vsel %vm443, %v5859, 0
        %5862 = vmatprep.subr.mxu0 0.0
        %5863 = vmatpush1.msra.mxu0 %v5860
        %5864 = vmatprep.subr.mxu0 0.0
        %5865 = vmatpush1.msra.mxu0 0.0
        %5866 = vmatprep.subr.mxu0 0.0
        %5867 = vmatpush1.msra.mxu0 0.0
        %5868 = vmatprep.subr.mxu0 0.0
        %5869 = vmatpush1.msra.mxu0 0.0
        %5870 = vmatprep.subr.mxu0 0.0
        %5871 = vmatpush1.msra.mxu0 0.0
        %5872 = vmatprep.subr.mxu0 0.0
        %5873 = vmatpush1.msra.mxu0 0.0
        %5874 = vmatprep.subr.mxu0 0.0
        %5875 = vmatpush1.msra.mxu0 0.0
        %5876 = vmatprep.subr.mxu0 0.0
        %5877 = vmatpush1.msra.mxu0 0.0
        %5878 = vmatprep.subr.mxu0 0.0
        %5879 = vmatpush1.msra.mxu0 0.0
        %5880 = vmatprep.subr.mxu0 0.0
        %5881 = vmatpush1.msra.mxu0 0.0
        %5882 = vmatprep.subr.mxu0 0.0
        %5883 = vmatpush1.msra.mxu0 0.0
        %5884 = vmatprep.subr.mxu0 0.0
        %5885 = vmatpush1.msra.mxu0 0.0
        %5886 = vmatprep.subr.mxu0 0.0
        %5887 = vmatpush1.msra.mxu0 0.0
        %5888 = vmatprep.subr.mxu0 0.0
        %5889 = vmatpush1.msra.mxu0 0.0
        %5890 = vmatprep.subr.mxu0 0.0
        %5891 = vmatpush1.msra.mxu0 0.0
        %5892 = vmatprep.subr.mxu0 0.0
        %5893 = vmatpush1.msra.mxu0 0.0
        %5894 = vmatprep.subr.mxu0 0.0
        %5895 = vmatpush1.msra.mxu0 0.0
        %5896 = vmatprep.subr.mxu0 0.0
        %5897 = vmatpush1.msra.mxu0 0.0
        %5898 = vmatprep.subr.mxu0 0.0
        %5899 = vmatpush1.msra.mxu0 0.0
        %5900 = vmatprep.subr.mxu0 0.0
        %5901 = vmatpush1.msra.mxu0 0.0
        %5902 = vmatprep.subr.mxu0 0.0
        %5903 = vmatpush1.msra.mxu0 0.0
        %5904 = vmatprep.subr.mxu0 0.0
        %5905 = vmatpush1.msra.mxu0 0.0
        %5906 = vmatprep.subr.mxu0 0.0
        %5907 = vmatpush1.msra.mxu0 0.0
        %5908 = vmatprep.subr.mxu0 0.0
        %5909 = vmatpush1.msra.mxu0 0.0
        %5910 = vmatprep.subr.mxu0 0.0
        %5911 = vmatpush1.msra.mxu0 0.0
        %5912 = vmatprep.subr.mxu0 0.0
        %5913 = vmatpush1.msra.mxu0 0.0
        %5914 = vmatprep.subr.mxu0 0.0
        %5915 = vmatpush1.msra.mxu0 0.0
        %5916 = vmatprep.subr.mxu0 0.0
        %5917 = vmatpush1.msra.mxu0 0.0
        %5918 = vmatprep.subr.mxu0 0.0
        %5919 = vmatpush1.msra.mxu0 0.0
        %5920 = vmatprep.subr.mxu0 0.0
        %5921 = vmatpush1.msra.mxu0 0.0
        %5922 = vmatprep.subr.mxu0 0.0
        %5923 = vmatpush1.msra.mxu0 0.0
        %5924 = vmatprep.subr.mxu0 0.0
        %5925 = vmatpush1.msra.mxu0 0.0
        %5926 = vmatprep.mubr.f32.mxu0 0.0
        %5927 = vmatmul.mubr.f32.gmra.mrb[0].mxu0 %v1703
        %v5928 = vpop.f32.mrb[0].mxu0
        %v5929 = vadd.f32 0.0, %v5928
        %v5930 = vpop.f32.mrb[0].mxu0
        %5931 = vdwg.mxu0
        %v5933 = vsel %vm1777, %v5929, 0
        %5935 = vmatprep.subr.mxu0 0.0
        %5936 = vmatpush1.msra.mxu0 %v1677
        %5937 = vmatprep.subr.mxu0 0.0
        %5938 = vmatpush1.msra.mxu0 %v1678
        %5939 = vmatprep.subr.mxu0 0.0
        %5940 = vmatpush1.msra.mxu0 %v1679
        %5941 = vmatprep.subr.mxu0 0.0
        %5942 = vmatpush1.msra.mxu0 %v1680
        %5943 = vmatprep.subr.mxu0 0.0
        %5944 = vmatpush1.msra.mxu0 0.0
        %5945 = vmatprep.subr.mxu0 0.0
        %5946 = vmatpush1.msra.mxu0 0.0
        %5947 = vmatprep.subr.mxu0 0.0
        %5948 = vmatpush1.msra.mxu0 0.0
        %5949 = vmatprep.subr.mxu0 0.0
        %5950 = vmatpush1.msra.mxu0 0.0
        %5951 = vmatprep.subr.mxu0 0.0
        %5952 = vmatpush1.msra.mxu0 0.0
        %5953 = vmatprep.subr.mxu0 0.0
        %5954 = vmatpush1.msra.mxu0 0.0
        %5955 = vmatprep.subr.mxu0 0.0
        %5956 = vmatpush1.msra.mxu0 0.0
        %5957 = vmatprep.subr.mxu0 0.0
        %5958 = vmatpush1.msra.mxu0 0.0
        %5959 = vmatprep.subr.mxu0 0.0
        %5960 = vmatpush1.msra.mxu0 0.0
        %5961 = vmatprep.subr.mxu0 0.0
        %5962 = vmatpush1.msra.mxu0 0.0
        %5963 = vmatprep.subr.mxu0 0.0
        %5964 = vmatpush1.msra.mxu0 0.0
        %5965 = vmatprep.subr.mxu0 0.0
        %5966 = vmatpush1.msra.mxu0 0.0
        %5967 = vmatprep.subr.mxu0 0.0
        %5968 = vmatpush1.msra.mxu0 0.0
        %5969 = vmatprep.subr.mxu0 0.0
        %5970 = vmatpush1.msra.mxu0 0.0
        %5971 = vmatprep.subr.mxu0 0.0
        %5972 = vmatpush1.msra.mxu0 0.0
        %5973 = vmatprep.subr.mxu0 0.0
        %5974 = vmatpush1.msra.mxu0 0.0
        %5975 = vmatprep.subr.mxu0 0.0
        %5976 = vmatpush1.msra.mxu0 0.0
        %5977 = vmatprep.subr.mxu0 0.0
        %5978 = vmatpush1.msra.mxu0 0.0
        %5979 = vmatprep.subr.mxu0 0.0
        %5980 = vmatpush1.msra.mxu0 0.0
        %5981 = vmatprep.subr.mxu0 0.0
        %5982 = vmatpush1.msra.mxu0 0.0
        %5983 = vmatprep.subr.mxu0 0.0
        %5984 = vmatpush1.msra.mxu0 0.0
        %5985 = vmatprep.subr.mxu0 0.0
        %5986 = vmatpush1.msra.mxu0 0.0
        %5987 = vmatprep.subr.mxu0 0.0
        %5988 = vmatpush1.msra.mxu0 0.0
        %5989 = vmatprep.subr.mxu0 0.0
        %5990 = vmatpush1.msra.mxu0 0.0
        %5991 = vmatprep.subr.mxu0 0.0
        %5992 = vmatpush1.msra.mxu0 0.0
        %5993 = vmatprep.subr.mxu0 0.0
        %5994 = vmatpush1.msra.mxu0 0.0
        %5995 = vmatprep.subr.mxu0 0.0
        %5996 = vmatpush1.msra.mxu0 0.0
        %5997 = vmatprep.subr.mxu0 0.0
        %5998 = vmatpush1.msra.mxu0 0.0
        %5999 = vmatprep.mubr.f32.mxu0 0.0
        %6000 = vmatmul.mubr.f32.gmra.mrb[0].mxu0 %v5933
        %v6001 = vpop.f32.mrb[0].mxu0
        %v6002 = vadd.f32 0.0, %v6001
        %v6003 = vpop.f32.mrb[0].mxu0
        %6004 = vdwg.mxu0
        %v6005 = vld [vmem:[#allocation2 + $0xc0] sm:$0xff]
        %v6006 = vadd.f32 %v6005, %v6002
        %6007 = vst.msk [vmem:[#allocation2 + $0xc0] sm:$0xff] %vm1853, %v6006
        %v6008 = vld [vmem:[#allocation2 + $0xc0] sm:$0xff]
        %6010 = vrot.lane.b32.xlu0 %v6002, 64
        %v6011 = vpop.permute.xlu0 %6010
        %v6013 = vadd.f32 %v6008, %v6011
        %6014 = vst.msk [vmem:[#allocation2 + $0xc0] sm:$0xff] %vm1861, %v6013
        %v6015 = vld [vmem:[%s314 + $0x19] sm:$0x1]
        %v6016 = vld [vmem:[%s314 + $0x39] sm:$0x1]
        %v6017 = vld [vmem:[%s314 + $0x59] sm:$0x1]
        %v6018 = vld [vmem:[%s314 + $0x79] sm:$0x1]
        %v6019 = vmax.f32 %v6015, 0.0
        %v6020 = vmax.f32 %v6016, 0.0
        %v6021 = vmax.f32 %v6017, 0.0
        %v6022 = vmax.f32 %v6018, 0.0
        %v6027 = vrot.slane %v6020, 7
        %v6028 = vsel %vm1694, %v6027, %v6019
        %v6029 = vrot.slane %v6021, 6
        %v6030 = vsel %vm1697, %v6029, %v6028
        %v6031 = vrot.slane %v6022, 5
        %v6032 = vsel %vm1700, %v6031, %v6030
        %v6033 = vsel %vm443, %v6032, 0
        %6035 = vmatprep.subr.mxu0 0.0
        %6036 = vmatpush1.msra.mxu0 %v6033
        %6037 = vmatprep.subr.mxu0 0.0
        %6038 = vmatpush1.msra.mxu0 0.0
        %6039 = vmatprep.subr.mxu0 0.0
        %6040 = vmatpush1.msra.mxu0 0.0
        %6041 = vmatprep.subr.mxu0 0.0
        %6042 = vmatpush1.msra.mxu0 0.0
        %6043 = vmatprep.subr.mxu0 0.0
        %6044 = vmatpush1.msra.mxu0 0.0
        %6045 = vmatprep.subr.mxu0 0.0
        %6046 = vmatpush1.msra.mxu0 0.0
        %6047 = vmatprep.subr.mxu0 0.0
        %6048 = vmatpush1.msra.mxu0 0.0
        %6049 = vmatprep.subr.mxu0 0.0
        %6050 = vmatpush1.msra.mxu0 0.0
        %6051 = vmatprep.subr.mxu0 0.0
        %6052 = vmatpush1.msra.mxu0 0.0
        %6053 = vmatprep.subr.mxu0 0.0
        %6054 = vmatpush1.msra.mxu0 0.0
        %6055 = vmatprep.subr.mxu0 0.0
        %6056 = vmatpush1.msra.mxu0 0.0
        %6057 = vmatprep.subr.mxu0 0.0
        %6058 = vmatpush1.msra.mxu0 0.0
        %6059 = vmatprep.subr.mxu0 0.0
        %6060 = vmatpush1.msra.mxu0 0.0
        %6061 = vmatprep.subr.mxu0 0.0
        %6062 = vmatpush1.msra.mxu0 0.0
        %6063 = vmatprep.subr.mxu0 0.0
        %6064 = vmatpush1.msra.mxu0 0.0
        %6065 = vmatprep.subr.mxu0 0.0
        %6066 = vmatpush1.msra.mxu0 0.0
        %6067 = vmatprep.subr.mxu0 0.0
        %6068 = vmatpush1.msra.mxu0 0.0
        %6069 = vmatprep.subr.mxu0 0.0
        %6070 = vmatpush1.msra.mxu0 0.0
        %6071 = vmatprep.subr.mxu0 0.0
        %6072 = vmatpush1.msra.mxu0 0.0
        %6073 = vmatprep.subr.mxu0 0.0
        %6074 = vmatpush1.msra.mxu0 0.0
        %6075 = vmatprep.subr.mxu0 0.0
        %6076 = vmatpush1.msra.mxu0 0.0
        %6077 = vmatprep.subr.mxu0 0.0
        %6078 = vmatpush1.msra.mxu0 0.0
        %6079 = vmatprep.subr.mxu0 0.0
        %6080 = vmatpush1.msra.mxu0 0.0
        %6081 = vmatprep.subr.mxu0 0.0
        %6082 = vmatpush1.msra.mxu0 0.0
        %6083 = vmatprep.subr.mxu0 0.0
        %6084 = vmatpush1.msra.mxu0 0.0
        %6085 = vmatprep.subr.mxu0 0.0
        %6086 = vmatpush1.msra.mxu0 0.0
        %6087 = vmatprep.subr.mxu0 0.0
        %6088 = vmatpush1.msra.mxu0 0.0
        %6089 = vmatprep.subr.mxu0 0.0
        %6090 = vmatpush1.msra.mxu0 0.0
        %6091 = vmatprep.subr.mxu0 0.0
        %6092 = vmatpush1.msra.mxu0 0.0
        %6093 = vmatprep.subr.mxu0 0.0
        %6094 = vmatpush1.msra.mxu0 0.0
        %6095 = vmatprep.subr.mxu0 0.0
        %6096 = vmatpush1.msra.mxu0 0.0
        %6097 = vmatprep.subr.mxu0 0.0
        %6098 = vmatpush1.msra.mxu0 0.0
        %6099 = vmatprep.mubr.f32.mxu0 0.0
        %6100 = vmatmul.mubr.f32.gmra.mrb[0].mxu0 %v1703
        %v6101 = vpop.f32.mrb[0].mxu0
        %v6102 = vadd.f32 0.0, %v6101
        %v6103 = vpop.f32.mrb[0].mxu0
        %6104 = vdwg.mxu0
        %v6106 = vsel %vm1777, %v6102, 0
        %6108 = vmatprep.subr.mxu0 0.0
        %6109 = vmatpush1.msra.mxu0 %v1677
        %6110 = vmatprep.subr.mxu0 0.0
        %6111 = vmatpush1.msra.mxu0 %v1678
        %6112 = vmatprep.subr.mxu0 0.0
        %6113 = vmatpush1.msra.mxu0 %v1679
        %6114 = vmatprep.subr.mxu0 0.0
        %6115 = vmatpush1.msra.mxu0 %v1680
        %6116 = vmatprep.subr.mxu0 0.0
        %6117 = vmatpush1.msra.mxu0 0.0
        %6118 = vmatprep.subr.mxu0 0.0
        %6119 = vmatpush1.msra.mxu0 0.0
        %6120 = vmatprep.subr.mxu0 0.0
        %6121 = vmatpush1.msra.mxu0 0.0
        %6122 = vmatprep.subr.mxu0 0.0
        %6123 = vmatpush1.msra.mxu0 0.0
        %6124 = vmatprep.subr.mxu0 0.0
        %6125 = vmatpush1.msra.mxu0 0.0
        %6126 = vmatprep.subr.mxu0 0.0
        %6127 = vmatpush1.msra.mxu0 0.0
        %6128 = vmatprep.subr.mxu0 0.0
        %6129 = vmatpush1.msra.mxu0 0.0
        %6130 = vmatprep.subr.mxu0 0.0
        %6131 = vmatpush1.msra.mxu0 0.0
        %6132 = vmatprep.subr.mxu0 0.0
        %6133 = vmatpush1.msra.mxu0 0.0
        %6134 = vmatprep.subr.mxu0 0.0
        %6135 = vmatpush1.msra.mxu0 0.0
        %6136 = vmatprep.subr.mxu0 0.0
        %6137 = vmatpush1.msra.mxu0 0.0
        %6138 = vmatprep.subr.mxu0 0.0
        %6139 = vmatpush1.msra.mxu0 0.0
        %6140 = vmatprep.subr.mxu0 0.0
        %6141 = vmatpush1.msra.mxu0 0.0
        %6142 = vmatprep.subr.mxu0 0.0
        %6143 = vmatpush1.msra.mxu0 0.0
        %6144 = vmatprep.subr.mxu0 0.0
        %6145 = vmatpush1.msra.mxu0 0.0
        %6146 = vmatprep.subr.mxu0 0.0
        %6147 = vmatpush1.msra.mxu0 0.0
        %6148 = vmatprep.subr.mxu0 0.0
        %6149 = vmatpush1.msra.mxu0 0.0
        %6150 = vmatprep.subr.mxu0 0.0
        %6151 = vmatpush1.msra.mxu0 0.0
        %6152 = vmatprep.subr.mxu0 0.0
        %6153 = vmatpush1.msra.mxu0 0.0
        %6154 = vmatprep.subr.mxu0 0.0
        %6155 = vmatpush1.msra.mxu0 0.0
        %6156 = vmatprep.subr.mxu0 0.0
        %6157 = vmatpush1.msra.mxu0 0.0
        %6158 = vmatprep.subr.mxu0 0.0
        %6159 = vmatpush1.msra.mxu0 0.0
        %6160 = vmatprep.subr.mxu0 0.0
        %6161 = vmatpush1.msra.mxu0 0.0
        %6162 = vmatprep.subr.mxu0 0.0
        %6163 = vmatpush1.msra.mxu0 0.0
        %6164 = vmatprep.subr.mxu0 0.0
        %6165 = vmatpush1.msra.mxu0 0.0
        %6166 = vmatprep.subr.mxu0 0.0
        %6167 = vmatpush1.msra.mxu0 0.0
        %6168 = vmatprep.subr.mxu0 0.0
        %6169 = vmatpush1.msra.mxu0 0.0
        %6170 = vmatprep.subr.mxu0 0.0
        %6171 = vmatpush1.msra.mxu0 0.0
        %6172 = vmatprep.mubr.f32.mxu0 0.0
        %6173 = vmatmul.mubr.f32.gmra.mrb[0].mxu0 %v6106
        %v6174 = vpop.f32.mrb[0].mxu0
        %v6175 = vadd.f32 0.0, %v6174
        %v6176 = vpop.f32.mrb[0].mxu0
        %6177 = vdwg.mxu0
        %v6178 = vld [vmem:[#allocation2 + $0xc8] sm:$0xff]
        %v6179 = vadd.f32 %v6178, %v6175
        %6180 = vst.msk [vmem:[#allocation2 + $0xc8] sm:$0xff] %vm1853, %v6179
        %v6181 = vld [vmem:[#allocation2 + $0xc8] sm:$0xff]
        %6183 = vrot.lane.b32.xlu0 %v6175, 64
        %v6184 = vpop.permute.xlu0 %6183
        %v6186 = vadd.f32 %v6181, %v6184
        %6187 = vst.msk [vmem:[#allocation2 + $0xc8] sm:$0xff] %vm1861, %v6186
        %v6188 = vld [vmem:[%s314 + $0x1a] sm:$0x1]
        %v6189 = vld [vmem:[%s314 + $0x3a] sm:$0x1]
        %v6190 = vld [vmem:[%s314 + $0x5a] sm:$0x1]
        %v6191 = vld [vmem:[%s314 + $0x7a] sm:$0x1]
        %v6192 = vmax.f32 %v6188, 0.0
        %v6193 = vmax.f32 %v6189, 0.0
        %v6194 = vmax.f32 %v6190, 0.0
        %v6195 = vmax.f32 %v6191, 0.0
        %v6200 = vrot.slane %v6193, 7
        %v6201 = vsel %vm1694, %v6200, %v6192
        %v6202 = vrot.slane %v6194, 6
        %v6203 = vsel %vm1697, %v6202, %v6201
        %v6204 = vrot.slane %v6195, 5
        %v6205 = vsel %vm1700, %v6204, %v6203
        %v6206 = vsel %vm443, %v6205, 0
        %6208 = vmatprep.subr.mxu0 0.0
        %6209 = vmatpush1.msra.mxu0 %v6206
        %6210 = vmatprep.subr.mxu0 0.0
        %6211 = vmatpush1.msra.mxu0 0.0
        %6212 = vmatprep.subr.mxu0 0.0
        %6213 = vmatpush1.msra.mxu0 0.0
        %6214 = vmatprep.subr.mxu0 0.0
        %6215 = vmatpush1.msra.mxu0 0.0
        %6216 = vmatprep.subr.mxu0 0.0
        %6217 = vmatpush1.msra.mxu0 0.0
        %6218 = vmatprep.subr.mxu0 0.0
        %6219 = vmatpush1.msra.mxu0 0.0
        %6220 = vmatprep.subr.mxu0 0.0
        %6221 = vmatpush1.msra.mxu0 0.0
        %6222 = vmatprep.subr.mxu0 0.0
        %6223 = vmatpush1.msra.mxu0 0.0
        %6224 = vmatprep.subr.mxu0 0.0
        %6225 = vmatpush1.msra.mxu0 0.0
        %6226 = vmatprep.subr.mxu0 0.0
        %6227 = vmatpush1.msra.mxu0 0.0
        %6228 = vmatprep.subr.mxu0 0.0
        %6229 = vmatpush1.msra.mxu0 0.0
        %6230 = vmatprep.subr.mxu0 0.0
        %6231 = vmatpush1.msra.mxu0 0.0
        %6232 = vmatprep.subr.mxu0 0.0
        %6233 = vmatpush1.msra.mxu0 0.0
        %6234 = vmatprep.subr.mxu0 0.0
        %6235 = vmatpush1.msra.mxu0 0.0
        %6236 = vmatprep.subr.mxu0 0.0
        %6237 = vmatpush1.msra.mxu0 0.0
        %6238 = vmatprep.subr.mxu0 0.0
        %6239 = vmatpush1.msra.mxu0 0.0
        %6240 = vmatprep.subr.mxu0 0.0
        %6241 = vmatpush1.msra.mxu0 0.0
        %6242 = vmatprep.subr.mxu0 0.0
        %6243 = vmatpush1.msra.mxu0 0.0
        %6244 = vmatprep.subr.mxu0 0.0
        %6245 = vmatpush1.msra.mxu0 0.0
        %6246 = vmatprep.subr.mxu0 0.0
        %6247 = vmatpush1.msra.mxu0 0.0
        %6248 = vmatprep.subr.mxu0 0.0
        %6249 = vmatpush1.msra.mxu0 0.0
        %6250 = vmatprep.subr.mxu0 0.0
        %6251 = vmatpush1.msra.mxu0 0.0
        %6252 = vmatprep.subr.mxu0 0.0
        %6253 = vmatpush1.msra.mxu0 0.0
        %6254 = vmatprep.subr.mxu0 0.0
        %6255 = vmatpush1.msra.mxu0 0.0
        %6256 = vmatprep.subr.mxu0 0.0
        %6257 = vmatpush1.msra.mxu0 0.0
        %6258 = vmatprep.subr.mxu0 0.0
        %6259 = vmatpush1.msra.mxu0 0.0
        %6260 = vmatprep.subr.mxu0 0.0
        %6261 = vmatpush1.msra.mxu0 0.0
        %6262 = vmatprep.subr.mxu0 0.0
        %6263 = vmatpush1.msra.mxu0 0.0
        %6264 = vmatprep.subr.mxu0 0.0
        %6265 = vmatpush1.msra.mxu0 0.0
        %6266 = vmatprep.subr.mxu0 0.0
        %6267 = vmatpush1.msra.mxu0 0.0
        %6268 = vmatprep.subr.mxu0 0.0
        %6269 = vmatpush1.msra.mxu0 0.0
        %6270 = vmatprep.subr.mxu0 0.0
        %6271 = vmatpush1.msra.mxu0 0.0
        %6272 = vmatprep.mubr.f32.mxu0 0.0
        %6273 = vmatmul.mubr.f32.gmra.mrb[0].mxu0 %v1703
        %v6274 = vpop.f32.mrb[0].mxu0
        %v6275 = vadd.f32 0.0, %v6274
        %v6276 = vpop.f32.mrb[0].mxu0
        %6277 = vdwg.mxu0
        %v6279 = vsel %vm1777, %v6275, 0
        %6281 = vmatprep.subr.mxu0 0.0
        %6282 = vmatpush1.msra.mxu0 %v1677
        %6283 = vmatprep.subr.mxu0 0.0
        %6284 = vmatpush1.msra.mxu0 %v1678
        %6285 = vmatprep.subr.mxu0 0.0
        %6286 = vmatpush1.msra.mxu0 %v1679
        %6287 = vmatprep.subr.mxu0 0.0
        %6288 = vmatpush1.msra.mxu0 %v1680
        %6289 = vmatprep.subr.mxu0 0.0
        %6290 = vmatpush1.msra.mxu0 0.0
        %6291 = vmatprep.subr.mxu0 0.0
        %6292 = vmatpush1.msra.mxu0 0.0
        %6293 = vmatprep.subr.mxu0 0.0
        %6294 = vmatpush1.msra.mxu0 0.0
        %6295 = vmatprep.subr.mxu0 0.0
        %6296 = vmatpush1.msra.mxu0 0.0
        %6297 = vmatprep.subr.mxu0 0.0
        %6298 = vmatpush1.msra.mxu0 0.0
        %6299 = vmatprep.subr.mxu0 0.0
        %6300 = vmatpush1.msra.mxu0 0.0
        %6301 = vmatprep.subr.mxu0 0.0
        %6302 = vmatpush1.msra.mxu0 0.0
        %6303 = vmatprep.subr.mxu0 0.0
        %6304 = vmatpush1.msra.mxu0 0.0
        %6305 = vmatprep.subr.mxu0 0.0
        %6306 = vmatpush1.msra.mxu0 0.0
        %6307 = vmatprep.subr.mxu0 0.0
        %6308 = vmatpush1.msra.mxu0 0.0
        %6309 = vmatprep.subr.mxu0 0.0
        %6310 = vmatpush1.msra.mxu0 0.0
        %6311 = vmatprep.subr.mxu0 0.0
        %6312 = vmatpush1.msra.mxu0 0.0
        %6313 = vmatprep.subr.mxu0 0.0
        %6314 = vmatpush1.msra.mxu0 0.0
        %6315 = vmatprep.subr.mxu0 0.0
        %6316 = vmatpush1.msra.mxu0 0.0
        %6317 = vmatprep.subr.mxu0 0.0
        %6318 = vmatpush1.msra.mxu0 0.0
        %6319 = vmatprep.subr.mxu0 0.0
        %6320 = vmatpush1.msra.mxu0 0.0
        %6321 = vmatprep.subr.mxu0 0.0
        %6322 = vmatpush1.msra.mxu0 0.0
        %6323 = vmatprep.subr.mxu0 0.0
        %6324 = vmatpush1.msra.mxu0 0.0
        %6325 = vmatprep.subr.mxu0 0.0
        %6326 = vmatpush1.msra.mxu0 0.0
        %6327 = vmatprep.subr.mxu0 0.0
        %6328 = vmatpush1.msra.mxu0 0.0
        %6329 = vmatprep.subr.mxu0 0.0
        %6330 = vmatpush1.msra.mxu0 0.0
        %6331 = vmatprep.subr.mxu0 0.0
        %6332 = vmatpush1.msra.mxu0 0.0
        %6333 = vmatprep.subr.mxu0 0.0
        %6334 = vmatpush1.msra.mxu0 0.0
        %6335 = vmatprep.subr.mxu0 0.0
        %6336 = vmatpush1.msra.mxu0 0.0
        %6337 = vmatprep.subr.mxu0 0.0
        %6338 = vmatpush1.msra.mxu0 0.0
        %6339 = vmatprep.subr.mxu0 0.0
        %6340 = vmatpush1.msra.mxu0 0.0
        %6341 = vmatprep.subr.mxu0 0.0
        %6342 = vmatpush1.msra.mxu0 0.0
        %6343 = vmatprep.subr.mxu0 0.0
        %6344 = vmatpush1.msra.mxu0 0.0
        %6345 = vmatprep.mubr.f32.mxu0 0.0
        %6346 = vmatmul.mubr.f32.gmra.mrb[0].mxu0 %v6279
        %v6347 = vpop.f32.mrb[0].mxu0
        %v6348 = vadd.f32 0.0, %v6347
        %v6349 = vpop.f32.mrb[0].mxu0
        %6350 = vdwg.mxu0
        %v6351 = vld [vmem:[#allocation2 + $0xd0] sm:$0xff]
        %v6352 = vadd.f32 %v6351, %v6348
        %6353 = vst.msk [vmem:[#allocation2 + $0xd0] sm:$0xff] %vm1853, %v6352
        %v6354 = vld [vmem:[#allocation2 + $0xd0] sm:$0xff]
        %6356 = vrot.lane.b32.xlu0 %v6348, 64
        %v6357 = vpop.permute.xlu0 %6356
        %v6359 = vadd.f32 %v6354, %v6357
        %6360 = vst.msk [vmem:[#allocation2 + $0xd0] sm:$0xff] %vm1861, %v6359
        %v6361 = vld [vmem:[%s314 + $0x1b] sm:$0x1]
        %v6362 = vld [vmem:[%s314 + $0x3b] sm:$0x1]
        %v6363 = vld [vmem:[%s314 + $0x5b] sm:$0x1]
        %v6364 = vld [vmem:[%s314 + $0x7b] sm:$0x1]
        %v6365 = vmax.f32 %v6361, 0.0
        %v6366 = vmax.f32 %v6362, 0.0
        %v6367 = vmax.f32 %v6363, 0.0
        %v6368 = vmax.f32 %v6364, 0.0
        %v6373 = vrot.slane %v6366, 7
        %v6374 = vsel %vm1694, %v6373, %v6365
        %v6375 = vrot.slane %v6367, 6
        %v6376 = vsel %vm1697, %v6375, %v6374
        %v6377 = vrot.slane %v6368, 5
        %v6378 = vsel %vm1700, %v6377, %v6376
        %v6379 = vsel %vm443, %v6378, 0
        %6381 = vmatprep.subr.mxu0 0.0
        %6382 = vmatpush1.msra.mxu0 %v6379
        %6383 = vmatprep.subr.mxu0 0.0
        %6384 = vmatpush1.msra.mxu0 0.0
        %6385 = vmatprep.subr.mxu0 0.0
        %6386 = vmatpush1.msra.mxu0 0.0
        %6387 = vmatprep.subr.mxu0 0.0
        %6388 = vmatpush1.msra.mxu0 0.0
        %6389 = vmatprep.subr.mxu0 0.0
        %6390 = vmatpush1.msra.mxu0 0.0
        %6391 = vmatprep.subr.mxu0 0.0
        %6392 = vmatpush1.msra.mxu0 0.0
        %6393 = vmatprep.subr.mxu0 0.0
        %6394 = vmatpush1.msra.mxu0 0.0
        %6395 = vmatprep.subr.mxu0 0.0
        %6396 = vmatpush1.msra.mxu0 0.0
        %6397 = vmatprep.subr.mxu0 0.0
        %6398 = vmatpush1.msra.mxu0 0.0
        %6399 = vmatprep.subr.mxu0 0.0
        %6400 = vmatpush1.msra.mxu0 0.0
        %6401 = vmatprep.subr.mxu0 0.0
        %6402 = vmatpush1.msra.mxu0 0.0
        %6403 = vmatprep.subr.mxu0 0.0
        %6404 = vmatpush1.msra.mxu0 0.0
        %6405 = vmatprep.subr.mxu0 0.0
        %6406 = vmatpush1.msra.mxu0 0.0
        %6407 = vmatprep.subr.mxu0 0.0
        %6408 = vmatpush1.msra.mxu0 0.0
        %6409 = vmatprep.subr.mxu0 0.0
        %6410 = vmatpush1.msra.mxu0 0.0
        %6411 = vmatprep.subr.mxu0 0.0
        %6412 = vmatpush1.msra.mxu0 0.0
        %6413 = vmatprep.subr.mxu0 0.0
        %6414 = vmatpush1.msra.mxu0 0.0
        %6415 = vmatprep.subr.mxu0 0.0
        %6416 = vmatpush1.msra.mxu0 0.0
        %6417 = vmatprep.subr.mxu0 0.0
        %6418 = vmatpush1.msra.mxu0 0.0
        %6419 = vmatprep.subr.mxu0 0.0
        %6420 = vmatpush1.msra.mxu0 0.0
        %6421 = vmatprep.subr.mxu0 0.0
        %6422 = vmatpush1.msra.mxu0 0.0
        %6423 = vmatprep.subr.mxu0 0.0
        %6424 = vmatpush1.msra.mxu0 0.0
        %6425 = vmatprep.subr.mxu0 0.0
        %6426 = vmatpush1.msra.mxu0 0.0
        %6427 = vmatprep.subr.mxu0 0.0
        %6428 = vmatpush1.msra.mxu0 0.0
        %6429 = vmatprep.subr.mxu0 0.0
        %6430 = vmatpush1.msra.mxu0 0.0
        %6431 = vmatprep.subr.mxu0 0.0
        %6432 = vmatpush1.msra.mxu0 0.0
        %6433 = vmatprep.subr.mxu0 0.0
        %6434 = vmatpush1.msra.mxu0 0.0
        %6435 = vmatprep.subr.mxu0 0.0
        %6436 = vmatpush1.msra.mxu0 0.0
        %6437 = vmatprep.subr.mxu0 0.0
        %6438 = vmatpush1.msra.mxu0 0.0
        %6439 = vmatprep.subr.mxu0 0.0
        %6440 = vmatpush1.msra.mxu0 0.0
        %6441 = vmatprep.subr.mxu0 0.0
        %6442 = vmatpush1.msra.mxu0 0.0
        %6443 = vmatprep.subr.mxu0 0.0
        %6444 = vmatpush1.msra.mxu0 0.0
        %6445 = vmatprep.mubr.f32.mxu0 0.0
        %6446 = vmatmul.mubr.f32.gmra.mrb[0].mxu0 %v1703
        %v6447 = vpop.f32.mrb[0].mxu0
        %v6448 = vadd.f32 0.0, %v6447
        %v6449 = vpop.f32.mrb[0].mxu0
        %6450 = vdwg.mxu0
        %v6452 = vsel %vm1777, %v6448, 0
        %6454 = vmatprep.subr.mxu0 0.0
        %6455 = vmatpush1.msra.mxu0 %v1677
        %6456 = vmatprep.subr.mxu0 0.0
        %6457 = vmatpush1.msra.mxu0 %v1678
        %6458 = vmatprep.subr.mxu0 0.0
        %6459 = vmatpush1.msra.mxu0 %v1679
        %6460 = vmatprep.subr.mxu0 0.0
        %6461 = vmatpush1.msra.mxu0 %v1680
        %6462 = vmatprep.subr.mxu0 0.0
        %6463 = vmatpush1.msra.mxu0 0.0
        %6464 = vmatprep.subr.mxu0 0.0
        %6465 = vmatpush1.msra.mxu0 0.0
        %6466 = vmatprep.subr.mxu0 0.0
        %6467 = vmatpush1.msra.mxu0 0.0
        %6468 = vmatprep.subr.mxu0 0.0
        %6469 = vmatpush1.msra.mxu0 0.0
        %6470 = vmatprep.subr.mxu0 0.0
        %6471 = vmatpush1.msra.mxu0 0.0
        %6472 = vmatprep.subr.mxu0 0.0
        %6473 = vmatpush1.msra.mxu0 0.0
        %6474 = vmatprep.subr.mxu0 0.0
        %6475 = vmatpush1.msra.mxu0 0.0
        %6476 = vmatprep.subr.mxu0 0.0
        %6477 = vmatpush1.msra.mxu0 0.0
        %6478 = vmatprep.subr.mxu0 0.0
        %6479 = vmatpush1.msra.mxu0 0.0
        %6480 = vmatprep.subr.mxu0 0.0
        %6481 = vmatpush1.msra.mxu0 0.0
        %6482 = vmatprep.subr.mxu0 0.0
        %6483 = vmatpush1.msra.mxu0 0.0
        %6484 = vmatprep.subr.mxu0 0.0
        %6485 = vmatpush1.msra.mxu0 0.0
        %6486 = vmatprep.subr.mxu0 0.0
        %6487 = vmatpush1.msra.mxu0 0.0
        %6488 = vmatprep.subr.mxu0 0.0
        %6489 = vmatpush1.msra.mxu0 0.0
        %6490 = vmatprep.subr.mxu0 0.0
        %6491 = vmatpush1.msra.mxu0 0.0
        %6492 = vmatprep.subr.mxu0 0.0
        %6493 = vmatpush1.msra.mxu0 0.0
        %6494 = vmatprep.subr.mxu0 0.0
        %6495 = vmatpush1.msra.mxu0 0.0
        %6496 = vmatprep.subr.mxu0 0.0
        %6497 = vmatpush1.msra.mxu0 0.0
        %6498 = vmatprep.subr.mxu0 0.0
        %6499 = vmatpush1.msra.mxu0 0.0
        %6500 = vmatprep.subr.mxu0 0.0
        %6501 = vmatpush1.msra.mxu0 0.0
        %6502 = vmatprep.subr.mxu0 0.0
        %6503 = vmatpush1.msra.mxu0 0.0
        %6504 = vmatprep.subr.mxu0 0.0
        %6505 = vmatpush1.msra.mxu0 0.0
        %6506 = vmatprep.subr.mxu0 0.0
        %6507 = vmatpush1.msra.mxu0 0.0
        %6508 = vmatprep.subr.mxu0 0.0
        %6509 = vmatpush1.msra.mxu0 0.0
        %6510 = vmatprep.subr.mxu0 0.0
        %6511 = vmatpush1.msra.mxu0 0.0
        %6512 = vmatprep.subr.mxu0 0.0
        %6513 = vmatpush1.msra.mxu0 0.0
        %6514 = vmatprep.subr.mxu0 0.0
        %6515 = vmatpush1.msra.mxu0 0.0
        %6516 = vmatprep.subr.mxu0 0.0
        %6517 = vmatpush1.msra.mxu0 0.0
        %6518 = vmatprep.mubr.f32.mxu0 0.0
        %6519 = vmatmul.mubr.f32.gmra.mrb[0].mxu0 %v6452
        %v6520 = vpop.f32.mrb[0].mxu0
        %v6521 = vadd.f32 0.0, %v6520
        %v6522 = vpop.f32.mrb[0].mxu0
        %6523 = vdwg.mxu0
        %v6524 = vld [vmem:[#allocation2 + $0xd8] sm:$0xff]
        %v6525 = vadd.f32 %v6524, %v6521
        %6526 = vst.msk [vmem:[#allocation2 + $0xd8] sm:$0xff] %vm1853, %v6525
        %v6527 = vld [vmem:[#allocation2 + $0xd8] sm:$0xff]
        %6529 = vrot.lane.b32.xlu0 %v6521, 64
        %v6530 = vpop.permute.xlu0 %6529
        %v6532 = vadd.f32 %v6527, %v6530
        %6533 = vst.msk [vmem:[#allocation2 + $0xd8] sm:$0xff] %vm1861, %v6532
        %v6534 = vld [vmem:[%s314 + $0x1c] sm:$0x1]
        %v6535 = vld [vmem:[%s314 + $0x3c] sm:$0x1]
        %v6536 = vld [vmem:[%s314 + $0x5c] sm:$0x1]
        %v6537 = vld [vmem:[%s314 + $0x7c] sm:$0x1]
        %v6538 = vmax.f32 %v6534, 0.0
        %v6539 = vmax.f32 %v6535, 0.0
        %v6540 = vmax.f32 %v6536, 0.0
        %v6541 = vmax.f32 %v6537, 0.0
        %v6546 = vrot.slane %v6539, 7
        %v6547 = vsel %vm1694, %v6546, %v6538
        %v6548 = vrot.slane %v6540, 6
        %v6549 = vsel %vm1697, %v6548, %v6547
        %v6550 = vrot.slane %v6541, 5
        %v6551 = vsel %vm1700, %v6550, %v6549
        %v6552 = vsel %vm443, %v6551, 0
        %6554 = vmatprep.subr.mxu0 0.0
        %6555 = vmatpush1.msra.mxu0 %v6552
        %6556 = vmatprep.subr.mxu0 0.0
        %6557 = vmatpush1.msra.mxu0 0.0
        %6558 = vmatprep.subr.mxu0 0.0
        %6559 = vmatpush1.msra.mxu0 0.0
        %6560 = vmatprep.subr.mxu0 0.0
        %6561 = vmatpush1.msra.mxu0 0.0
        %6562 = vmatprep.subr.mxu0 0.0
        %6563 = vmatpush1.msra.mxu0 0.0
        %6564 = vmatprep.subr.mxu0 0.0
        %6565 = vmatpush1.msra.mxu0 0.0
        %6566 = vmatprep.subr.mxu0 0.0
        %6567 = vmatpush1.msra.mxu0 0.0
        %6568 = vmatprep.subr.mxu0 0.0
        %6569 = vmatpush1.msra.mxu0 0.0
        %6570 = vmatprep.subr.mxu0 0.0
        %6571 = vmatpush1.msra.mxu0 0.0
        %6572 = vmatprep.subr.mxu0 0.0
        %6573 = vmatpush1.msra.mxu0 0.0
        %6574 = vmatprep.subr.mxu0 0.0
        %6575 = vmatpush1.msra.mxu0 0.0
        %6576 = vmatprep.subr.mxu0 0.0
        %6577 = vmatpush1.msra.mxu0 0.0
        %6578 = vmatprep.subr.mxu0 0.0
        %6579 = vmatpush1.msra.mxu0 0.0
        %6580 = vmatprep.subr.mxu0 0.0
        %6581 = vmatpush1.msra.mxu0 0.0
        %6582 = vmatprep.subr.mxu0 0.0
        %6583 = vmatpush1.msra.mxu0 0.0
        %6584 = vmatprep.subr.mxu0 0.0
        %6585 = vmatpush1.msra.mxu0 0.0
        %6586 = vmatprep.subr.mxu0 0.0
        %6587 = vmatpush1.msra.mxu0 0.0
        %6588 = vmatprep.subr.mxu0 0.0
        %6589 = vmatpush1.msra.mxu0 0.0
        %6590 = vmatprep.subr.mxu0 0.0
        %6591 = vmatpush1.msra.mxu0 0.0
        %6592 = vmatprep.subr.mxu0 0.0
        %6593 = vmatpush1.msra.mxu0 0.0
        %6594 = vmatprep.subr.mxu0 0.0
        %6595 = vmatpush1.msra.mxu0 0.0
        %6596 = vmatprep.subr.mxu0 0.0
        %6597 = vmatpush1.msra.mxu0 0.0
        %6598 = vmatprep.subr.mxu0 0.0
        %6599 = vmatpush1.msra.mxu0 0.0
        %6600 = vmatprep.subr.mxu0 0.0
        %6601 = vmatpush1.msra.mxu0 0.0
        %6602 = vmatprep.subr.mxu0 0.0
        %6603 = vmatpush1.msra.mxu0 0.0
        %6604 = vmatprep.subr.mxu0 0.0
        %6605 = vmatpush1.msra.mxu0 0.0
        %6606 = vmatprep.subr.mxu0 0.0
        %6607 = vmatpush1.msra.mxu0 0.0
        %6608 = vmatprep.subr.mxu0 0.0
        %6609 = vmatpush1.msra.mxu0 0.0
        %6610 = vmatprep.subr.mxu0 0.0
        %6611 = vmatpush1.msra.mxu0 0.0
        %6612 = vmatprep.subr.mxu0 0.0
        %6613 = vmatpush1.msra.mxu0 0.0
        %6614 = vmatprep.subr.mxu0 0.0
        %6615 = vmatpush1.msra.mxu0 0.0
        %6616 = vmatprep.subr.mxu0 0.0
        %6617 = vmatpush1.msra.mxu0 0.0
        %6618 = vmatprep.mubr.f32.mxu0 0.0
        %6619 = vmatmul.mubr.f32.gmra.mrb[0].mxu0 %v1703
        %v6620 = vpop.f32.mrb[0].mxu0
        %v6621 = vadd.f32 0.0, %v6620
        %v6622 = vpop.f32.mrb[0].mxu0
        %6623 = vdwg.mxu0
        %v6625 = vsel %vm1777, %v6621, 0
        %6627 = vmatprep.subr.mxu0 0.0
        %6628 = vmatpush1.msra.mxu0 %v1677
        %6629 = vmatprep.subr.mxu0 0.0
        %6630 = vmatpush1.msra.mxu0 %v1678
        %6631 = vmatprep.subr.mxu0 0.0
        %6632 = vmatpush1.msra.mxu0 %v1679
        %6633 = vmatprep.subr.mxu0 0.0
        %6634 = vmatpush1.msra.mxu0 %v1680
        %6635 = vmatprep.subr.mxu0 0.0
        %6636 = vmatpush1.msra.mxu0 0.0
        %6637 = vmatprep.subr.mxu0 0.0
        %6638 = vmatpush1.msra.mxu0 0.0
        %6639 = vmatprep.subr.mxu0 0.0
        %6640 = vmatpush1.msra.mxu0 0.0
        %6641 = vmatprep.subr.mxu0 0.0
        %6642 = vmatpush1.msra.mxu0 0.0
        %6643 = vmatprep.subr.mxu0 0.0
        %6644 = vmatpush1.msra.mxu0 0.0
        %6645 = vmatprep.subr.mxu0 0.0
        %6646 = vmatpush1.msra.mxu0 0.0
        %6647 = vmatprep.subr.mxu0 0.0
        %6648 = vmatpush1.msra.mxu0 0.0
        %6649 = vmatprep.subr.mxu0 0.0
        %6650 = vmatpush1.msra.mxu0 0.0
        %6651 = vmatprep.subr.mxu0 0.0
        %6652 = vmatpush1.msra.mxu0 0.0
        %6653 = vmatprep.subr.mxu0 0.0
        %6654 = vmatpush1.msra.mxu0 0.0
        %6655 = vmatprep.subr.mxu0 0.0
        %6656 = vmatpush1.msra.mxu0 0.0
        %6657 = vmatprep.subr.mxu0 0.0
        %6658 = vmatpush1.msra.mxu0 0.0
        %6659 = vmatprep.subr.mxu0 0.0
        %6660 = vmatpush1.msra.mxu0 0.0
        %6661 = vmatprep.subr.mxu0 0.0
        %6662 = vmatpush1.msra.mxu0 0.0
        %6663 = vmatprep.subr.mxu0 0.0
        %6664 = vmatpush1.msra.mxu0 0.0
        %6665 = vmatprep.subr.mxu0 0.0
        %6666 = vmatpush1.msra.mxu0 0.0
        %6667 = vmatprep.subr.mxu0 0.0
        %6668 = vmatpush1.msra.mxu0 0.0
        %6669 = vmatprep.subr.mxu0 0.0
        %6670 = vmatpush1.msra.mxu0 0.0
        %6671 = vmatprep.subr.mxu0 0.0
        %6672 = vmatpush1.msra.mxu0 0.0
        %6673 = vmatprep.subr.mxu0 0.0
        %6674 = vmatpush1.msra.mxu0 0.0
        %6675 = vmatprep.subr.mxu0 0.0
        %6676 = vmatpush1.msra.mxu0 0.0
        %6677 = vmatprep.subr.mxu0 0.0
        %6678 = vmatpush1.msra.mxu0 0.0
        %6679 = vmatprep.subr.mxu0 0.0
        %6680 = vmatpush1.msra.mxu0 0.0
        %6681 = vmatprep.subr.mxu0 0.0
        %6682 = vmatpush1.msra.mxu0 0.0
        %6683 = vmatprep.subr.mxu0 0.0
        %6684 = vmatpush1.msra.mxu0 0.0
        %6685 = vmatprep.subr.mxu0 0.0
        %6686 = vmatpush1.msra.mxu0 0.0
        %6687 = vmatprep.subr.mxu0 0.0
        %6688 = vmatpush1.msra.mxu0 0.0
        %6689 = vmatprep.subr.mxu0 0.0
        %6690 = vmatpush1.msra.mxu0 0.0
        %6691 = vmatprep.mubr.f32.mxu0 0.0
        %6692 = vmatmul.mubr.f32.gmra.mrb[0].mxu0 %v6625
        %v6693 = vpop.f32.mrb[0].mxu0
        %v6694 = vadd.f32 0.0, %v6693
        %v6695 = vpop.f32.mrb[0].mxu0
        %6696 = vdwg.mxu0
        %v6697 = vld [vmem:[#allocation2 + $0xe0] sm:$0xff]
        %v6698 = vadd.f32 %v6697, %v6694
        %6699 = vst.msk [vmem:[#allocation2 + $0xe0] sm:$0xff] %vm1853, %v6698
        %v6700 = vld [vmem:[#allocation2 + $0xe0] sm:$0xff]
        %6702 = vrot.lane.b32.xlu0 %v6694, 64
        %v6703 = vpop.permute.xlu0 %6702
        %v6705 = vadd.f32 %v6700, %v6703
        %6706 = vst.msk [vmem:[#allocation2 + $0xe0] sm:$0xff] %vm1861, %v6705
        %v6707 = vld [vmem:[%s314 + $0x1d] sm:$0x1]
        %v6708 = vld [vmem:[%s314 + $0x3d] sm:$0x1]
        %v6709 = vld [vmem:[%s314 + $0x5d] sm:$0x1]
        %v6710 = vld [vmem:[%s314 + $0x7d] sm:$0x1]
        %v6711 = vmax.f32 %v6707, 0.0
        %v6712 = vmax.f32 %v6708, 0.0
        %v6713 = vmax.f32 %v6709, 0.0
        %v6714 = vmax.f32 %v6710, 0.0
        %v6719 = vrot.slane %v6712, 7
        %v6720 = vsel %vm1694, %v6719, %v6711
        %v6721 = vrot.slane %v6713, 6
        %v6722 = vsel %vm1697, %v6721, %v6720
        %v6723 = vrot.slane %v6714, 5
        %v6724 = vsel %vm1700, %v6723, %v6722
        %v6725 = vsel %vm443, %v6724, 0
        %6727 = vmatprep.subr.mxu0 0.0
        %6728 = vmatpush1.msra.mxu0 %v6725
        %6729 = vmatprep.subr.mxu0 0.0
        %6730 = vmatpush1.msra.mxu0 0.0
        %6731 = vmatprep.subr.mxu0 0.0
        %6732 = vmatpush1.msra.mxu0 0.0
        %6733 = vmatprep.subr.mxu0 0.0
        %6734 = vmatpush1.msra.mxu0 0.0
        %6735 = vmatprep.subr.mxu0 0.0
        %6736 = vmatpush1.msra.mxu0 0.0
        %6737 = vmatprep.subr.mxu0 0.0
        %6738 = vmatpush1.msra.mxu0 0.0
        %6739 = vmatprep.subr.mxu0 0.0
        %6740 = vmatpush1.msra.mxu0 0.0
        %6741 = vmatprep.subr.mxu0 0.0
        %6742 = vmatpush1.msra.mxu0 0.0
        %6743 = vmatprep.subr.mxu0 0.0
        %6744 = vmatpush1.msra.mxu0 0.0
        %6745 = vmatprep.subr.mxu0 0.0
        %6746 = vmatpush1.msra.mxu0 0.0
        %6747 = vmatprep.subr.mxu0 0.0
        %6748 = vmatpush1.msra.mxu0 0.0
        %6749 = vmatprep.subr.mxu0 0.0
        %6750 = vmatpush1.msra.mxu0 0.0
        %6751 = vmatprep.subr.mxu0 0.0
        %6752 = vmatpush1.msra.mxu0 0.0
        %6753 = vmatprep.subr.mxu0 0.0
        %6754 = vmatpush1.msra.mxu0 0.0
        %6755 = vmatprep.subr.mxu0 0.0
        %6756 = vmatpush1.msra.mxu0 0.0
        %6757 = vmatprep.subr.mxu0 0.0
        %6758 = vmatpush1.msra.mxu0 0.0
        %6759 = vmatprep.subr.mxu0 0.0
        %6760 = vmatpush1.msra.mxu0 0.0
        %6761 = vmatprep.subr.mxu0 0.0
        %6762 = vmatpush1.msra.mxu0 0.0
        %6763 = vmatprep.subr.mxu0 0.0
        %6764 = vmatpush1.msra.mxu0 0.0
        %6765 = vmatprep.subr.mxu0 0.0
        %6766 = vmatpush1.msra.mxu0 0.0
        %6767 = vmatprep.subr.mxu0 0.0
        %6768 = vmatpush1.msra.mxu0 0.0
        %6769 = vmatprep.subr.mxu0 0.0
        %6770 = vmatpush1.msra.mxu0 0.0
        %6771 = vmatprep.subr.mxu0 0.0
        %6772 = vmatpush1.msra.mxu0 0.0
        %6773 = vmatprep.subr.mxu0 0.0
        %6774 = vmatpush1.msra.mxu0 0.0
        %6775 = vmatprep.subr.mxu0 0.0
        %6776 = vmatpush1.msra.mxu0 0.0
        %6777 = vmatprep.subr.mxu0 0.0
        %6778 = vmatpush1.msra.mxu0 0.0
        %6779 = vmatprep.subr.mxu0 0.0
        %6780 = vmatpush1.msra.mxu0 0.0
        %6781 = vmatprep.subr.mxu0 0.0
        %6782 = vmatpush1.msra.mxu0 0.0
        %6783 = vmatprep.subr.mxu0 0.0
        %6784 = vmatpush1.msra.mxu0 0.0
        %6785 = vmatprep.subr.mxu0 0.0
        %6786 = vmatpush1.msra.mxu0 0.0
        %6787 = vmatprep.subr.mxu0 0.0
        %6788 = vmatpush1.msra.mxu0 0.0
        %6789 = vmatprep.subr.mxu0 0.0
        %6790 = vmatpush1.msra.mxu0 0.0
        %6791 = vmatprep.mubr.f32.mxu0 0.0
        %6792 = vmatmul.mubr.f32.gmra.mrb[0].mxu0 %v1703
        %v6793 = vpop.f32.mrb[0].mxu0
        %v6794 = vadd.f32 0.0, %v6793
        %v6795 = vpop.f32.mrb[0].mxu0
        %6796 = vdwg.mxu0
        %v6798 = vsel %vm1777, %v6794, 0
        %6800 = vmatprep.subr.mxu0 0.0
        %6801 = vmatpush1.msra.mxu0 %v1677
        %6802 = vmatprep.subr.mxu0 0.0
        %6803 = vmatpush1.msra.mxu0 %v1678
        %6804 = vmatprep.subr.mxu0 0.0
        %6805 = vmatpush1.msra.mxu0 %v1679
        %6806 = vmatprep.subr.mxu0 0.0
        %6807 = vmatpush1.msra.mxu0 %v1680
        %6808 = vmatprep.subr.mxu0 0.0
        %6809 = vmatpush1.msra.mxu0 0.0
        %6810 = vmatprep.subr.mxu0 0.0
        %6811 = vmatpush1.msra.mxu0 0.0
        %6812 = vmatprep.subr.mxu0 0.0
        %6813 = vmatpush1.msra.mxu0 0.0
        %6814 = vmatprep.subr.mxu0 0.0
        %6815 = vmatpush1.msra.mxu0 0.0
        %6816 = vmatprep.subr.mxu0 0.0
        %6817 = vmatpush1.msra.mxu0 0.0
        %6818 = vmatprep.subr.mxu0 0.0
        %6819 = vmatpush1.msra.mxu0 0.0
        %6820 = vmatprep.subr.mxu0 0.0
        %6821 = vmatpush1.msra.mxu0 0.0
        %6822 = vmatprep.subr.mxu0 0.0
        %6823 = vmatpush1.msra.mxu0 0.0
        %6824 = vmatprep.subr.mxu0 0.0
        %6825 = vmatpush1.msra.mxu0 0.0
        %6826 = vmatprep.subr.mxu0 0.0
        %6827 = vmatpush1.msra.mxu0 0.0
        %6828 = vmatprep.subr.mxu0 0.0
        %6829 = vmatpush1.msra.mxu0 0.0
        %6830 = vmatprep.subr.mxu0 0.0
        %6831 = vmatpush1.msra.mxu0 0.0
        %6832 = vmatprep.subr.mxu0 0.0
        %6833 = vmatpush1.msra.mxu0 0.0
        %6834 = vmatprep.subr.mxu0 0.0
        %6835 = vmatpush1.msra.mxu0 0.0
        %6836 = vmatprep.subr.mxu0 0.0
        %6837 = vmatpush1.msra.mxu0 0.0
        %6838 = vmatprep.subr.mxu0 0.0
        %6839 = vmatpush1.msra.mxu0 0.0
        %6840 = vmatprep.subr.mxu0 0.0
        %6841 = vmatpush1.msra.mxu0 0.0
        %6842 = vmatprep.subr.mxu0 0.0
        %6843 = vmatpush1.msra.mxu0 0.0
        %6844 = vmatprep.subr.mxu0 0.0
        %6845 = vmatpush1.msra.mxu0 0.0
        %6846 = vmatprep.subr.mxu0 0.0
        %6847 = vmatpush1.msra.mxu0 0.0
        %6848 = vmatprep.subr.mxu0 0.0
        %6849 = vmatpush1.msra.mxu0 0.0
        %6850 = vmatprep.subr.mxu0 0.0
        %6851 = vmatpush1.msra.mxu0 0.0
        %6852 = vmatprep.subr.mxu0 0.0
        %6853 = vmatpush1.msra.mxu0 0.0
        %6854 = vmatprep.subr.mxu0 0.0
        %6855 = vmatpush1.msra.mxu0 0.0
        %6856 = vmatprep.subr.mxu0 0.0
        %6857 = vmatpush1.msra.mxu0 0.0
        %6858 = vmatprep.subr.mxu0 0.0
        %6859 = vmatpush1.msra.mxu0 0.0
        %6860 = vmatprep.subr.mxu0 0.0
        %6861 = vmatpush1.msra.mxu0 0.0
        %6862 = vmatprep.subr.mxu0 0.0
        %6863 = vmatpush1.msra.mxu0 0.0
        %6864 = vmatprep.mubr.f32.mxu0 0.0
        %6865 = vmatmul.mubr.f32.gmra.mrb[0].mxu0 %v6798
        %v6866 = vpop.f32.mrb[0].mxu0
        %v6867 = vadd.f32 0.0, %v6866
        %v6868 = vpop.f32.mrb[0].mxu0
        %6869 = vdwg.mxu0
        %v6870 = vld [vmem:[#allocation2 + $0xe8] sm:$0xff]
        %v6871 = vadd.f32 %v6870, %v6867
        %6872 = vst.msk [vmem:[#allocation2 + $0xe8] sm:$0xff] %vm1853, %v6871
        %v6873 = vld [vmem:[#allocation2 + $0xe8] sm:$0xff]
        %6875 = vrot.lane.b32.xlu0 %v6867, 64
        %v6876 = vpop.permute.xlu0 %6875
        %v6878 = vadd.f32 %v6873, %v6876
        %6879 = vst.msk [vmem:[#allocation2 + $0xe8] sm:$0xff] %vm1861, %v6878
        %v6880 = vld [vmem:[%s314 + $0x1e] sm:$0x1]
        %v6881 = vld [vmem:[%s314 + $0x3e] sm:$0x1]
        %v6882 = vld [vmem:[%s314 + $0x5e] sm:$0x1]
        %v6883 = vld [vmem:[%s314 + $0x7e] sm:$0x1]
        %v6884 = vmax.f32 %v6880, 0.0
        %v6885 = vmax.f32 %v6881, 0.0
        %v6886 = vmax.f32 %v6882, 0.0
        %v6887 = vmax.f32 %v6883, 0.0
        %v6892 = vrot.slane %v6885, 7
        %v6893 = vsel %vm1694, %v6892, %v6884
        %v6894 = vrot.slane %v6886, 6
        %v6895 = vsel %vm1697, %v6894, %v6893
        %v6896 = vrot.slane %v6887, 5
        %v6897 = vsel %vm1700, %v6896, %v6895
        %v6898 = vsel %vm443, %v6897, 0
        %6900 = vmatprep.subr.mxu0 0.0
        %6901 = vmatpush1.msra.mxu0 %v6898
        %6902 = vmatprep.subr.mxu0 0.0
        %6903 = vmatpush1.msra.mxu0 0.0
        %6904 = vmatprep.subr.mxu0 0.0
        %6905 = vmatpush1.msra.mxu0 0.0
        %6906 = vmatprep.subr.mxu0 0.0
        %6907 = vmatpush1.msra.mxu0 0.0
        %6908 = vmatprep.subr.mxu0 0.0
        %6909 = vmatpush1.msra.mxu0 0.0
        %6910 = vmatprep.subr.mxu0 0.0
        %6911 = vmatpush1.msra.mxu0 0.0
        %6912 = vmatprep.subr.mxu0 0.0
        %6913 = vmatpush1.msra.mxu0 0.0
        %6914 = vmatprep.subr.mxu0 0.0
        %6915 = vmatpush1.msra.mxu0 0.0
        %6916 = vmatprep.subr.mxu0 0.0
        %6917 = vmatpush1.msra.mxu0 0.0
        %6918 = vmatprep.subr.mxu0 0.0
        %6919 = vmatpush1.msra.mxu0 0.0
        %6920 = vmatprep.subr.mxu0 0.0
        %6921 = vmatpush1.msra.mxu0 0.0
        %6922 = vmatprep.subr.mxu0 0.0
        %6923 = vmatpush1.msra.mxu0 0.0
        %6924 = vmatprep.subr.mxu0 0.0
        %6925 = vmatpush1.msra.mxu0 0.0
        %6926 = vmatprep.subr.mxu0 0.0
        %6927 = vmatpush1.msra.mxu0 0.0
        %6928 = vmatprep.subr.mxu0 0.0
        %6929 = vmatpush1.msra.mxu0 0.0
        %6930 = vmatprep.subr.mxu0 0.0
        %6931 = vmatpush1.msra.mxu0 0.0
        %6932 = vmatprep.subr.mxu0 0.0
        %6933 = vmatpush1.msra.mxu0 0.0
        %6934 = vmatprep.subr.mxu0 0.0
        %6935 = vmatpush1.msra.mxu0 0.0
        %6936 = vmatprep.subr.mxu0 0.0
        %6937 = vmatpush1.msra.mxu0 0.0
        %6938 = vmatprep.subr.mxu0 0.0
        %6939 = vmatpush1.msra.mxu0 0.0
        %6940 = vmatprep.subr.mxu0 0.0
        %6941 = vmatpush1.msra.mxu0 0.0
        %6942 = vmatprep.subr.mxu0 0.0
        %6943 = vmatpush1.msra.mxu0 0.0
        %6944 = vmatprep.subr.mxu0 0.0
        %6945 = vmatpush1.msra.mxu0 0.0
        %6946 = vmatprep.subr.mxu0 0.0
        %6947 = vmatpush1.msra.mxu0 0.0
        %6948 = vmatprep.subr.mxu0 0.0
        %6949 = vmatpush1.msra.mxu0 0.0
        %6950 = vmatprep.subr.mxu0 0.0
        %6951 = vmatpush1.msra.mxu0 0.0
        %6952 = vmatprep.subr.mxu0 0.0
        %6953 = vmatpush1.msra.mxu0 0.0
        %6954 = vmatprep.subr.mxu0 0.0
        %6955 = vmatpush1.msra.mxu0 0.0
        %6956 = vmatprep.subr.mxu0 0.0
        %6957 = vmatpush1.msra.mxu0 0.0
        %6958 = vmatprep.subr.mxu0 0.0
        %6959 = vmatpush1.msra.mxu0 0.0
        %6960 = vmatprep.subr.mxu0 0.0
        %6961 = vmatpush1.msra.mxu0 0.0
        %6962 = vmatprep.subr.mxu0 0.0
        %6963 = vmatpush1.msra.mxu0 0.0
        %6964 = vmatprep.mubr.f32.mxu0 0.0
        %6965 = vmatmul.mubr.f32.gmra.mrb[0].mxu0 %v1703
        %v6966 = vpop.f32.mrb[0].mxu0
        %v6967 = vadd.f32 0.0, %v6966
        %v6968 = vpop.f32.mrb[0].mxu0
        %6969 = vdwg.mxu0
        %v6971 = vsel %vm1777, %v6967, 0
        %6973 = vmatprep.subr.mxu0 0.0
        %6974 = vmatpush1.msra.mxu0 %v1677
        %6975 = vmatprep.subr.mxu0 0.0
        %6976 = vmatpush1.msra.mxu0 %v1678
        %6977 = vmatprep.subr.mxu0 0.0
        %6978 = vmatpush1.msra.mxu0 %v1679
        %6979 = vmatprep.subr.mxu0 0.0
        %6980 = vmatpush1.msra.mxu0 %v1680
        %6981 = vmatprep.subr.mxu0 0.0
        %6982 = vmatpush1.msra.mxu0 0.0
        %6983 = vmatprep.subr.mxu0 0.0
        %6984 = vmatpush1.msra.mxu0 0.0
        %6985 = vmatprep.subr.mxu0 0.0
        %6986 = vmatpush1.msra.mxu0 0.0
        %6987 = vmatprep.subr.mxu0 0.0
        %6988 = vmatpush1.msra.mxu0 0.0
        %6989 = vmatprep.subr.mxu0 0.0
        %6990 = vmatpush1.msra.mxu0 0.0
        %6991 = vmatprep.subr.mxu0 0.0
        %6992 = vmatpush1.msra.mxu0 0.0
        %6993 = vmatprep.subr.mxu0 0.0
        %6994 = vmatpush1.msra.mxu0 0.0
        %6995 = vmatprep.subr.mxu0 0.0
        %6996 = vmatpush1.msra.mxu0 0.0
        %6997 = vmatprep.subr.mxu0 0.0
        %6998 = vmatpush1.msra.mxu0 0.0
        %6999 = vmatprep.subr.mxu0 0.0
        %7000 = vmatpush1.msra.mxu0 0.0
        %7001 = vmatprep.subr.mxu0 0.0
        %7002 = vmatpush1.msra.mxu0 0.0
        %7003 = vmatprep.subr.mxu0 0.0
        %7004 = vmatpush1.msra.mxu0 0.0
        %7005 = vmatprep.subr.mxu0 0.0
        %7006 = vmatpush1.msra.mxu0 0.0
        %7007 = vmatprep.subr.mxu0 0.0
        %7008 = vmatpush1.msra.mxu0 0.0
        %7009 = vmatprep.subr.mxu0 0.0
        %7010 = vmatpush1.msra.mxu0 0.0
        %7011 = vmatprep.subr.mxu0 0.0
        %7012 = vmatpush1.msra.mxu0 0.0
        %7013 = vmatprep.subr.mxu0 0.0
        %7014 = vmatpush1.msra.mxu0 0.0
        %7015 = vmatprep.subr.mxu0 0.0
        %7016 = vmatpush1.msra.mxu0 0.0
        %7017 = vmatprep.subr.mxu0 0.0
        %7018 = vmatpush1.msra.mxu0 0.0
        %7019 = vmatprep.subr.mxu0 0.0
        %7020 = vmatpush1.msra.mxu0 0.0
        %7021 = vmatprep.subr.mxu0 0.0
        %7022 = vmatpush1.msra.mxu0 0.0
        %7023 = vmatprep.subr.mxu0 0.0
        %7024 = vmatpush1.msra.mxu0 0.0
        %7025 = vmatprep.subr.mxu0 0.0
        %7026 = vmatpush1.msra.mxu0 0.0
        %7027 = vmatprep.subr.mxu0 0.0
        %7028 = vmatpush1.msra.mxu0 0.0
        %7029 = vmatprep.subr.mxu0 0.0
        %7030 = vmatpush1.msra.mxu0 0.0
        %7031 = vmatprep.subr.mxu0 0.0
        %7032 = vmatpush1.msra.mxu0 0.0
        %7033 = vmatprep.subr.mxu0 0.0
        %7034 = vmatpush1.msra.mxu0 0.0
        %7035 = vmatprep.subr.mxu0 0.0
        %7036 = vmatpush1.msra.mxu0 0.0
        %7037 = vmatprep.mubr.f32.mxu0 0.0
        %7038 = vmatmul.mubr.f32.gmra.mrb[0].mxu0 %v6971
        %v7039 = vpop.f32.mrb[0].mxu0
        %v7040 = vadd.f32 0.0, %v7039
        %v7041 = vpop.f32.mrb[0].mxu0
        %7042 = vdwg.mxu0
        %v7043 = vld [vmem:[#allocation2 + $0xf0] sm:$0xff]
        %v7044 = vadd.f32 %v7043, %v7040
        %7045 = vst.msk [vmem:[#allocation2 + $0xf0] sm:$0xff] %vm1853, %v7044
        %v7046 = vld [vmem:[#allocation2 + $0xf0] sm:$0xff]
        %7048 = vrot.lane.b32.xlu0 %v7040, 64
        %v7049 = vpop.permute.xlu0 %7048
        %v7051 = vadd.f32 %v7046, %v7049
        %7052 = vst.msk [vmem:[#allocation2 + $0xf0] sm:$0xff] %vm1861, %v7051
        %v7053 = vld [vmem:[%s314 + $0x1f] sm:$0x1]
        %v7054 = vld [vmem:[%s314 + $0x3f] sm:$0x1]
        %v7055 = vld [vmem:[%s314 + $0x5f] sm:$0x1]
        %v7056 = vld [vmem:[%s314 + $0x7f] sm:$0x1]
        %v7057 = vmax.f32 %v7053, 0.0
        %v7058 = vmax.f32 %v7054, 0.0
        %v7059 = vmax.f32 %v7055, 0.0
        %v7060 = vmax.f32 %v7056, 0.0
        %v7065 = vrot.slane %v7058, 7
        %v7066 = vsel %vm1694, %v7065, %v7057
        %v7067 = vrot.slane %v7059, 6
        %v7068 = vsel %vm1697, %v7067, %v7066
        %v7069 = vrot.slane %v7060, 5
        %v7070 = vsel %vm1700, %v7069, %v7068
        %v7071 = vsel %vm443, %v7070, 0
        %7073 = vmatprep.subr.mxu0 0.0
        %7074 = vmatpush1.msra.mxu0 %v7071
        %7075 = vmatprep.subr.mxu0 0.0
        %7076 = vmatpush1.msra.mxu0 0.0
        %7077 = vmatprep.subr.mxu0 0.0
        %7078 = vmatpush1.msra.mxu0 0.0
        %7079 = vmatprep.subr.mxu0 0.0
        %7080 = vmatpush1.msra.mxu0 0.0
        %7081 = vmatprep.subr.mxu0 0.0
        %7082 = vmatpush1.msra.mxu0 0.0
        %7083 = vmatprep.subr.mxu0 0.0
        %7084 = vmatpush1.msra.mxu0 0.0
        %7085 = vmatprep.subr.mxu0 0.0
        %7086 = vmatpush1.msra.mxu0 0.0
        %7087 = vmatprep.subr.mxu0 0.0
        %7088 = vmatpush1.msra.mxu0 0.0
        %7089 = vmatprep.subr.mxu0 0.0
        %7090 = vmatpush1.msra.mxu0 0.0
        %7091 = vmatprep.subr.mxu0 0.0
        %7092 = vmatpush1.msra.mxu0 0.0
        %7093 = vmatprep.subr.mxu0 0.0
        %7094 = vmatpush1.msra.mxu0 0.0
        %7095 = vmatprep.subr.mxu0 0.0
        %7096 = vmatpush1.msra.mxu0 0.0
        %7097 = vmatprep.subr.mxu0 0.0
        %7098 = vmatpush1.msra.mxu0 0.0
        %7099 = vmatprep.subr.mxu0 0.0
        %7100 = vmatpush1.msra.mxu0 0.0
        %7101 = vmatprep.subr.mxu0 0.0
        %7102 = vmatpush1.msra.mxu0 0.0
        %7103 = vmatprep.subr.mxu0 0.0
        %7104 = vmatpush1.msra.mxu0 0.0
        %7105 = vmatprep.subr.mxu0 0.0
        %7106 = vmatpush1.msra.mxu0 0.0
        %7107 = vmatprep.subr.mxu0 0.0
        %7108 = vmatpush1.msra.mxu0 0.0
        %7109 = vmatprep.subr.mxu0 0.0
        %7110 = vmatpush1.msra.mxu0 0.0
        %7111 = vmatprep.subr.mxu0 0.0
        %7112 = vmatpush1.msra.mxu0 0.0
        %7113 = vmatprep.subr.mxu0 0.0
        %7114 = vmatpush1.msra.mxu0 0.0
        %7115 = vmatprep.subr.mxu0 0.0
        %7116 = vmatpush1.msra.mxu0 0.0
        %7117 = vmatprep.subr.mxu0 0.0
        %7118 = vmatpush1.msra.mxu0 0.0
        %7119 = vmatprep.subr.mxu0 0.0
        %7120 = vmatpush1.msra.mxu0 0.0
        %7121 = vmatprep.subr.mxu0 0.0
        %7122 = vmatpush1.msra.mxu0 0.0
        %7123 = vmatprep.subr.mxu0 0.0
        %7124 = vmatpush1.msra.mxu0 0.0
        %7125 = vmatprep.subr.mxu0 0.0
        %7126 = vmatpush1.msra.mxu0 0.0
        %7127 = vmatprep.subr.mxu0 0.0
        %7128 = vmatpush1.msra.mxu0 0.0
        %7129 = vmatprep.subr.mxu0 0.0
        %7130 = vmatpush1.msra.mxu0 0.0
        %7131 = vmatprep.subr.mxu0 0.0
        %7132 = vmatpush1.msra.mxu0 0.0
        %7133 = vmatprep.subr.mxu0 0.0
        %7134 = vmatpush1.msra.mxu0 0.0
        %7135 = vmatprep.subr.mxu0 0.0
        %7136 = vmatpush1.msra.mxu0 0.0
        %7137 = vmatprep.mubr.f32.mxu0 0.0
        %7138 = vmatmul.mubr.f32.gmra.mrb[0].mxu0 %v1703
        %v7139 = vpop.f32.mrb[0].mxu0
        %v7140 = vadd.f32 0.0, %v7139
        %v7141 = vpop.f32.mrb[0].mxu0
        %7142 = vdwg.mxu0
        %v7144 = vsel %vm1777, %v7140, 0
        %7146 = vmatprep.subr.mxu0 0.0
        %7147 = vmatpush1.msra.mxu0 %v1677
        %7148 = vmatprep.subr.mxu0 0.0
        %7149 = vmatpush1.msra.mxu0 %v1678
        %7150 = vmatprep.subr.mxu0 0.0
        %7151 = vmatpush1.msra.mxu0 %v1679
        %7152 = vmatprep.subr.mxu0 0.0
        %7153 = vmatpush1.msra.mxu0 %v1680
        %7154 = vmatprep.subr.mxu0 0.0
        %7155 = vmatpush1.msra.mxu0 0.0
        %7156 = vmatprep.subr.mxu0 0.0
        %7157 = vmatpush1.msra.mxu0 0.0
        %7158 = vmatprep.subr.mxu0 0.0
        %7159 = vmatpush1.msra.mxu0 0.0
        %7160 = vmatprep.subr.mxu0 0.0
        %7161 = vmatpush1.msra.mxu0 0.0
        %7162 = vmatprep.subr.mxu0 0.0
        %7163 = vmatpush1.msra.mxu0 0.0
        %7164 = vmatprep.subr.mxu0 0.0
        %7165 = vmatpush1.msra.mxu0 0.0
        %7166 = vmatprep.subr.mxu0 0.0
        %7167 = vmatpush1.msra.mxu0 0.0
        %7168 = vmatprep.subr.mxu0 0.0
        %7169 = vmatpush1.msra.mxu0 0.0
        %7170 = vmatprep.subr.mxu0 0.0
        %7171 = vmatpush1.msra.mxu0 0.0
        %7172 = vmatprep.subr.mxu0 0.0
        %7173 = vmatpush1.msra.mxu0 0.0
        %7174 = vmatprep.subr.mxu0 0.0
        %7175 = vmatpush1.msra.mxu0 0.0
        %7176 = vmatprep.subr.mxu0 0.0
        %7177 = vmatpush1.msra.mxu0 0.0
        %7178 = vmatprep.subr.mxu0 0.0
        %7179 = vmatpush1.msra.mxu0 0.0
        %7180 = vmatprep.subr.mxu0 0.0
        %7181 = vmatpush1.msra.mxu0 0.0
        %7182 = vmatprep.subr.mxu0 0.0
        %7183 = vmatpush1.msra.mxu0 0.0
        %7184 = vmatprep.subr.mxu0 0.0
        %7185 = vmatpush1.msra.mxu0 0.0
        %7186 = vmatprep.subr.mxu0 0.0
        %7187 = vmatpush1.msra.mxu0 0.0
        %7188 = vmatprep.subr.mxu0 0.0
        %7189 = vmatpush1.msra.mxu0 0.0
        %7190 = vmatprep.subr.mxu0 0.0
        %7191 = vmatpush1.msra.mxu0 0.0
        %7192 = vmatprep.subr.mxu0 0.0
        %7193 = vmatpush1.msra.mxu0 0.0
        %7194 = vmatprep.subr.mxu0 0.0
        %7195 = vmatpush1.msra.mxu0 0.0
        %7196 = vmatprep.subr.mxu0 0.0
        %7197 = vmatpush1.msra.mxu0 0.0
        %7198 = vmatprep.subr.mxu0 0.0
        %7199 = vmatpush1.msra.mxu0 0.0
        %7200 = vmatprep.subr.mxu0 0.0
        %7201 = vmatpush1.msra.mxu0 0.0
        %7202 = vmatprep.subr.mxu0 0.0
        %7203 = vmatpush1.msra.mxu0 0.0
        %7204 = vmatprep.subr.mxu0 0.0
        %7205 = vmatpush1.msra.mxu0 0.0
        %7206 = vmatprep.subr.mxu0 0.0
        %7207 = vmatpush1.msra.mxu0 0.0
        %7208 = vmatprep.subr.mxu0 0.0
        %7209 = vmatpush1.msra.mxu0 0.0
        %7210 = vmatprep.mubr.f32.mxu0 0.0
        %7211 = vmatmul.mubr.f32.gmra.mrb[0].mxu0 %v7144
        %v7212 = vpop.f32.mrb[0].mxu0
        %v7213 = vadd.f32 0.0, %v7212
        %v7214 = vpop.f32.mrb[0].mxu0
        %7215 = vdwg.mxu0
        %v7216 = vld [vmem:[#allocation2 + $0xf8] sm:$0xff]
        %v7217 = vadd.f32 %v7216, %v7213
        %7218 = vst.msk [vmem:[#allocation2 + $0xf8] sm:$0xff] %vm1853, %v7217
        %v7219 = vld [vmem:[#allocation2 + $0xf8] sm:$0xff]
        %7221 = vrot.lane.b32.xlu0 %v7213, 64
        %v7222 = vpop.permute.xlu0 %7221
        %v7224 = vadd.f32 %v7219, %v7222
        %7225 = vst.msk [vmem:[#allocation2 + $0xf8] sm:$0xff] %vm1861, %v7224
        %v7226 = vld [vmem:[#allocation2] sm:$0xff]
        %v7227 = vld [vmem:[#allocation2 + $0x8] sm:$0xff]
        %v7228 = vld [vmem:[#allocation2 + $0x10] sm:$0xff]
        %v7229 = vld [vmem:[#allocation2 + $0x18] sm:$0xff]
        %v7230 = vld [vmem:[#allocation2 + $0x20] sm:$0xff]
        %v7231 = vld [vmem:[#allocation2 + $0x28] sm:$0xff]
        %v7232 = vld [vmem:[#allocation2 + $0x30] sm:$0xff]
        %v7233 = vld [vmem:[#allocation2 + $0x38] sm:$0xff]
        %v7234 = vld [vmem:[#allocation2 + $0x40] sm:$0xff]
        %v7235 = vld [vmem:[#allocation2 + $0x48] sm:$0xff]
        %v7236 = vld [vmem:[#allocation2 + $0x50] sm:$0xff]
        %v7237 = vld [vmem:[#allocation2 + $0x58] sm:$0xff]
        %v7238 = vld [vmem:[#allocation2 + $0x60] sm:$0xff]
        %v7239 = vld [vmem:[#allocation2 + $0x68] sm:$0xff]
        %v7240 = vld [vmem:[#allocation2 + $0x70] sm:$0xff]
        %v7241 = vld [vmem:[#allocation2 + $0x78] sm:$0xff]
        %v7242 = vld [vmem:[#allocation2 + $0x80] sm:$0xff]
        %v7243 = vld [vmem:[#allocation2 + $0x88] sm:$0xff]
        %v7244 = vld [vmem:[#allocation2 + $0x90] sm:$0xff]
        %v7245 = vld [vmem:[#allocation2 + $0x98] sm:$0xff]
        %v7246 = vld [vmem:[#allocation2 + $0xa0] sm:$0xff]
        %v7247 = vld [vmem:[#allocation2 + $0xa8] sm:$0xff]
        %v7248 = vld [vmem:[#allocation2 + $0xb0] sm:$0xff]
        %v7249 = vld [vmem:[#allocation2 + $0xb8] sm:$0xff]
        %v7250 = vld [vmem:[#allocation2 + $0xc0] sm:$0xff]
        %v7251 = vld [vmem:[#allocation2 + $0xc8] sm:$0xff]
        %v7252 = vld [vmem:[#allocation2 + $0xd0] sm:$0xff]
        %v7253 = vld [vmem:[#allocation2 + $0xd8] sm:$0xff]
        %v7254 = vld [vmem:[#allocation2 + $0xe0] sm:$0xff]
        %v7255 = vld [vmem:[#allocation2 + $0xe8] sm:$0xff]
        %v7256 = vld [vmem:[#allocation2 + $0xf0] sm:$0xff]
        %v7257 = vld [vmem:[#allocation2 + $0xf8] sm:$0xff]
        %v7258 = vadd.f32 %v7226, %v7227
        %v7259 = vadd.f32 %v7258, %v7228
        %v7260 = vadd.f32 %v7259, %v7229
        %v7261 = vadd.f32 %v7260, %v7230
        %v7262 = vadd.f32 %v7261, %v7231
        %v7263 = vadd.f32 %v7262, %v7232
        %v7264 = vadd.f32 %v7263, %v7233
        %v7265 = vadd.f32 %v7264, %v7234
        %v7266 = vadd.f32 %v7265, %v7235
        %v7267 = vadd.f32 %v7266, %v7236
        %v7268 = vadd.f32 %v7267, %v7237
        %v7269 = vadd.f32 %v7268, %v7238
        %v7270 = vadd.f32 %v7269, %v7239
        %v7271 = vadd.f32 %v7270, %v7240
        %v7272 = vadd.f32 %v7271, %v7241
        %v7273 = vadd.f32 %v7272, %v7242
        %v7274 = vadd.f32 %v7273, %v7243
        %v7275 = vadd.f32 %v7274, %v7244
        %v7276 = vadd.f32 %v7275, %v7245
        %v7277 = vadd.f32 %v7276, %v7246
        %v7278 = vadd.f32 %v7277, %v7247
        %v7279 = vadd.f32 %v7278, %v7248
        %v7280 = vadd.f32 %v7279, %v7249
        %v7281 = vadd.f32 %v7280, %v7250
        %v7282 = vadd.f32 %v7281, %v7251
        %v7283 = vadd.f32 %v7282, %v7252
        %v7284 = vadd.f32 %v7283, %v7253
        %v7285 = vadd.f32 %v7284, %v7254
        %v7286 = vadd.f32 %v7285, %v7255
        %v7287 = vadd.f32 %v7286, %v7256
        %v7288 = vadd.f32 %v7287, %v7257
        %7289 = vadd.xlane.f32.xlu0 %v7288
        %v7290 = vpop.xlane.xlu0 %7289
        %vm7291 = vcmask 7168
        %7292 = vst.msk [vmem:[%s376] sm:$0xff] %vm7291, %v7290
        %v7293 = vmul.f32 %v7226, %v7226
        %v7294 = vmul.f32 %v7227, %v7227
        %v7295 = vmul.f32 %v7228, %v7228
        %v7296 = vmul.f32 %v7229, %v7229
        %v7297 = vmul.f32 %v7230, %v7230
        %v7298 = vmul.f32 %v7231, %v7231
        %v7299 = vmul.f32 %v7232, %v7232
        %v7300 = vmul.f32 %v7233, %v7233
        %v7301 = vmul.f32 %v7234, %v7234
        %v7302 = vmul.f32 %v7235, %v7235
        %v7303 = vmul.f32 %v7236, %v7236
        %v7304 = vmul.f32 %v7237, %v7237
        %v7305 = vmul.f32 %v7238, %v7238
        %v7306 = vmul.f32 %v7239, %v7239
        %v7307 = vmul.f32 %v7240, %v7240
        %v7308 = vmul.f32 %v7241, %v7241
        %v7309 = vmul.f32 %v7242, %v7242
        %v7310 = vmul.f32 %v7243, %v7243
        %v7311 = vmul.f32 %v7244, %v7244
        %v7312 = vmul.f32 %v7245, %v7245
        %v7313 = vmul.f32 %v7246, %v7246
        %v7314 = vmul.f32 %v7247, %v7247
        %v7315 = vmul.f32 %v7248, %v7248
        %v7316 = vmul.f32 %v7249, %v7249
        %v7317 = vmul.f32 %v7250, %v7250
        %v7318 = vmul.f32 %v7251, %v7251
        %v7319 = vmul.f32 %v7252, %v7252
        %v7320 = vmul.f32 %v7253, %v7253
        %v7321 = vmul.f32 %v7254, %v7254
        %v7322 = vmul.f32 %v7255, %v7255
        %v7323 = vmul.f32 %v7256, %v7256
        %v7324 = vmul.f32 %v7257, %v7257
        %v7325 = vadd.f32 %v7293, %v7294
        %v7326 = vadd.f32 %v7325, %v7295
        %v7327 = vadd.f32 %v7326, %v7296
        %v7328 = vadd.f32 %v7327, %v7297
        %v7329 = vadd.f32 %v7328, %v7298
        %v7330 = vadd.f32 %v7329, %v7299
        %v7331 = vadd.f32 %v7330, %v7300
        %v7332 = vadd.f32 %v7331, %v7301
        %v7333 = vadd.f32 %v7332, %v7302
        %v7334 = vadd.f32 %v7333, %v7303
        %v7335 = vadd.f32 %v7334, %v7304
        %v7336 = vadd.f32 %v7335, %v7305
        %v7337 = vadd.f32 %v7336, %v7306
        %v7338 = vadd.f32 %v7337, %v7307
        %v7339 = vadd.f32 %v7338, %v7308
        %v7340 = vadd.f32 %v7339, %v7309
        %v7341 = vadd.f32 %v7340, %v7310
        %v7342 = vadd.f32 %v7341, %v7311
        %v7343 = vadd.f32 %v7342, %v7312
        %v7344 = vadd.f32 %v7343, %v7313
        %v7345 = vadd.f32 %v7344, %v7314
        %v7346 = vadd.f32 %v7345, %v7315
        %v7347 = vadd.f32 %v7346, %v7316
        %v7348 = vadd.f32 %v7347, %v7317
        %v7349 = vadd.f32 %v7348, %v7318
        %v7350 = vadd.f32 %v7349, %v7319
        %v7351 = vadd.f32 %v7350, %v7320
        %v7352 = vadd.f32 %v7351, %v7321
        %v7353 = vadd.f32 %v7352, %v7322
        %v7354 = vadd.f32 %v7353, %v7323
        %v7355 = vadd.f32 %v7354, %v7324
        %7356 = vadd.xlane.f32.xlu0 %v7355
        %v7357 = vpop.xlane.xlu0 %7356
        %7358 = vst.msk [vmem:[%s383] sm:$0xff] %vm7291, %v7357
        %p7359 = scmp.lt.s32.totalorder %s29, 1
        %s7360 = scalar_select %p7359, %s29, 1
        %p7361 = scmp.lt.s32.totalorder %s30, 0
        %s7362 = scalar_select %p7361, %s30, 0
        %s7363 = sadd.s32 %s7362, %s7360
        %s7364 = smul.addr %s7363, 8
        %s7365 = scalar_lea.vmem %s6, %s7364
        %p7366 = scmp.lt.s32.totalorder %s29, 1
        %s7367 = scalar_select %p7366, %s29, 1
        %p7368 = scmp.lt.s32.totalorder %s30, 0
        %s7369 = scalar_select %p7368, %s30, 0
        %s7370 = sadd.s32 %s7369, %s7367
        %s7371 = smul.addr %s7370, 8
        %s7372 = scalar_lea.vmem %s7, %s7371
        // Predicated region
        $region53: #{tpu_custom_call.1} parent=43 // pred_check
          %p7373 = pneg %p197
        $region54: #{tpu_custom_call.1} parent=43 // pred_check_branch
          %7375 = sbr.rel (%p7373) target = $region56
        $region55: #{tpu_custom_call.1} parent=43 // pred_region
          _
        $region56: #{tpu_custom_call.1} parent=43 // pred_fallthru
          _
        // Predicated region
        $region57: #{tpu_custom_call.1} parent=43 // pred_check
          %p7376 = pneg %p225
        $region58: #{tpu_custom_call.1} parent=43 // pred_check_branch
          %7378 = sbr.rel (%p7376) target = $region60
        $region59: #{tpu_custom_call.1} parent=43 // pred_region
          _
        $region60: #{tpu_custom_call.1} parent=43 // pred_fallthru
          _
      $region44: #{tpu_custom_call.1} parent=5 // pred_fallthru
        _
      %p7379 = scmp.le.s32.totalorder 2, %s20
      // Predicated region
      $region61: #{tpu_custom_call.1} parent=5 // pred_check
        %p7380 = pneg %p7379
      $region62: #{tpu_custom_call.1} parent=5 // pred_check_branch
        %7382 = sbr.rel (%p7380) target = $region64
      $region63: #{tpu_custom_call.1} parent=5 // pred_region
        %s7383 = ssub.s32 %s20, 2
        // Predicated region
        $region65: #{tpu_custom_call.1} parent=63 // pred_check
          %p7384 = pneg %p203
        $region66: #{tpu_custom_call.1} parent=63 // pred_check_branch
          %7386 = sbr.rel (%p7384) target = $region68
        $region67: #{tpu_custom_call.1} parent=63 // pred_region
          %p7387 = scmp.lt.s32.totalorder %s31, 1
          %s7388 = scalar_select %p7387, %s31, 1
          %p7389 = scmp.lt.s32.totalorder %s32, 0
          %s7390 = scalar_select %p7389, %s32, 0
          %s7391 = sadd.s32 %s7390, %s7388
          %s7392 = smul.addr %s7391, 8
          %s7393 = scalar_lea.vmem %s6, %s7392
        $region68: #{tpu_custom_call.1} parent=63 // pred_fallthru
          _
        // Predicated region
        $region69: #{tpu_custom_call.1} parent=63 // pred_check
          %p7394 = pneg %p231
        $region70: #{tpu_custom_call.1} parent=63 // pred_check_branch
          %7396 = sbr.rel (%p7394) target = $region72
        $region71: #{tpu_custom_call.1} parent=63 // pred_region
          %p7397 = scmp.lt.s32.totalorder %s31, 1
          %s7398 = scalar_select %p7397, %s31, 1
          %p7399 = scmp.lt.s32.totalorder %s32, 0
          %s7400 = scalar_select %p7399, %s32, 0
          %s7401 = sadd.s32 %s7400, %s7398
          %s7402 = smul.addr %s7401, 8
          %s7403 = scalar_lea.vmem %s7, %s7402
        $region72: #{tpu_custom_call.1} parent=63 // pred_fallthru
          _
      $region64: #{tpu_custom_call.1} parent=5 // pred_fallthru
        _
    $region6: #{tpu_custom_call.1} parent=1 // loop_footer
      %s24 = sadd.s32 1, %s20
    $region7: #{tpu_custom_call.1} parent=1 // loop_footer_branch
      %19 = sbr.rel target = $region3
    $region8: #{tpu_custom_call.1} parent=1 // loop_exit
      _
    %7404 = vsyncpa [#allocation4], 1
    %s7405 = scalar_lea.sflag [#allocation4], 1
    %7406 = vsyncpa %s7405, 1
    %7407 = vsyncpa [#allocation6], 1
    %s7408 = scalar_lea.sflag [#allocation6], 1
    %7409 = vsyncpa %s7408, 1

</llo_original>
